<compile_context>
chip_gen: v6e
topology: v6e:2x2x1
jax: 0.10.0
libtpu: 0.0.40
codegen_flags: <defaults>
</compile_context>

<pallas_src>
import math
import jax
import jax.numpy as jnp
from jax.experimental import pallas as pl
from jax.experimental.pallas import tpu as pltpu


def make_seq2seq_kernel(num_layers, seq_len, batch, hidden):
    """Build a kernel closed over the (static) layer / time / batch / hidden sizes."""
    L, T, B, H = num_layers, seq_len, batch, hidden

    def kernel(x_ref, h0_ref, c0_ref, wih0_ref, rec_ref, bias_ref,
               lin_w_ref, lin_b_ref, out_ref):
        # ---- load everything ONCE (hoisted out of the recurrence) ----
        x = x_ref[...]                 # (T*B, D)        time-major flattened input
        h0 = h0_ref[...]               # (L, B, H)
        c0 = c0_ref[...]               # (L, B, H)
        wih0 = wih0_ref[...]           # (2, D, 4H)      layer-0 input projections (enc, dec)
        rec = rec_ref[...]             # (2, L, 2H, 4H)  fused [W_ih; W_hh] (layer 0: top half zero)
        bias = bias_ref[...]           # (2, L, 1, 4H)
        lin_w = lin_w_ref[...]         # (H, O)
        lin_b = lin_b_ref[...]         # (1, O)

        h = [h0[l] for l in range(L)]
        c = [c0[l] for l in range(L)]

        def apply_gates(gates, c_prev):
            # gate columns were permuted in the wrapper to [i, f, o, g]:
            # one contiguous sigmoid over 3H lanes + one tanh over H lanes.
            sg = jax.nn.sigmoid(gates[:, :3 * H])
            g = jnp.tanh(gates[:, 3 * H:])
            i = sg[:, 0 * H:1 * H]
            f = sg[:, 1 * H:2 * H]
            o = sg[:, 2 * H:3 * H]
            c_new = f * c_prev + i * g
            h_new = o * jnp.tanh(c_new)
            return h_new, c_new

        inp = h[L - 1]
        # stack 0 = encoder LSTM over the full sequence,
        # stack 1 = per-step decoder LSTM carrying the encoder's final (h, c).
        # Both consume x[:, t, :]; only the last decoder hidden state feeds the Linear
        # (matches the PyTorch module, which returns outputs[:, -1, :]).
        for s in range(2):
            # layer-0 input projection for ALL timesteps at once (off the critical path)
            x_proj = jnp.dot(x, wih0[s], preferred_element_type=jnp.float32)  # (T*B, 4H)
            w_hh0 = rec[s, 0, H:, :]                                           # (H, 4H)
            b0 = bias[s, 0]                                                    # (1, 4H)
            w_l = [rec[s, l] for l in range(1, L)]                             # (2H, 4H) each
            b_l = [bias[s, l] for l in range(1, L)]                            # (1, 4H) each

            # T is small: full unroll keeps the serial h/c chain latency-minimal.
            for t in range(T):
                # layer 0: precomputed x-projection + recurrent matmul
                gates = (x_proj[t * B:(t + 1) * B, :]
                         + jnp.dot(h[0], w_hh0, preferred_element_type=jnp.float32)
                         + b0)
                h[0], c[0] = apply_gates(gates, c[0])
                inp = h[0]
                # layers >0: single fused dot per cell: [inp, h_l] @ [W_ih; W_hh]
                for l in range(1, L):
                    xh = jnp.concatenate([inp, h[l]], axis=-1)                 # (B, 2H)
                    gates = (jnp.dot(xh, w_l[l - 1],
                                     preferred_element_type=jnp.float32)
                             + b_l[l - 1])
                    h[l], c[l] = apply_gates(gates, c[l])
                    inp = h[l]

        # ---- final Linear on the last decoder hidden state ----
        pred = jnp.dot(inp, lin_w, preferred_element_type=jnp.float32) + lin_b
        out_ref[...] = pred.astype(out_ref.dtype)

    return kernel


# ---------------- wrapper: weight permutation / packing + pallas_call ----------------
def _permute_gates(w):
    """Permute the 4H gate axis from PyTorch order [i, f, g, o] to [i, f, o, g]."""
    H = w.shape[-1] // 4
    return jnp.concatenate(
        [w[..., :2 * H], w[..., 3 * H:], w[..., 2 * H:3 * H]], axis=-1)


def _pack_stack(params, hidden):
    """Pack one LSTM stack (list of (wih_T, whh_T, b) in PyTorch gate order)."""
    H = hidden
    wih0 = _permute_gates(params[0][0])                        # (D, 4H)
    rec_layers, biases = [], []
    for l, (wih, whh, b) in enumerate(params):
        whh_p = _permute_gates(whh)                            # (H, 4H)
        b_p = _permute_gates(b).reshape(1, 4 * H)              # (1, 4H)
        if l == 0:
            # layer-0 input projection is precomputed in the kernel; top half unused.
            rec = jnp.concatenate([jnp.zeros_like(whh_p), whh_p], axis=0)
        else:
            wih_p = _permute_gates(wih)                        # (H, 4H)
            rec = jnp.concatenate([wih_p, whh_p], axis=0)      # (2H, 4H)
        rec_layers.append(rec)
        biases.append(b_p)
    return wih0, jnp.stack(rec_layers), jnp.stack(biases)      # (D,4H),(L,2H,4H),(L,1,4H)


def seq2seq_forward(x, h0, c0, enc_params, dec_params, lin_w, lin_b, output_dim):
    B, T, D = x.shape
    L = len(enc_params)
    H = enc_params[0][1].shape[0]          # whh_T is (H, 4H)

    enc_wih0, enc_rec, enc_b = _pack_stack(enc_params, H)
    dec_wih0, dec_rec, dec_b = _pack_stack(dec_params, H)

    wih0 = jnp.stack([enc_wih0, dec_wih0])      # (2, D, 4H)
    rec = jnp.stack([enc_rec, dec_rec])         # (2, L, 2H, 4H)
    bias = jnp.stack([enc_b, dec_b])            # (2, L, 1, 4H)

    # time-major flattened input: row (t, b) -> t*B + b  (layout plumbing kept outside kernel)
    x_tb = jnp.transpose(x, (1, 0, 2)).reshape(T * B, D)

    kernel = make_seq2seq_kernel(L, T, B, H)
    vmem = pl.BlockSpec(memory_space=pltpu.MemorySpace.VMEM)

    return pl.pallas_call(
        kernel,
        out_shape=jax.ShapeDtypeStruct((B, output_dim), jnp.float32),
        in_specs=[vmem] * 8,
        out_specs=vmem,
    )(x_tb, h0, c0, wih0, rec, bias, lin_w, lin_b)


# ---------------- parameter init (PyTorch-style, standard [i,f,g,o] order) ----------------
def init_lstm_params(key, num_layers, input_dim, hidden):
    """PyTorch-style uniform(-1/sqrt(H), 1/sqrt(H)) init; weights pre-transposed to (in, 4H)."""
    bound = 1.0 / math.sqrt(hidden)
    params = []
    for l in range(num_layers):
        in_d = input_dim if l == 0 else hidden
        key, k1, k2, k3, k4 = jax.random.split(key, 5)
        wih = jax.random.uniform(k1, (4 * hidden, in_d), jnp.float32, -bound, bound)
        whh = jax.random.uniform(k2, (4 * hidden, hidden), jnp.float32, -bound, bound)
        bih = jax.random.uniform(k3, (4 * hidden,), jnp.float32, -bound, bound)
        bhh = jax.random.uniform(k4, (4 * hidden,), jnp.float32, -bound, bound)
        params.append((wih.T, whh.T, (bih + bhh).reshape(1, -1)))
    return params, key


# ---------------- pure-JAX reference (PyTorch gate order, for correctness check) ----------------
def reference_forward(x, h0, c0, enc_params, dec_params, lin_w, lin_b):
    def cell(xv, hv, cv, wih, whh, b):
        gates = xv @ wih + hv @ whh + b
        H = hv.shape[-1]
        i = jax.nn.sigmoid(gates[:, 0 * H:1 * H])
        f = jax.nn.sigmoid(gates[:, 1 * H:2 * H])
        g = jnp.tanh(gates[:, 2 * H:3 * H])
        o = jax.nn.sigmoid(gates[:, 3 * H:4 * H])
        cn = f * cv + i * g
        return o * jnp.tanh(cn), cn

    L = len(enc_params)
    T = x.shape[1]
    h = [h0[l] for l in range(L)]
    c = [c0[l] for l in range(L)]
    for t in range(T):
        inp = x[:, t, :]
        for l in range(L):
            h[l], c[l] = cell(inp, h[l], c[l], *enc_params[l])
            inp = h[l]
    for t in range(T):
        inp = x[:, t, :]
        for l in range(L):
            h[l], c[l] = cell(inp, h[l], c[l], *dec_params[l])
            inp = h[l]
    return inp @ lin_w + lin_b


if __name__ == "__main__":
    # Shapes consistent with the module defaults:
    # Seq2SeqModel(input_dim=4, output_dim=2, sequence_dim=8, mid_dim=8, hidden_lstm_layers=3)
    B, T, D = 4, 8, 4
    H, L, O = 8, 3, 2

    key = jax.random.PRNGKey(0)
    key, kx, kh, kc, klw, klb = jax.random.split(key, 6)
    x = jax.random.normal(kx, (B, T, D), jnp.float32)

    # deterministic stand-in for the torch.randn h_0 / c_0 drawn inside Encoder.forward
    h0 = jax.random.normal(kh, (L, B, H), jnp.float32)
    c0 = jax.random.normal(kc, (L, B, H), jnp.float32)

    enc_params, key = init_lstm_params(key, L, D, H)
    dec_params, key = init_lstm_params(key, L, D, H)
    bound = 1.0 / math.sqrt(H)
    lin_w = jax.random.uniform(klw, (H, O), jnp.float32, -bound, bound)
    lin_b = jax.random.uniform(klb, (1, O), jnp.float32, -bound, bound)

    out = seq2seq_forward(x, h0, c0, enc_params, dec_params, lin_w, lin_b, O)
    out = jax.block_until_ready(out)

    ref = reference_forward(x, h0, c0, enc_params, dec_params, lin_w, lin_b)
    assert out.shape == (B, O)
    assert jnp.allclose(out, ref, atol=1e-4, rtol=1e-4), (out, ref)

    print("KERNEL_OK")
</pallas_src>

<mosaic_0001>
module attributes {stable_mosaic.version = 11 : i64} {
  func.func @kernel(%arg0: memref<32x4xf32, #tpu.memory_space<vmem>>, %arg1: memref<3x4x8xf32, #tpu.memory_space<vmem>>, %arg2: memref<3x4x8xf32, #tpu.memory_space<vmem>>, %arg3: memref<2x4x32xf32, #tpu.memory_space<vmem>>, %arg4: memref<2x3x16x32xf32, #tpu.memory_space<vmem>>, %arg5: memref<2x3x1x32xf32, #tpu.memory_space<vmem>>, %arg6: memref<8x2xf32, #tpu.memory_space<vmem>>, %arg7: memref<1x2xf32, #tpu.memory_space<vmem>>, %arg8: memref<4x2xf32, #tpu.memory_space<vmem>>) attributes {dimension_semantics = [], scalar_prefetch = 0 : i64, scratch_operands = 0 : i64, tpu.core_type = #tpu.core_type<tc>} {
    %c0 = arith.constant 0 : index
    %c0_0 = arith.constant 0 : index
    %0 = vector.load %arg0[%c0, %c0_0] : memref<32x4xf32, #tpu.memory_space<vmem>>, vector<32x4xf32>
    %c0_1 = arith.constant 0 : index
    %c0_2 = arith.constant 0 : index
    %c0_3 = arith.constant 0 : index
    %1 = vector.load %arg1[%c0_1, %c0_2, %c0_3] : memref<3x4x8xf32, #tpu.memory_space<vmem>>, vector<3x4x8xf32>
    %c0_4 = arith.constant 0 : index
    %c0_5 = arith.constant 0 : index
    %c0_6 = arith.constant 0 : index
    %2 = vector.load %arg2[%c0_4, %c0_5, %c0_6] : memref<3x4x8xf32, #tpu.memory_space<vmem>>, vector<3x4x8xf32>
    %c0_7 = arith.constant 0 : index
    %c0_8 = arith.constant 0 : index
    %c0_9 = arith.constant 0 : index
    %3 = vector.load %arg3[%c0_7, %c0_8, %c0_9] : memref<2x4x32xf32, #tpu.memory_space<vmem>>, vector<2x4x32xf32>
    %c0_10 = arith.constant 0 : index
    %c0_11 = arith.constant 0 : index
    %c0_12 = arith.constant 0 : index
    %c0_13 = arith.constant 0 : index
    %4 = vector.load %arg4[%c0_10, %c0_11, %c0_12, %c0_13] : memref<2x3x16x32xf32, #tpu.memory_space<vmem>>, vector<2x3x16x32xf32>
    %c0_14 = arith.constant 0 : index
    %c0_15 = arith.constant 0 : index
    %c0_16 = arith.constant 0 : index
    %c0_17 = arith.constant 0 : index
    %5 = vector.load %arg5[%c0_14, %c0_15, %c0_16, %c0_17] : memref<2x3x1x32xf32, #tpu.memory_space<vmem>>, vector<2x3x1x32xf32>
    %c0_18 = arith.constant 0 : index
    %c0_19 = arith.constant 0 : index
    %6 = vector.load %arg6[%c0_18, %c0_19] : memref<8x2xf32, #tpu.memory_space<vmem>>, vector<8x2xf32>
    %c0_20 = arith.constant 0 : index
    %c0_21 = arith.constant 0 : index
    %7 = vector.load %arg7[%c0_20, %c0_21] : memref<1x2xf32, #tpu.memory_space<vmem>>, vector<1x2xf32>
    %8 = vector.extract_strided_slice %1 {offsets = [0, 0, 0], sizes = [1, 4, 8], strides = [1, 1, 1]} : vector<3x4x8xf32> to vector<1x4x8xf32>
    %9 = vector.shape_cast %8 : vector<1x4x8xf32> to vector<4x8xf32>
    %10 = vector.extract_strided_slice %1 {offsets = [1, 0, 0], sizes = [1, 4, 8], strides = [1, 1, 1]} : vector<3x4x8xf32> to vector<1x4x8xf32>
    %11 = vector.shape_cast %10 : vector<1x4x8xf32> to vector<4x8xf32>
    %12 = vector.extract_strided_slice %1 {offsets = [2, 0, 0], sizes = [1, 4, 8], strides = [1, 1, 1]} : vector<3x4x8xf32> to vector<1x4x8xf32>
    %13 = vector.shape_cast %12 : vector<1x4x8xf32> to vector<4x8xf32>
    %14 = vector.extract_strided_slice %2 {offsets = [0, 0, 0], sizes = [1, 4, 8], strides = [1, 1, 1]} : vector<3x4x8xf32> to vector<1x4x8xf32>
    %15 = vector.shape_cast %14 : vector<1x4x8xf32> to vector<4x8xf32>
    %16 = vector.extract_strided_slice %2 {offsets = [1, 0, 0], sizes = [1, 4, 8], strides = [1, 1, 1]} : vector<3x4x8xf32> to vector<1x4x8xf32>
    %17 = vector.shape_cast %16 : vector<1x4x8xf32> to vector<4x8xf32>
    %18 = vector.extract_strided_slice %2 {offsets = [2, 0, 0], sizes = [1, 4, 8], strides = [1, 1, 1]} : vector<3x4x8xf32> to vector<1x4x8xf32>
    %19 = vector.shape_cast %18 : vector<1x4x8xf32> to vector<4x8xf32>
    %20 = vector.extract_strided_slice %3 {offsets = [0, 0, 0], sizes = [1, 4, 32], strides = [1, 1, 1]} : vector<2x4x32xf32> to vector<1x4x32xf32>
    %21 = vector.shape_cast %20 : vector<1x4x32xf32> to vector<4x32xf32>
    %cst = arith.constant dense<0.000000e+00> : vector<32x32xf32>
    %22 = tpu.matmul %0, %21, %cst {dimension_numbers = #tpu.dot_dimension_numbers<[1], [0], [0], [1], [0, 0, 1, 1], [], []>} : vector<32x4xf32>, vector<4x32xf32>, vector<32x32xf32> -> vector<32x32xf32>
    %23 = vector.extract_strided_slice %4 {offsets = [0, 0, 8, 0], sizes = [1, 1, 8, 32], strides = [1, 1, 1, 1]} : vector<2x3x16x32xf32> to vector<1x1x8x32xf32>
    %24 = vector.shape_cast %23 : vector<1x1x8x32xf32> to vector<8x32xf32>
    %25 = vector.extract_strided_slice %5 {offsets = [0, 0, 0, 0], sizes = [1, 1, 1, 32], strides = [1, 1, 1, 1]} : vector<2x3x1x32xf32> to vector<1x1x1x32xf32>
    %26 = vector.shape_cast %25 : vector<1x1x1x32xf32> to vector<1x32xf32>
    %27 = vector.extract_strided_slice %4 {offsets = [0, 1, 0, 0], sizes = [1, 1, 16, 32], strides = [1, 1, 1, 1]} : vector<2x3x16x32xf32> to vector<1x1x16x32xf32>
    %28 = vector.shape_cast %27 : vector<1x1x16x32xf32> to vector<16x32xf32>
    %29 = vector.extract_strided_slice %4 {offsets = [0, 2, 0, 0], sizes = [1, 1, 16, 32], strides = [1, 1, 1, 1]} : vector<2x3x16x32xf32> to vector<1x1x16x32xf32>
    %30 = vector.shape_cast %29 : vector<1x1x16x32xf32> to vector<16x32xf32>
    %31 = vector.extract_strided_slice %5 {offsets = [0, 1, 0, 0], sizes = [1, 1, 1, 32], strides = [1, 1, 1, 1]} : vector<2x3x1x32xf32> to vector<1x1x1x32xf32>
    %32 = vector.shape_cast %31 : vector<1x1x1x32xf32> to vector<1x32xf32>
    %33 = vector.extract_strided_slice %5 {offsets = [0, 2, 0, 0], sizes = [1, 1, 1, 32], strides = [1, 1, 1, 1]} : vector<2x3x1x32xf32> to vector<1x1x1x32xf32>
    %34 = vector.shape_cast %33 : vector<1x1x1x32xf32> to vector<1x32xf32>
    %35 = vector.extract_strided_slice %22 {offsets = [0, 0], sizes = [4, 32], strides = [1, 1]} : vector<32x32xf32> to vector<4x32xf32>
    %cst_22 = arith.constant dense<0.000000e+00> : vector<4x32xf32>
    %36 = tpu.matmul %9, %24, %cst_22 {dimension_numbers = #tpu.dot_dimension_numbers<[1], [0], [0], [1], [0, 0, 1, 1], [], []>} : vector<4x8xf32>, vector<8x32xf32>, vector<4x32xf32> -> vector<4x32xf32>
    %37 = arith.addf %35, %36 : vector<4x32xf32>
    %38 = vector.broadcast %26 : vector<1x32xf32> to vector<4x32xf32>
    %39 = arith.addf %37, %38 : vector<4x32xf32>
    %40 = vector.extract_strided_slice %39 {offsets = [0, 0], sizes = [4, 24], strides = [1, 1]} : vector<4x32xf32> to vector<4x24xf32>
    %41 = arith.negf %40 : vector<4x24xf32>
    %42 = math.exp %41 : vector<4x24xf32>
    %cst_23 = arith.constant 1.000000e+00 : f32
    %43 = vector.broadcast %cst_23 : f32 to vector<4x24xf32>
    %44 = arith.addf %43, %42 : vector<4x24xf32>
    %45 = arith.divf %43, %44 : vector<4x24xf32>
    %46 = vector.extract_strided_slice %39 {offsets = [0, 24], sizes = [4, 8], strides = [1, 1]} : vector<4x32xf32> to vector<4x8xf32>
    %47 = math.tanh %46 : vector<4x8xf32>
    %48 = vector.extract_strided_slice %45 {offsets = [0, 0], sizes = [4, 8], strides = [1, 1]} : vector<4x24xf32> to vector<4x8xf32>
    %49 = vector.extract_strided_slice %45 {offsets = [0, 8], sizes = [4, 8], strides = [1, 1]} : vector<4x24xf32> to vector<4x8xf32>
    %50 = vector.extract_strided_slice %45 {offsets = [0, 16], sizes = [4, 8], strides = [1, 1]} : vector<4x24xf32> to vector<4x8xf32>
    %51 = arith.mulf %49, %15 : vector<4x8xf32>
    %52 = arith.mulf %48, %47 : vector<4x8xf32>
    %53 = arith.addf %51, %52 : vector<4x8xf32>
    %54 = math.tanh %53 : vector<4x8xf32>
    %55 = arith.mulf %50, %54 : vector<4x8xf32>
    %56 = tpu.concatenate %55, %11 in 1 : vector<4x8xf32>, vector<4x8xf32> -> vector<4x16xf32>
    %cst_24 = arith.constant dense<0.000000e+00> : vector<4x32xf32>
    %57 = tpu.matmul %56, %28, %cst_24 {dimension_numbers = #tpu.dot_dimension_numbers<[1], [0], [0], [1], [0, 0, 1, 1], [], []>} : vector<4x16xf32>, vector<16x32xf32>, vector<4x32xf32> -> vector<4x32xf32>
    %58 = vector.broadcast %32 : vector<1x32xf32> to vector<4x32xf32>
    %59 = arith.addf %57, %58 : vector<4x32xf32>
    %60 = vector.extract_strided_slice %59 {offsets = [0, 0], sizes = [4, 24], strides = [1, 1]} : vector<4x32xf32> to vector<4x24xf32>
    %61 = arith.negf %60 : vector<4x24xf32>
    %62 = math.exp %61 : vector<4x24xf32>
    %cst_25 = arith.constant 1.000000e+00 : f32
    %63 = vector.broadcast %cst_25 : f32 to vector<4x24xf32>
    %64 = arith.addf %63, %62 : vector<4x24xf32>
    %65 = arith.divf %63, %64 : vector<4x24xf32>
    %66 = vector.extract_strided_slice %59 {offsets = [0, 24], sizes = [4, 8], strides = [1, 1]} : vector<4x32xf32> to vector<4x8xf32>
    %67 = math.tanh %66 : vector<4x8xf32>
    %68 = vector.extract_strided_slice %65 {offsets = [0, 0], sizes = [4, 8], strides = [1, 1]} : vector<4x24xf32> to vector<4x8xf32>
    %69 = vector.extract_strided_slice %65 {offsets = [0, 8], sizes = [4, 8], strides = [1, 1]} : vector<4x24xf32> to vector<4x8xf32>
    %70 = vector.extract_strided_slice %65 {offsets = [0, 16], sizes = [4, 8], strides = [1, 1]} : vector<4x24xf32> to vector<4x8xf32>
    %71 = arith.mulf %69, %17 : vector<4x8xf32>
    %72 = arith.mulf %68, %67 : vector<4x8xf32>
    %73 = arith.addf %71, %72 : vector<4x8xf32>
    %74 = math.tanh %73 : vector<4x8xf32>
    %75 = arith.mulf %70, %74 : vector<4x8xf32>
    %76 = tpu.concatenate %75, %13 in 1 : vector<4x8xf32>, vector<4x8xf32> -> vector<4x16xf32>
    %cst_26 = arith.constant dense<0.000000e+00> : vector<4x32xf32>
    %77 = tpu.matmul %76, %30, %cst_26 {dimension_numbers = #tpu.dot_dimension_numbers<[1], [0], [0], [1], [0, 0, 1, 1], [], []>} : vector<4x16xf32>, vector<16x32xf32>, vector<4x32xf32> -> vector<4x32xf32>
    %78 = vector.broadcast %34 : vector<1x32xf32> to vector<4x32xf32>
    %79 = arith.addf %77, %78 : vector<4x32xf32>
    %80 = vector.extract_strided_slice %79 {offsets = [0, 0], sizes = [4, 24], strides = [1, 1]} : vector<4x32xf32> to vector<4x24xf32>
    %81 = arith.negf %80 : vector<4x24xf32>
    %82 = math.exp %81 : vector<4x24xf32>
    %cst_27 = arith.constant 1.000000e+00 : f32
    %83 = vector.broadcast %cst_27 : f32 to vector<4x24xf32>
    %84 = arith.addf %83, %82 : vector<4x24xf32>
    %85 = arith.divf %83, %84 : vector<4x24xf32>
    %86 = vector.extract_strided_slice %79 {offsets = [0, 24], sizes = [4, 8], strides = [1, 1]} : vector<4x32xf32> to vector<4x8xf32>
    %87 = math.tanh %86 : vector<4x8xf32>
    %88 = vector.extract_strided_slice %85 {offsets = [0, 0], sizes = [4, 8], strides = [1, 1]} : vector<4x24xf32> to vector<4x8xf32>
    %89 = vector.extract_strided_slice %85 {offsets = [0, 8], sizes = [4, 8], strides = [1, 1]} : vector<4x24xf32> to vector<4x8xf32>
    %90 = vector.extract_strided_slice %85 {offsets = [0, 16], sizes = [4, 8], strides = [1, 1]} : vector<4x24xf32> to vector<4x8xf32>
    %91 = arith.mulf %89, %19 : vector<4x8xf32>
    %92 = arith.mulf %88, %87 : vector<4x8xf32>
    %93 = arith.addf %91, %92 : vector<4x8xf32>
    %94 = math.tanh %93 : vector<4x8xf32>
    %95 = arith.mulf %90, %94 : vector<4x8xf32>
    %96 = vector.extract_strided_slice %22 {offsets = [4, 0], sizes = [4, 32], strides = [1, 1]} : vector<32x32xf32> to vector<4x32xf32>
    %cst_28 = arith.constant dense<0.000000e+00> : vector<4x32xf32>
    %97 = tpu.matmul %55, %24, %cst_28 {dimension_numbers = #tpu.dot_dimension_numbers<[1], [0], [0], [1], [0, 0, 1, 1], [], []>} : vector<4x8xf32>, vector<8x32xf32>, vector<4x32xf32> -> vector<4x32xf32>
    %98 = arith.addf %96, %97 : vector<4x32xf32>
    %99 = vector.broadcast %26 : vector<1x32xf32> to vector<4x32xf32>
    %100 = arith.addf %98, %99 : vector<4x32xf32>
    %101 = vector.extract_strided_slice %100 {offsets = [0, 0], sizes = [4, 24], strides = [1, 1]} : vector<4x32xf32> to vector<4x24xf32>
    %102 = arith.negf %101 : vector<4x24xf32>
    %103 = math.exp %102 : vector<4x24xf32>
    %cst_29 = arith.constant 1.000000e+00 : f32
    %104 = vector.broadcast %cst_29 : f32 to vector<4x24xf32>
    %105 = arith.addf %104, %103 : vector<4x24xf32>
    %106 = arith.divf %104, %105 : vector<4x24xf32>
    %107 = vector.extract_strided_slice %100 {offsets = [0, 24], sizes = [4, 8], strides = [1, 1]} : vector<4x32xf32> to vector<4x8xf32>
    %108 = math.tanh %107 : vector<4x8xf32>
    %109 = vector.extract_strided_slice %106 {offsets = [0, 0], sizes = [4, 8], strides = [1, 1]} : vector<4x24xf32> to vector<4x8xf32>
    %110 = vector.extract_strided_slice %106 {offsets = [0, 8], sizes = [4, 8], strides = [1, 1]} : vector<4x24xf32> to vector<4x8xf32>
    %111 = vector.extract_strided_slice %106 {offsets = [0, 16], sizes = [4, 8], strides = [1, 1]} : vector<4x24xf32> to vector<4x8xf32>
    %112 = arith.mulf %110, %53 : vector<4x8xf32>
    %113 = arith.mulf %109, %108 : vector<4x8xf32>
    %114 = arith.addf %112, %113 : vector<4x8xf32>
    %115 = math.tanh %114 : vector<4x8xf32>
    %116 = arith.mulf %111, %115 : vector<4x8xf32>
    %117 = tpu.concatenate %116, %75 in 1 : vector<4x8xf32>, vector<4x8xf32> -> vector<4x16xf32>
    %cst_30 = arith.constant dense<0.000000e+00> : vector<4x32xf32>
    %118 = tpu.matmul %117, %28, %cst_30 {dimension_numbers = #tpu.dot_dimension_numbers<[1], [0], [0], [1], [0, 0, 1, 1], [], []>} : vector<4x16xf32>, vector<16x32xf32>, vector<4x32xf32> -> vector<4x32xf32>
    %119 = vector.broadcast %32 : vector<1x32xf32> to vector<4x32xf32>
    %120 = arith.addf %118, %119 : vector<4x32xf32>
    %121 = vector.extract_strided_slice %120 {offsets = [0, 0], sizes = [4, 24], strides = [1, 1]} : vector<4x32xf32> to vector<4x24xf32>
    %122 = arith.negf %121 : vector<4x24xf32>
    %123 = math.exp %122 : vector<4x24xf32>
    %cst_31 = arith.constant 1.000000e+00 : f32
    %124 = vector.broadcast %cst_31 : f32 to vector<4x24xf32>
    %125 = arith.addf %124, %123 : vector<4x24xf32>
    %126 = arith.divf %124, %125 : vector<4x24xf32>
    %127 = vector.extract_strided_slice %120 {offsets = [0, 24], sizes = [4, 8], strides = [1, 1]} : vector<4x32xf32> to vector<4x8xf32>
    %128 = math.tanh %127 : vector<4x8xf32>
    %129 = vector.extract_strided_slice %126 {offsets = [0, 0], sizes = [4, 8], strides = [1, 1]} : vector<4x24xf32> to vector<4x8xf32>
    %130 = vector.extract_strided_slice %126 {offsets = [0, 8], sizes = [4, 8], strides = [1, 1]} : vector<4x24xf32> to vector<4x8xf32>
    %131 = vector.extract_strided_slice %126 {offsets = [0, 16], sizes = [4, 8], strides = [1, 1]} : vector<4x24xf32> to vector<4x8xf32>
    %132 = arith.mulf %130, %73 : vector<4x8xf32>
    %133 = arith.mulf %129, %128 : vector<4x8xf32>
    %134 = arith.addf %132, %133 : vector<4x8xf32>
    %135 = math.tanh %134 : vector<4x8xf32>
    %136 = arith.mulf %131, %135 : vector<4x8xf32>
    %137 = tpu.concatenate %136, %95 in 1 : vector<4x8xf32>, vector<4x8xf32> -> vector<4x16xf32>
    %cst_32 = arith.constant dense<0.000000e+00> : vector<4x32xf32>
    %138 = tpu.matmul %137, %30, %cst_32 {dimension_numbers = #tpu.dot_dimension_numbers<[1], [0], [0], [1], [0, 0, 1, 1], [], []>} : vector<4x16xf32>, vector<16x32xf32>, vector<4x32xf32> -> vector<4x32xf32>
    %139 = vector.broadcast %34 : vector<1x32xf32> to vector<4x32xf32>
    %140 = arith.addf %138, %139 : vector<4x32xf32>
    %141 = vector.extract_strided_slice %140 {offsets = [0, 0], sizes = [4, 24], strides = [1, 1]} : vector<4x32xf32> to vector<4x24xf32>
    %142 = arith.negf %141 : vector<4x24xf32>
    %143 = math.exp %142 : vector<4x24xf32>
    %cst_33 = arith.constant 1.000000e+00 : f32
    %144 = vector.broadcast %cst_33 : f32 to vector<4x24xf32>
    %145 = arith.addf %144, %143 : vector<4x24xf32>
    %146 = arith.divf %144, %145 : vector<4x24xf32>
    %147 = vector.extract_strided_slice %140 {offsets = [0, 24], sizes = [4, 8], strides = [1, 1]} : vector<4x32xf32> to vector<4x8xf32>
    %148 = math.tanh %147 : vector<4x8xf32>
    %149 = vector.extract_strided_slice %146 {offsets = [0, 0], sizes = [4, 8], strides = [1, 1]} : vector<4x24xf32> to vector<4x8xf32>
    %150 = vector.extract_strided_slice %146 {offsets = [0, 8], sizes = [4, 8], strides = [1, 1]} : vector<4x24xf32> to vector<4x8xf32>
    %151 = vector.extract_strided_slice %146 {offsets = [0, 16], sizes = [4, 8], strides = [1, 1]} : vector<4x24xf32> to vector<4x8xf32>
    %152 = arith.mulf %150, %93 : vector<4x8xf32>
    %153 = arith.mulf %149, %148 : vector<4x8xf32>
    %154 = arith.addf %152, %153 : vector<4x8xf32>
    %155 = math.tanh %154 : vector<4x8xf32>
    %156 = arith.mulf %151, %155 : vector<4x8xf32>
    %157 = vector.extract_strided_slice %22 {offsets = [8, 0], sizes = [4, 32], strides = [1, 1]} : vector<32x32xf32> to vector<4x32xf32>
    %cst_34 = arith.constant dense<0.000000e+00> : vector<4x32xf32>
    %158 = tpu.matmul %116, %24, %cst_34 {dimension_numbers = #tpu.dot_dimension_numbers<[1], [0], [0], [1], [0, 0, 1, 1], [], []>} : vector<4x8xf32>, vector<8x32xf32>, vector<4x32xf32> -> vector<4x32xf32>
    %159 = arith.addf %157, %158 : vector<4x32xf32>
    %160 = vector.broadcast %26 : vector<1x32xf32> to vector<4x32xf32>
    %161 = arith.addf %159, %160 : vector<4x32xf32>
    %162 = vector.extract_strided_slice %161 {offsets = [0, 0], sizes = [4, 24], strides = [1, 1]} : vector<4x32xf32> to vector<4x24xf32>
    %163 = arith.negf %162 : vector<4x24xf32>
    %164 = math.exp %163 : vector<4x24xf32>
    %cst_35 = arith.constant 1.000000e+00 : f32
    %165 = vector.broadcast %cst_35 : f32 to vector<4x24xf32>
    %166 = arith.addf %165, %164 : vector<4x24xf32>
    %167 = arith.divf %165, %166 : vector<4x24xf32>
    %168 = vector.extract_strided_slice %161 {offsets = [0, 24], sizes = [4, 8], strides = [1, 1]} : vector<4x32xf32> to vector<4x8xf32>
    %169 = math.tanh %168 : vector<4x8xf32>
    %170 = vector.extract_strided_slice %167 {offsets = [0, 0], sizes = [4, 8], strides = [1, 1]} : vector<4x24xf32> to vector<4x8xf32>
    %171 = vector.extract_strided_slice %167 {offsets = [0, 8], sizes = [4, 8], strides = [1, 1]} : vector<4x24xf32> to vector<4x8xf32>
    %172 = vector.extract_strided_slice %167 {offsets = [0, 16], sizes = [4, 8], strides = [1, 1]} : vector<4x24xf32> to vector<4x8xf32>
    %173 = arith.mulf %171, %114 : vector<4x8xf32>
    %174 = arith.mulf %170, %169 : vector<4x8xf32>
    %175 = arith.addf %173, %174 : vector<4x8xf32>
    %176 = math.tanh %175 : vector<4x8xf32>
    %177 = arith.mulf %172, %176 : vector<4x8xf32>
    %178 = tpu.concatenate %177, %136 in 1 : vector<4x8xf32>, vector<4x8xf32> -> vector<4x16xf32>
    %cst_36 = arith.constant dense<0.000000e+00> : vector<4x32xf32>
    %179 = tpu.matmul %178, %28, %cst_36 {dimension_numbers = #tpu.dot_dimension_numbers<[1], [0], [0], [1], [0, 0, 1, 1], [], []>} : vector<4x16xf32>, vector<16x32xf32>, vector<4x32xf32> -> vector<4x32xf32>
    %180 = vector.broadcast %32 : vector<1x32xf32> to vector<4x32xf32>
    %181 = arith.addf %179, %180 : vector<4x32xf32>
    %182 = vector.extract_strided_slice %181 {offsets = [0, 0], sizes = [4, 24], strides = [1, 1]} : vector<4x32xf32> to vector<4x24xf32>
    %183 = arith.negf %182 : vector<4x24xf32>
    %184 = math.exp %183 : vector<4x24xf32>
    %cst_37 = arith.constant 1.000000e+00 : f32
    %185 = vector.broadcast %cst_37 : f32 to vector<4x24xf32>
    %186 = arith.addf %185, %184 : vector<4x24xf32>
    %187 = arith.divf %185, %186 : vector<4x24xf32>
    %188 = vector.extract_strided_slice %181 {offsets = [0, 24], sizes = [4, 8], strides = [1, 1]} : vector<4x32xf32> to vector<4x8xf32>
    %189 = math.tanh %188 : vector<4x8xf32>
    %190 = vector.extract_strided_slice %187 {offsets = [0, 0], sizes = [4, 8], strides = [1, 1]} : vector<4x24xf32> to vector<4x8xf32>
    %191 = vector.extract_strided_slice %187 {offsets = [0, 8], sizes = [4, 8], strides = [1, 1]} : vector<4x24xf32> to vector<4x8xf32>
    %192 = vector.extract_strided_slice %187 {offsets = [0, 16], sizes = [4, 8], strides = [1, 1]} : vector<4x24xf32> to vector<4x8xf32>
    %193 = arith.mulf %191, %134 : vector<4x8xf32>
    %194 = arith.mulf %190, %189 : vector<4x8xf32>
    %195 = arith.addf %193, %194 : vector<4x8xf32>
    %196 = math.tanh %195 : vector<4x8xf32>
    %197 = arith.mulf %192, %196 : vector<4x8xf32>
    %198 = tpu.concatenate %197, %156 in 1 : vector<4x8xf32>, vector<4x8xf32> -> vector<4x16xf32>
    %cst_38 = arith.constant dense<0.000000e+00> : vector<4x32xf32>
    %199 = tpu.matmul %198, %30, %cst_38 {dimension_numbers = #tpu.dot_dimension_numbers<[1], [0], [0], [1], [0, 0, 1, 1], [], []>} : vector<4x16xf32>, vector<16x32xf32>, vector<4x32xf32> -> vector<4x32xf32>
    %200 = vector.broadcast %34 : vector<1x32xf32> to vector<4x32xf32>
    %201 = arith.addf %199, %200 : vector<4x32xf32>
    %202 = vector.extract_strided_slice %201 {offsets = [0, 0], sizes = [4, 24], strides = [1, 1]} : vector<4x32xf32> to vector<4x24xf32>
    %203 = arith.negf %202 : vector<4x24xf32>
    %204 = math.exp %203 : vector<4x24xf32>
    %cst_39 = arith.constant 1.000000e+00 : f32
    %205 = vector.broadcast %cst_39 : f32 to vector<4x24xf32>
    %206 = arith.addf %205, %204 : vector<4x24xf32>
    %207 = arith.divf %205, %206 : vector<4x24xf32>
    %208 = vector.extract_strided_slice %201 {offsets = [0, 24], sizes = [4, 8], strides = [1, 1]} : vector<4x32xf32> to vector<4x8xf32>
    %209 = math.tanh %208 : vector<4x8xf32>
    %210 = vector.extract_strided_slice %207 {offsets = [0, 0], sizes = [4, 8], strides = [1, 1]} : vector<4x24xf32> to vector<4x8xf32>
    %211 = vector.extract_strided_slice %207 {offsets = [0, 8], sizes = [4, 8], strides = [1, 1]} : vector<4x24xf32> to vector<4x8xf32>
    %212 = vector.extract_strided_slice %207 {offsets = [0, 16], sizes = [4, 8], strides = [1, 1]} : vector<4x24xf32> to vector<4x8xf32>
    %213 = arith.mulf %211, %154 : vector<4x8xf32>
    %214 = arith.mulf %210, %209 : vector<4x8xf32>
    %215 = arith.addf %213, %214 : vector<4x8xf32>
    %216 = math.tanh %215 : vector<4x8xf32>
    %217 = arith.mulf %212, %216 : vector<4x8xf32>
    %218 = vector.extract_strided_slice %22 {offsets = [12, 0], sizes = [4, 32], strides = [1, 1]} : vector<32x32xf32> to vector<4x32xf32>
    %cst_40 = arith.constant dense<0.000000e+00> : vector<4x32xf32>
    %219 = tpu.matmul %177, %24, %cst_40 {dimension_numbers = #tpu.dot_dimension_numbers<[1], [0], [0], [1], [0, 0, 1, 1], [], []>} : vector<4x8xf32>, vector<8x32xf32>, vector<4x32xf32> -> vector<4x32xf32>
    %220 = arith.addf %218, %219 : vector<4x32xf32>
    %221 = vector.broadcast %26 : vector<1x32xf32> to vector<4x32xf32>
    %222 = arith.addf %220, %221 : vector<4x32xf32>
    %223 = vector.extract_strided_slice %222 {offsets = [0, 0], sizes = [4, 24], strides = [1, 1]} : vector<4x32xf32> to vector<4x24xf32>
    %224 = arith.negf %223 : vector<4x24xf32>
    %225 = math.exp %224 : vector<4x24xf32>
    %cst_41 = arith.constant 1.000000e+00 : f32
    %226 = vector.broadcast %cst_41 : f32 to vector<4x24xf32>
    %227 = arith.addf %226, %225 : vector<4x24xf32>
    %228 = arith.divf %226, %227 : vector<4x24xf32>
    %229 = vector.extract_strided_slice %222 {offsets = [0, 24], sizes = [4, 8], strides = [1, 1]} : vector<4x32xf32> to vector<4x8xf32>
    %230 = math.tanh %229 : vector<4x8xf32>
    %231 = vector.extract_strided_slice %228 {offsets = [0, 0], sizes = [4, 8], strides = [1, 1]} : vector<4x24xf32> to vector<4x8xf32>
    %232 = vector.extract_strided_slice %228 {offsets = [0, 8], sizes = [4, 8], strides = [1, 1]} : vector<4x24xf32> to vector<4x8xf32>
    %233 = vector.extract_strided_slice %228 {offsets = [0, 16], sizes = [4, 8], strides = [1, 1]} : vector<4x24xf32> to vector<4x8xf32>
    %234 = arith.mulf %232, %175 : vector<4x8xf32>
    %235 = arith.mulf %231, %230 : vector<4x8xf32>
    %236 = arith.addf %234, %235 : vector<4x8xf32>
    %237 = math.tanh %236 : vector<4x8xf32>
    %238 = arith.mulf %233, %237 : vector<4x8xf32>
    %239 = tpu.concatenate %238, %197 in 1 : vector<4x8xf32>, vector<4x8xf32> -> vector<4x16xf32>
    %cst_42 = arith.constant dense<0.000000e+00> : vector<4x32xf32>
    %240 = tpu.matmul %239, %28, %cst_42 {dimension_numbers = #tpu.dot_dimension_numbers<[1], [0], [0], [1], [0, 0, 1, 1], [], []>} : vector<4x16xf32>, vector<16x32xf32>, vector<4x32xf32> -> vector<4x32xf32>
    %241 = vector.broadcast %32 : vector<1x32xf32> to vector<4x32xf32>
    %242 = arith.addf %240, %241 : vector<4x32xf32>
    %243 = vector.extract_strided_slice %242 {offsets = [0, 0], sizes = [4, 24], strides = [1, 1]} : vector<4x32xf32> to vector<4x24xf32>
    %244 = arith.negf %243 : vector<4x24xf32>
    %245 = math.exp %244 : vector<4x24xf32>
    %cst_43 = arith.constant 1.000000e+00 : f32
    %246 = vector.broadcast %cst_43 : f32 to vector<4x24xf32>
    %247 = arith.addf %246, %245 : vector<4x24xf32>
    %248 = arith.divf %246, %247 : vector<4x24xf32>
    %249 = vector.extract_strided_slice %242 {offsets = [0, 24], sizes = [4, 8], strides = [1, 1]} : vector<4x32xf32> to vector<4x8xf32>
    %250 = math.tanh %249 : vector<4x8xf32>
    %251 = vector.extract_strided_slice %248 {offsets = [0, 0], sizes = [4, 8], strides = [1, 1]} : vector<4x24xf32> to vector<4x8xf32>
    %252 = vector.extract_strided_slice %248 {offsets = [0, 8], sizes = [4, 8], strides = [1, 1]} : vector<4x24xf32> to vector<4x8xf32>
    %253 = vector.extract_strided_slice %248 {offsets = [0, 16], sizes = [4, 8], strides = [1, 1]} : vector<4x24xf32> to vector<4x8xf32>
    %254 = arith.mulf %252, %195 : vector<4x8xf32>
    %255 = arith.mulf %251, %250 : vector<4x8xf32>
    %256 = arith.addf %254, %255 : vector<4x8xf32>
    %257 = math.tanh %256 : vector<4x8xf32>
    %258 = arith.mulf %253, %257 : vector<4x8xf32>
    %259 = tpu.concatenate %258, %217 in 1 : vector<4x8xf32>, vector<4x8xf32> -> vector<4x16xf32>
    %cst_44 = arith.constant dense<0.000000e+00> : vector<4x32xf32>
    %260 = tpu.matmul %259, %30, %cst_44 {dimension_numbers = #tpu.dot_dimension_numbers<[1], [0], [0], [1], [0, 0, 1, 1], [], []>} : vector<4x16xf32>, vector<16x32xf32>, vector<4x32xf32> -> vector<4x32xf32>
    %261 = vector.broadcast %34 : vector<1x32xf32> to vector<4x32xf32>
    %262 = arith.addf %260, %261 : vector<4x32xf32>
    %263 = vector.extract_strided_slice %262 {offsets = [0, 0], sizes = [4, 24], strides = [1, 1]} : vector<4x32xf32> to vector<4x24xf32>
    %264 = arith.negf %263 : vector<4x24xf32>
    %265 = math.exp %264 : vector<4x24xf32>
    %cst_45 = arith.constant 1.000000e+00 : f32
    %266 = vector.broadcast %cst_45 : f32 to vector<4x24xf32>
    %267 = arith.addf %266, %265 : vector<4x24xf32>
    %268 = arith.divf %266, %267 : vector<4x24xf32>
    %269 = vector.extract_strided_slice %262 {offsets = [0, 24], sizes = [4, 8], strides = [1, 1]} : vector<4x32xf32> to vector<4x8xf32>
    %270 = math.tanh %269 : vector<4x8xf32>
    %271 = vector.extract_strided_slice %268 {offsets = [0, 0], sizes = [4, 8], strides = [1, 1]} : vector<4x24xf32> to vector<4x8xf32>
    %272 = vector.extract_strided_slice %268 {offsets = [0, 8], sizes = [4, 8], strides = [1, 1]} : vector<4x24xf32> to vector<4x8xf32>
    %273 = vector.extract_strided_slice %268 {offsets = [0, 16], sizes = [4, 8], strides = [1, 1]} : vector<4x24xf32> to vector<4x8xf32>
    %274 = arith.mulf %272, %215 : vector<4x8xf32>
    %275 = arith.mulf %271, %270 : vector<4x8xf32>
    %276 = arith.addf %274, %275 : vector<4x8xf32>
    %277 = math.tanh %276 : vector<4x8xf32>
    %278 = arith.mulf %273, %277 : vector<4x8xf32>
    %279 = vector.extract_strided_slice %22 {offsets = [16, 0], sizes = [4, 32], strides = [1, 1]} : vector<32x32xf32> to vector<4x32xf32>
    %cst_46 = arith.constant dense<0.000000e+00> : vector<4x32xf32>
    %280 = tpu.matmul %238, %24, %cst_46 {dimension_numbers = #tpu.dot_dimension_numbers<[1], [0], [0], [1], [0, 0, 1, 1], [], []>} : vector<4x8xf32>, vector<8x32xf32>, vector<4x32xf32> -> vector<4x32xf32>
    %281 = arith.addf %279, %280 : vector<4x32xf32>
    %282 = vector.broadcast %26 : vector<1x32xf32> to vector<4x32xf32>
    %283 = arith.addf %281, %282 : vector<4x32xf32>
    %284 = vector.extract_strided_slice %283 {offsets = [0, 0], sizes = [4, 24], strides = [1, 1]} : vector<4x32xf32> to vector<4x24xf32>
    %285 = arith.negf %284 : vector<4x24xf32>
    %286 = math.exp %285 : vector<4x24xf32>
    %cst_47 = arith.constant 1.000000e+00 : f32
    %287 = vector.broadcast %cst_47 : f32 to vector<4x24xf32>
    %288 = arith.addf %287, %286 : vector<4x24xf32>
    %289 = arith.divf %287, %288 : vector<4x24xf32>
    %290 = vector.extract_strided_slice %283 {offsets = [0, 24], sizes = [4, 8], strides = [1, 1]} : vector<4x32xf32> to vector<4x8xf32>
    %291 = math.tanh %290 : vector<4x8xf32>
    %292 = vector.extract_strided_slice %289 {offsets = [0, 0], sizes = [4, 8], strides = [1, 1]} : vector<4x24xf32> to vector<4x8xf32>
    %293 = vector.extract_strided_slice %289 {offsets = [0, 8], sizes = [4, 8], strides = [1, 1]} : vector<4x24xf32> to vector<4x8xf32>
    %294 = vector.extract_strided_slice %289 {offsets = [0, 16], sizes = [4, 8], strides = [1, 1]} : vector<4x24xf32> to vector<4x8xf32>
    %295 = arith.mulf %293, %236 : vector<4x8xf32>
    %296 = arith.mulf %292, %291 : vector<4x8xf32>
    %297 = arith.addf %295, %296 : vector<4x8xf32>
    %298 = math.tanh %297 : vector<4x8xf32>
    %299 = arith.mulf %294, %298 : vector<4x8xf32>
    %300 = tpu.concatenate %299, %258 in 1 : vector<4x8xf32>, vector<4x8xf32> -> vector<4x16xf32>
    %cst_48 = arith.constant dense<0.000000e+00> : vector<4x32xf32>
    %301 = tpu.matmul %300, %28, %cst_48 {dimension_numbers = #tpu.dot_dimension_numbers<[1], [0], [0], [1], [0, 0, 1, 1], [], []>} : vector<4x16xf32>, vector<16x32xf32>, vector<4x32xf32> -> vector<4x32xf32>
    %302 = vector.broadcast %32 : vector<1x32xf32> to vector<4x32xf32>
    %303 = arith.addf %301, %302 : vector<4x32xf32>
    %304 = vector.extract_strided_slice %303 {offsets = [0, 0], sizes = [4, 24], strides = [1, 1]} : vector<4x32xf32> to vector<4x24xf32>
    %305 = arith.negf %304 : vector<4x24xf32>
    %306 = math.exp %305 : vector<4x24xf32>
    %cst_49 = arith.constant 1.000000e+00 : f32
    %307 = vector.broadcast %cst_49 : f32 to vector<4x24xf32>
    %308 = arith.addf %307, %306 : vector<4x24xf32>
    %309 = arith.divf %307, %308 : vector<4x24xf32>
    %310 = vector.extract_strided_slice %303 {offsets = [0, 24], sizes = [4, 8], strides = [1, 1]} : vector<4x32xf32> to vector<4x8xf32>
    %311 = math.tanh %310 : vector<4x8xf32>
    %312 = vector.extract_strided_slice %309 {offsets = [0, 0], sizes = [4, 8], strides = [1, 1]} : vector<4x24xf32> to vector<4x8xf32>
    %313 = vector.extract_strided_slice %309 {offsets = [0, 8], sizes = [4, 8], strides = [1, 1]} : vector<4x24xf32> to vector<4x8xf32>
    %314 = vector.extract_strided_slice %309 {offsets = [0, 16], sizes = [4, 8], strides = [1, 1]} : vector<4x24xf32> to vector<4x8xf32>
    %315 = arith.mulf %313, %256 : vector<4x8xf32>
    %316 = arith.mulf %312, %311 : vector<4x8xf32>
    %317 = arith.addf %315, %316 : vector<4x8xf32>
    %318 = math.tanh %317 : vector<4x8xf32>
    %319 = arith.mulf %314, %318 : vector<4x8xf32>
    %320 = tpu.concatenate %319, %278 in 1 : vector<4x8xf32>, vector<4x8xf32> -> vector<4x16xf32>
    %cst_50 = arith.constant dense<0.000000e+00> : vector<4x32xf32>
    %321 = tpu.matmul %320, %30, %cst_50 {dimension_numbers = #tpu.dot_dimension_numbers<[1], [0], [0], [1], [0, 0, 1, 1], [], []>} : vector<4x16xf32>, vector<16x32xf32>, vector<4x32xf32> -> vector<4x32xf32>
    %322 = vector.broadcast %34 : vector<1x32xf32> to vector<4x32xf32>
    %323 = arith.addf %321, %322 : vector<4x32xf32>
    %324 = vector.extract_strided_slice %323 {offsets = [0, 0], sizes = [4, 24], strides = [1, 1]} : vector<4x32xf32> to vector<4x24xf32>
    %325 = arith.negf %324 : vector<4x24xf32>
    %326 = math.exp %325 : vector<4x24xf32>
    %cst_51 = arith.constant 1.000000e+00 : f32
    %327 = vector.broadcast %cst_51 : f32 to vector<4x24xf32>
    %328 = arith.addf %327, %326 : vector<4x24xf32>
    %329 = arith.divf %327, %328 : vector<4x24xf32>
    %330 = vector.extract_strided_slice %323 {offsets = [0, 24], sizes = [4, 8], strides = [1, 1]} : vector<4x32xf32> to vector<4x8xf32>
    %331 = math.tanh %330 : vector<4x8xf32>
    %332 = vector.extract_strided_slice %329 {offsets = [0, 0], sizes = [4, 8], strides = [1, 1]} : vector<4x24xf32> to vector<4x8xf32>
    %333 = vector.extract_strided_slice %329 {offsets = [0, 8], sizes = [4, 8], strides = [1, 1]} : vector<4x24xf32> to vector<4x8xf32>
    %334 = vector.extract_strided_slice %329 {offsets = [0, 16], sizes = [4, 8], strides = [1, 1]} : vector<4x24xf32> to vector<4x8xf32>
    %335 = arith.mulf %333, %276 : vector<4x8xf32>
    %336 = arith.mulf %332, %331 : vector<4x8xf32>
    %337 = arith.addf %335, %336 : vector<4x8xf32>
    %338 = math.tanh %337 : vector<4x8xf32>
    %339 = arith.mulf %334, %338 : vector<4x8xf32>
    %340 = vector.extract_strided_slice %22 {offsets = [20, 0], sizes = [4, 32], strides = [1, 1]} : vector<32x32xf32> to vector<4x32xf32>
    %cst_52 = arith.constant dense<0.000000e+00> : vector<4x32xf32>
    %341 = tpu.matmul %299, %24, %cst_52 {dimension_numbers = #tpu.dot_dimension_numbers<[1], [0], [0], [1], [0, 0, 1, 1], [], []>} : vector<4x8xf32>, vector<8x32xf32>, vector<4x32xf32> -> vector<4x32xf32>
    %342 = arith.addf %340, %341 : vector<4x32xf32>
    %343 = vector.broadcast %26 : vector<1x32xf32> to vector<4x32xf32>
    %344 = arith.addf %342, %343 : vector<4x32xf32>
    %345 = vector.extract_strided_slice %344 {offsets = [0, 0], sizes = [4, 24], strides = [1, 1]} : vector<4x32xf32> to vector<4x24xf32>
    %346 = arith.negf %345 : vector<4x24xf32>
    %347 = math.exp %346 : vector<4x24xf32>
    %cst_53 = arith.constant 1.000000e+00 : f32
    %348 = vector.broadcast %cst_53 : f32 to vector<4x24xf32>
    %349 = arith.addf %348, %347 : vector<4x24xf32>
    %350 = arith.divf %348, %349 : vector<4x24xf32>
    %351 = vector.extract_strided_slice %344 {offsets = [0, 24], sizes = [4, 8], strides = [1, 1]} : vector<4x32xf32> to vector<4x8xf32>
    %352 = math.tanh %351 : vector<4x8xf32>
    %353 = vector.extract_strided_slice %350 {offsets = [0, 0], sizes = [4, 8], strides = [1, 1]} : vector<4x24xf32> to vector<4x8xf32>
    %354 = vector.extract_strided_slice %350 {offsets = [0, 8], sizes = [4, 8], strides = [1, 1]} : vector<4x24xf32> to vector<4x8xf32>
    %355 = vector.extract_strided_slice %350 {offsets = [0, 16], sizes = [4, 8], strides = [1, 1]} : vector<4x24xf32> to vector<4x8xf32>
    %356 = arith.mulf %354, %297 : vector<4x8xf32>
    %357 = arith.mulf %353, %352 : vector<4x8xf32>
    %358 = arith.addf %356, %357 : vector<4x8xf32>
    %359 = math.tanh %358 : vector<4x8xf32>
    %360 = arith.mulf %355, %359 : vector<4x8xf32>
    %361 = tpu.concatenate %360, %319 in 1 : vector<4x8xf32>, vector<4x8xf32> -> vector<4x16xf32>
    %cst_54 = arith.constant dense<0.000000e+00> : vector<4x32xf32>
    %362 = tpu.matmul %361, %28, %cst_54 {dimension_numbers = #tpu.dot_dimension_numbers<[1], [0], [0], [1], [0, 0, 1, 1], [], []>} : vector<4x16xf32>, vector<16x32xf32>, vector<4x32xf32> -> vector<4x32xf32>
    %363 = vector.broadcast %32 : vector<1x32xf32> to vector<4x32xf32>
    %364 = arith.addf %362, %363 : vector<4x32xf32>
    %365 = vector.extract_strided_slice %364 {offsets = [0, 0], sizes = [4, 24], strides = [1, 1]} : vector<4x32xf32> to vector<4x24xf32>
    %366 = arith.negf %365 : vector<4x24xf32>
    %367 = math.exp %366 : vector<4x24xf32>
    %cst_55 = arith.constant 1.000000e+00 : f32
    %368 = vector.broadcast %cst_55 : f32 to vector<4x24xf32>
    %369 = arith.addf %368, %367 : vector<4x24xf32>
    %370 = arith.divf %368, %369 : vector<4x24xf32>
    %371 = vector.extract_strided_slice %364 {offsets = [0, 24], sizes = [4, 8], strides = [1, 1]} : vector<4x32xf32> to vector<4x8xf32>
    %372 = math.tanh %371 : vector<4x8xf32>
    %373 = vector.extract_strided_slice %370 {offsets = [0, 0], sizes = [4, 8], strides = [1, 1]} : vector<4x24xf32> to vector<4x8xf32>
    %374 = vector.extract_strided_slice %370 {offsets = [0, 8], sizes = [4, 8], strides = [1, 1]} : vector<4x24xf32> to vector<4x8xf32>
    %375 = vector.extract_strided_slice %370 {offsets = [0, 16], sizes = [4, 8], strides = [1, 1]} : vector<4x24xf32> to vector<4x8xf32>
    %376 = arith.mulf %374, %317 : vector<4x8xf32>
    %377 = arith.mulf %373, %372 : vector<4x8xf32>
    %378 = arith.addf %376, %377 : vector<4x8xf32>
    %379 = math.tanh %378 : vector<4x8xf32>
    %380 = arith.mulf %375, %379 : vector<4x8xf32>
    %381 = tpu.concatenate %380, %339 in 1 : vector<4x8xf32>, vector<4x8xf32> -> vector<4x16xf32>
    %cst_56 = arith.constant dense<0.000000e+00> : vector<4x32xf32>
    %382 = tpu.matmul %381, %30, %cst_56 {dimension_numbers = #tpu.dot_dimension_numbers<[1], [0], [0], [1], [0, 0, 1, 1], [], []>} : vector<4x16xf32>, vector<16x32xf32>, vector<4x32xf32> -> vector<4x32xf32>
    %383 = vector.broadcast %34 : vector<1x32xf32> to vector<4x32xf32>
    %384 = arith.addf %382, %383 : vector<4x32xf32>
    %385 = vector.extract_strided_slice %384 {offsets = [0, 0], sizes = [4, 24], strides = [1, 1]} : vector<4x32xf32> to vector<4x24xf32>
    %386 = arith.negf %385 : vector<4x24xf32>
    %387 = math.exp %386 : vector<4x24xf32>
    %cst_57 = arith.constant 1.000000e+00 : f32
    %388 = vector.broadcast %cst_57 : f32 to vector<4x24xf32>
    %389 = arith.addf %388, %387 : vector<4x24xf32>
    %390 = arith.divf %388, %389 : vector<4x24xf32>
    %391 = vector.extract_strided_slice %384 {offsets = [0, 24], sizes = [4, 8], strides = [1, 1]} : vector<4x32xf32> to vector<4x8xf32>
    %392 = math.tanh %391 : vector<4x8xf32>
    %393 = vector.extract_strided_slice %390 {offsets = [0, 0], sizes = [4, 8], strides = [1, 1]} : vector<4x24xf32> to vector<4x8xf32>
    %394 = vector.extract_strided_slice %390 {offsets = [0, 8], sizes = [4, 8], strides = [1, 1]} : vector<4x24xf32> to vector<4x8xf32>
    %395 = vector.extract_strided_slice %390 {offsets = [0, 16], sizes = [4, 8], strides = [1, 1]} : vector<4x24xf32> to vector<4x8xf32>
    %396 = arith.mulf %394, %337 : vector<4x8xf32>
    %397 = arith.mulf %393, %392 : vector<4x8xf32>
    %398 = arith.addf %396, %397 : vector<4x8xf32>
    %399 = math.tanh %398 : vector<4x8xf32>
    %400 = arith.mulf %395, %399 : vector<4x8xf32>
    %401 = vector.extract_strided_slice %22 {offsets = [24, 0], sizes = [4, 32], strides = [1, 1]} : vector<32x32xf32> to vector<4x32xf32>
    %cst_58 = arith.constant dense<0.000000e+00> : vector<4x32xf32>
    %402 = tpu.matmul %360, %24, %cst_58 {dimension_numbers = #tpu.dot_dimension_numbers<[1], [0], [0], [1], [0, 0, 1, 1], [], []>} : vector<4x8xf32>, vector<8x32xf32>, vector<4x32xf32> -> vector<4x32xf32>
    %403 = arith.addf %401, %402 : vector<4x32xf32>
    %404 = vector.broadcast %26 : vector<1x32xf32> to vector<4x32xf32>
    %405 = arith.addf %403, %404 : vector<4x32xf32>
    %406 = vector.extract_strided_slice %405 {offsets = [0, 0], sizes = [4, 24], strides = [1, 1]} : vector<4x32xf32> to vector<4x24xf32>
    %407 = arith.negf %406 : vector<4x24xf32>
    %408 = math.exp %407 : vector<4x24xf32>
    %cst_59 = arith.constant 1.000000e+00 : f32
    %409 = vector.broadcast %cst_59 : f32 to vector<4x24xf32>
    %410 = arith.addf %409, %408 : vector<4x24xf32>
    %411 = arith.divf %409, %410 : vector<4x24xf32>
    %412 = vector.extract_strided_slice %405 {offsets = [0, 24], sizes = [4, 8], strides = [1, 1]} : vector<4x32xf32> to vector<4x8xf32>
    %413 = math.tanh %412 : vector<4x8xf32>
    %414 = vector.extract_strided_slice %411 {offsets = [0, 0], sizes = [4, 8], strides = [1, 1]} : vector<4x24xf32> to vector<4x8xf32>
    %415 = vector.extract_strided_slice %411 {offsets = [0, 8], sizes = [4, 8], strides = [1, 1]} : vector<4x24xf32> to vector<4x8xf32>
    %416 = vector.extract_strided_slice %411 {offsets = [0, 16], sizes = [4, 8], strides = [1, 1]} : vector<4x24xf32> to vector<4x8xf32>
    %417 = arith.mulf %415, %358 : vector<4x8xf32>
    %418 = arith.mulf %414, %413 : vector<4x8xf32>
    %419 = arith.addf %417, %418 : vector<4x8xf32>
    %420 = math.tanh %419 : vector<4x8xf32>
    %421 = arith.mulf %416, %420 : vector<4x8xf32>
    %422 = tpu.concatenate %421, %380 in 1 : vector<4x8xf32>, vector<4x8xf32> -> vector<4x16xf32>
    %cst_60 = arith.constant dense<0.000000e+00> : vector<4x32xf32>
    %423 = tpu.matmul %422, %28, %cst_60 {dimension_numbers = #tpu.dot_dimension_numbers<[1], [0], [0], [1], [0, 0, 1, 1], [], []>} : vector<4x16xf32>, vector<16x32xf32>, vector<4x32xf32> -> vector<4x32xf32>
    %424 = vector.broadcast %32 : vector<1x32xf32> to vector<4x32xf32>
    %425 = arith.addf %423, %424 : vector<4x32xf32>
    %426 = vector.extract_strided_slice %425 {offsets = [0, 0], sizes = [4, 24], strides = [1, 1]} : vector<4x32xf32> to vector<4x24xf32>
    %427 = arith.negf %426 : vector<4x24xf32>
    %428 = math.exp %427 : vector<4x24xf32>
    %cst_61 = arith.constant 1.000000e+00 : f32
    %429 = vector.broadcast %cst_61 : f32 to vector<4x24xf32>
    %430 = arith.addf %429, %428 : vector<4x24xf32>
    %431 = arith.divf %429, %430 : vector<4x24xf32>
    %432 = vector.extract_strided_slice %425 {offsets = [0, 24], sizes = [4, 8], strides = [1, 1]} : vector<4x32xf32> to vector<4x8xf32>
    %433 = math.tanh %432 : vector<4x8xf32>
    %434 = vector.extract_strided_slice %431 {offsets = [0, 0], sizes = [4, 8], strides = [1, 1]} : vector<4x24xf32> to vector<4x8xf32>
    %435 = vector.extract_strided_slice %431 {offsets = [0, 8], sizes = [4, 8], strides = [1, 1]} : vector<4x24xf32> to vector<4x8xf32>
    %436 = vector.extract_strided_slice %431 {offsets = [0, 16], sizes = [4, 8], strides = [1, 1]} : vector<4x24xf32> to vector<4x8xf32>
    %437 = arith.mulf %435, %378 : vector<4x8xf32>
    %438 = arith.mulf %434, %433 : vector<4x8xf32>
    %439 = arith.addf %437, %438 : vector<4x8xf32>
    %440 = math.tanh %439 : vector<4x8xf32>
    %441 = arith.mulf %436, %440 : vector<4x8xf32>
    %442 = tpu.concatenate %441, %400 in 1 : vector<4x8xf32>, vector<4x8xf32> -> vector<4x16xf32>
    %cst_62 = arith.constant dense<0.000000e+00> : vector<4x32xf32>
    %443 = tpu.matmul %442, %30, %cst_62 {dimension_numbers = #tpu.dot_dimension_numbers<[1], [0], [0], [1], [0, 0, 1, 1], [], []>} : vector<4x16xf32>, vector<16x32xf32>, vector<4x32xf32> -> vector<4x32xf32>
    %444 = vector.broadcast %34 : vector<1x32xf32> to vector<4x32xf32>
    %445 = arith.addf %443, %444 : vector<4x32xf32>
    %446 = vector.extract_strided_slice %445 {offsets = [0, 0], sizes = [4, 24], strides = [1, 1]} : vector<4x32xf32> to vector<4x24xf32>
    %447 = arith.negf %446 : vector<4x24xf32>
    %448 = math.exp %447 : vector<4x24xf32>
    %cst_63 = arith.constant 1.000000e+00 : f32
    %449 = vector.broadcast %cst_63 : f32 to vector<4x24xf32>
    %450 = arith.addf %449, %448 : vector<4x24xf32>
    %451 = arith.divf %449, %450 : vector<4x24xf32>
    %452 = vector.extract_strided_slice %445 {offsets = [0, 24], sizes = [4, 8], strides = [1, 1]} : vector<4x32xf32> to vector<4x8xf32>
    %453 = math.tanh %452 : vector<4x8xf32>
    %454 = vector.extract_strided_slice %451 {offsets = [0, 0], sizes = [4, 8], strides = [1, 1]} : vector<4x24xf32> to vector<4x8xf32>
    %455 = vector.extract_strided_slice %451 {offsets = [0, 8], sizes = [4, 8], strides = [1, 1]} : vector<4x24xf32> to vector<4x8xf32>
    %456 = vector.extract_strided_slice %451 {offsets = [0, 16], sizes = [4, 8], strides = [1, 1]} : vector<4x24xf32> to vector<4x8xf32>
    %457 = arith.mulf %455, %398 : vector<4x8xf32>
    %458 = arith.mulf %454, %453 : vector<4x8xf32>
    %459 = arith.addf %457, %458 : vector<4x8xf32>
    %460 = math.tanh %459 : vector<4x8xf32>
    %461 = arith.mulf %456, %460 : vector<4x8xf32>
    %462 = vector.extract_strided_slice %22 {offsets = [28, 0], sizes = [4, 32], strides = [1, 1]} : vector<32x32xf32> to vector<4x32xf32>
    %cst_64 = arith.constant dense<0.000000e+00> : vector<4x32xf32>
    %463 = tpu.matmul %421, %24, %cst_64 {dimension_numbers = #tpu.dot_dimension_numbers<[1], [0], [0], [1], [0, 0, 1, 1], [], []>} : vector<4x8xf32>, vector<8x32xf32>, vector<4x32xf32> -> vector<4x32xf32>
    %464 = arith.addf %462, %463 : vector<4x32xf32>
    %465 = vector.broadcast %26 : vector<1x32xf32> to vector<4x32xf32>
    %466 = arith.addf %464, %465 : vector<4x32xf32>
    %467 = vector.extract_strided_slice %466 {offsets = [0, 0], sizes = [4, 24], strides = [1, 1]} : vector<4x32xf32> to vector<4x24xf32>
    %468 = arith.negf %467 : vector<4x24xf32>
    %469 = math.exp %468 : vector<4x24xf32>
    %cst_65 = arith.constant 1.000000e+00 : f32
    %470 = vector.broadcast %cst_65 : f32 to vector<4x24xf32>
    %471 = arith.addf %470, %469 : vector<4x24xf32>
    %472 = arith.divf %470, %471 : vector<4x24xf32>
    %473 = vector.extract_strided_slice %466 {offsets = [0, 24], sizes = [4, 8], strides = [1, 1]} : vector<4x32xf32> to vector<4x8xf32>
    %474 = math.tanh %473 : vector<4x8xf32>
    %475 = vector.extract_strided_slice %472 {offsets = [0, 0], sizes = [4, 8], strides = [1, 1]} : vector<4x24xf32> to vector<4x8xf32>
    %476 = vector.extract_strided_slice %472 {offsets = [0, 8], sizes = [4, 8], strides = [1, 1]} : vector<4x24xf32> to vector<4x8xf32>
    %477 = vector.extract_strided_slice %472 {offsets = [0, 16], sizes = [4, 8], strides = [1, 1]} : vector<4x24xf32> to vector<4x8xf32>
    %478 = arith.mulf %476, %419 : vector<4x8xf32>
    %479 = arith.mulf %475, %474 : vector<4x8xf32>
    %480 = arith.addf %478, %479 : vector<4x8xf32>
    %481 = math.tanh %480 : vector<4x8xf32>
    %482 = arith.mulf %477, %481 : vector<4x8xf32>
    %483 = tpu.concatenate %482, %441 in 1 : vector<4x8xf32>, vector<4x8xf32> -> vector<4x16xf32>
    %cst_66 = arith.constant dense<0.000000e+00> : vector<4x32xf32>
    %484 = tpu.matmul %483, %28, %cst_66 {dimension_numbers = #tpu.dot_dimension_numbers<[1], [0], [0], [1], [0, 0, 1, 1], [], []>} : vector<4x16xf32>, vector<16x32xf32>, vector<4x32xf32> -> vector<4x32xf32>
    %485 = vector.broadcast %32 : vector<1x32xf32> to vector<4x32xf32>
    %486 = arith.addf %484, %485 : vector<4x32xf32>
    %487 = vector.extract_strided_slice %486 {offsets = [0, 0], sizes = [4, 24], strides = [1, 1]} : vector<4x32xf32> to vector<4x24xf32>
    %488 = arith.negf %487 : vector<4x24xf32>
    %489 = math.exp %488 : vector<4x24xf32>
    %cst_67 = arith.constant 1.000000e+00 : f32
    %490 = vector.broadcast %cst_67 : f32 to vector<4x24xf32>
    %491 = arith.addf %490, %489 : vector<4x24xf32>
    %492 = arith.divf %490, %491 : vector<4x24xf32>
    %493 = vector.extract_strided_slice %486 {offsets = [0, 24], sizes = [4, 8], strides = [1, 1]} : vector<4x32xf32> to vector<4x8xf32>
    %494 = math.tanh %493 : vector<4x8xf32>
    %495 = vector.extract_strided_slice %492 {offsets = [0, 0], sizes = [4, 8], strides = [1, 1]} : vector<4x24xf32> to vector<4x8xf32>
    %496 = vector.extract_strided_slice %492 {offsets = [0, 8], sizes = [4, 8], strides = [1, 1]} : vector<4x24xf32> to vector<4x8xf32>
    %497 = vector.extract_strided_slice %492 {offsets = [0, 16], sizes = [4, 8], strides = [1, 1]} : vector<4x24xf32> to vector<4x8xf32>
    %498 = arith.mulf %496, %439 : vector<4x8xf32>
    %499 = arith.mulf %495, %494 : vector<4x8xf32>
    %500 = arith.addf %498, %499 : vector<4x8xf32>
    %501 = math.tanh %500 : vector<4x8xf32>
    %502 = arith.mulf %497, %501 : vector<4x8xf32>
    %503 = tpu.concatenate %502, %461 in 1 : vector<4x8xf32>, vector<4x8xf32> -> vector<4x16xf32>
    %cst_68 = arith.constant dense<0.000000e+00> : vector<4x32xf32>
    %504 = tpu.matmul %503, %30, %cst_68 {dimension_numbers = #tpu.dot_dimension_numbers<[1], [0], [0], [1], [0, 0, 1, 1], [], []>} : vector<4x16xf32>, vector<16x32xf32>, vector<4x32xf32> -> vector<4x32xf32>
    %505 = vector.broadcast %34 : vector<1x32xf32> to vector<4x32xf32>
    %506 = arith.addf %504, %505 : vector<4x32xf32>
    %507 = vector.extract_strided_slice %506 {offsets = [0, 0], sizes = [4, 24], strides = [1, 1]} : vector<4x32xf32> to vector<4x24xf32>
    %508 = arith.negf %507 : vector<4x24xf32>
    %509 = math.exp %508 : vector<4x24xf32>
    %cst_69 = arith.constant 1.000000e+00 : f32
    %510 = vector.broadcast %cst_69 : f32 to vector<4x24xf32>
    %511 = arith.addf %510, %509 : vector<4x24xf32>
    %512 = arith.divf %510, %511 : vector<4x24xf32>
    %513 = vector.extract_strided_slice %506 {offsets = [0, 24], sizes = [4, 8], strides = [1, 1]} : vector<4x32xf32> to vector<4x8xf32>
    %514 = math.tanh %513 : vector<4x8xf32>
    %515 = vector.extract_strided_slice %512 {offsets = [0, 0], sizes = [4, 8], strides = [1, 1]} : vector<4x24xf32> to vector<4x8xf32>
    %516 = vector.extract_strided_slice %512 {offsets = [0, 8], sizes = [4, 8], strides = [1, 1]} : vector<4x24xf32> to vector<4x8xf32>
    %517 = vector.extract_strided_slice %512 {offsets = [0, 16], sizes = [4, 8], strides = [1, 1]} : vector<4x24xf32> to vector<4x8xf32>
    %518 = arith.mulf %516, %459 : vector<4x8xf32>
    %519 = arith.mulf %515, %514 : vector<4x8xf32>
    %520 = arith.addf %518, %519 : vector<4x8xf32>
    %521 = math.tanh %520 : vector<4x8xf32>
    %522 = arith.mulf %517, %521 : vector<4x8xf32>
    %523 = vector.extract_strided_slice %3 {offsets = [1, 0, 0], sizes = [1, 4, 32], strides = [1, 1, 1]} : vector<2x4x32xf32> to vector<1x4x32xf32>
    %524 = vector.shape_cast %523 : vector<1x4x32xf32> to vector<4x32xf32>
    %cst_70 = arith.constant dense<0.000000e+00> : vector<32x32xf32>
    %525 = tpu.matmul %0, %524, %cst_70 {dimension_numbers = #tpu.dot_dimension_numbers<[1], [0], [0], [1], [0, 0, 1, 1], [], []>} : vector<32x4xf32>, vector<4x32xf32>, vector<32x32xf32> -> vector<32x32xf32>
    %526 = vector.extract_strided_slice %4 {offsets = [1, 0, 8, 0], sizes = [1, 1, 8, 32], strides = [1, 1, 1, 1]} : vector<2x3x16x32xf32> to vector<1x1x8x32xf32>
    %527 = vector.shape_cast %526 : vector<1x1x8x32xf32> to vector<8x32xf32>
    %528 = vector.extract_strided_slice %5 {offsets = [1, 0, 0, 0], sizes = [1, 1, 1, 32], strides = [1, 1, 1, 1]} : vector<2x3x1x32xf32> to vector<1x1x1x32xf32>
    %529 = vector.shape_cast %528 : vector<1x1x1x32xf32> to vector<1x32xf32>
    %530 = vector.extract_strided_slice %4 {offsets = [1, 1, 0, 0], sizes = [1, 1, 16, 32], strides = [1, 1, 1, 1]} : vector<2x3x16x32xf32> to vector<1x1x16x32xf32>
    %531 = vector.shape_cast %530 : vector<1x1x16x32xf32> to vector<16x32xf32>
    %532 = vector.extract_strided_slice %4 {offsets = [1, 2, 0, 0], sizes = [1, 1, 16, 32], strides = [1, 1, 1, 1]} : vector<2x3x16x32xf32> to vector<1x1x16x32xf32>
    %533 = vector.shape_cast %532 : vector<1x1x16x32xf32> to vector<16x32xf32>
    %534 = vector.extract_strided_slice %5 {offsets = [1, 1, 0, 0], sizes = [1, 1, 1, 32], strides = [1, 1, 1, 1]} : vector<2x3x1x32xf32> to vector<1x1x1x32xf32>
    %535 = vector.shape_cast %534 : vector<1x1x1x32xf32> to vector<1x32xf32>
    %536 = vector.extract_strided_slice %5 {offsets = [1, 2, 0, 0], sizes = [1, 1, 1, 32], strides = [1, 1, 1, 1]} : vector<2x3x1x32xf32> to vector<1x1x1x32xf32>
    %537 = vector.shape_cast %536 : vector<1x1x1x32xf32> to vector<1x32xf32>
    %538 = vector.extract_strided_slice %525 {offsets = [0, 0], sizes = [4, 32], strides = [1, 1]} : vector<32x32xf32> to vector<4x32xf32>
    %cst_71 = arith.constant dense<0.000000e+00> : vector<4x32xf32>
    %539 = tpu.matmul %482, %527, %cst_71 {dimension_numbers = #tpu.dot_dimension_numbers<[1], [0], [0], [1], [0, 0, 1, 1], [], []>} : vector<4x8xf32>, vector<8x32xf32>, vector<4x32xf32> -> vector<4x32xf32>
    %540 = arith.addf %538, %539 : vector<4x32xf32>
    %541 = vector.broadcast %529 : vector<1x32xf32> to vector<4x32xf32>
    %542 = arith.addf %540, %541 : vector<4x32xf32>
    %543 = vector.extract_strided_slice %542 {offsets = [0, 0], sizes = [4, 24], strides = [1, 1]} : vector<4x32xf32> to vector<4x24xf32>
    %544 = arith.negf %543 : vector<4x24xf32>
    %545 = math.exp %544 : vector<4x24xf32>
    %cst_72 = arith.constant 1.000000e+00 : f32
    %546 = vector.broadcast %cst_72 : f32 to vector<4x24xf32>
    %547 = arith.addf %546, %545 : vector<4x24xf32>
    %548 = arith.divf %546, %547 : vector<4x24xf32>
    %549 = vector.extract_strided_slice %542 {offsets = [0, 24], sizes = [4, 8], strides = [1, 1]} : vector<4x32xf32> to vector<4x8xf32>
    %550 = math.tanh %549 : vector<4x8xf32>
    %551 = vector.extract_strided_slice %548 {offsets = [0, 0], sizes = [4, 8], strides = [1, 1]} : vector<4x24xf32> to vector<4x8xf32>
    %552 = vector.extract_strided_slice %548 {offsets = [0, 8], sizes = [4, 8], strides = [1, 1]} : vector<4x24xf32> to vector<4x8xf32>
    %553 = vector.extract_strided_slice %548 {offsets = [0, 16], sizes = [4, 8], strides = [1, 1]} : vector<4x24xf32> to vector<4x8xf32>
    %554 = arith.mulf %552, %480 : vector<4x8xf32>
    %555 = arith.mulf %551, %550 : vector<4x8xf32>
    %556 = arith.addf %554, %555 : vector<4x8xf32>
    %557 = math.tanh %556 : vector<4x8xf32>
    %558 = arith.mulf %553, %557 : vector<4x8xf32>
    %559 = tpu.concatenate %558, %502 in 1 : vector<4x8xf32>, vector<4x8xf32> -> vector<4x16xf32>
    %cst_73 = arith.constant dense<0.000000e+00> : vector<4x32xf32>
    %560 = tpu.matmul %559, %531, %cst_73 {dimension_numbers = #tpu.dot_dimension_numbers<[1], [0], [0], [1], [0, 0, 1, 1], [], []>} : vector<4x16xf32>, vector<16x32xf32>, vector<4x32xf32> -> vector<4x32xf32>
    %561 = vector.broadcast %535 : vector<1x32xf32> to vector<4x32xf32>
    %562 = arith.addf %560, %561 : vector<4x32xf32>
    %563 = vector.extract_strided_slice %562 {offsets = [0, 0], sizes = [4, 24], strides = [1, 1]} : vector<4x32xf32> to vector<4x24xf32>
    %564 = arith.negf %563 : vector<4x24xf32>
    %565 = math.exp %564 : vector<4x24xf32>
    %cst_74 = arith.constant 1.000000e+00 : f32
    %566 = vector.broadcast %cst_74 : f32 to vector<4x24xf32>
    %567 = arith.addf %566, %565 : vector<4x24xf32>
    %568 = arith.divf %566, %567 : vector<4x24xf32>
    %569 = vector.extract_strided_slice %562 {offsets = [0, 24], sizes = [4, 8], strides = [1, 1]} : vector<4x32xf32> to vector<4x8xf32>
    %570 = math.tanh %569 : vector<4x8xf32>
    %571 = vector.extract_strided_slice %568 {offsets = [0, 0], sizes = [4, 8], strides = [1, 1]} : vector<4x24xf32> to vector<4x8xf32>
    %572 = vector.extract_strided_slice %568 {offsets = [0, 8], sizes = [4, 8], strides = [1, 1]} : vector<4x24xf32> to vector<4x8xf32>
    %573 = vector.extract_strided_slice %568 {offsets = [0, 16], sizes = [4, 8], strides = [1, 1]} : vector<4x24xf32> to vector<4x8xf32>
    %574 = arith.mulf %572, %500 : vector<4x8xf32>
    %575 = arith.mulf %571, %570 : vector<4x8xf32>
    %576 = arith.addf %574, %575 : vector<4x8xf32>
    %577 = math.tanh %576 : vector<4x8xf32>
    %578 = arith.mulf %573, %577 : vector<4x8xf32>
    %579 = tpu.concatenate %578, %522 in 1 : vector<4x8xf32>, vector<4x8xf32> -> vector<4x16xf32>
    %cst_75 = arith.constant dense<0.000000e+00> : vector<4x32xf32>
    %580 = tpu.matmul %579, %533, %cst_75 {dimension_numbers = #tpu.dot_dimension_numbers<[1], [0], [0], [1], [0, 0, 1, 1], [], []>} : vector<4x16xf32>, vector<16x32xf32>, vector<4x32xf32> -> vector<4x32xf32>
    %581 = vector.broadcast %537 : vector<1x32xf32> to vector<4x32xf32>
    %582 = arith.addf %580, %581 : vector<4x32xf32>
    %583 = vector.extract_strided_slice %582 {offsets = [0, 0], sizes = [4, 24], strides = [1, 1]} : vector<4x32xf32> to vector<4x24xf32>
    %584 = arith.negf %583 : vector<4x24xf32>
    %585 = math.exp %584 : vector<4x24xf32>
    %cst_76 = arith.constant 1.000000e+00 : f32
    %586 = vector.broadcast %cst_76 : f32 to vector<4x24xf32>
    %587 = arith.addf %586, %585 : vector<4x24xf32>
    %588 = arith.divf %586, %587 : vector<4x24xf32>
    %589 = vector.extract_strided_slice %582 {offsets = [0, 24], sizes = [4, 8], strides = [1, 1]} : vector<4x32xf32> to vector<4x8xf32>
    %590 = math.tanh %589 : vector<4x8xf32>
    %591 = vector.extract_strided_slice %588 {offsets = [0, 0], sizes = [4, 8], strides = [1, 1]} : vector<4x24xf32> to vector<4x8xf32>
    %592 = vector.extract_strided_slice %588 {offsets = [0, 8], sizes = [4, 8], strides = [1, 1]} : vector<4x24xf32> to vector<4x8xf32>
    %593 = vector.extract_strided_slice %588 {offsets = [0, 16], sizes = [4, 8], strides = [1, 1]} : vector<4x24xf32> to vector<4x8xf32>
    %594 = arith.mulf %592, %520 : vector<4x8xf32>
    %595 = arith.mulf %591, %590 : vector<4x8xf32>
    %596 = arith.addf %594, %595 : vector<4x8xf32>
    %597 = math.tanh %596 : vector<4x8xf32>
    %598 = arith.mulf %593, %597 : vector<4x8xf32>
    %599 = vector.extract_strided_slice %525 {offsets = [4, 0], sizes = [4, 32], strides = [1, 1]} : vector<32x32xf32> to vector<4x32xf32>
    %cst_77 = arith.constant dense<0.000000e+00> : vector<4x32xf32>
    %600 = tpu.matmul %558, %527, %cst_77 {dimension_numbers = #tpu.dot_dimension_numbers<[1], [0], [0], [1], [0, 0, 1, 1], [], []>} : vector<4x8xf32>, vector<8x32xf32>, vector<4x32xf32> -> vector<4x32xf32>
    %601 = arith.addf %599, %600 : vector<4x32xf32>
    %602 = vector.broadcast %529 : vector<1x32xf32> to vector<4x32xf32>
    %603 = arith.addf %601, %602 : vector<4x32xf32>
    %604 = vector.extract_strided_slice %603 {offsets = [0, 0], sizes = [4, 24], strides = [1, 1]} : vector<4x32xf32> to vector<4x24xf32>
    %605 = arith.negf %604 : vector<4x24xf32>
    %606 = math.exp %605 : vector<4x24xf32>
    %cst_78 = arith.constant 1.000000e+00 : f32
    %607 = vector.broadcast %cst_78 : f32 to vector<4x24xf32>
    %608 = arith.addf %607, %606 : vector<4x24xf32>
    %609 = arith.divf %607, %608 : vector<4x24xf32>
    %610 = vector.extract_strided_slice %603 {offsets = [0, 24], sizes = [4, 8], strides = [1, 1]} : vector<4x32xf32> to vector<4x8xf32>
    %611 = math.tanh %610 : vector<4x8xf32>
    %612 = vector.extract_strided_slice %609 {offsets = [0, 0], sizes = [4, 8], strides = [1, 1]} : vector<4x24xf32> to vector<4x8xf32>
    %613 = vector.extract_strided_slice %609 {offsets = [0, 8], sizes = [4, 8], strides = [1, 1]} : vector<4x24xf32> to vector<4x8xf32>
    %614 = vector.extract_strided_slice %609 {offsets = [0, 16], sizes = [4, 8], strides = [1, 1]} : vector<4x24xf32> to vector<4x8xf32>
    %615 = arith.mulf %613, %556 : vector<4x8xf32>
    %616 = arith.mulf %612, %611 : vector<4x8xf32>
    %617 = arith.addf %615, %616 : vector<4x8xf32>
    %618 = math.tanh %617 : vector<4x8xf32>
    %619 = arith.mulf %614, %618 : vector<4x8xf32>
    %620 = tpu.concatenate %619, %578 in 1 : vector<4x8xf32>, vector<4x8xf32> -> vector<4x16xf32>
    %cst_79 = arith.constant dense<0.000000e+00> : vector<4x32xf32>
    %621 = tpu.matmul %620, %531, %cst_79 {dimension_numbers = #tpu.dot_dimension_numbers<[1], [0], [0], [1], [0, 0, 1, 1], [], []>} : vector<4x16xf32>, vector<16x32xf32>, vector<4x32xf32> -> vector<4x32xf32>
    %622 = vector.broadcast %535 : vector<1x32xf32> to vector<4x32xf32>
    %623 = arith.addf %621, %622 : vector<4x32xf32>
    %624 = vector.extract_strided_slice %623 {offsets = [0, 0], sizes = [4, 24], strides = [1, 1]} : vector<4x32xf32> to vector<4x24xf32>
    %625 = arith.negf %624 : vector<4x24xf32>
    %626 = math.exp %625 : vector<4x24xf32>
    %cst_80 = arith.constant 1.000000e+00 : f32
    %627 = vector.broadcast %cst_80 : f32 to vector<4x24xf32>
    %628 = arith.addf %627, %626 : vector<4x24xf32>
    %629 = arith.divf %627, %628 : vector<4x24xf32>
    %630 = vector.extract_strided_slice %623 {offsets = [0, 24], sizes = [4, 8], strides = [1, 1]} : vector<4x32xf32> to vector<4x8xf32>
    %631 = math.tanh %630 : vector<4x8xf32>
    %632 = vector.extract_strided_slice %629 {offsets = [0, 0], sizes = [4, 8], strides = [1, 1]} : vector<4x24xf32> to vector<4x8xf32>
    %633 = vector.extract_strided_slice %629 {offsets = [0, 8], sizes = [4, 8], strides = [1, 1]} : vector<4x24xf32> to vector<4x8xf32>
    %634 = vector.extract_strided_slice %629 {offsets = [0, 16], sizes = [4, 8], strides = [1, 1]} : vector<4x24xf32> to vector<4x8xf32>
    %635 = arith.mulf %633, %576 : vector<4x8xf32>
    %636 = arith.mulf %632, %631 : vector<4x8xf32>
    %637 = arith.addf %635, %636 : vector<4x8xf32>
    %638 = math.tanh %637 : vector<4x8xf32>
    %639 = arith.mulf %634, %638 : vector<4x8xf32>
    %640 = tpu.concatenate %639, %598 in 1 : vector<4x8xf32>, vector<4x8xf32> -> vector<4x16xf32>
    %cst_81 = arith.constant dense<0.000000e+00> : vector<4x32xf32>
    %641 = tpu.matmul %640, %533, %cst_81 {dimension_numbers = #tpu.dot_dimension_numbers<[1], [0], [0], [1], [0, 0, 1, 1], [], []>} : vector<4x16xf32>, vector<16x32xf32>, vector<4x32xf32> -> vector<4x32xf32>
    %642 = vector.broadcast %537 : vector<1x32xf32> to vector<4x32xf32>
    %643 = arith.addf %641, %642 : vector<4x32xf32>
    %644 = vector.extract_strided_slice %643 {offsets = [0, 0], sizes = [4, 24], strides = [1, 1]} : vector<4x32xf32> to vector<4x24xf32>
    %645 = arith.negf %644 : vector<4x24xf32>
    %646 = math.exp %645 : vector<4x24xf32>
    %cst_82 = arith.constant 1.000000e+00 : f32
    %647 = vector.broadcast %cst_82 : f32 to vector<4x24xf32>
    %648 = arith.addf %647, %646 : vector<4x24xf32>
    %649 = arith.divf %647, %648 : vector<4x24xf32>
    %650 = vector.extract_strided_slice %643 {offsets = [0, 24], sizes = [4, 8], strides = [1, 1]} : vector<4x32xf32> to vector<4x8xf32>
    %651 = math.tanh %650 : vector<4x8xf32>
    %652 = vector.extract_strided_slice %649 {offsets = [0, 0], sizes = [4, 8], strides = [1, 1]} : vector<4x24xf32> to vector<4x8xf32>
    %653 = vector.extract_strided_slice %649 {offsets = [0, 8], sizes = [4, 8], strides = [1, 1]} : vector<4x24xf32> to vector<4x8xf32>
    %654 = vector.extract_strided_slice %649 {offsets = [0, 16], sizes = [4, 8], strides = [1, 1]} : vector<4x24xf32> to vector<4x8xf32>
    %655 = arith.mulf %653, %596 : vector<4x8xf32>
    %656 = arith.mulf %652, %651 : vector<4x8xf32>
    %657 = arith.addf %655, %656 : vector<4x8xf32>
    %658 = math.tanh %657 : vector<4x8xf32>
    %659 = arith.mulf %654, %658 : vector<4x8xf32>
    %660 = vector.extract_strided_slice %525 {offsets = [8, 0], sizes = [4, 32], strides = [1, 1]} : vector<32x32xf32> to vector<4x32xf32>
    %cst_83 = arith.constant dense<0.000000e+00> : vector<4x32xf32>
    %661 = tpu.matmul %619, %527, %cst_83 {dimension_numbers = #tpu.dot_dimension_numbers<[1], [0], [0], [1], [0, 0, 1, 1], [], []>} : vector<4x8xf32>, vector<8x32xf32>, vector<4x32xf32> -> vector<4x32xf32>
    %662 = arith.addf %660, %661 : vector<4x32xf32>
    %663 = vector.broadcast %529 : vector<1x32xf32> to vector<4x32xf32>
    %664 = arith.addf %662, %663 : vector<4x32xf32>
    %665 = vector.extract_strided_slice %664 {offsets = [0, 0], sizes = [4, 24], strides = [1, 1]} : vector<4x32xf32> to vector<4x24xf32>
    %666 = arith.negf %665 : vector<4x24xf32>
    %667 = math.exp %666 : vector<4x24xf32>
    %cst_84 = arith.constant 1.000000e+00 : f32
    %668 = vector.broadcast %cst_84 : f32 to vector<4x24xf32>
    %669 = arith.addf %668, %667 : vector<4x24xf32>
    %670 = arith.divf %668, %669 : vector<4x24xf32>
    %671 = vector.extract_strided_slice %664 {offsets = [0, 24], sizes = [4, 8], strides = [1, 1]} : vector<4x32xf32> to vector<4x8xf32>
    %672 = math.tanh %671 : vector<4x8xf32>
    %673 = vector.extract_strided_slice %670 {offsets = [0, 0], sizes = [4, 8], strides = [1, 1]} : vector<4x24xf32> to vector<4x8xf32>
    %674 = vector.extract_strided_slice %670 {offsets = [0, 8], sizes = [4, 8], strides = [1, 1]} : vector<4x24xf32> to vector<4x8xf32>
    %675 = vector.extract_strided_slice %670 {offsets = [0, 16], sizes = [4, 8], strides = [1, 1]} : vector<4x24xf32> to vector<4x8xf32>
    %676 = arith.mulf %674, %617 : vector<4x8xf32>
    %677 = arith.mulf %673, %672 : vector<4x8xf32>
    %678 = arith.addf %676, %677 : vector<4x8xf32>
    %679 = math.tanh %678 : vector<4x8xf32>
    %680 = arith.mulf %675, %679 : vector<4x8xf32>
    %681 = tpu.concatenate %680, %639 in 1 : vector<4x8xf32>, vector<4x8xf32> -> vector<4x16xf32>
    %cst_85 = arith.constant dense<0.000000e+00> : vector<4x32xf32>
    %682 = tpu.matmul %681, %531, %cst_85 {dimension_numbers = #tpu.dot_dimension_numbers<[1], [0], [0], [1], [0, 0, 1, 1], [], []>} : vector<4x16xf32>, vector<16x32xf32>, vector<4x32xf32> -> vector<4x32xf32>
    %683 = vector.broadcast %535 : vector<1x32xf32> to vector<4x32xf32>
    %684 = arith.addf %682, %683 : vector<4x32xf32>
    %685 = vector.extract_strided_slice %684 {offsets = [0, 0], sizes = [4, 24], strides = [1, 1]} : vector<4x32xf32> to vector<4x24xf32>
    %686 = arith.negf %685 : vector<4x24xf32>
    %687 = math.exp %686 : vector<4x24xf32>
    %cst_86 = arith.constant 1.000000e+00 : f32
    %688 = vector.broadcast %cst_86 : f32 to vector<4x24xf32>
    %689 = arith.addf %688, %687 : vector<4x24xf32>
    %690 = arith.divf %688, %689 : vector<4x24xf32>
    %691 = vector.extract_strided_slice %684 {offsets = [0, 24], sizes = [4, 8], strides = [1, 1]} : vector<4x32xf32> to vector<4x8xf32>
    %692 = math.tanh %691 : vector<4x8xf32>
    %693 = vector.extract_strided_slice %690 {offsets = [0, 0], sizes = [4, 8], strides = [1, 1]} : vector<4x24xf32> to vector<4x8xf32>
    %694 = vector.extract_strided_slice %690 {offsets = [0, 8], sizes = [4, 8], strides = [1, 1]} : vector<4x24xf32> to vector<4x8xf32>
    %695 = vector.extract_strided_slice %690 {offsets = [0, 16], sizes = [4, 8], strides = [1, 1]} : vector<4x24xf32> to vector<4x8xf32>
    %696 = arith.mulf %694, %637 : vector<4x8xf32>
    %697 = arith.mulf %693, %692 : vector<4x8xf32>
    %698 = arith.addf %696, %697 : vector<4x8xf32>
    %699 = math.tanh %698 : vector<4x8xf32>
    %700 = arith.mulf %695, %699 : vector<4x8xf32>
    %701 = tpu.concatenate %700, %659 in 1 : vector<4x8xf32>, vector<4x8xf32> -> vector<4x16xf32>
    %cst_87 = arith.constant dense<0.000000e+00> : vector<4x32xf32>
    %702 = tpu.matmul %701, %533, %cst_87 {dimension_numbers = #tpu.dot_dimension_numbers<[1], [0], [0], [1], [0, 0, 1, 1], [], []>} : vector<4x16xf32>, vector<16x32xf32>, vector<4x32xf32> -> vector<4x32xf32>
    %703 = vector.broadcast %537 : vector<1x32xf32> to vector<4x32xf32>
    %704 = arith.addf %702, %703 : vector<4x32xf32>
    %705 = vector.extract_strided_slice %704 {offsets = [0, 0], sizes = [4, 24], strides = [1, 1]} : vector<4x32xf32> to vector<4x24xf32>
    %706 = arith.negf %705 : vector<4x24xf32>
    %707 = math.exp %706 : vector<4x24xf32>
    %cst_88 = arith.constant 1.000000e+00 : f32
    %708 = vector.broadcast %cst_88 : f32 to vector<4x24xf32>
    %709 = arith.addf %708, %707 : vector<4x24xf32>
    %710 = arith.divf %708, %709 : vector<4x24xf32>
    %711 = vector.extract_strided_slice %704 {offsets = [0, 24], sizes = [4, 8], strides = [1, 1]} : vector<4x32xf32> to vector<4x8xf32>
    %712 = math.tanh %711 : vector<4x8xf32>
    %713 = vector.extract_strided_slice %710 {offsets = [0, 0], sizes = [4, 8], strides = [1, 1]} : vector<4x24xf32> to vector<4x8xf32>
    %714 = vector.extract_strided_slice %710 {offsets = [0, 8], sizes = [4, 8], strides = [1, 1]} : vector<4x24xf32> to vector<4x8xf32>
    %715 = vector.extract_strided_slice %710 {offsets = [0, 16], sizes = [4, 8], strides = [1, 1]} : vector<4x24xf32> to vector<4x8xf32>
    %716 = arith.mulf %714, %657 : vector<4x8xf32>
    %717 = arith.mulf %713, %712 : vector<4x8xf32>
    %718 = arith.addf %716, %717 : vector<4x8xf32>
    %719 = math.tanh %718 : vector<4x8xf32>
    %720 = arith.mulf %715, %719 : vector<4x8xf32>
    %721 = vector.extract_strided_slice %525 {offsets = [12, 0], sizes = [4, 32], strides = [1, 1]} : vector<32x32xf32> to vector<4x32xf32>
    %cst_89 = arith.constant dense<0.000000e+00> : vector<4x32xf32>
    %722 = tpu.matmul %680, %527, %cst_89 {dimension_numbers = #tpu.dot_dimension_numbers<[1], [0], [0], [1], [0, 0, 1, 1], [], []>} : vector<4x8xf32>, vector<8x32xf32>, vector<4x32xf32> -> vector<4x32xf32>
    %723 = arith.addf %721, %722 : vector<4x32xf32>
    %724 = vector.broadcast %529 : vector<1x32xf32> to vector<4x32xf32>
    %725 = arith.addf %723, %724 : vector<4x32xf32>
    %726 = vector.extract_strided_slice %725 {offsets = [0, 0], sizes = [4, 24], strides = [1, 1]} : vector<4x32xf32> to vector<4x24xf32>
    %727 = arith.negf %726 : vector<4x24xf32>
    %728 = math.exp %727 : vector<4x24xf32>
    %cst_90 = arith.constant 1.000000e+00 : f32
    %729 = vector.broadcast %cst_90 : f32 to vector<4x24xf32>
    %730 = arith.addf %729, %728 : vector<4x24xf32>
    %731 = arith.divf %729, %730 : vector<4x24xf32>
    %732 = vector.extract_strided_slice %725 {offsets = [0, 24], sizes = [4, 8], strides = [1, 1]} : vector<4x32xf32> to vector<4x8xf32>
    %733 = math.tanh %732 : vector<4x8xf32>
    %734 = vector.extract_strided_slice %731 {offsets = [0, 0], sizes = [4, 8], strides = [1, 1]} : vector<4x24xf32> to vector<4x8xf32>
    %735 = vector.extract_strided_slice %731 {offsets = [0, 8], sizes = [4, 8], strides = [1, 1]} : vector<4x24xf32> to vector<4x8xf32>
    %736 = vector.extract_strided_slice %731 {offsets = [0, 16], sizes = [4, 8], strides = [1, 1]} : vector<4x24xf32> to vector<4x8xf32>
    %737 = arith.mulf %735, %678 : vector<4x8xf32>
    %738 = arith.mulf %734, %733 : vector<4x8xf32>
    %739 = arith.addf %737, %738 : vector<4x8xf32>
    %740 = math.tanh %739 : vector<4x8xf32>
    %741 = arith.mulf %736, %740 : vector<4x8xf32>
    %742 = tpu.concatenate %741, %700 in 1 : vector<4x8xf32>, vector<4x8xf32> -> vector<4x16xf32>
    %cst_91 = arith.constant dense<0.000000e+00> : vector<4x32xf32>
    %743 = tpu.matmul %742, %531, %cst_91 {dimension_numbers = #tpu.dot_dimension_numbers<[1], [0], [0], [1], [0, 0, 1, 1], [], []>} : vector<4x16xf32>, vector<16x32xf32>, vector<4x32xf32> -> vector<4x32xf32>
    %744 = vector.broadcast %535 : vector<1x32xf32> to vector<4x32xf32>
    %745 = arith.addf %743, %744 : vector<4x32xf32>
    %746 = vector.extract_strided_slice %745 {offsets = [0, 0], sizes = [4, 24], strides = [1, 1]} : vector<4x32xf32> to vector<4x24xf32>
    %747 = arith.negf %746 : vector<4x24xf32>
    %748 = math.exp %747 : vector<4x24xf32>
    %cst_92 = arith.constant 1.000000e+00 : f32
    %749 = vector.broadcast %cst_92 : f32 to vector<4x24xf32>
    %750 = arith.addf %749, %748 : vector<4x24xf32>
    %751 = arith.divf %749, %750 : vector<4x24xf32>
    %752 = vector.extract_strided_slice %745 {offsets = [0, 24], sizes = [4, 8], strides = [1, 1]} : vector<4x32xf32> to vector<4x8xf32>
    %753 = math.tanh %752 : vector<4x8xf32>
    %754 = vector.extract_strided_slice %751 {offsets = [0, 0], sizes = [4, 8], strides = [1, 1]} : vector<4x24xf32> to vector<4x8xf32>
    %755 = vector.extract_strided_slice %751 {offsets = [0, 8], sizes = [4, 8], strides = [1, 1]} : vector<4x24xf32> to vector<4x8xf32>
    %756 = vector.extract_strided_slice %751 {offsets = [0, 16], sizes = [4, 8], strides = [1, 1]} : vector<4x24xf32> to vector<4x8xf32>
    %757 = arith.mulf %755, %698 : vector<4x8xf32>
    %758 = arith.mulf %754, %753 : vector<4x8xf32>
    %759 = arith.addf %757, %758 : vector<4x8xf32>
    %760 = math.tanh %759 : vector<4x8xf32>
    %761 = arith.mulf %756, %760 : vector<4x8xf32>
    %762 = tpu.concatenate %761, %720 in 1 : vector<4x8xf32>, vector<4x8xf32> -> vector<4x16xf32>
    %cst_93 = arith.constant dense<0.000000e+00> : vector<4x32xf32>
    %763 = tpu.matmul %762, %533, %cst_93 {dimension_numbers = #tpu.dot_dimension_numbers<[1], [0], [0], [1], [0, 0, 1, 1], [], []>} : vector<4x16xf32>, vector<16x32xf32>, vector<4x32xf32> -> vector<4x32xf32>
    %764 = vector.broadcast %537 : vector<1x32xf32> to vector<4x32xf32>
    %765 = arith.addf %763, %764 : vector<4x32xf32>
    %766 = vector.extract_strided_slice %765 {offsets = [0, 0], sizes = [4, 24], strides = [1, 1]} : vector<4x32xf32> to vector<4x24xf32>
    %767 = arith.negf %766 : vector<4x24xf32>
    %768 = math.exp %767 : vector<4x24xf32>
    %cst_94 = arith.constant 1.000000e+00 : f32
    %769 = vector.broadcast %cst_94 : f32 to vector<4x24xf32>
    %770 = arith.addf %769, %768 : vector<4x24xf32>
    %771 = arith.divf %769, %770 : vector<4x24xf32>
    %772 = vector.extract_strided_slice %765 {offsets = [0, 24], sizes = [4, 8], strides = [1, 1]} : vector<4x32xf32> to vector<4x8xf32>
    %773 = math.tanh %772 : vector<4x8xf32>
    %774 = vector.extract_strided_slice %771 {offsets = [0, 0], sizes = [4, 8], strides = [1, 1]} : vector<4x24xf32> to vector<4x8xf32>
    %775 = vector.extract_strided_slice %771 {offsets = [0, 8], sizes = [4, 8], strides = [1, 1]} : vector<4x24xf32> to vector<4x8xf32>
    %776 = vector.extract_strided_slice %771 {offsets = [0, 16], sizes = [4, 8], strides = [1, 1]} : vector<4x24xf32> to vector<4x8xf32>
    %777 = arith.mulf %775, %718 : vector<4x8xf32>
    %778 = arith.mulf %774, %773 : vector<4x8xf32>
    %779 = arith.addf %777, %778 : vector<4x8xf32>
    %780 = math.tanh %779 : vector<4x8xf32>
    %781 = arith.mulf %776, %780 : vector<4x8xf32>
    %782 = vector.extract_strided_slice %525 {offsets = [16, 0], sizes = [4, 32], strides = [1, 1]} : vector<32x32xf32> to vector<4x32xf32>
    %cst_95 = arith.constant dense<0.000000e+00> : vector<4x32xf32>
    %783 = tpu.matmul %741, %527, %cst_95 {dimension_numbers = #tpu.dot_dimension_numbers<[1], [0], [0], [1], [0, 0, 1, 1], [], []>} : vector<4x8xf32>, vector<8x32xf32>, vector<4x32xf32> -> vector<4x32xf32>
    %784 = arith.addf %782, %783 : vector<4x32xf32>
    %785 = vector.broadcast %529 : vector<1x32xf32> to vector<4x32xf32>
    %786 = arith.addf %784, %785 : vector<4x32xf32>
    %787 = vector.extract_strided_slice %786 {offsets = [0, 0], sizes = [4, 24], strides = [1, 1]} : vector<4x32xf32> to vector<4x24xf32>
    %788 = arith.negf %787 : vector<4x24xf32>
    %789 = math.exp %788 : vector<4x24xf32>
    %cst_96 = arith.constant 1.000000e+00 : f32
    %790 = vector.broadcast %cst_96 : f32 to vector<4x24xf32>
    %791 = arith.addf %790, %789 : vector<4x24xf32>
    %792 = arith.divf %790, %791 : vector<4x24xf32>
    %793 = vector.extract_strided_slice %786 {offsets = [0, 24], sizes = [4, 8], strides = [1, 1]} : vector<4x32xf32> to vector<4x8xf32>
    %794 = math.tanh %793 : vector<4x8xf32>
    %795 = vector.extract_strided_slice %792 {offsets = [0, 0], sizes = [4, 8], strides = [1, 1]} : vector<4x24xf32> to vector<4x8xf32>
    %796 = vector.extract_strided_slice %792 {offsets = [0, 8], sizes = [4, 8], strides = [1, 1]} : vector<4x24xf32> to vector<4x8xf32>
    %797 = vector.extract_strided_slice %792 {offsets = [0, 16], sizes = [4, 8], strides = [1, 1]} : vector<4x24xf32> to vector<4x8xf32>
    %798 = arith.mulf %796, %739 : vector<4x8xf32>
    %799 = arith.mulf %795, %794 : vector<4x8xf32>
    %800 = arith.addf %798, %799 : vector<4x8xf32>
    %801 = math.tanh %800 : vector<4x8xf32>
    %802 = arith.mulf %797, %801 : vector<4x8xf32>
    %803 = tpu.concatenate %802, %761 in 1 : vector<4x8xf32>, vector<4x8xf32> -> vector<4x16xf32>
    %cst_97 = arith.constant dense<0.000000e+00> : vector<4x32xf32>
    %804 = tpu.matmul %803, %531, %cst_97 {dimension_numbers = #tpu.dot_dimension_numbers<[1], [0], [0], [1], [0, 0, 1, 1], [], []>} : vector<4x16xf32>, vector<16x32xf32>, vector<4x32xf32> -> vector<4x32xf32>
    %805 = vector.broadcast %535 : vector<1x32xf32> to vector<4x32xf32>
    %806 = arith.addf %804, %805 : vector<4x32xf32>
    %807 = vector.extract_strided_slice %806 {offsets = [0, 0], sizes = [4, 24], strides = [1, 1]} : vector<4x32xf32> to vector<4x24xf32>
    %808 = arith.negf %807 : vector<4x24xf32>
    %809 = math.exp %808 : vector<4x24xf32>
    %cst_98 = arith.constant 1.000000e+00 : f32
    %810 = vector.broadcast %cst_98 : f32 to vector<4x24xf32>
    %811 = arith.addf %810, %809 : vector<4x24xf32>
    %812 = arith.divf %810, %811 : vector<4x24xf32>
    %813 = vector.extract_strided_slice %806 {offsets = [0, 24], sizes = [4, 8], strides = [1, 1]} : vector<4x32xf32> to vector<4x8xf32>
    %814 = math.tanh %813 : vector<4x8xf32>
    %815 = vector.extract_strided_slice %812 {offsets = [0, 0], sizes = [4, 8], strides = [1, 1]} : vector<4x24xf32> to vector<4x8xf32>
    %816 = vector.extract_strided_slice %812 {offsets = [0, 8], sizes = [4, 8], strides = [1, 1]} : vector<4x24xf32> to vector<4x8xf32>
    %817 = vector.extract_strided_slice %812 {offsets = [0, 16], sizes = [4, 8], strides = [1, 1]} : vector<4x24xf32> to vector<4x8xf32>
    %818 = arith.mulf %816, %759 : vector<4x8xf32>
    %819 = arith.mulf %815, %814 : vector<4x8xf32>
    %820 = arith.addf %818, %819 : vector<4x8xf32>
    %821 = math.tanh %820 : vector<4x8xf32>
    %822 = arith.mulf %817, %821 : vector<4x8xf32>
    %823 = tpu.concatenate %822, %781 in 1 : vector<4x8xf32>, vector<4x8xf32> -> vector<4x16xf32>
    %cst_99 = arith.constant dense<0.000000e+00> : vector<4x32xf32>
    %824 = tpu.matmul %823, %533, %cst_99 {dimension_numbers = #tpu.dot_dimension_numbers<[1], [0], [0], [1], [0, 0, 1, 1], [], []>} : vector<4x16xf32>, vector<16x32xf32>, vector<4x32xf32> -> vector<4x32xf32>
    %825 = vector.broadcast %537 : vector<1x32xf32> to vector<4x32xf32>
    %826 = arith.addf %824, %825 : vector<4x32xf32>
    %827 = vector.extract_strided_slice %826 {offsets = [0, 0], sizes = [4, 24], strides = [1, 1]} : vector<4x32xf32> to vector<4x24xf32>
    %828 = arith.negf %827 : vector<4x24xf32>
    %829 = math.exp %828 : vector<4x24xf32>
    %cst_100 = arith.constant 1.000000e+00 : f32
    %830 = vector.broadcast %cst_100 : f32 to vector<4x24xf32>
    %831 = arith.addf %830, %829 : vector<4x24xf32>
    %832 = arith.divf %830, %831 : vector<4x24xf32>
    %833 = vector.extract_strided_slice %826 {offsets = [0, 24], sizes = [4, 8], strides = [1, 1]} : vector<4x32xf32> to vector<4x8xf32>
    %834 = math.tanh %833 : vector<4x8xf32>
    %835 = vector.extract_strided_slice %832 {offsets = [0, 0], sizes = [4, 8], strides = [1, 1]} : vector<4x24xf32> to vector<4x8xf32>
    %836 = vector.extract_strided_slice %832 {offsets = [0, 8], sizes = [4, 8], strides = [1, 1]} : vector<4x24xf32> to vector<4x8xf32>
    %837 = vector.extract_strided_slice %832 {offsets = [0, 16], sizes = [4, 8], strides = [1, 1]} : vector<4x24xf32> to vector<4x8xf32>
    %838 = arith.mulf %836, %779 : vector<4x8xf32>
    %839 = arith.mulf %835, %834 : vector<4x8xf32>
    %840 = arith.addf %838, %839 : vector<4x8xf32>
    %841 = math.tanh %840 : vector<4x8xf32>
    %842 = arith.mulf %837, %841 : vector<4x8xf32>
    %843 = vector.extract_strided_slice %525 {offsets = [20, 0], sizes = [4, 32], strides = [1, 1]} : vector<32x32xf32> to vector<4x32xf32>
    %cst_101 = arith.constant dense<0.000000e+00> : vector<4x32xf32>
    %844 = tpu.matmul %802, %527, %cst_101 {dimension_numbers = #tpu.dot_dimension_numbers<[1], [0], [0], [1], [0, 0, 1, 1], [], []>} : vector<4x8xf32>, vector<8x32xf32>, vector<4x32xf32> -> vector<4x32xf32>
    %845 = arith.addf %843, %844 : vector<4x32xf32>
    %846 = vector.broadcast %529 : vector<1x32xf32> to vector<4x32xf32>
    %847 = arith.addf %845, %846 : vector<4x32xf32>
    %848 = vector.extract_strided_slice %847 {offsets = [0, 0], sizes = [4, 24], strides = [1, 1]} : vector<4x32xf32> to vector<4x24xf32>
    %849 = arith.negf %848 : vector<4x24xf32>
    %850 = math.exp %849 : vector<4x24xf32>
    %cst_102 = arith.constant 1.000000e+00 : f32
    %851 = vector.broadcast %cst_102 : f32 to vector<4x24xf32>
    %852 = arith.addf %851, %850 : vector<4x24xf32>
    %853 = arith.divf %851, %852 : vector<4x24xf32>
    %854 = vector.extract_strided_slice %847 {offsets = [0, 24], sizes = [4, 8], strides = [1, 1]} : vector<4x32xf32> to vector<4x8xf32>
    %855 = math.tanh %854 : vector<4x8xf32>
    %856 = vector.extract_strided_slice %853 {offsets = [0, 0], sizes = [4, 8], strides = [1, 1]} : vector<4x24xf32> to vector<4x8xf32>
    %857 = vector.extract_strided_slice %853 {offsets = [0, 8], sizes = [4, 8], strides = [1, 1]} : vector<4x24xf32> to vector<4x8xf32>
    %858 = vector.extract_strided_slice %853 {offsets = [0, 16], sizes = [4, 8], strides = [1, 1]} : vector<4x24xf32> to vector<4x8xf32>
    %859 = arith.mulf %857, %800 : vector<4x8xf32>
    %860 = arith.mulf %856, %855 : vector<4x8xf32>
    %861 = arith.addf %859, %860 : vector<4x8xf32>
    %862 = math.tanh %861 : vector<4x8xf32>
    %863 = arith.mulf %858, %862 : vector<4x8xf32>
    %864 = tpu.concatenate %863, %822 in 1 : vector<4x8xf32>, vector<4x8xf32> -> vector<4x16xf32>
    %cst_103 = arith.constant dense<0.000000e+00> : vector<4x32xf32>
    %865 = tpu.matmul %864, %531, %cst_103 {dimension_numbers = #tpu.dot_dimension_numbers<[1], [0], [0], [1], [0, 0, 1, 1], [], []>} : vector<4x16xf32>, vector<16x32xf32>, vector<4x32xf32> -> vector<4x32xf32>
    %866 = vector.broadcast %535 : vector<1x32xf32> to vector<4x32xf32>
    %867 = arith.addf %865, %866 : vector<4x32xf32>
    %868 = vector.extract_strided_slice %867 {offsets = [0, 0], sizes = [4, 24], strides = [1, 1]} : vector<4x32xf32> to vector<4x24xf32>
    %869 = arith.negf %868 : vector<4x24xf32>
    %870 = math.exp %869 : vector<4x24xf32>
    %cst_104 = arith.constant 1.000000e+00 : f32
    %871 = vector.broadcast %cst_104 : f32 to vector<4x24xf32>
    %872 = arith.addf %871, %870 : vector<4x24xf32>
    %873 = arith.divf %871, %872 : vector<4x24xf32>
    %874 = vector.extract_strided_slice %867 {offsets = [0, 24], sizes = [4, 8], strides = [1, 1]} : vector<4x32xf32> to vector<4x8xf32>
    %875 = math.tanh %874 : vector<4x8xf32>
    %876 = vector.extract_strided_slice %873 {offsets = [0, 0], sizes = [4, 8], strides = [1, 1]} : vector<4x24xf32> to vector<4x8xf32>
    %877 = vector.extract_strided_slice %873 {offsets = [0, 8], sizes = [4, 8], strides = [1, 1]} : vector<4x24xf32> to vector<4x8xf32>
    %878 = vector.extract_strided_slice %873 {offsets = [0, 16], sizes = [4, 8], strides = [1, 1]} : vector<4x24xf32> to vector<4x8xf32>
    %879 = arith.mulf %877, %820 : vector<4x8xf32>
    %880 = arith.mulf %876, %875 : vector<4x8xf32>
    %881 = arith.addf %879, %880 : vector<4x8xf32>
    %882 = math.tanh %881 : vector<4x8xf32>
    %883 = arith.mulf %878, %882 : vector<4x8xf32>
    %884 = tpu.concatenate %883, %842 in 1 : vector<4x8xf32>, vector<4x8xf32> -> vector<4x16xf32>
    %cst_105 = arith.constant dense<0.000000e+00> : vector<4x32xf32>
    %885 = tpu.matmul %884, %533, %cst_105 {dimension_numbers = #tpu.dot_dimension_numbers<[1], [0], [0], [1], [0, 0, 1, 1], [], []>} : vector<4x16xf32>, vector<16x32xf32>, vector<4x32xf32> -> vector<4x32xf32>
    %886 = vector.broadcast %537 : vector<1x32xf32> to vector<4x32xf32>
    %887 = arith.addf %885, %886 : vector<4x32xf32>
    %888 = vector.extract_strided_slice %887 {offsets = [0, 0], sizes = [4, 24], strides = [1, 1]} : vector<4x32xf32> to vector<4x24xf32>
    %889 = arith.negf %888 : vector<4x24xf32>
    %890 = math.exp %889 : vector<4x24xf32>
    %cst_106 = arith.constant 1.000000e+00 : f32
    %891 = vector.broadcast %cst_106 : f32 to vector<4x24xf32>
    %892 = arith.addf %891, %890 : vector<4x24xf32>
    %893 = arith.divf %891, %892 : vector<4x24xf32>
    %894 = vector.extract_strided_slice %887 {offsets = [0, 24], sizes = [4, 8], strides = [1, 1]} : vector<4x32xf32> to vector<4x8xf32>
    %895 = math.tanh %894 : vector<4x8xf32>
    %896 = vector.extract_strided_slice %893 {offsets = [0, 0], sizes = [4, 8], strides = [1, 1]} : vector<4x24xf32> to vector<4x8xf32>
    %897 = vector.extract_strided_slice %893 {offsets = [0, 8], sizes = [4, 8], strides = [1, 1]} : vector<4x24xf32> to vector<4x8xf32>
    %898 = vector.extract_strided_slice %893 {offsets = [0, 16], sizes = [4, 8], strides = [1, 1]} : vector<4x24xf32> to vector<4x8xf32>
    %899 = arith.mulf %897, %840 : vector<4x8xf32>
    %900 = arith.mulf %896, %895 : vector<4x8xf32>
    %901 = arith.addf %899, %900 : vector<4x8xf32>
    %902 = math.tanh %901 : vector<4x8xf32>
    %903 = arith.mulf %898, %902 : vector<4x8xf32>
    %904 = vector.extract_strided_slice %525 {offsets = [24, 0], sizes = [4, 32], strides = [1, 1]} : vector<32x32xf32> to vector<4x32xf32>
    %cst_107 = arith.constant dense<0.000000e+00> : vector<4x32xf32>
    %905 = tpu.matmul %863, %527, %cst_107 {dimension_numbers = #tpu.dot_dimension_numbers<[1], [0], [0], [1], [0, 0, 1, 1], [], []>} : vector<4x8xf32>, vector<8x32xf32>, vector<4x32xf32> -> vector<4x32xf32>
    %906 = arith.addf %904, %905 : vector<4x32xf32>
    %907 = vector.broadcast %529 : vector<1x32xf32> to vector<4x32xf32>
    %908 = arith.addf %906, %907 : vector<4x32xf32>
    %909 = vector.extract_strided_slice %908 {offsets = [0, 0], sizes = [4, 24], strides = [1, 1]} : vector<4x32xf32> to vector<4x24xf32>
    %910 = arith.negf %909 : vector<4x24xf32>
    %911 = math.exp %910 : vector<4x24xf32>
    %cst_108 = arith.constant 1.000000e+00 : f32
    %912 = vector.broadcast %cst_108 : f32 to vector<4x24xf32>
    %913 = arith.addf %912, %911 : vector<4x24xf32>
    %914 = arith.divf %912, %913 : vector<4x24xf32>
    %915 = vector.extract_strided_slice %908 {offsets = [0, 24], sizes = [4, 8], strides = [1, 1]} : vector<4x32xf32> to vector<4x8xf32>
    %916 = math.tanh %915 : vector<4x8xf32>
    %917 = vector.extract_strided_slice %914 {offsets = [0, 0], sizes = [4, 8], strides = [1, 1]} : vector<4x24xf32> to vector<4x8xf32>
    %918 = vector.extract_strided_slice %914 {offsets = [0, 8], sizes = [4, 8], strides = [1, 1]} : vector<4x24xf32> to vector<4x8xf32>
    %919 = vector.extract_strided_slice %914 {offsets = [0, 16], sizes = [4, 8], strides = [1, 1]} : vector<4x24xf32> to vector<4x8xf32>
    %920 = arith.mulf %918, %861 : vector<4x8xf32>
    %921 = arith.mulf %917, %916 : vector<4x8xf32>
    %922 = arith.addf %920, %921 : vector<4x8xf32>
    %923 = math.tanh %922 : vector<4x8xf32>
    %924 = arith.mulf %919, %923 : vector<4x8xf32>
    %925 = tpu.concatenate %924, %883 in 1 : vector<4x8xf32>, vector<4x8xf32> -> vector<4x16xf32>
    %cst_109 = arith.constant dense<0.000000e+00> : vector<4x32xf32>
    %926 = tpu.matmul %925, %531, %cst_109 {dimension_numbers = #tpu.dot_dimension_numbers<[1], [0], [0], [1], [0, 0, 1, 1], [], []>} : vector<4x16xf32>, vector<16x32xf32>, vector<4x32xf32> -> vector<4x32xf32>
    %927 = vector.broadcast %535 : vector<1x32xf32> to vector<4x32xf32>
    %928 = arith.addf %926, %927 : vector<4x32xf32>
    %929 = vector.extract_strided_slice %928 {offsets = [0, 0], sizes = [4, 24], strides = [1, 1]} : vector<4x32xf32> to vector<4x24xf32>
    %930 = arith.negf %929 : vector<4x24xf32>
    %931 = math.exp %930 : vector<4x24xf32>
    %cst_110 = arith.constant 1.000000e+00 : f32
    %932 = vector.broadcast %cst_110 : f32 to vector<4x24xf32>
    %933 = arith.addf %932, %931 : vector<4x24xf32>
    %934 = arith.divf %932, %933 : vector<4x24xf32>
    %935 = vector.extract_strided_slice %928 {offsets = [0, 24], sizes = [4, 8], strides = [1, 1]} : vector<4x32xf32> to vector<4x8xf32>
    %936 = math.tanh %935 : vector<4x8xf32>
    %937 = vector.extract_strided_slice %934 {offsets = [0, 0], sizes = [4, 8], strides = [1, 1]} : vector<4x24xf32> to vector<4x8xf32>
    %938 = vector.extract_strided_slice %934 {offsets = [0, 8], sizes = [4, 8], strides = [1, 1]} : vector<4x24xf32> to vector<4x8xf32>
    %939 = vector.extract_strided_slice %934 {offsets = [0, 16], sizes = [4, 8], strides = [1, 1]} : vector<4x24xf32> to vector<4x8xf32>
    %940 = arith.mulf %938, %881 : vector<4x8xf32>
    %941 = arith.mulf %937, %936 : vector<4x8xf32>
    %942 = arith.addf %940, %941 : vector<4x8xf32>
    %943 = math.tanh %942 : vector<4x8xf32>
    %944 = arith.mulf %939, %943 : vector<4x8xf32>
    %945 = tpu.concatenate %944, %903 in 1 : vector<4x8xf32>, vector<4x8xf32> -> vector<4x16xf32>
    %cst_111 = arith.constant dense<0.000000e+00> : vector<4x32xf32>
    %946 = tpu.matmul %945, %533, %cst_111 {dimension_numbers = #tpu.dot_dimension_numbers<[1], [0], [0], [1], [0, 0, 1, 1], [], []>} : vector<4x16xf32>, vector<16x32xf32>, vector<4x32xf32> -> vector<4x32xf32>
    %947 = vector.broadcast %537 : vector<1x32xf32> to vector<4x32xf32>
    %948 = arith.addf %946, %947 : vector<4x32xf32>
    %949 = vector.extract_strided_slice %948 {offsets = [0, 0], sizes = [4, 24], strides = [1, 1]} : vector<4x32xf32> to vector<4x24xf32>
    %950 = arith.negf %949 : vector<4x24xf32>
    %951 = math.exp %950 : vector<4x24xf32>
    %cst_112 = arith.constant 1.000000e+00 : f32
    %952 = vector.broadcast %cst_112 : f32 to vector<4x24xf32>
    %953 = arith.addf %952, %951 : vector<4x24xf32>
    %954 = arith.divf %952, %953 : vector<4x24xf32>
    %955 = vector.extract_strided_slice %948 {offsets = [0, 24], sizes = [4, 8], strides = [1, 1]} : vector<4x32xf32> to vector<4x8xf32>
    %956 = math.tanh %955 : vector<4x8xf32>
    %957 = vector.extract_strided_slice %954 {offsets = [0, 0], sizes = [4, 8], strides = [1, 1]} : vector<4x24xf32> to vector<4x8xf32>
    %958 = vector.extract_strided_slice %954 {offsets = [0, 8], sizes = [4, 8], strides = [1, 1]} : vector<4x24xf32> to vector<4x8xf32>
    %959 = vector.extract_strided_slice %954 {offsets = [0, 16], sizes = [4, 8], strides = [1, 1]} : vector<4x24xf32> to vector<4x8xf32>
    %960 = arith.mulf %958, %901 : vector<4x8xf32>
    %961 = arith.mulf %957, %956 : vector<4x8xf32>
    %962 = arith.addf %960, %961 : vector<4x8xf32>
    %963 = math.tanh %962 : vector<4x8xf32>
    %964 = arith.mulf %959, %963 : vector<4x8xf32>
    %965 = vector.extract_strided_slice %525 {offsets = [28, 0], sizes = [4, 32], strides = [1, 1]} : vector<32x32xf32> to vector<4x32xf32>
    %cst_113 = arith.constant dense<0.000000e+00> : vector<4x32xf32>
    %966 = tpu.matmul %924, %527, %cst_113 {dimension_numbers = #tpu.dot_dimension_numbers<[1], [0], [0], [1], [0, 0, 1, 1], [], []>} : vector<4x8xf32>, vector<8x32xf32>, vector<4x32xf32> -> vector<4x32xf32>
    %967 = arith.addf %965, %966 : vector<4x32xf32>
    %968 = vector.broadcast %529 : vector<1x32xf32> to vector<4x32xf32>
    %969 = arith.addf %967, %968 : vector<4x32xf32>
    %970 = vector.extract_strided_slice %969 {offsets = [0, 0], sizes = [4, 24], strides = [1, 1]} : vector<4x32xf32> to vector<4x24xf32>
    %971 = arith.negf %970 : vector<4x24xf32>
    %972 = math.exp %971 : vector<4x24xf32>
    %cst_114 = arith.constant 1.000000e+00 : f32
    %973 = vector.broadcast %cst_114 : f32 to vector<4x24xf32>
    %974 = arith.addf %973, %972 : vector<4x24xf32>
    %975 = arith.divf %973, %974 : vector<4x24xf32>
    %976 = vector.extract_strided_slice %969 {offsets = [0, 24], sizes = [4, 8], strides = [1, 1]} : vector<4x32xf32> to vector<4x8xf32>
    %977 = math.tanh %976 : vector<4x8xf32>
    %978 = vector.extract_strided_slice %975 {offsets = [0, 0], sizes = [4, 8], strides = [1, 1]} : vector<4x24xf32> to vector<4x8xf32>
    %979 = vector.extract_strided_slice %975 {offsets = [0, 8], sizes = [4, 8], strides = [1, 1]} : vector<4x24xf32> to vector<4x8xf32>
    %980 = vector.extract_strided_slice %975 {offsets = [0, 16], sizes = [4, 8], strides = [1, 1]} : vector<4x24xf32> to vector<4x8xf32>
    %981 = arith.mulf %979, %922 : vector<4x8xf32>
    %982 = arith.mulf %978, %977 : vector<4x8xf32>
    %983 = arith.addf %981, %982 : vector<4x8xf32>
    %984 = math.tanh %983 : vector<4x8xf32>
    %985 = arith.mulf %980, %984 : vector<4x8xf32>
    %986 = tpu.concatenate %985, %944 in 1 : vector<4x8xf32>, vector<4x8xf32> -> vector<4x16xf32>
    %cst_115 = arith.constant dense<0.000000e+00> : vector<4x32xf32>
    %987 = tpu.matmul %986, %531, %cst_115 {dimension_numbers = #tpu.dot_dimension_numbers<[1], [0], [0], [1], [0, 0, 1, 1], [], []>} : vector<4x16xf32>, vector<16x32xf32>, vector<4x32xf32> -> vector<4x32xf32>
    %988 = vector.broadcast %535 : vector<1x32xf32> to vector<4x32xf32>
    %989 = arith.addf %987, %988 : vector<4x32xf32>
    %990 = vector.extract_strided_slice %989 {offsets = [0, 0], sizes = [4, 24], strides = [1, 1]} : vector<4x32xf32> to vector<4x24xf32>
    %991 = arith.negf %990 : vector<4x24xf32>
    %992 = math.exp %991 : vector<4x24xf32>
    %cst_116 = arith.constant 1.000000e+00 : f32
    %993 = vector.broadcast %cst_116 : f32 to vector<4x24xf32>
    %994 = arith.addf %993, %992 : vector<4x24xf32>
    %995 = arith.divf %993, %994 : vector<4x24xf32>
    %996 = vector.extract_strided_slice %989 {offsets = [0, 24], sizes = [4, 8], strides = [1, 1]} : vector<4x32xf32> to vector<4x8xf32>
    %997 = math.tanh %996 : vector<4x8xf32>
    %998 = vector.extract_strided_slice %995 {offsets = [0, 0], sizes = [4, 8], strides = [1, 1]} : vector<4x24xf32> to vector<4x8xf32>
    %999 = vector.extract_strided_slice %995 {offsets = [0, 8], sizes = [4, 8], strides = [1, 1]} : vector<4x24xf32> to vector<4x8xf32>
    %1000 = vector.extract_strided_slice %995 {offsets = [0, 16], sizes = [4, 8], strides = [1, 1]} : vector<4x24xf32> to vector<4x8xf32>
    %1001 = arith.mulf %999, %942 : vector<4x8xf32>
    %1002 = arith.mulf %998, %997 : vector<4x8xf32>
    %1003 = arith.addf %1001, %1002 : vector<4x8xf32>
    %1004 = math.tanh %1003 : vector<4x8xf32>
    %1005 = arith.mulf %1000, %1004 : vector<4x8xf32>
    %1006 = tpu.concatenate %1005, %964 in 1 : vector<4x8xf32>, vector<4x8xf32> -> vector<4x16xf32>
    %cst_117 = arith.constant dense<0.000000e+00> : vector<4x32xf32>
    %1007 = tpu.matmul %1006, %533, %cst_117 {dimension_numbers = #tpu.dot_dimension_numbers<[1], [0], [0], [1], [0, 0, 1, 1], [], []>} : vector<4x16xf32>, vector<16x32xf32>, vector<4x32xf32> -> vector<4x32xf32>
    %1008 = vector.broadcast %537 : vector<1x32xf32> to vector<4x32xf32>
    %1009 = arith.addf %1007, %1008 : vector<4x32xf32>
    %1010 = vector.extract_strided_slice %1009 {offsets = [0, 0], sizes = [4, 24], strides = [1, 1]} : vector<4x32xf32> to vector<4x24xf32>
    %1011 = arith.negf %1010 : vector<4x24xf32>
    %1012 = math.exp %1011 : vector<4x24xf32>
    %cst_118 = arith.constant 1.000000e+00 : f32
    %1013 = vector.broadcast %cst_118 : f32 to vector<4x24xf32>
    %1014 = arith.addf %1013, %1012 : vector<4x24xf32>
    %1015 = arith.divf %1013, %1014 : vector<4x24xf32>
    %1016 = vector.extract_strided_slice %1009 {offsets = [0, 24], sizes = [4, 8], strides = [1, 1]} : vector<4x32xf32> to vector<4x8xf32>
    %1017 = math.tanh %1016 : vector<4x8xf32>
    %1018 = vector.extract_strided_slice %1015 {offsets = [0, 0], sizes = [4, 8], strides = [1, 1]} : vector<4x24xf32> to vector<4x8xf32>
    %1019 = vector.extract_strided_slice %1015 {offsets = [0, 8], sizes = [4, 8], strides = [1, 1]} : vector<4x24xf32> to vector<4x8xf32>
    %1020 = vector.extract_strided_slice %1015 {offsets = [0, 16], sizes = [4, 8], strides = [1, 1]} : vector<4x24xf32> to vector<4x8xf32>
    %1021 = arith.mulf %1019, %962 : vector<4x8xf32>
    %1022 = arith.mulf %1018, %1017 : vector<4x8xf32>
    %1023 = arith.addf %1021, %1022 : vector<4x8xf32>
    %1024 = math.tanh %1023 : vector<4x8xf32>
    %1025 = arith.mulf %1020, %1024 : vector<4x8xf32>
    %cst_119 = arith.constant dense<0.000000e+00> : vector<4x2xf32>
    %1026 = tpu.matmul %1025, %6, %cst_119 {dimension_numbers = #tpu.dot_dimension_numbers<[1], [0], [0], [1], [0, 0, 1, 1], [], []>} : vector<4x8xf32>, vector<8x2xf32>, vector<4x2xf32> -> vector<4x2xf32>
    %1027 = vector.broadcast %7 : vector<1x2xf32> to vector<4x2xf32>
    %1028 = arith.addf %1026, %1027 : vector<4x2xf32>
    %c0_120 = arith.constant 0 : index
    %c0_121 = arith.constant 0 : index
    %1029 = vector.load %arg8[%c0_120, %c0_121] : memref<4x2xf32, #tpu.memory_space<vmem>>, vector<4x2xf32>
    tpu.vector_store %arg8[%c0_120, %c0_121], %1028 {strides = array<i32>} : memref<4x2xf32, #tpu.memory_space<vmem>>, vector<4x2xf32>,
    return
  }
}

</mosaic_0001>

<llo_original>
// kernel: tpu_custom_call.1
$region0: #{tpu_custom_call.1}
  #allocation0 [shape = 'u32[]', space=smem, size = 0x4, offset = 0x4, fixed_abs, tag = 'smem constant byte address 0x4 - core index']
  #allocation1 [shape = 'u32[144,128]{1,0:T(1,128)}', space=vmem, size = 0x12000, scoped, tag = 'internal scratch']
  %s0 = inlined_call_operand.vmem [shape: f32[32,4], index: 0, kind: input, shape index: {}]
  %s1 = inlined_call_operand.vmem [shape: f32[3,4,8], index: 1, kind: input, shape index: {}]
  %s2 = inlined_call_operand.vmem [shape: f32[3,4,8], index: 2, kind: input, shape index: {}]
  %s3 = inlined_call_operand.vmem [shape: f32[2,4,32], index: 3, kind: input, shape index: {}]
  %s4 = inlined_call_operand.hbm [shape: f32[2,3,16,32], index: 4, kind: input, shape index: {}]
  %s5 = inlined_call_operand.vmem [shape: f32[2,3,1,32], index: 5, kind: input, shape index: {}]
  %s6 = inlined_call_operand.vmem [shape: f32[8,2], index: 6, kind: input, shape index: {}]
  %s7 = inlined_call_operand.vmem [shape: f32[1,2], index: 7, kind: input, shape index: {}]
  %s8 = inlined_call_operand.vmem [shape: f32[4,2], index: 8, kind: output, shape index: {}]
  %s9 = sld [smem:[#allocation0]]
  $region46: #{tpu_custom_call.1} parent=0
    _
  %s11 = ssub.s32 1, %s9
  %s12 = scalar_select 0, %s11, %s9
  $region1: #{tpu_custom_call.1} parent=0
    #allocation2 [shape = 'u8[49152]{0}', space=vmem, size = 0xc000, scoped, tag = 'input window, operand 4, single buffered']
    #allocation3 [shape = 's32[1]{0}', space=sflag, size = 0x4, scoped, tag = 'scoped memory for tpu_custom_call.1']
    %13 = vsyncpa [#allocation3], 0
    // Predicated region
    $region2: #{tpu_custom_call.1} parent=1 // pred_check
      _
    $region3: #{tpu_custom_call.1} parent=1 // pred_check_branch
      %15 = sbr.rel (0) target = $region5
    $region4: #{tpu_custom_call.1} parent=1 // pred_region
      _
    $region5: #{tpu_custom_call.1} parent=1 // pred_fallthru
      _
    // Predicated region
    $region6: #{tpu_custom_call.1} parent=1 // pred_check
      _
    $region7: #{tpu_custom_call.1} parent=1 // pred_check_branch
      %17 = sbr.rel (0) target = $region9
    $region8: #{tpu_custom_call.1} parent=1 // pred_region
      _
    $region9: #{tpu_custom_call.1} parent=1 // pred_fallthru
      _
    // Predicated region
    $region10: #{tpu_custom_call.1} parent=1 // pred_check
      _
    $region11: #{tpu_custom_call.1} parent=1 // pred_check_branch
      %19 = sbr.rel (0) target = $region13
    $region12: #{tpu_custom_call.1} parent=1 // pred_region
      _
    $region13: #{tpu_custom_call.1} parent=1 // pred_fallthru
      _
    // Predicated region
    $region14: #{tpu_custom_call.1} parent=1 // pred_check
      _
    $region15: #{tpu_custom_call.1} parent=1 // pred_check_branch
      %21 = sbr.rel (0) target = $region17
    $region16: #{tpu_custom_call.1} parent=1 // pred_region
      _
    $region17: #{tpu_custom_call.1} parent=1 // pred_fallthru
      _
    // Predicated region
    $region18: #{tpu_custom_call.1} parent=1 // pred_check
      _
    $region19: #{tpu_custom_call.1} parent=1 // pred_check_branch
      %23 = sbr.rel (0) target = $region21
    $region20: #{tpu_custom_call.1} parent=1 // pred_region
      %s25 = ssub.s32 1536, 1536
      %26 = vsyncadd [#allocation3], %s25
      %s27 = sshll.u32 [#allocation2], 4
      %s28 = int_to_ptr.vmem [resolvable:$true] %s27
      %33 = dma.hbm_to_vmem [thread:$0]  %s4, 1536, %s28, [#allocation3], 128, 128, 8
    $region21: #{tpu_custom_call.1} parent=1 // pred_fallthru
      _
    // Predicated region
    $region22: #{tpu_custom_call.1} parent=1 // pred_check
      _
    $region23: #{tpu_custom_call.1} parent=1 // pred_check_branch
      %35 = sbr.rel (0) target = $region25
    $region24: #{tpu_custom_call.1} parent=1 // pred_region
      _
    $region25: #{tpu_custom_call.1} parent=1 // pred_fallthru
      _
    // Predicated region
    $region26: #{tpu_custom_call.1} parent=1 // pred_check
      _
    $region27: #{tpu_custom_call.1} parent=1 // pred_check_branch
      %37 = sbr.rel (0) target = $region29
    $region28: #{tpu_custom_call.1} parent=1 // pred_region
      _
    $region29: #{tpu_custom_call.1} parent=1 // pred_fallthru
      _
    // Predicated region
    $region30: #{tpu_custom_call.1} parent=1 // pred_check
      _
    $region31: #{tpu_custom_call.1} parent=1 // pred_check_branch
      %39 = sbr.rel (0) target = $region33
    $region32: #{tpu_custom_call.1} parent=1 // pred_region
      _
    $region33: #{tpu_custom_call.1} parent=1 // pred_fallthru
      _
    // Predicated region
    $region34: #{tpu_custom_call.1} parent=1 // pred_check
      _
    $region35: #{tpu_custom_call.1} parent=1 // pred_check_branch
      %41 = sbr.rel (0) target = $region37
    $region36: #{tpu_custom_call.1} parent=1 // pred_region
      %42 = dma.done [#allocation3], 1536
    $region37: #{tpu_custom_call.1} parent=1 // pred_fallthru
      _
    %v43 = vld [vmem:[%s0] sm:$0xff]
    %v44 = vld [vmem:[%s0 + $0x8] sm:$0xff]
    %v45 = vld [vmem:[%s0 + $0x10] sm:$0xff]
    %v46 = vld [vmem:[%s0 + $0x18] sm:$0xff]
    %v47 = vld [vmem:[%s1] sm:$0xf]
    %v48 = vld [vmem:[%s1 + $0x4] sm:$0xf]
    %v49 = vld [vmem:[%s1 + $0x8] sm:$0xf]
    %v50 = vld [vmem:[%s2] sm:$0xf]
    %v51 = vld [vmem:[%s2 + $0x4] sm:$0xf]
    %v52 = vld [vmem:[%s2 + $0x8] sm:$0xf]
    %v53 = vld [vmem:[%s3] sm:$0xf]
    %v54 = vld [vmem:[%s3 + $0x4] sm:$0xf]
    %v55 = vld [vmem:[#allocation2 + $0x8] sm:$0xff]
    %v56 = vld [vmem:[#allocation2 + $0x10] sm:$0xff]
    %v57 = vld [vmem:[#allocation2 + $0x18] sm:$0xff]
    %v58 = vld [vmem:[#allocation2 + $0x20] sm:$0xff]
    %v59 = vld [vmem:[#allocation2 + $0x28] sm:$0xff]
    %v60 = vld [vmem:[#allocation2 + $0x38] sm:$0xff]
    %v61 = vld [vmem:[#allocation2 + $0x40] sm:$0xff]
    %v62 = vld [vmem:[#allocation2 + $0x48] sm:$0xff]
    %v63 = vld [vmem:[#allocation2 + $0x50] sm:$0xff]
    %v64 = vld [vmem:[#allocation2 + $0x58] sm:$0xff]
    %v65 = vld [vmem:[%s5] sm:$0x1]
    %v66 = vld [vmem:[%s5 + $0x1] sm:$0x1]
    %v67 = vld [vmem:[%s5 + $0x2] sm:$0x1]
    %v68 = vld [vmem:[%s5 + $0x3] sm:$0x1]
    %v69 = vld [vmem:[%s5 + $0x4] sm:$0x1]
    %v70 = vld [vmem:[%s5 + $0x5] sm:$0x1]
    %v71 = vld [vmem:[%s6] sm:$0xff]
    %v72 = vld [vmem:[%s7] sm:$0x1]
    %vm73 = vcmask 31744
    %v75 = vsel %vm73, %v43, 0
    %v78 = vsel %vm73, %v44, 0
    %v81 = vsel %vm73, %v45, 0
    %v84 = vsel %vm73, %v46, 0
    %vm86 = vcmask 1043456
    %v88 = vsel %vm86, %v53, 0
    %90 = vmatprep.subr.mxu0 0.0
    %91 = vmatpush1.msra.mxu0 0.0
    %92 = vmatprep.subr.mxu0 0.0
    %93 = vmatpush1.msra.mxu0 0.0
    %94 = vmatprep.subr.mxu0 0.0
    %95 = vmatpush1.msra.mxu0 0.0
    %96 = vmatprep.subr.mxu0 0.0
    %97 = vmatpush1.msra.mxu0 0.0
    %98 = vmatprep.subr.mxu0 0.0
    %99 = vmatpush1.msra.mxu0 0.0
    %100 = vmatprep.subr.mxu0 0.0
    %101 = vmatpush1.msra.mxu0 0.0
    %102 = vmatprep.subr.mxu0 0.0
    %103 = vmatpush1.msra.mxu0 0.0
    %104 = vmatprep.subr.mxu0 0.0
    %105 = vmatpush1.msra.mxu0 0.0
    %106 = vmatprep.subr.mxu0 0.0
    %107 = vmatpush1.msra.mxu0 0.0
    %108 = vmatprep.subr.mxu0 0.0
    %109 = vmatpush1.msra.mxu0 0.0
    %110 = vmatprep.subr.mxu0 0.0
    %111 = vmatpush1.msra.mxu0 0.0
    %112 = vmatprep.subr.mxu0 0.0
    %113 = vmatpush1.msra.mxu0 0.0
    %114 = vmatprep.subr.mxu0 0.0
    %115 = vmatpush1.msra.mxu0 0.0
    %116 = vmatprep.subr.mxu0 0.0
    %117 = vmatpush1.msra.mxu0 0.0
    %118 = vmatprep.subr.mxu0 0.0
    %119 = vmatpush1.msra.mxu0 0.0
    %120 = vmatprep.subr.mxu0 0.0
    %121 = vmatpush1.msra.mxu0 %v88
    %122 = vmatprep.subr.mxu0 0.0
    %123 = vmatpush2.msra.mxu0 0.0
    %124 = vmatprep.subr.mxu0 0.0
    %125 = vmatpush2.msra.mxu0 0.0
    %126 = vmatprep.subr.mxu0 0.0
    %127 = vmatpush2.msra.mxu0 0.0
    %128 = vmatprep.subr.mxu0 0.0
    %129 = vmatpush2.msra.mxu0 0.0
    %130 = vmatprep.subr.mxu0 0.0
    %131 = vmatpush2.msra.mxu0 0.0
    %132 = vmatprep.subr.mxu0 0.0
    %133 = vmatpush2.msra.mxu0 0.0
    %134 = vmatprep.subr.mxu0 0.0
    %135 = vmatpush2.msra.mxu0 0.0
    %136 = vmatprep.subr.mxu0 0.0
    %137 = vmatpush2.msra.mxu0 0.0
    %138 = vmatprep.subr.mxu0 0.0
    %139 = vmatpush2.msra.mxu0 0.0
    %140 = vmatprep.subr.mxu0 0.0
    %141 = vmatpush2.msra.mxu0 0.0
    %142 = vmatprep.subr.mxu0 0.0
    %143 = vmatpush2.msra.mxu0 0.0
    %144 = vmatprep.subr.mxu0 0.0
    %145 = vmatpush2.msra.mxu0 0.0
    %146 = vmatprep.subr.mxu0 0.0
    %147 = vmatpush2.msra.mxu0 0.0
    %148 = vmatprep.subr.mxu0 0.0
    %149 = vmatpush2.msra.mxu0 0.0
    %150 = vmatprep.subr.mxu0 0.0
    %151 = vmatpush2.msra.mxu0 0.0
    %152 = vmatprep.subr.mxu0 0.0
    %153 = vmatpush2.msra.mxu0 0.0
    %154 = vmatprep.mubr.f32.mxu0 0.0
    %155 = vmatmul.mubr.f32.gmra.mxu0 %v75
    %v156 = vpop.f32.mrf.mxu0
    %v157 = vadd.f32 0.0, %v156
    %v158 = vpop.f32.mrf.mxu0
    %159 = vmatprep.mubr.f32.mxu0 0.0
    %160 = vmatmul.mubr.f32.gmra.mxu0 %v78
    %v161 = vpop.f32.mrf.mxu0
    %v162 = vadd.f32 0.0, %v161
    %v163 = vpop.f32.mrf.mxu0
    %164 = vmatprep.mubr.f32.mxu0 0.0
    %165 = vmatmul.mubr.f32.gmra.mxu0 %v81
    %v166 = vpop.f32.mrf.mxu0
    %v167 = vadd.f32 0.0, %v166
    %v168 = vpop.f32.mrf.mxu0
    %169 = vmatprep.mubr.f32.mxu0 0.0
    %170 = vmatmul.mubr.f32.gmra.mxu0 %v84
    %v171 = vpop.f32.mrf.mxu0
    %v172 = vadd.f32 0.0, %v171
    %v173 = vpop.f32.mrf.mxu0
    %174 = vdwg.mxu0
    %vm175 = vcmask 64512
    %v177 = vsel %vm175, %v47, 0
    %179 = vmatprep.subr.mxu0 0.0
    %180 = vmatpush1.msra.mxu0 0.0
    %181 = vmatprep.subr.mxu0 0.0
    %182 = vmatpush1.msra.mxu0 0.0
    %183 = vmatprep.subr.mxu0 0.0
    %184 = vmatpush1.msra.mxu0 0.0
    %185 = vmatprep.subr.mxu0 0.0
    %186 = vmatpush1.msra.mxu0 0.0
    %187 = vmatprep.subr.mxu0 0.0
    %188 = vmatpush1.msra.mxu0 0.0
    %189 = vmatprep.subr.mxu0 0.0
    %190 = vmatpush1.msra.mxu0 0.0
    %191 = vmatprep.subr.mxu0 0.0
    %192 = vmatpush1.msra.mxu0 0.0
    %193 = vmatprep.subr.mxu0 0.0
    %194 = vmatpush1.msra.mxu0 0.0
    %195 = vmatprep.subr.mxu0 0.0
    %196 = vmatpush1.msra.mxu0 0.0
    %197 = vmatprep.subr.mxu0 0.0
    %198 = vmatpush1.msra.mxu0 0.0
    %199 = vmatprep.subr.mxu0 0.0
    %200 = vmatpush1.msra.mxu0 0.0
    %201 = vmatprep.subr.mxu0 0.0
    %202 = vmatpush1.msra.mxu0 0.0
    %203 = vmatprep.subr.mxu0 0.0
    %204 = vmatpush1.msra.mxu0 0.0
    %205 = vmatprep.subr.mxu0 0.0
    %206 = vmatpush1.msra.mxu0 0.0
    %207 = vmatprep.subr.mxu0 0.0
    %208 = vmatpush1.msra.mxu0 0.0
    %209 = vmatprep.subr.mxu0 0.0
    %210 = vmatpush1.msra.mxu0 %v55
    %211 = vmatprep.subr.mxu0 0.0
    %212 = vmatpush2.msra.mxu0 0.0
    %213 = vmatprep.subr.mxu0 0.0
    %214 = vmatpush2.msra.mxu0 0.0
    %215 = vmatprep.subr.mxu0 0.0
    %216 = vmatpush2.msra.mxu0 0.0
    %217 = vmatprep.subr.mxu0 0.0
    %218 = vmatpush2.msra.mxu0 0.0
    %219 = vmatprep.subr.mxu0 0.0
    %220 = vmatpush2.msra.mxu0 0.0
    %221 = vmatprep.subr.mxu0 0.0
    %222 = vmatpush2.msra.mxu0 0.0
    %223 = vmatprep.subr.mxu0 0.0
    %224 = vmatpush2.msra.mxu0 0.0
    %225 = vmatprep.subr.mxu0 0.0
    %226 = vmatpush2.msra.mxu0 0.0
    %227 = vmatprep.subr.mxu0 0.0
    %228 = vmatpush2.msra.mxu0 0.0
    %229 = vmatprep.subr.mxu0 0.0
    %230 = vmatpush2.msra.mxu0 0.0
    %231 = vmatprep.subr.mxu0 0.0
    %232 = vmatpush2.msra.mxu0 0.0
    %233 = vmatprep.subr.mxu0 0.0
    %234 = vmatpush2.msra.mxu0 0.0
    %235 = vmatprep.subr.mxu0 0.0
    %236 = vmatpush2.msra.mxu0 0.0
    %237 = vmatprep.subr.mxu0 0.0
    %238 = vmatpush2.msra.mxu0 0.0
    %239 = vmatprep.subr.mxu0 0.0
    %240 = vmatpush2.msra.mxu0 0.0
    %241 = vmatprep.subr.mxu0 0.0
    %242 = vmatpush2.msra.mxu0 0.0
    %243 = vmatprep.mubr.f32.mxu0 0.0
    %244 = vmatmul.mubr.f32.gmra.mxu0 %v177
    %v245 = vpop.f32.mrf.mxu0
    %v246 = vadd.f32 0.0, %v245
    %v247 = vpop.f32.mrf.mxu0
    %248 = vdwg.mxu0
    %v249 = vadd.f32 %v157, %v246
    %v251 = vlaneseq
    %v252 = vshrl.u32 %v251, 7
    %v253 = vsub.s32 0, %v252
    %v254 = vrot.slane %v65, %v253
    %v256 = vadd.f32 %v249, %v254
    %v257 = vxor.u32 %v256, 2147483648
    %v258 = vmul.f32 %v257, 1.442695
    %v259 = vpow.pop %v258
    %v260 = vadd.f32 %v259, 1.0
    %v261 = vrcp.pop %v260
    %v262 = vmul.f32 1.0, %v261
    %v263 = vtanh.pop %v256
    %265 = vrot.lane.b32.xlu0 %v50, 8
    %v266 = vpop.permute.xlu0 %265
    %v268 = vmul.f32 %v262, %v266
    %270 = vrot.lane.b32.xlu0 %v263, 104
    %v271 = vpop.permute.xlu0 %270
    %v273 = vmul.f32 %v262, %v271
    %275 = vrot.lane.b32.xlu0 %v273, 8
    %v276 = vpop.permute.xlu0 %275
    %v278 = vadd.f32 %v268, %v276
    %v279 = vtanh.pop %v278
    %281 = vrot.lane.b32.xlu0 %v279, 8
    %v282 = vpop.permute.xlu0 %281
    %v284 = vmul.f32 %v262, %v282
    %286 = vrot.lane.b32.xlu0 %v284, 112
    %v287 = vpop.permute.xlu0 %286
    %290 = vrot.lane.b32.xlu0 %v48, 8
    %v291 = vpop.permute.xlu0 %290
    %v293 = vsel %vm175, %v287, %v291
    %v295 = vlaneseq
    %v296 = vshrl.u32 %v295, 7
    %v297 = vsub.s32 0, %v296
    %v298 = vrot.slane %v66, %v297
    %vm300 = vcmask 130048
    %v302 = vsel %vm300, %v293, 0
    %304 = vmatprep.subr.mxu0 0.0
    %305 = vmatpush1.msra.mxu0 0.0
    %306 = vmatprep.subr.mxu0 0.0
    %307 = vmatpush1.msra.mxu0 0.0
    %308 = vmatprep.subr.mxu0 0.0
    %309 = vmatpush1.msra.mxu0 0.0
    %310 = vmatprep.subr.mxu0 0.0
    %311 = vmatpush1.msra.mxu0 0.0
    %312 = vmatprep.subr.mxu0 0.0
    %313 = vmatpush1.msra.mxu0 0.0
    %314 = vmatprep.subr.mxu0 0.0
    %315 = vmatpush1.msra.mxu0 0.0
    %316 = vmatprep.subr.mxu0 0.0
    %317 = vmatpush1.msra.mxu0 0.0
    %318 = vmatprep.subr.mxu0 0.0
    %319 = vmatpush1.msra.mxu0 0.0
    %320 = vmatprep.subr.mxu0 0.0
    %321 = vmatpush1.msra.mxu0 0.0
    %322 = vmatprep.subr.mxu0 0.0
    %323 = vmatpush1.msra.mxu0 0.0
    %324 = vmatprep.subr.mxu0 0.0
    %325 = vmatpush1.msra.mxu0 0.0
    %326 = vmatprep.subr.mxu0 0.0
    %327 = vmatpush1.msra.mxu0 0.0
    %328 = vmatprep.subr.mxu0 0.0
    %329 = vmatpush1.msra.mxu0 0.0
    %330 = vmatprep.subr.mxu0 0.0
    %331 = vmatpush1.msra.mxu0 0.0
    %332 = vmatprep.subr.mxu0 0.0
    %333 = vmatpush1.msra.mxu0 %v57
    %334 = vmatprep.subr.mxu0 0.0
    %335 = vmatpush1.msra.mxu0 %v56
    %336 = vmatprep.subr.mxu0 0.0
    %337 = vmatpush2.msra.mxu0 0.0
    %338 = vmatprep.subr.mxu0 0.0
    %339 = vmatpush2.msra.mxu0 0.0
    %340 = vmatprep.subr.mxu0 0.0
    %341 = vmatpush2.msra.mxu0 0.0
    %342 = vmatprep.subr.mxu0 0.0
    %343 = vmatpush2.msra.mxu0 0.0
    %344 = vmatprep.subr.mxu0 0.0
    %345 = vmatpush2.msra.mxu0 0.0
    %346 = vmatprep.subr.mxu0 0.0
    %347 = vmatpush2.msra.mxu0 0.0
    %348 = vmatprep.subr.mxu0 0.0
    %349 = vmatpush2.msra.mxu0 0.0
    %350 = vmatprep.subr.mxu0 0.0
    %351 = vmatpush2.msra.mxu0 0.0
    %352 = vmatprep.subr.mxu0 0.0
    %353 = vmatpush2.msra.mxu0 0.0
    %354 = vmatprep.subr.mxu0 0.0
    %355 = vmatpush2.msra.mxu0 0.0
    %356 = vmatprep.subr.mxu0 0.0
    %357 = vmatpush2.msra.mxu0 0.0
    %358 = vmatprep.subr.mxu0 0.0
    %359 = vmatpush2.msra.mxu0 0.0
    %360 = vmatprep.subr.mxu0 0.0
    %361 = vmatpush2.msra.mxu0 0.0
    %362 = vmatprep.subr.mxu0 0.0
    %363 = vmatpush2.msra.mxu0 0.0
    %364 = vmatprep.subr.mxu0 0.0
    %365 = vmatpush2.msra.mxu0 0.0
    %366 = vmatprep.subr.mxu0 0.0
    %367 = vmatpush2.msra.mxu0 0.0
    %368 = vmatprep.mubr.f32.mxu0 0.0
    %369 = vmatmul.mubr.f32.gmra.mxu0 %v302
    %v370 = vpop.f32.mrf.mxu0
    %v371 = vadd.f32 %v298, %v370
    %v372 = vpop.f32.mrf.mxu0
    %373 = vdwg.mxu0
    %v374 = vxor.u32 %v371, 2147483648
    %v375 = vmul.f32 %v374, 1.442695
    %v376 = vpow.pop %v375
    %v377 = vadd.f32 %v376, 1.0
    %v378 = vrcp.pop %v377
    %v379 = vmul.f32 1.0, %v378
    %v380 = vtanh.pop %v371
    %382 = vrot.lane.b32.xlu0 %v51, 8
    %v383 = vpop.permute.xlu0 %382
    %v385 = vmul.f32 %v379, %v383
    %387 = vrot.lane.b32.xlu0 %v380, 104
    %v388 = vpop.permute.xlu0 %387
    %v390 = vmul.f32 %v379, %v388
    %392 = vrot.lane.b32.xlu0 %v390, 8
    %v393 = vpop.permute.xlu0 %392
    %v395 = vadd.f32 %v385, %v393
    %v396 = vtanh.pop %v395
    %398 = vrot.lane.b32.xlu0 %v396, 8
    %v399 = vpop.permute.xlu0 %398
    %v401 = vmul.f32 %v379, %v399
    %403 = vrot.lane.b32.xlu0 %v401, 112
    %v404 = vpop.permute.xlu0 %403
    %407 = vrot.lane.b32.xlu0 %v49, 8
    %v408 = vpop.permute.xlu0 %407
    %v410 = vsel %vm175, %v404, %v408
    %v412 = vlaneseq
    %v413 = vshrl.u32 %v412, 7
    %v414 = vsub.s32 0, %v413
    %v415 = vrot.slane %v67, %v414
    %v418 = vsel %vm300, %v410, 0
    %420 = vmatprep.subr.mxu0 0.0
    %421 = vmatpush1.msra.mxu0 0.0
    %422 = vmatprep.subr.mxu0 0.0
    %423 = vmatpush1.msra.mxu0 0.0
    %424 = vmatprep.subr.mxu0 0.0
    %425 = vmatpush1.msra.mxu0 0.0
    %426 = vmatprep.subr.mxu0 0.0
    %427 = vmatpush1.msra.mxu0 0.0
    %428 = vmatprep.subr.mxu0 0.0
    %429 = vmatpush1.msra.mxu0 0.0
    %430 = vmatprep.subr.mxu0 0.0
    %431 = vmatpush1.msra.mxu0 0.0
    %432 = vmatprep.subr.mxu0 0.0
    %433 = vmatpush1.msra.mxu0 0.0
    %434 = vmatprep.subr.mxu0 0.0
    %435 = vmatpush1.msra.mxu0 0.0
    %436 = vmatprep.subr.mxu0 0.0
    %437 = vmatpush1.msra.mxu0 0.0
    %438 = vmatprep.subr.mxu0 0.0
    %439 = vmatpush1.msra.mxu0 0.0
    %440 = vmatprep.subr.mxu0 0.0
    %441 = vmatpush1.msra.mxu0 0.0
    %442 = vmatprep.subr.mxu0 0.0
    %443 = vmatpush1.msra.mxu0 0.0
    %444 = vmatprep.subr.mxu0 0.0
    %445 = vmatpush1.msra.mxu0 0.0
    %446 = vmatprep.subr.mxu0 0.0
    %447 = vmatpush1.msra.mxu0 0.0
    %448 = vmatprep.subr.mxu0 0.0
    %449 = vmatpush1.msra.mxu0 %v59
    %450 = vmatprep.subr.mxu0 0.0
    %451 = vmatpush1.msra.mxu0 %v58
    %452 = vmatprep.subr.mxu0 0.0
    %453 = vmatpush2.msra.mxu0 0.0
    %454 = vmatprep.subr.mxu0 0.0
    %455 = vmatpush2.msra.mxu0 0.0
    %456 = vmatprep.subr.mxu0 0.0
    %457 = vmatpush2.msra.mxu0 0.0
    %458 = vmatprep.subr.mxu0 0.0
    %459 = vmatpush2.msra.mxu0 0.0
    %460 = vmatprep.subr.mxu0 0.0
    %461 = vmatpush2.msra.mxu0 0.0
    %462 = vmatprep.subr.mxu0 0.0
    %463 = vmatpush2.msra.mxu0 0.0
    %464 = vmatprep.subr.mxu0 0.0
    %465 = vmatpush2.msra.mxu0 0.0
    %466 = vmatprep.subr.mxu0 0.0
    %467 = vmatpush2.msra.mxu0 0.0
    %468 = vmatprep.subr.mxu0 0.0
    %469 = vmatpush2.msra.mxu0 0.0
    %470 = vmatprep.subr.mxu0 0.0
    %471 = vmatpush2.msra.mxu0 0.0
    %472 = vmatprep.subr.mxu0 0.0
    %473 = vmatpush2.msra.mxu0 0.0
    %474 = vmatprep.subr.mxu0 0.0
    %475 = vmatpush2.msra.mxu0 0.0
    %476 = vmatprep.subr.mxu0 0.0
    %477 = vmatpush2.msra.mxu0 0.0
    %478 = vmatprep.subr.mxu0 0.0
    %479 = vmatpush2.msra.mxu0 0.0
    %480 = vmatprep.subr.mxu0 0.0
    %481 = vmatpush2.msra.mxu0 0.0
    %482 = vmatprep.subr.mxu0 0.0
    %483 = vmatpush2.msra.mxu0 0.0
    %484 = vmatprep.mubr.f32.mxu0 0.0
    %485 = vmatmul.mubr.f32.gmra.mxu0 %v418
    %v486 = vpop.f32.mrf.mxu0
    %v487 = vadd.f32 %v415, %v486
    %v488 = vpop.f32.mrf.mxu0
    %489 = vdwg.mxu0
    %v490 = vxor.u32 %v487, 2147483648
    %v491 = vmul.f32 %v490, 1.442695
    %v492 = vpow.pop %v491
    %v493 = vadd.f32 %v492, 1.0
    %v494 = vrcp.pop %v493
    %v495 = vmul.f32 1.0, %v494
    %v496 = vtanh.pop %v487
    %498 = vrot.lane.b32.xlu0 %v52, 8
    %v499 = vpop.permute.xlu0 %498
    %v501 = vmul.f32 %v495, %v499
    %503 = vrot.lane.b32.xlu0 %v496, 104
    %v504 = vpop.permute.xlu0 %503
    %v506 = vmul.f32 %v495, %v504
    %508 = vrot.lane.b32.xlu0 %v506, 8
    %v509 = vpop.permute.xlu0 %508
    %v511 = vadd.f32 %v501, %v509
    %v512 = vtanh.pop %v511
    %514 = vrot.lane.b32.xlu0 %v512, 8
    %v515 = vpop.permute.xlu0 %514
    %v517 = vmul.f32 %v495, %v515
    %v518 = vsel %vm175, %v287, 0
    %520 = vmatprep.subr.mxu0 0.0
    %521 = vmatpush1.msra.mxu0 0.0
    %522 = vmatprep.subr.mxu0 0.0
    %523 = vmatpush1.msra.mxu0 0.0
    %524 = vmatprep.subr.mxu0 0.0
    %525 = vmatpush1.msra.mxu0 0.0
    %526 = vmatprep.subr.mxu0 0.0
    %527 = vmatpush1.msra.mxu0 0.0
    %528 = vmatprep.subr.mxu0 0.0
    %529 = vmatpush1.msra.mxu0 0.0
    %530 = vmatprep.subr.mxu0 0.0
    %531 = vmatpush1.msra.mxu0 0.0
    %532 = vmatprep.subr.mxu0 0.0
    %533 = vmatpush1.msra.mxu0 0.0
    %534 = vmatprep.subr.mxu0 0.0
    %535 = vmatpush1.msra.mxu0 0.0
    %536 = vmatprep.subr.mxu0 0.0
    %537 = vmatpush1.msra.mxu0 0.0
    %538 = vmatprep.subr.mxu0 0.0
    %539 = vmatpush1.msra.mxu0 0.0
    %540 = vmatprep.subr.mxu0 0.0
    %541 = vmatpush1.msra.mxu0 0.0
    %542 = vmatprep.subr.mxu0 0.0
    %543 = vmatpush1.msra.mxu0 0.0
    %544 = vmatprep.subr.mxu0 0.0
    %545 = vmatpush1.msra.mxu0 0.0
    %546 = vmatprep.subr.mxu0 0.0
    %547 = vmatpush1.msra.mxu0 0.0
    %548 = vmatprep.subr.mxu0 0.0
    %549 = vmatpush1.msra.mxu0 0.0
    %550 = vmatprep.subr.mxu0 0.0
    %551 = vmatpush1.msra.mxu0 %v55
    %552 = vmatprep.subr.mxu0 0.0
    %553 = vmatpush2.msra.mxu0 0.0
    %554 = vmatprep.subr.mxu0 0.0
    %555 = vmatpush2.msra.mxu0 0.0
    %556 = vmatprep.subr.mxu0 0.0
    %557 = vmatpush2.msra.mxu0 0.0
    %558 = vmatprep.subr.mxu0 0.0
    %559 = vmatpush2.msra.mxu0 0.0
    %560 = vmatprep.subr.mxu0 0.0
    %561 = vmatpush2.msra.mxu0 0.0
    %562 = vmatprep.subr.mxu0 0.0
    %563 = vmatpush2.msra.mxu0 0.0
    %564 = vmatprep.subr.mxu0 0.0
    %565 = vmatpush2.msra.mxu0 0.0
    %566 = vmatprep.subr.mxu0 0.0
    %567 = vmatpush2.msra.mxu0 0.0
    %568 = vmatprep.subr.mxu0 0.0
    %569 = vmatpush2.msra.mxu0 0.0
    %570 = vmatprep.subr.mxu0 0.0
    %571 = vmatpush2.msra.mxu0 0.0
    %572 = vmatprep.subr.mxu0 0.0
    %573 = vmatpush2.msra.mxu0 0.0
    %574 = vmatprep.subr.mxu0 0.0
    %575 = vmatpush2.msra.mxu0 0.0
    %576 = vmatprep.subr.mxu0 0.0
    %577 = vmatpush2.msra.mxu0 0.0
    %578 = vmatprep.subr.mxu0 0.0
    %579 = vmatpush2.msra.mxu0 0.0
    %580 = vmatprep.subr.mxu0 0.0
    %581 = vmatpush2.msra.mxu0 0.0
    %582 = vmatprep.subr.mxu0 0.0
    %583 = vmatpush2.msra.mxu0 0.0
    %584 = vmatprep.mubr.f32.mxu0 0.0
    %585 = vmatmul.mubr.f32.gmra.mxu0 %v518
    %v586 = vpop.f32.mrf.mxu0
    %v587 = vadd.f32 0.0, %v586
    %v588 = vpop.f32.mrf.mxu0
    %589 = vdwg.mxu0
    %v591 = vrot.slane %v587, 4
    %v593 = vadd.f32 %v157, %v591
    %v594 = vadd.f32 %v593, %v254
    %v595 = vxor.u32 %v594, 2147483648
    %v596 = vmul.f32 %v595, 1.442695
    %v597 = vpow.pop %v596
    %v598 = vadd.f32 %v597, 1.0
    %v599 = vrcp.pop %v598
    %v600 = vmul.f32 1.0, %v599
    %v601 = vtanh.pop %v594
    %v603 = vrot.slane %v278, 4
    %v605 = vmul.f32 %v600, %v603
    %607 = vrot.lane.b32.xlu0 %v601, 104
    %v608 = vpop.permute.xlu0 %607
    %v610 = vmul.f32 %v600, %v608
    %612 = vrot.lane.b32.xlu0 %v610, 8
    %v613 = vpop.permute.xlu0 %612
    %v615 = vadd.f32 %v605, %v613
    %v616 = vtanh.pop %v615
    %618 = vrot.lane.b32.xlu0 %v616, 8
    %v619 = vpop.permute.xlu0 %618
    %v621 = vmul.f32 %v600, %v619
    %623 = vrot.lane.b32.xlu0 %v621, 112
    %v624 = vpop.permute.xlu0 %623
    %v626 = vrot.slane %v401, 4
    %627 = vrot.lane.b32.xlu0 %v626, 120
    %v628 = vpop.permute.xlu0 %627
    %v630 = vsel %vm175, %v624, %v628
    %v632 = vrot.slane %v630, 4
    %v633 = vsel %vm300, %v632, 0
    %635 = vmatprep.subr.mxu0 0.0
    %636 = vmatpush1.msra.mxu0 0.0
    %637 = vmatprep.subr.mxu0 0.0
    %638 = vmatpush1.msra.mxu0 0.0
    %639 = vmatprep.subr.mxu0 0.0
    %640 = vmatpush1.msra.mxu0 0.0
    %641 = vmatprep.subr.mxu0 0.0
    %642 = vmatpush1.msra.mxu0 0.0
    %643 = vmatprep.subr.mxu0 0.0
    %644 = vmatpush1.msra.mxu0 0.0
    %645 = vmatprep.subr.mxu0 0.0
    %646 = vmatpush1.msra.mxu0 0.0
    %647 = vmatprep.subr.mxu0 0.0
    %648 = vmatpush1.msra.mxu0 0.0
    %649 = vmatprep.subr.mxu0 0.0
    %650 = vmatpush1.msra.mxu0 0.0
    %651 = vmatprep.subr.mxu0 0.0
    %652 = vmatpush1.msra.mxu0 0.0
    %653 = vmatprep.subr.mxu0 0.0
    %654 = vmatpush1.msra.mxu0 0.0
    %655 = vmatprep.subr.mxu0 0.0
    %656 = vmatpush1.msra.mxu0 0.0
    %657 = vmatprep.subr.mxu0 0.0
    %658 = vmatpush1.msra.mxu0 0.0
    %659 = vmatprep.subr.mxu0 0.0
    %660 = vmatpush1.msra.mxu0 0.0
    %661 = vmatprep.subr.mxu0 0.0
    %662 = vmatpush1.msra.mxu0 0.0
    %663 = vmatprep.subr.mxu0 0.0
    %664 = vmatpush1.msra.mxu0 %v57
    %665 = vmatprep.subr.mxu0 0.0
    %666 = vmatpush1.msra.mxu0 %v56
    %667 = vmatprep.subr.mxu0 0.0
    %668 = vmatpush2.msra.mxu0 0.0
    %669 = vmatprep.subr.mxu0 0.0
    %670 = vmatpush2.msra.mxu0 0.0
    %671 = vmatprep.subr.mxu0 0.0
    %672 = vmatpush2.msra.mxu0 0.0
    %673 = vmatprep.subr.mxu0 0.0
    %674 = vmatpush2.msra.mxu0 0.0
    %675 = vmatprep.subr.mxu0 0.0
    %676 = vmatpush2.msra.mxu0 0.0
    %677 = vmatprep.subr.mxu0 0.0
    %678 = vmatpush2.msra.mxu0 0.0
    %679 = vmatprep.subr.mxu0 0.0
    %680 = vmatpush2.msra.mxu0 0.0
    %681 = vmatprep.subr.mxu0 0.0
    %682 = vmatpush2.msra.mxu0 0.0
    %683 = vmatprep.subr.mxu0 0.0
    %684 = vmatpush2.msra.mxu0 0.0
    %685 = vmatprep.subr.mxu0 0.0
    %686 = vmatpush2.msra.mxu0 0.0
    %687 = vmatprep.subr.mxu0 0.0
    %688 = vmatpush2.msra.mxu0 0.0
    %689 = vmatprep.subr.mxu0 0.0
    %690 = vmatpush2.msra.mxu0 0.0
    %691 = vmatprep.subr.mxu0 0.0
    %692 = vmatpush2.msra.mxu0 0.0
    %693 = vmatprep.subr.mxu0 0.0
    %694 = vmatpush2.msra.mxu0 0.0
    %695 = vmatprep.subr.mxu0 0.0
    %696 = vmatpush2.msra.mxu0 0.0
    %697 = vmatprep.subr.mxu0 0.0
    %698 = vmatpush2.msra.mxu0 0.0
    %699 = vmatprep.mubr.f32.mxu0 0.0
    %700 = vmatmul.mubr.f32.gmra.mxu0 %v633
    %v701 = vpop.f32.mrf.mxu0
    %v702 = vadd.f32 %v298, %v701
    %v703 = vpop.f32.mrf.mxu0
    %704 = vdwg.mxu0
    %v705 = vxor.u32 %v702, 2147483648
    %v706 = vmul.f32 %v705, 1.442695
    %v707 = vpow.pop %v706
    %v708 = vadd.f32 %v707, 1.0
    %v709 = vrcp.pop %v708
    %v710 = vmul.f32 1.0, %v709
    %v711 = vtanh.pop %v702
    %v712 = vmul.f32 %v710, %v395
    %714 = vrot.lane.b32.xlu0 %v711, 104
    %v715 = vpop.permute.xlu0 %714
    %v717 = vmul.f32 %v710, %v715
    %719 = vrot.lane.b32.xlu0 %v717, 8
    %v720 = vpop.permute.xlu0 %719
    %v722 = vadd.f32 %v712, %v720
    %v723 = vtanh.pop %v722
    %725 = vrot.lane.b32.xlu0 %v723, 8
    %v726 = vpop.permute.xlu0 %725
    %v728 = vmul.f32 %v710, %v726
    %730 = vrot.lane.b32.xlu0 %v728, 112
    %v731 = vpop.permute.xlu0 %730
    %734 = vrot.lane.b32.xlu0 %v517, 120
    %v735 = vpop.permute.xlu0 %734
    %v737 = vsel %vm175, %v731, %v735
    %v739 = vsel %vm300, %v737, 0
    %741 = vmatprep.subr.mxu0 0.0
    %742 = vmatpush1.msra.mxu0 0.0
    %743 = vmatprep.subr.mxu0 0.0
    %744 = vmatpush1.msra.mxu0 0.0
    %745 = vmatprep.subr.mxu0 0.0
    %746 = vmatpush1.msra.mxu0 0.0
    %747 = vmatprep.subr.mxu0 0.0
    %748 = vmatpush1.msra.mxu0 0.0
    %749 = vmatprep.subr.mxu0 0.0
    %750 = vmatpush1.msra.mxu0 0.0
    %751 = vmatprep.subr.mxu0 0.0
    %752 = vmatpush1.msra.mxu0 0.0
    %753 = vmatprep.subr.mxu0 0.0
    %754 = vmatpush1.msra.mxu0 0.0
    %755 = vmatprep.subr.mxu0 0.0
    %756 = vmatpush1.msra.mxu0 0.0
    %757 = vmatprep.subr.mxu0 0.0
    %758 = vmatpush1.msra.mxu0 0.0
    %759 = vmatprep.subr.mxu0 0.0
    %760 = vmatpush1.msra.mxu0 0.0
    %761 = vmatprep.subr.mxu0 0.0
    %762 = vmatpush1.msra.mxu0 0.0
    %763 = vmatprep.subr.mxu0 0.0
    %764 = vmatpush1.msra.mxu0 0.0
    %765 = vmatprep.subr.mxu0 0.0
    %766 = vmatpush1.msra.mxu0 0.0
    %767 = vmatprep.subr.mxu0 0.0
    %768 = vmatpush1.msra.mxu0 0.0
    %769 = vmatprep.subr.mxu0 0.0
    %770 = vmatpush1.msra.mxu0 %v59
    %771 = vmatprep.subr.mxu0 0.0
    %772 = vmatpush1.msra.mxu0 %v58
    %773 = vmatprep.subr.mxu0 0.0
    %774 = vmatpush2.msra.mxu0 0.0
    %775 = vmatprep.subr.mxu0 0.0
    %776 = vmatpush2.msra.mxu0 0.0
    %777 = vmatprep.subr.mxu0 0.0
    %778 = vmatpush2.msra.mxu0 0.0
    %779 = vmatprep.subr.mxu0 0.0
    %780 = vmatpush2.msra.mxu0 0.0
    %781 = vmatprep.subr.mxu0 0.0
    %782 = vmatpush2.msra.mxu0 0.0
    %783 = vmatprep.subr.mxu0 0.0
    %784 = vmatpush2.msra.mxu0 0.0
    %785 = vmatprep.subr.mxu0 0.0
    %786 = vmatpush2.msra.mxu0 0.0
    %787 = vmatprep.subr.mxu0 0.0
    %788 = vmatpush2.msra.mxu0 0.0
    %789 = vmatprep.subr.mxu0 0.0
    %790 = vmatpush2.msra.mxu0 0.0
    %791 = vmatprep.subr.mxu0 0.0
    %792 = vmatpush2.msra.mxu0 0.0
    %793 = vmatprep.subr.mxu0 0.0
    %794 = vmatpush2.msra.mxu0 0.0
    %795 = vmatprep.subr.mxu0 0.0
    %796 = vmatpush2.msra.mxu0 0.0
    %797 = vmatprep.subr.mxu0 0.0
    %798 = vmatpush2.msra.mxu0 0.0
    %799 = vmatprep.subr.mxu0 0.0
    %800 = vmatpush2.msra.mxu0 0.0
    %801 = vmatprep.subr.mxu0 0.0
    %802 = vmatpush2.msra.mxu0 0.0
    %803 = vmatprep.subr.mxu0 0.0
    %804 = vmatpush2.msra.mxu0 0.0
    %805 = vmatprep.mubr.f32.mxu0 0.0
    %806 = vmatmul.mubr.f32.gmra.mxu0 %v739
    %v807 = vpop.f32.mrf.mxu0
    %v808 = vadd.f32 %v415, %v807
    %v809 = vpop.f32.mrf.mxu0
    %810 = vdwg.mxu0
    %v811 = vxor.u32 %v808, 2147483648
    %v812 = vmul.f32 %v811, 1.442695
    %v813 = vpow.pop %v812
    %v814 = vadd.f32 %v813, 1.0
    %v815 = vrcp.pop %v814
    %v816 = vmul.f32 1.0, %v815
    %v817 = vtanh.pop %v808
    %v818 = vmul.f32 %v816, %v511
    %820 = vrot.lane.b32.xlu0 %v817, 104
    %v821 = vpop.permute.xlu0 %820
    %v823 = vmul.f32 %v816, %v821
    %825 = vrot.lane.b32.xlu0 %v823, 8
    %v826 = vpop.permute.xlu0 %825
    %v828 = vadd.f32 %v818, %v826
    %v829 = vtanh.pop %v828
    %831 = vrot.lane.b32.xlu0 %v829, 8
    %v832 = vpop.permute.xlu0 %831
    %v834 = vmul.f32 %v816, %v832
    %v835 = vrot.slane %v621, 4
    %836 = vrot.lane.b32.xlu0 %v835, 112
    %v837 = vpop.permute.xlu0 %836
    %v838 = vsel %vm175, %v837, 0
    %840 = vmatprep.subr.mxu0 0.0
    %841 = vmatpush1.msra.mxu0 0.0
    %842 = vmatprep.subr.mxu0 0.0
    %843 = vmatpush1.msra.mxu0 0.0
    %844 = vmatprep.subr.mxu0 0.0
    %845 = vmatpush1.msra.mxu0 0.0
    %846 = vmatprep.subr.mxu0 0.0
    %847 = vmatpush1.msra.mxu0 0.0
    %848 = vmatprep.subr.mxu0 0.0
    %849 = vmatpush1.msra.mxu0 0.0
    %850 = vmatprep.subr.mxu0 0.0
    %851 = vmatpush1.msra.mxu0 0.0
    %852 = vmatprep.subr.mxu0 0.0
    %853 = vmatpush1.msra.mxu0 0.0
    %854 = vmatprep.subr.mxu0 0.0
    %855 = vmatpush1.msra.mxu0 0.0
    %856 = vmatprep.subr.mxu0 0.0
    %857 = vmatpush1.msra.mxu0 0.0
    %858 = vmatprep.subr.mxu0 0.0
    %859 = vmatpush1.msra.mxu0 0.0
    %860 = vmatprep.subr.mxu0 0.0
    %861 = vmatpush1.msra.mxu0 0.0
    %862 = vmatprep.subr.mxu0 0.0
    %863 = vmatpush1.msra.mxu0 0.0
    %864 = vmatprep.subr.mxu0 0.0
    %865 = vmatpush1.msra.mxu0 0.0
    %866 = vmatprep.subr.mxu0 0.0
    %867 = vmatpush1.msra.mxu0 0.0
    %868 = vmatprep.subr.mxu0 0.0
    %869 = vmatpush1.msra.mxu0 0.0
    %870 = vmatprep.subr.mxu0 0.0
    %871 = vmatpush1.msra.mxu0 %v55
    %872 = vmatprep.subr.mxu0 0.0
    %873 = vmatpush2.msra.mxu0 0.0
    %874 = vmatprep.subr.mxu0 0.0
    %875 = vmatpush2.msra.mxu0 0.0
    %876 = vmatprep.subr.mxu0 0.0
    %877 = vmatpush2.msra.mxu0 0.0
    %878 = vmatprep.subr.mxu0 0.0
    %879 = vmatpush2.msra.mxu0 0.0
    %880 = vmatprep.subr.mxu0 0.0
    %881 = vmatpush2.msra.mxu0 0.0
    %882 = vmatprep.subr.mxu0 0.0
    %883 = vmatpush2.msra.mxu0 0.0
    %884 = vmatprep.subr.mxu0 0.0
    %885 = vmatpush2.msra.mxu0 0.0
    %886 = vmatprep.subr.mxu0 0.0
    %887 = vmatpush2.msra.mxu0 0.0
    %888 = vmatprep.subr.mxu0 0.0
    %889 = vmatpush2.msra.mxu0 0.0
    %890 = vmatprep.subr.mxu0 0.0
    %891 = vmatpush2.msra.mxu0 0.0
    %892 = vmatprep.subr.mxu0 0.0
    %893 = vmatpush2.msra.mxu0 0.0
    %894 = vmatprep.subr.mxu0 0.0
    %895 = vmatpush2.msra.mxu0 0.0
    %896 = vmatprep.subr.mxu0 0.0
    %897 = vmatpush2.msra.mxu0 0.0
    %898 = vmatprep.subr.mxu0 0.0
    %899 = vmatpush2.msra.mxu0 0.0
    %900 = vmatprep.subr.mxu0 0.0
    %901 = vmatpush2.msra.mxu0 0.0
    %902 = vmatprep.subr.mxu0 0.0
    %903 = vmatpush2.msra.mxu0 0.0
    %904 = vmatprep.mubr.f32.mxu0 0.0
    %905 = vmatmul.mubr.f32.gmra.mxu0 %v838
    %v906 = vpop.f32.mrf.mxu0
    %v907 = vadd.f32 0.0, %v906
    %v908 = vpop.f32.mrf.mxu0
    %909 = vdwg.mxu0
    %v910 = vadd.f32 %v162, %v907
    %v911 = vadd.f32 %v910, %v254
    %v912 = vxor.u32 %v911, 2147483648
    %v913 = vmul.f32 %v912, 1.442695
    %v914 = vpow.pop %v913
    %v915 = vadd.f32 %v914, 1.0
    %v916 = vrcp.pop %v915
    %v917 = vmul.f32 1.0, %v916
    %v918 = vtanh.pop %v911
    %v920 = vrot.slane %v615, 4
    %v922 = vmul.f32 %v917, %v920
    %924 = vrot.lane.b32.xlu0 %v918, 104
    %v925 = vpop.permute.xlu0 %924
    %v927 = vmul.f32 %v917, %v925
    %929 = vrot.lane.b32.xlu0 %v927, 8
    %v930 = vpop.permute.xlu0 %929
    %v932 = vadd.f32 %v922, %v930
    %v933 = vtanh.pop %v932
    %935 = vrot.lane.b32.xlu0 %v933, 8
    %v936 = vpop.permute.xlu0 %935
    %v938 = vmul.f32 %v917, %v936
    %940 = vrot.lane.b32.xlu0 %v938, 112
    %v941 = vpop.permute.xlu0 %940
    %943 = vrot.lane.b32.xlu0 %v728, 120
    %v944 = vpop.permute.xlu0 %943
    %v946 = vsel %vm175, %v941, %v944
    %v948 = vsel %vm300, %v946, 0
    %950 = vmatprep.subr.mxu0 0.0
    %951 = vmatpush1.msra.mxu0 0.0
    %952 = vmatprep.subr.mxu0 0.0
    %953 = vmatpush1.msra.mxu0 0.0
    %954 = vmatprep.subr.mxu0 0.0
    %955 = vmatpush1.msra.mxu0 0.0
    %956 = vmatprep.subr.mxu0 0.0
    %957 = vmatpush1.msra.mxu0 0.0
    %958 = vmatprep.subr.mxu0 0.0
    %959 = vmatpush1.msra.mxu0 0.0
    %960 = vmatprep.subr.mxu0 0.0
    %961 = vmatpush1.msra.mxu0 0.0
    %962 = vmatprep.subr.mxu0 0.0
    %963 = vmatpush1.msra.mxu0 0.0
    %964 = vmatprep.subr.mxu0 0.0
    %965 = vmatpush1.msra.mxu0 0.0
    %966 = vmatprep.subr.mxu0 0.0
    %967 = vmatpush1.msra.mxu0 0.0
    %968 = vmatprep.subr.mxu0 0.0
    %969 = vmatpush1.msra.mxu0 0.0
    %970 = vmatprep.subr.mxu0 0.0
    %971 = vmatpush1.msra.mxu0 0.0
    %972 = vmatprep.subr.mxu0 0.0
    %973 = vmatpush1.msra.mxu0 0.0
    %974 = vmatprep.subr.mxu0 0.0
    %975 = vmatpush1.msra.mxu0 0.0
    %976 = vmatprep.subr.mxu0 0.0
    %977 = vmatpush1.msra.mxu0 0.0
    %978 = vmatprep.subr.mxu0 0.0
    %979 = vmatpush1.msra.mxu0 %v57
    %980 = vmatprep.subr.mxu0 0.0
    %981 = vmatpush1.msra.mxu0 %v56
    %982 = vmatprep.subr.mxu0 0.0
    %983 = vmatpush2.msra.mxu0 0.0
    %984 = vmatprep.subr.mxu0 0.0
    %985 = vmatpush2.msra.mxu0 0.0
    %986 = vmatprep.subr.mxu0 0.0
    %987 = vmatpush2.msra.mxu0 0.0
    %988 = vmatprep.subr.mxu0 0.0
    %989 = vmatpush2.msra.mxu0 0.0
    %990 = vmatprep.subr.mxu0 0.0
    %991 = vmatpush2.msra.mxu0 0.0
    %992 = vmatprep.subr.mxu0 0.0
    %993 = vmatpush2.msra.mxu0 0.0
    %994 = vmatprep.subr.mxu0 0.0
    %995 = vmatpush2.msra.mxu0 0.0
    %996 = vmatprep.subr.mxu0 0.0
    %997 = vmatpush2.msra.mxu0 0.0
    %998 = vmatprep.subr.mxu0 0.0
    %999 = vmatpush2.msra.mxu0 0.0
    %1000 = vmatprep.subr.mxu0 0.0
    %1001 = vmatpush2.msra.mxu0 0.0
    %1002 = vmatprep.subr.mxu0 0.0
    %1003 = vmatpush2.msra.mxu0 0.0
    %1004 = vmatprep.subr.mxu0 0.0
    %1005 = vmatpush2.msra.mxu0 0.0
    %1006 = vmatprep.subr.mxu0 0.0
    %1007 = vmatpush2.msra.mxu0 0.0
    %1008 = vmatprep.subr.mxu0 0.0
    %1009 = vmatpush2.msra.mxu0 0.0
    %1010 = vmatprep.subr.mxu0 0.0
    %1011 = vmatpush2.msra.mxu0 0.0
    %1012 = vmatprep.subr.mxu0 0.0
    %1013 = vmatpush2.msra.mxu0 0.0
    %1014 = vmatprep.mubr.f32.mxu0 0.0
    %1015 = vmatmul.mubr.f32.gmra.mxu0 %v948
    %v1016 = vpop.f32.mrf.mxu0
    %v1017 = vadd.f32 %v298, %v1016
    %v1018 = vpop.f32.mrf.mxu0
    %1019 = vdwg.mxu0
    %v1020 = vxor.u32 %v1017, 2147483648
    %v1021 = vmul.f32 %v1020, 1.442695
    %v1022 = vpow.pop %v1021
    %v1023 = vadd.f32 %v1022, 1.0
    %v1024 = vrcp.pop %v1023
    %v1025 = vmul.f32 1.0, %v1024
    %v1026 = vtanh.pop %v1017
    %v1027 = vmul.f32 %v1025, %v722
    %1029 = vrot.lane.b32.xlu0 %v1026, 104
    %v1030 = vpop.permute.xlu0 %1029
    %v1032 = vmul.f32 %v1025, %v1030
    %1034 = vrot.lane.b32.xlu0 %v1032, 8
    %v1035 = vpop.permute.xlu0 %1034
    %v1037 = vadd.f32 %v1027, %v1035
    %v1038 = vtanh.pop %v1037
    %1040 = vrot.lane.b32.xlu0 %v1038, 8
    %v1041 = vpop.permute.xlu0 %1040
    %v1043 = vmul.f32 %v1025, %v1041
    %1045 = vrot.lane.b32.xlu0 %v1043, 112
    %v1046 = vpop.permute.xlu0 %1045
    %1049 = vrot.lane.b32.xlu0 %v834, 120
    %v1050 = vpop.permute.xlu0 %1049
    %v1052 = vsel %vm175, %v1046, %v1050
    %v1054 = vsel %vm300, %v1052, 0
    %1056 = vmatprep.subr.mxu0 0.0
    %1057 = vmatpush1.msra.mxu0 0.0
    %1058 = vmatprep.subr.mxu0 0.0
    %1059 = vmatpush1.msra.mxu0 0.0
    %1060 = vmatprep.subr.mxu0 0.0
    %1061 = vmatpush1.msra.mxu0 0.0
    %1062 = vmatprep.subr.mxu0 0.0
    %1063 = vmatpush1.msra.mxu0 0.0
    %1064 = vmatprep.subr.mxu0 0.0
    %1065 = vmatpush1.msra.mxu0 0.0
    %1066 = vmatprep.subr.mxu0 0.0
    %1067 = vmatpush1.msra.mxu0 0.0
    %1068 = vmatprep.subr.mxu0 0.0
    %1069 = vmatpush1.msra.mxu0 0.0
    %1070 = vmatprep.subr.mxu0 0.0
    %1071 = vmatpush1.msra.mxu0 0.0
    %1072 = vmatprep.subr.mxu0 0.0
    %1073 = vmatpush1.msra.mxu0 0.0
    %1074 = vmatprep.subr.mxu0 0.0
    %1075 = vmatpush1.msra.mxu0 0.0
    %1076 = vmatprep.subr.mxu0 0.0
    %1077 = vmatpush1.msra.mxu0 0.0
    %1078 = vmatprep.subr.mxu0 0.0
    %1079 = vmatpush1.msra.mxu0 0.0
    %1080 = vmatprep.subr.mxu0 0.0
    %1081 = vmatpush1.msra.mxu0 0.0
    %1082 = vmatprep.subr.mxu0 0.0
    %1083 = vmatpush1.msra.mxu0 0.0
    %1084 = vmatprep.subr.mxu0 0.0
    %1085 = vmatpush1.msra.mxu0 %v59
    %1086 = vmatprep.subr.mxu0 0.0
    %1087 = vmatpush1.msra.mxu0 %v58
    %1088 = vmatprep.subr.mxu0 0.0
    %1089 = vmatpush2.msra.mxu0 0.0
    %1090 = vmatprep.subr.mxu0 0.0
    %1091 = vmatpush2.msra.mxu0 0.0
    %1092 = vmatprep.subr.mxu0 0.0
    %1093 = vmatpush2.msra.mxu0 0.0
    %1094 = vmatprep.subr.mxu0 0.0
    %1095 = vmatpush2.msra.mxu0 0.0
    %1096 = vmatprep.subr.mxu0 0.0
    %1097 = vmatpush2.msra.mxu0 0.0
    %1098 = vmatprep.subr.mxu0 0.0
    %1099 = vmatpush2.msra.mxu0 0.0
    %1100 = vmatprep.subr.mxu0 0.0
    %1101 = vmatpush2.msra.mxu0 0.0
    %1102 = vmatprep.subr.mxu0 0.0
    %1103 = vmatpush2.msra.mxu0 0.0
    %1104 = vmatprep.subr.mxu0 0.0
    %1105 = vmatpush2.msra.mxu0 0.0
    %1106 = vmatprep.subr.mxu0 0.0
    %1107 = vmatpush2.msra.mxu0 0.0
    %1108 = vmatprep.subr.mxu0 0.0
    %1109 = vmatpush2.msra.mxu0 0.0
    %1110 = vmatprep.subr.mxu0 0.0
    %1111 = vmatpush2.msra.mxu0 0.0
    %1112 = vmatprep.subr.mxu0 0.0
    %1113 = vmatpush2.msra.mxu0 0.0
    %1114 = vmatprep.subr.mxu0 0.0
    %1115 = vmatpush2.msra.mxu0 0.0
    %1116 = vmatprep.subr.mxu0 0.0
    %1117 = vmatpush2.msra.mxu0 0.0
    %1118 = vmatprep.subr.mxu0 0.0
    %1119 = vmatpush2.msra.mxu0 0.0
    %1120 = vmatprep.mubr.f32.mxu0 0.0
    %1121 = vmatmul.mubr.f32.gmra.mxu0 %v1054
    %v1122 = vpop.f32.mrf.mxu0
    %v1123 = vadd.f32 %v415, %v1122
    %v1124 = vpop.f32.mrf.mxu0
    %1125 = vdwg.mxu0
    %v1126 = vxor.u32 %v1123, 2147483648
    %v1127 = vmul.f32 %v1126, 1.442695
    %v1128 = vpow.pop %v1127
    %v1129 = vadd.f32 %v1128, 1.0
    %v1130 = vrcp.pop %v1129
    %v1131 = vmul.f32 1.0, %v1130
    %v1132 = vtanh.pop %v1123
    %v1133 = vmul.f32 %v1131, %v828
    %1135 = vrot.lane.b32.xlu0 %v1132, 104
    %v1136 = vpop.permute.xlu0 %1135
    %v1138 = vmul.f32 %v1131, %v1136
    %1140 = vrot.lane.b32.xlu0 %v1138, 8
    %v1141 = vpop.permute.xlu0 %1140
    %v1143 = vadd.f32 %v1133, %v1141
    %v1144 = vtanh.pop %v1143
    %1146 = vrot.lane.b32.xlu0 %v1144, 8
    %v1147 = vpop.permute.xlu0 %1146
    %v1149 = vmul.f32 %v1131, %v1147
    %v1150 = vsel %vm175, %v941, 0
    %1152 = vmatprep.subr.mxu0 0.0
    %1153 = vmatpush1.msra.mxu0 0.0
    %1154 = vmatprep.subr.mxu0 0.0
    %1155 = vmatpush1.msra.mxu0 0.0
    %1156 = vmatprep.subr.mxu0 0.0
    %1157 = vmatpush1.msra.mxu0 0.0
    %1158 = vmatprep.subr.mxu0 0.0
    %1159 = vmatpush1.msra.mxu0 0.0
    %1160 = vmatprep.subr.mxu0 0.0
    %1161 = vmatpush1.msra.mxu0 0.0
    %1162 = vmatprep.subr.mxu0 0.0
    %1163 = vmatpush1.msra.mxu0 0.0
    %1164 = vmatprep.subr.mxu0 0.0
    %1165 = vmatpush1.msra.mxu0 0.0
    %1166 = vmatprep.subr.mxu0 0.0
    %1167 = vmatpush1.msra.mxu0 0.0
    %1168 = vmatprep.subr.mxu0 0.0
    %1169 = vmatpush1.msra.mxu0 0.0
    %1170 = vmatprep.subr.mxu0 0.0
    %1171 = vmatpush1.msra.mxu0 0.0
    %1172 = vmatprep.subr.mxu0 0.0
    %1173 = vmatpush1.msra.mxu0 0.0
    %1174 = vmatprep.subr.mxu0 0.0
    %1175 = vmatpush1.msra.mxu0 0.0
    %1176 = vmatprep.subr.mxu0 0.0
    %1177 = vmatpush1.msra.mxu0 0.0
    %1178 = vmatprep.subr.mxu0 0.0
    %1179 = vmatpush1.msra.mxu0 0.0
    %1180 = vmatprep.subr.mxu0 0.0
    %1181 = vmatpush1.msra.mxu0 0.0
    %1182 = vmatprep.subr.mxu0 0.0
    %1183 = vmatpush1.msra.mxu0 %v55
    %1184 = vmatprep.subr.mxu0 0.0
    %1185 = vmatpush2.msra.mxu0 0.0
    %1186 = vmatprep.subr.mxu0 0.0
    %1187 = vmatpush2.msra.mxu0 0.0
    %1188 = vmatprep.subr.mxu0 0.0
    %1189 = vmatpush2.msra.mxu0 0.0
    %1190 = vmatprep.subr.mxu0 0.0
    %1191 = vmatpush2.msra.mxu0 0.0
    %1192 = vmatprep.subr.mxu0 0.0
    %1193 = vmatpush2.msra.mxu0 0.0
    %1194 = vmatprep.subr.mxu0 0.0
    %1195 = vmatpush2.msra.mxu0 0.0
    %1196 = vmatprep.subr.mxu0 0.0
    %1197 = vmatpush2.msra.mxu0 0.0
    %1198 = vmatprep.subr.mxu0 0.0
    %1199 = vmatpush2.msra.mxu0 0.0
    %1200 = vmatprep.subr.mxu0 0.0
    %1201 = vmatpush2.msra.mxu0 0.0
    %1202 = vmatprep.subr.mxu0 0.0
    %1203 = vmatpush2.msra.mxu0 0.0
    %1204 = vmatprep.subr.mxu0 0.0
    %1205 = vmatpush2.msra.mxu0 0.0
    %1206 = vmatprep.subr.mxu0 0.0
    %1207 = vmatpush2.msra.mxu0 0.0
    %1208 = vmatprep.subr.mxu0 0.0
    %1209 = vmatpush2.msra.mxu0 0.0
    %1210 = vmatprep.subr.mxu0 0.0
    %1211 = vmatpush2.msra.mxu0 0.0
    %1212 = vmatprep.subr.mxu0 0.0
    %1213 = vmatpush2.msra.mxu0 0.0
    %1214 = vmatprep.subr.mxu0 0.0
    %1215 = vmatpush2.msra.mxu0 0.0
    %1216 = vmatprep.mubr.f32.mxu0 0.0
    %1217 = vmatmul.mubr.f32.gmra.mxu0 %v1150
    %v1218 = vpop.f32.mrf.mxu0
    %v1219 = vadd.f32 0.0, %v1218
    %v1220 = vpop.f32.mrf.mxu0
    %1221 = vdwg.mxu0
    %v1223 = vrot.slane %v1219, 4
    %v1225 = vadd.f32 %v162, %v1223
    %v1226 = vadd.f32 %v1225, %v254
    %v1227 = vxor.u32 %v1226, 2147483648
    %v1228 = vmul.f32 %v1227, 1.442695
    %v1229 = vpow.pop %v1228
    %v1230 = vadd.f32 %v1229, 1.0
    %v1231 = vrcp.pop %v1230
    %v1232 = vmul.f32 1.0, %v1231
    %v1233 = vtanh.pop %v1226
    %v1235 = vrot.slane %v932, 4
    %v1237 = vmul.f32 %v1232, %v1235
    %1239 = vrot.lane.b32.xlu0 %v1233, 104
    %v1240 = vpop.permute.xlu0 %1239
    %v1242 = vmul.f32 %v1232, %v1240
    %1244 = vrot.lane.b32.xlu0 %v1242, 8
    %v1245 = vpop.permute.xlu0 %1244
    %v1247 = vadd.f32 %v1237, %v1245
    %v1248 = vtanh.pop %v1247
    %1250 = vrot.lane.b32.xlu0 %v1248, 8
    %v1251 = vpop.permute.xlu0 %1250
    %v1253 = vmul.f32 %v1232, %v1251
    %1255 = vrot.lane.b32.xlu0 %v1253, 112
    %v1256 = vpop.permute.xlu0 %1255
    %v1258 = vrot.slane %v1043, 4
    %1259 = vrot.lane.b32.xlu0 %v1258, 120
    %v1260 = vpop.permute.xlu0 %1259
    %v1262 = vsel %vm175, %v1256, %v1260
    %v1264 = vrot.slane %v1262, 4
    %v1265 = vsel %vm300, %v1264, 0
    %1267 = vmatprep.subr.mxu0 0.0
    %1268 = vmatpush1.msra.mxu0 0.0
    %1269 = vmatprep.subr.mxu0 0.0
    %1270 = vmatpush1.msra.mxu0 0.0
    %1271 = vmatprep.subr.mxu0 0.0
    %1272 = vmatpush1.msra.mxu0 0.0
    %1273 = vmatprep.subr.mxu0 0.0
    %1274 = vmatpush1.msra.mxu0 0.0
    %1275 = vmatprep.subr.mxu0 0.0
    %1276 = vmatpush1.msra.mxu0 0.0
    %1277 = vmatprep.subr.mxu0 0.0
    %1278 = vmatpush1.msra.mxu0 0.0
    %1279 = vmatprep.subr.mxu0 0.0
    %1280 = vmatpush1.msra.mxu0 0.0
    %1281 = vmatprep.subr.mxu0 0.0
    %1282 = vmatpush1.msra.mxu0 0.0
    %1283 = vmatprep.subr.mxu0 0.0
    %1284 = vmatpush1.msra.mxu0 0.0
    %1285 = vmatprep.subr.mxu0 0.0
    %1286 = vmatpush1.msra.mxu0 0.0
    %1287 = vmatprep.subr.mxu0 0.0
    %1288 = vmatpush1.msra.mxu0 0.0
    %1289 = vmatprep.subr.mxu0 0.0
    %1290 = vmatpush1.msra.mxu0 0.0
    %1291 = vmatprep.subr.mxu0 0.0
    %1292 = vmatpush1.msra.mxu0 0.0
    %1293 = vmatprep.subr.mxu0 0.0
    %1294 = vmatpush1.msra.mxu0 0.0
    %1295 = vmatprep.subr.mxu0 0.0
    %1296 = vmatpush1.msra.mxu0 %v57
    %1297 = vmatprep.subr.mxu0 0.0
    %1298 = vmatpush1.msra.mxu0 %v56
    %1299 = vmatprep.subr.mxu0 0.0
    %1300 = vmatpush2.msra.mxu0 0.0
    %1301 = vmatprep.subr.mxu0 0.0
    %1302 = vmatpush2.msra.mxu0 0.0
    %1303 = vmatprep.subr.mxu0 0.0
    %1304 = vmatpush2.msra.mxu0 0.0
    %1305 = vmatprep.subr.mxu0 0.0
    %1306 = vmatpush2.msra.mxu0 0.0
    %1307 = vmatprep.subr.mxu0 0.0
    %1308 = vmatpush2.msra.mxu0 0.0
    %1309 = vmatprep.subr.mxu0 0.0
    %1310 = vmatpush2.msra.mxu0 0.0
    %1311 = vmatprep.subr.mxu0 0.0
    %1312 = vmatpush2.msra.mxu0 0.0
    %1313 = vmatprep.subr.mxu0 0.0
    %1314 = vmatpush2.msra.mxu0 0.0
    %1315 = vmatprep.subr.mxu0 0.0
    %1316 = vmatpush2.msra.mxu0 0.0
    %1317 = vmatprep.subr.mxu0 0.0
    %1318 = vmatpush2.msra.mxu0 0.0
    %1319 = vmatprep.subr.mxu0 0.0
    %1320 = vmatpush2.msra.mxu0 0.0
    %1321 = vmatprep.subr.mxu0 0.0
    %1322 = vmatpush2.msra.mxu0 0.0
    %1323 = vmatprep.subr.mxu0 0.0
    %1324 = vmatpush2.msra.mxu0 0.0
    %1325 = vmatprep.subr.mxu0 0.0
    %1326 = vmatpush2.msra.mxu0 0.0
    %1327 = vmatprep.subr.mxu0 0.0
    %1328 = vmatpush2.msra.mxu0 0.0
    %1329 = vmatprep.subr.mxu0 0.0
    %1330 = vmatpush2.msra.mxu0 0.0
    %1331 = vmatprep.mubr.f32.mxu0 0.0
    %1332 = vmatmul.mubr.f32.gmra.mxu0 %v1265
    %v1333 = vpop.f32.mrf.mxu0
    %v1334 = vadd.f32 %v298, %v1333
    %v1335 = vpop.f32.mrf.mxu0
    %1336 = vdwg.mxu0
    %v1337 = vxor.u32 %v1334, 2147483648
    %v1338 = vmul.f32 %v1337, 1.442695
    %v1339 = vpow.pop %v1338
    %v1340 = vadd.f32 %v1339, 1.0
    %v1341 = vrcp.pop %v1340
    %v1342 = vmul.f32 1.0, %v1341
    %v1343 = vtanh.pop %v1334
    %v1344 = vmul.f32 %v1342, %v1037
    %1346 = vrot.lane.b32.xlu0 %v1343, 104
    %v1347 = vpop.permute.xlu0 %1346
    %v1349 = vmul.f32 %v1342, %v1347
    %1351 = vrot.lane.b32.xlu0 %v1349, 8
    %v1352 = vpop.permute.xlu0 %1351
    %v1354 = vadd.f32 %v1344, %v1352
    %v1355 = vtanh.pop %v1354
    %1357 = vrot.lane.b32.xlu0 %v1355, 8
    %v1358 = vpop.permute.xlu0 %1357
    %v1360 = vmul.f32 %v1342, %v1358
    %1362 = vrot.lane.b32.xlu0 %v1360, 112
    %v1363 = vpop.permute.xlu0 %1362
    %1366 = vrot.lane.b32.xlu0 %v1149, 120
    %v1367 = vpop.permute.xlu0 %1366
    %v1369 = vsel %vm175, %v1363, %v1367
    %v1371 = vsel %vm300, %v1369, 0
    %1373 = vmatprep.subr.mxu0 0.0
    %1374 = vmatpush1.msra.mxu0 0.0
    %1375 = vmatprep.subr.mxu0 0.0
    %1376 = vmatpush1.msra.mxu0 0.0
    %1377 = vmatprep.subr.mxu0 0.0
    %1378 = vmatpush1.msra.mxu0 0.0
    %1379 = vmatprep.subr.mxu0 0.0
    %1380 = vmatpush1.msra.mxu0 0.0
    %1381 = vmatprep.subr.mxu0 0.0
    %1382 = vmatpush1.msra.mxu0 0.0
    %1383 = vmatprep.subr.mxu0 0.0
    %1384 = vmatpush1.msra.mxu0 0.0
    %1385 = vmatprep.subr.mxu0 0.0
    %1386 = vmatpush1.msra.mxu0 0.0
    %1387 = vmatprep.subr.mxu0 0.0
    %1388 = vmatpush1.msra.mxu0 0.0
    %1389 = vmatprep.subr.mxu0 0.0
    %1390 = vmatpush1.msra.mxu0 0.0
    %1391 = vmatprep.subr.mxu0 0.0
    %1392 = vmatpush1.msra.mxu0 0.0
    %1393 = vmatprep.subr.mxu0 0.0
    %1394 = vmatpush1.msra.mxu0 0.0
    %1395 = vmatprep.subr.mxu0 0.0
    %1396 = vmatpush1.msra.mxu0 0.0
    %1397 = vmatprep.subr.mxu0 0.0
    %1398 = vmatpush1.msra.mxu0 0.0
    %1399 = vmatprep.subr.mxu0 0.0
    %1400 = vmatpush1.msra.mxu0 0.0
    %1401 = vmatprep.subr.mxu0 0.0
    %1402 = vmatpush1.msra.mxu0 %v59
    %1403 = vmatprep.subr.mxu0 0.0
    %1404 = vmatpush1.msra.mxu0 %v58
    %1405 = vmatprep.subr.mxu0 0.0
    %1406 = vmatpush2.msra.mxu0 0.0
    %1407 = vmatprep.subr.mxu0 0.0
    %1408 = vmatpush2.msra.mxu0 0.0
    %1409 = vmatprep.subr.mxu0 0.0
    %1410 = vmatpush2.msra.mxu0 0.0
    %1411 = vmatprep.subr.mxu0 0.0
    %1412 = vmatpush2.msra.mxu0 0.0
    %1413 = vmatprep.subr.mxu0 0.0
    %1414 = vmatpush2.msra.mxu0 0.0
    %1415 = vmatprep.subr.mxu0 0.0
    %1416 = vmatpush2.msra.mxu0 0.0
    %1417 = vmatprep.subr.mxu0 0.0
    %1418 = vmatpush2.msra.mxu0 0.0
    %1419 = vmatprep.subr.mxu0 0.0
    %1420 = vmatpush2.msra.mxu0 0.0
    %1421 = vmatprep.subr.mxu0 0.0
    %1422 = vmatpush2.msra.mxu0 0.0
    %1423 = vmatprep.subr.mxu0 0.0
    %1424 = vmatpush2.msra.mxu0 0.0
    %1425 = vmatprep.subr.mxu0 0.0
    %1426 = vmatpush2.msra.mxu0 0.0
    %1427 = vmatprep.subr.mxu0 0.0
    %1428 = vmatpush2.msra.mxu0 0.0
    %1429 = vmatprep.subr.mxu0 0.0
    %1430 = vmatpush2.msra.mxu0 0.0
    %1431 = vmatprep.subr.mxu0 0.0
    %1432 = vmatpush2.msra.mxu0 0.0
    %1433 = vmatprep.subr.mxu0 0.0
    %1434 = vmatpush2.msra.mxu0 0.0
    %1435 = vmatprep.subr.mxu0 0.0
    %1436 = vmatpush2.msra.mxu0 0.0
    %1437 = vmatprep.mubr.f32.mxu0 0.0
    %1438 = vmatmul.mubr.f32.gmra.mxu0 %v1371
    %v1439 = vpop.f32.mrf.mxu0
    %v1440 = vadd.f32 %v415, %v1439
    %v1441 = vpop.f32.mrf.mxu0
    %1442 = vdwg.mxu0
    %v1443 = vxor.u32 %v1440, 2147483648
    %v1444 = vmul.f32 %v1443, 1.442695
    %v1445 = vpow.pop %v1444
    %v1446 = vadd.f32 %v1445, 1.0
    %v1447 = vrcp.pop %v1446
    %v1448 = vmul.f32 1.0, %v1447
    %v1449 = vtanh.pop %v1440
    %v1450 = vmul.f32 %v1448, %v1143
    %1452 = vrot.lane.b32.xlu0 %v1449, 104
    %v1453 = vpop.permute.xlu0 %1452
    %v1455 = vmul.f32 %v1448, %v1453
    %1457 = vrot.lane.b32.xlu0 %v1455, 8
    %v1458 = vpop.permute.xlu0 %1457
    %v1460 = vadd.f32 %v1450, %v1458
    %v1461 = vtanh.pop %v1460
    %1463 = vrot.lane.b32.xlu0 %v1461, 8
    %v1464 = vpop.permute.xlu0 %1463
    %v1466 = vmul.f32 %v1448, %v1464
    %v1467 = vrot.slane %v1253, 4
    %1468 = vrot.lane.b32.xlu0 %v1467, 112
    %v1469 = vpop.permute.xlu0 %1468
    %v1470 = vsel %vm175, %v1469, 0
    %1472 = vmatprep.subr.mxu0 0.0
    %1473 = vmatpush1.msra.mxu0 0.0
    %1474 = vmatprep.subr.mxu0 0.0
    %1475 = vmatpush1.msra.mxu0 0.0
    %1476 = vmatprep.subr.mxu0 0.0
    %1477 = vmatpush1.msra.mxu0 0.0
    %1478 = vmatprep.subr.mxu0 0.0
    %1479 = vmatpush1.msra.mxu0 0.0
    %1480 = vmatprep.subr.mxu0 0.0
    %1481 = vmatpush1.msra.mxu0 0.0
    %1482 = vmatprep.subr.mxu0 0.0
    %1483 = vmatpush1.msra.mxu0 0.0
    %1484 = vmatprep.subr.mxu0 0.0
    %1485 = vmatpush1.msra.mxu0 0.0
    %1486 = vmatprep.subr.mxu0 0.0
    %1487 = vmatpush1.msra.mxu0 0.0
    %1488 = vmatprep.subr.mxu0 0.0
    %1489 = vmatpush1.msra.mxu0 0.0
    %1490 = vmatprep.subr.mxu0 0.0
    %1491 = vmatpush1.msra.mxu0 0.0
    %1492 = vmatprep.subr.mxu0 0.0
    %1493 = vmatpush1.msra.mxu0 0.0
    %1494 = vmatprep.subr.mxu0 0.0
    %1495 = vmatpush1.msra.mxu0 0.0
    %1496 = vmatprep.subr.mxu0 0.0
    %1497 = vmatpush1.msra.mxu0 0.0
    %1498 = vmatprep.subr.mxu0 0.0
    %1499 = vmatpush1.msra.mxu0 0.0
    %1500 = vmatprep.subr.mxu0 0.0
    %1501 = vmatpush1.msra.mxu0 0.0
    %1502 = vmatprep.subr.mxu0 0.0
    %1503 = vmatpush1.msra.mxu0 %v55
    %1504 = vmatprep.subr.mxu0 0.0
    %1505 = vmatpush2.msra.mxu0 0.0
    %1506 = vmatprep.subr.mxu0 0.0
    %1507 = vmatpush2.msra.mxu0 0.0
    %1508 = vmatprep.subr.mxu0 0.0
    %1509 = vmatpush2.msra.mxu0 0.0
    %1510 = vmatprep.subr.mxu0 0.0
    %1511 = vmatpush2.msra.mxu0 0.0
    %1512 = vmatprep.subr.mxu0 0.0
    %1513 = vmatpush2.msra.mxu0 0.0
    %1514 = vmatprep.subr.mxu0 0.0
    %1515 = vmatpush2.msra.mxu0 0.0
    %1516 = vmatprep.subr.mxu0 0.0
    %1517 = vmatpush2.msra.mxu0 0.0
    %1518 = vmatprep.subr.mxu0 0.0
    %1519 = vmatpush2.msra.mxu0 0.0
    %1520 = vmatprep.subr.mxu0 0.0
    %1521 = vmatpush2.msra.mxu0 0.0
    %1522 = vmatprep.subr.mxu0 0.0
    %1523 = vmatpush2.msra.mxu0 0.0
    %1524 = vmatprep.subr.mxu0 0.0
    %1525 = vmatpush2.msra.mxu0 0.0
    %1526 = vmatprep.subr.mxu0 0.0
    %1527 = vmatpush2.msra.mxu0 0.0
    %1528 = vmatprep.subr.mxu0 0.0
    %1529 = vmatpush2.msra.mxu0 0.0
    %1530 = vmatprep.subr.mxu0 0.0
    %1531 = vmatpush2.msra.mxu0 0.0
    %1532 = vmatprep.subr.mxu0 0.0
    %1533 = vmatpush2.msra.mxu0 0.0
    %1534 = vmatprep.subr.mxu0 0.0
    %1535 = vmatpush2.msra.mxu0 0.0
    %1536 = vmatprep.mubr.f32.mxu0 0.0
    %1537 = vmatmul.mubr.f32.gmra.mxu0 %v1470
    %v1538 = vpop.f32.mrf.mxu0
    %v1539 = vadd.f32 0.0, %v1538
    %v1540 = vpop.f32.mrf.mxu0
    %1541 = vdwg.mxu0
    %v1542 = vadd.f32 %v167, %v1539
    %v1543 = vadd.f32 %v1542, %v254
    %v1544 = vxor.u32 %v1543, 2147483648
    %v1545 = vmul.f32 %v1544, 1.442695
    %v1546 = vpow.pop %v1545
    %v1547 = vadd.f32 %v1546, 1.0
    %v1548 = vrcp.pop %v1547
    %v1549 = vmul.f32 1.0, %v1548
    %v1550 = vtanh.pop %v1543
    %v1552 = vrot.slane %v1247, 4
    %v1554 = vmul.f32 %v1549, %v1552
    %1556 = vrot.lane.b32.xlu0 %v1550, 104
    %v1557 = vpop.permute.xlu0 %1556
    %v1559 = vmul.f32 %v1549, %v1557
    %1561 = vrot.lane.b32.xlu0 %v1559, 8
    %v1562 = vpop.permute.xlu0 %1561
    %v1564 = vadd.f32 %v1554, %v1562
    %v1565 = vtanh.pop %v1564
    %1567 = vrot.lane.b32.xlu0 %v1565, 8
    %v1568 = vpop.permute.xlu0 %1567
    %v1570 = vmul.f32 %v1549, %v1568
    %1572 = vrot.lane.b32.xlu0 %v1570, 112
    %v1573 = vpop.permute.xlu0 %1572
    %1575 = vrot.lane.b32.xlu0 %v1360, 120
    %v1576 = vpop.permute.xlu0 %1575
    %v1578 = vsel %vm175, %v1573, %v1576
    %v1580 = vsel %vm300, %v1578, 0
    %1582 = vmatprep.subr.mxu0 0.0
    %1583 = vmatpush1.msra.mxu0 0.0
    %1584 = vmatprep.subr.mxu0 0.0
    %1585 = vmatpush1.msra.mxu0 0.0
    %1586 = vmatprep.subr.mxu0 0.0
    %1587 = vmatpush1.msra.mxu0 0.0
    %1588 = vmatprep.subr.mxu0 0.0
    %1589 = vmatpush1.msra.mxu0 0.0
    %1590 = vmatprep.subr.mxu0 0.0
    %1591 = vmatpush1.msra.mxu0 0.0
    %1592 = vmatprep.subr.mxu0 0.0
    %1593 = vmatpush1.msra.mxu0 0.0
    %1594 = vmatprep.subr.mxu0 0.0
    %1595 = vmatpush1.msra.mxu0 0.0
    %1596 = vmatprep.subr.mxu0 0.0
    %1597 = vmatpush1.msra.mxu0 0.0
    %1598 = vmatprep.subr.mxu0 0.0
    %1599 = vmatpush1.msra.mxu0 0.0
    %1600 = vmatprep.subr.mxu0 0.0
    %1601 = vmatpush1.msra.mxu0 0.0
    %1602 = vmatprep.subr.mxu0 0.0
    %1603 = vmatpush1.msra.mxu0 0.0
    %1604 = vmatprep.subr.mxu0 0.0
    %1605 = vmatpush1.msra.mxu0 0.0
    %1606 = vmatprep.subr.mxu0 0.0
    %1607 = vmatpush1.msra.mxu0 0.0
    %1608 = vmatprep.subr.mxu0 0.0
    %1609 = vmatpush1.msra.mxu0 0.0
    %1610 = vmatprep.subr.mxu0 0.0
    %1611 = vmatpush1.msra.mxu0 %v57
    %1612 = vmatprep.subr.mxu0 0.0
    %1613 = vmatpush1.msra.mxu0 %v56
    %1614 = vmatprep.subr.mxu0 0.0
    %1615 = vmatpush2.msra.mxu0 0.0
    %1616 = vmatprep.subr.mxu0 0.0
    %1617 = vmatpush2.msra.mxu0 0.0
    %1618 = vmatprep.subr.mxu0 0.0
    %1619 = vmatpush2.msra.mxu0 0.0
    %1620 = vmatprep.subr.mxu0 0.0
    %1621 = vmatpush2.msra.mxu0 0.0
    %1622 = vmatprep.subr.mxu0 0.0
    %1623 = vmatpush2.msra.mxu0 0.0
    %1624 = vmatprep.subr.mxu0 0.0
    %1625 = vmatpush2.msra.mxu0 0.0
    %1626 = vmatprep.subr.mxu0 0.0
    %1627 = vmatpush2.msra.mxu0 0.0
    %1628 = vmatprep.subr.mxu0 0.0
    %1629 = vmatpush2.msra.mxu0 0.0
    %1630 = vmatprep.subr.mxu0 0.0
    %1631 = vmatpush2.msra.mxu0 0.0
    %1632 = vmatprep.subr.mxu0 0.0
    %1633 = vmatpush2.msra.mxu0 0.0
    %1634 = vmatprep.subr.mxu0 0.0
    %1635 = vmatpush2.msra.mxu0 0.0
    %1636 = vmatprep.subr.mxu0 0.0
    %1637 = vmatpush2.msra.mxu0 0.0
    %1638 = vmatprep.subr.mxu0 0.0
    %1639 = vmatpush2.msra.mxu0 0.0
    %1640 = vmatprep.subr.mxu0 0.0
    %1641 = vmatpush2.msra.mxu0 0.0
    %1642 = vmatprep.subr.mxu0 0.0
    %1643 = vmatpush2.msra.mxu0 0.0
    %1644 = vmatprep.subr.mxu0 0.0
    %1645 = vmatpush2.msra.mxu0 0.0
    %1646 = vmatprep.mubr.f32.mxu0 0.0
    %1647 = vmatmul.mubr.f32.gmra.mxu0 %v1580
    %v1648 = vpop.f32.mrf.mxu0
    %v1649 = vadd.f32 %v298, %v1648
    %v1650 = vpop.f32.mrf.mxu0
    %1651 = vdwg.mxu0
    %v1652 = vxor.u32 %v1649, 2147483648
    %v1653 = vmul.f32 %v1652, 1.442695
    %v1654 = vpow.pop %v1653
    %v1655 = vadd.f32 %v1654, 1.0
    %v1656 = vrcp.pop %v1655
    %v1657 = vmul.f32 1.0, %v1656
    %v1658 = vtanh.pop %v1649
    %v1659 = vmul.f32 %v1657, %v1354
    %1661 = vrot.lane.b32.xlu0 %v1658, 104
    %v1662 = vpop.permute.xlu0 %1661
    %v1664 = vmul.f32 %v1657, %v1662
    %1666 = vrot.lane.b32.xlu0 %v1664, 8
    %v1667 = vpop.permute.xlu0 %1666
    %v1669 = vadd.f32 %v1659, %v1667
    %v1670 = vtanh.pop %v1669
    %1672 = vrot.lane.b32.xlu0 %v1670, 8
    %v1673 = vpop.permute.xlu0 %1672
    %v1675 = vmul.f32 %v1657, %v1673
    %1677 = vrot.lane.b32.xlu0 %v1675, 112
    %v1678 = vpop.permute.xlu0 %1677
    %1681 = vrot.lane.b32.xlu0 %v1466, 120
    %v1682 = vpop.permute.xlu0 %1681
    %v1684 = vsel %vm175, %v1678, %v1682
    %v1686 = vsel %vm300, %v1684, 0
    %1688 = vmatprep.subr.mxu0 0.0
    %1689 = vmatpush1.msra.mxu0 0.0
    %1690 = vmatprep.subr.mxu0 0.0
    %1691 = vmatpush1.msra.mxu0 0.0
    %1692 = vmatprep.subr.mxu0 0.0
    %1693 = vmatpush1.msra.mxu0 0.0
    %1694 = vmatprep.subr.mxu0 0.0
    %1695 = vmatpush1.msra.mxu0 0.0
    %1696 = vmatprep.subr.mxu0 0.0
    %1697 = vmatpush1.msra.mxu0 0.0
    %1698 = vmatprep.subr.mxu0 0.0
    %1699 = vmatpush1.msra.mxu0 0.0
    %1700 = vmatprep.subr.mxu0 0.0
    %1701 = vmatpush1.msra.mxu0 0.0
    %1702 = vmatprep.subr.mxu0 0.0
    %1703 = vmatpush1.msra.mxu0 0.0
    %1704 = vmatprep.subr.mxu0 0.0
    %1705 = vmatpush1.msra.mxu0 0.0
    %1706 = vmatprep.subr.mxu0 0.0
    %1707 = vmatpush1.msra.mxu0 0.0
    %1708 = vmatprep.subr.mxu0 0.0
    %1709 = vmatpush1.msra.mxu0 0.0
    %1710 = vmatprep.subr.mxu0 0.0
    %1711 = vmatpush1.msra.mxu0 0.0
    %1712 = vmatprep.subr.mxu0 0.0
    %1713 = vmatpush1.msra.mxu0 0.0
    %1714 = vmatprep.subr.mxu0 0.0
    %1715 = vmatpush1.msra.mxu0 0.0
    %1716 = vmatprep.subr.mxu0 0.0
    %1717 = vmatpush1.msra.mxu0 %v59
    %1718 = vmatprep.subr.mxu0 0.0
    %1719 = vmatpush1.msra.mxu0 %v58
    %1720 = vmatprep.subr.mxu0 0.0
    %1721 = vmatpush2.msra.mxu0 0.0
    %1722 = vmatprep.subr.mxu0 0.0
    %1723 = vmatpush2.msra.mxu0 0.0
    %1724 = vmatprep.subr.mxu0 0.0
    %1725 = vmatpush2.msra.mxu0 0.0
    %1726 = vmatprep.subr.mxu0 0.0
    %1727 = vmatpush2.msra.mxu0 0.0
    %1728 = vmatprep.subr.mxu0 0.0
    %1729 = vmatpush2.msra.mxu0 0.0
    %1730 = vmatprep.subr.mxu0 0.0
    %1731 = vmatpush2.msra.mxu0 0.0
    %1732 = vmatprep.subr.mxu0 0.0
    %1733 = vmatpush2.msra.mxu0 0.0
    %1734 = vmatprep.subr.mxu0 0.0
    %1735 = vmatpush2.msra.mxu0 0.0
    %1736 = vmatprep.subr.mxu0 0.0
    %1737 = vmatpush2.msra.mxu0 0.0
    %1738 = vmatprep.subr.mxu0 0.0
    %1739 = vmatpush2.msra.mxu0 0.0
    %1740 = vmatprep.subr.mxu0 0.0
    %1741 = vmatpush2.msra.mxu0 0.0
    %1742 = vmatprep.subr.mxu0 0.0
    %1743 = vmatpush2.msra.mxu0 0.0
    %1744 = vmatprep.subr.mxu0 0.0
    %1745 = vmatpush2.msra.mxu0 0.0
    %1746 = vmatprep.subr.mxu0 0.0
    %1747 = vmatpush2.msra.mxu0 0.0
    %1748 = vmatprep.subr.mxu0 0.0
    %1749 = vmatpush2.msra.mxu0 0.0
    %1750 = vmatprep.subr.mxu0 0.0
    %1751 = vmatpush2.msra.mxu0 0.0
    %1752 = vmatprep.mubr.f32.mxu0 0.0
    %1753 = vmatmul.mubr.f32.gmra.mxu0 %v1686
    %v1754 = vpop.f32.mrf.mxu0
    %v1755 = vadd.f32 %v415, %v1754
    %v1756 = vpop.f32.mrf.mxu0
    %1757 = vdwg.mxu0
    %v1758 = vxor.u32 %v1755, 2147483648
    %v1759 = vmul.f32 %v1758, 1.442695
    %v1760 = vpow.pop %v1759
    %v1761 = vadd.f32 %v1760, 1.0
    %v1762 = vrcp.pop %v1761
    %v1763 = vmul.f32 1.0, %v1762
    %v1764 = vtanh.pop %v1755
    %v1765 = vmul.f32 %v1763, %v1460
    %1767 = vrot.lane.b32.xlu0 %v1764, 104
    %v1768 = vpop.permute.xlu0 %1767
    %v1770 = vmul.f32 %v1763, %v1768
    %1772 = vrot.lane.b32.xlu0 %v1770, 8
    %v1773 = vpop.permute.xlu0 %1772
    %v1775 = vadd.f32 %v1765, %v1773
    %v1776 = vtanh.pop %v1775
    %1778 = vrot.lane.b32.xlu0 %v1776, 8
    %v1779 = vpop.permute.xlu0 %1778
    %v1781 = vmul.f32 %v1763, %v1779
    %v1782 = vsel %vm175, %v1573, 0
    %1784 = vmatprep.subr.mxu0 0.0
    %1785 = vmatpush1.msra.mxu0 0.0
    %1786 = vmatprep.subr.mxu0 0.0
    %1787 = vmatpush1.msra.mxu0 0.0
    %1788 = vmatprep.subr.mxu0 0.0
    %1789 = vmatpush1.msra.mxu0 0.0
    %1790 = vmatprep.subr.mxu0 0.0
    %1791 = vmatpush1.msra.mxu0 0.0
    %1792 = vmatprep.subr.mxu0 0.0
    %1793 = vmatpush1.msra.mxu0 0.0
    %1794 = vmatprep.subr.mxu0 0.0
    %1795 = vmatpush1.msra.mxu0 0.0
    %1796 = vmatprep.subr.mxu0 0.0
    %1797 = vmatpush1.msra.mxu0 0.0
    %1798 = vmatprep.subr.mxu0 0.0
    %1799 = vmatpush1.msra.mxu0 0.0
    %1800 = vmatprep.subr.mxu0 0.0
    %1801 = vmatpush1.msra.mxu0 0.0
    %1802 = vmatprep.subr.mxu0 0.0
    %1803 = vmatpush1.msra.mxu0 0.0
    %1804 = vmatprep.subr.mxu0 0.0
    %1805 = vmatpush1.msra.mxu0 0.0
    %1806 = vmatprep.subr.mxu0 0.0
    %1807 = vmatpush1.msra.mxu0 0.0
    %1808 = vmatprep.subr.mxu0 0.0
    %1809 = vmatpush1.msra.mxu0 0.0
    %1810 = vmatprep.subr.mxu0 0.0
    %1811 = vmatpush1.msra.mxu0 0.0
    %1812 = vmatprep.subr.mxu0 0.0
    %1813 = vmatpush1.msra.mxu0 0.0
    %1814 = vmatprep.subr.mxu0 0.0
    %1815 = vmatpush1.msra.mxu0 %v55
    %1816 = vmatprep.subr.mxu0 0.0
    %1817 = vmatpush2.msra.mxu0 0.0
    %1818 = vmatprep.subr.mxu0 0.0
    %1819 = vmatpush2.msra.mxu0 0.0
    %1820 = vmatprep.subr.mxu0 0.0
    %1821 = vmatpush2.msra.mxu0 0.0
    %1822 = vmatprep.subr.mxu0 0.0
    %1823 = vmatpush2.msra.mxu0 0.0
    %1824 = vmatprep.subr.mxu0 0.0
    %1825 = vmatpush2.msra.mxu0 0.0
    %1826 = vmatprep.subr.mxu0 0.0
    %1827 = vmatpush2.msra.mxu0 0.0
    %1828 = vmatprep.subr.mxu0 0.0
    %1829 = vmatpush2.msra.mxu0 0.0
    %1830 = vmatprep.subr.mxu0 0.0
    %1831 = vmatpush2.msra.mxu0 0.0
    %1832 = vmatprep.subr.mxu0 0.0
    %1833 = vmatpush2.msra.mxu0 0.0
    %1834 = vmatprep.subr.mxu0 0.0
    %1835 = vmatpush2.msra.mxu0 0.0
    %1836 = vmatprep.subr.mxu0 0.0
    %1837 = vmatpush2.msra.mxu0 0.0
    %1838 = vmatprep.subr.mxu0 0.0
    %1839 = vmatpush2.msra.mxu0 0.0
    %1840 = vmatprep.subr.mxu0 0.0
    %1841 = vmatpush2.msra.mxu0 0.0
    %1842 = vmatprep.subr.mxu0 0.0
    %1843 = vmatpush2.msra.mxu0 0.0
    %1844 = vmatprep.subr.mxu0 0.0
    %1845 = vmatpush2.msra.mxu0 0.0
    %1846 = vmatprep.subr.mxu0 0.0
    %1847 = vmatpush2.msra.mxu0 0.0
    %1848 = vmatprep.mubr.f32.mxu0 0.0
    %1849 = vmatmul.mubr.f32.gmra.mxu0 %v1782
    %v1850 = vpop.f32.mrf.mxu0
    %v1851 = vadd.f32 0.0, %v1850
    %v1852 = vpop.f32.mrf.mxu0
    %1853 = vdwg.mxu0
    %v1855 = vrot.slane %v1851, 4
    %v1857 = vadd.f32 %v167, %v1855
    %v1858 = vadd.f32 %v1857, %v254
    %v1859 = vxor.u32 %v1858, 2147483648
    %v1860 = vmul.f32 %v1859, 1.442695
    %v1861 = vpow.pop %v1860
    %v1862 = vadd.f32 %v1861, 1.0
    %v1863 = vrcp.pop %v1862
    %v1864 = vmul.f32 1.0, %v1863
    %v1865 = vtanh.pop %v1858
    %v1867 = vrot.slane %v1564, 4
    %v1869 = vmul.f32 %v1864, %v1867
    %1871 = vrot.lane.b32.xlu0 %v1865, 104
    %v1872 = vpop.permute.xlu0 %1871
    %v1874 = vmul.f32 %v1864, %v1872
    %1876 = vrot.lane.b32.xlu0 %v1874, 8
    %v1877 = vpop.permute.xlu0 %1876
    %v1879 = vadd.f32 %v1869, %v1877
    %v1880 = vtanh.pop %v1879
    %1882 = vrot.lane.b32.xlu0 %v1880, 8
    %v1883 = vpop.permute.xlu0 %1882
    %v1885 = vmul.f32 %v1864, %v1883
    %1887 = vrot.lane.b32.xlu0 %v1885, 112
    %v1888 = vpop.permute.xlu0 %1887
    %v1890 = vrot.slane %v1675, 4
    %1891 = vrot.lane.b32.xlu0 %v1890, 120
    %v1892 = vpop.permute.xlu0 %1891
    %v1894 = vsel %vm175, %v1888, %v1892
    %v1896 = vrot.slane %v1894, 4
    %v1897 = vsel %vm300, %v1896, 0
    %1899 = vmatprep.subr.mxu0 0.0
    %1900 = vmatpush1.msra.mxu0 0.0
    %1901 = vmatprep.subr.mxu0 0.0
    %1902 = vmatpush1.msra.mxu0 0.0
    %1903 = vmatprep.subr.mxu0 0.0
    %1904 = vmatpush1.msra.mxu0 0.0
    %1905 = vmatprep.subr.mxu0 0.0
    %1906 = vmatpush1.msra.mxu0 0.0
    %1907 = vmatprep.subr.mxu0 0.0
    %1908 = vmatpush1.msra.mxu0 0.0
    %1909 = vmatprep.subr.mxu0 0.0
    %1910 = vmatpush1.msra.mxu0 0.0
    %1911 = vmatprep.subr.mxu0 0.0
    %1912 = vmatpush1.msra.mxu0 0.0
    %1913 = vmatprep.subr.mxu0 0.0
    %1914 = vmatpush1.msra.mxu0 0.0
    %1915 = vmatprep.subr.mxu0 0.0
    %1916 = vmatpush1.msra.mxu0 0.0
    %1917 = vmatprep.subr.mxu0 0.0
    %1918 = vmatpush1.msra.mxu0 0.0
    %1919 = vmatprep.subr.mxu0 0.0
    %1920 = vmatpush1.msra.mxu0 0.0
    %1921 = vmatprep.subr.mxu0 0.0
    %1922 = vmatpush1.msra.mxu0 0.0
    %1923 = vmatprep.subr.mxu0 0.0
    %1924 = vmatpush1.msra.mxu0 0.0
    %1925 = vmatprep.subr.mxu0 0.0
    %1926 = vmatpush1.msra.mxu0 0.0
    %1927 = vmatprep.subr.mxu0 0.0
    %1928 = vmatpush1.msra.mxu0 %v57
    %1929 = vmatprep.subr.mxu0 0.0
    %1930 = vmatpush1.msra.mxu0 %v56
    %1931 = vmatprep.subr.mxu0 0.0
    %1932 = vmatpush2.msra.mxu0 0.0
    %1933 = vmatprep.subr.mxu0 0.0
    %1934 = vmatpush2.msra.mxu0 0.0
    %1935 = vmatprep.subr.mxu0 0.0
    %1936 = vmatpush2.msra.mxu0 0.0
    %1937 = vmatprep.subr.mxu0 0.0
    %1938 = vmatpush2.msra.mxu0 0.0
    %1939 = vmatprep.subr.mxu0 0.0
    %1940 = vmatpush2.msra.mxu0 0.0
    %1941 = vmatprep.subr.mxu0 0.0
    %1942 = vmatpush2.msra.mxu0 0.0
    %1943 = vmatprep.subr.mxu0 0.0
    %1944 = vmatpush2.msra.mxu0 0.0
    %1945 = vmatprep.subr.mxu0 0.0
    %1946 = vmatpush2.msra.mxu0 0.0
    %1947 = vmatprep.subr.mxu0 0.0
    %1948 = vmatpush2.msra.mxu0 0.0
    %1949 = vmatprep.subr.mxu0 0.0
    %1950 = vmatpush2.msra.mxu0 0.0
    %1951 = vmatprep.subr.mxu0 0.0
    %1952 = vmatpush2.msra.mxu0 0.0
    %1953 = vmatprep.subr.mxu0 0.0
    %1954 = vmatpush2.msra.mxu0 0.0
    %1955 = vmatprep.subr.mxu0 0.0
    %1956 = vmatpush2.msra.mxu0 0.0
    %1957 = vmatprep.subr.mxu0 0.0
    %1958 = vmatpush2.msra.mxu0 0.0
    %1959 = vmatprep.subr.mxu0 0.0
    %1960 = vmatpush2.msra.mxu0 0.0
    %1961 = vmatprep.subr.mxu0 0.0
    %1962 = vmatpush2.msra.mxu0 0.0
    %1963 = vmatprep.mubr.f32.mxu0 0.0
    %1964 = vmatmul.mubr.f32.gmra.mxu0 %v1897
    %v1965 = vpop.f32.mrf.mxu0
    %v1966 = vadd.f32 %v298, %v1965
    %v1967 = vpop.f32.mrf.mxu0
    %1968 = vdwg.mxu0
    %v1969 = vxor.u32 %v1966, 2147483648
    %v1970 = vmul.f32 %v1969, 1.442695
    %v1971 = vpow.pop %v1970
    %v1972 = vadd.f32 %v1971, 1.0
    %v1973 = vrcp.pop %v1972
    %v1974 = vmul.f32 1.0, %v1973
    %v1975 = vtanh.pop %v1966
    %v1976 = vmul.f32 %v1974, %v1669
    %1978 = vrot.lane.b32.xlu0 %v1975, 104
    %v1979 = vpop.permute.xlu0 %1978
    %v1981 = vmul.f32 %v1974, %v1979
    %1983 = vrot.lane.b32.xlu0 %v1981, 8
    %v1984 = vpop.permute.xlu0 %1983
    %v1986 = vadd.f32 %v1976, %v1984
    %v1987 = vtanh.pop %v1986
    %1989 = vrot.lane.b32.xlu0 %v1987, 8
    %v1990 = vpop.permute.xlu0 %1989
    %v1992 = vmul.f32 %v1974, %v1990
    %1994 = vrot.lane.b32.xlu0 %v1992, 112
    %v1995 = vpop.permute.xlu0 %1994
    %1998 = vrot.lane.b32.xlu0 %v1781, 120
    %v1999 = vpop.permute.xlu0 %1998
    %v2001 = vsel %vm175, %v1995, %v1999
    %v2003 = vsel %vm300, %v2001, 0
    %2005 = vmatprep.subr.mxu0 0.0
    %2006 = vmatpush1.msra.mxu0 0.0
    %2007 = vmatprep.subr.mxu0 0.0
    %2008 = vmatpush1.msra.mxu0 0.0
    %2009 = vmatprep.subr.mxu0 0.0
    %2010 = vmatpush1.msra.mxu0 0.0
    %2011 = vmatprep.subr.mxu0 0.0
    %2012 = vmatpush1.msra.mxu0 0.0
    %2013 = vmatprep.subr.mxu0 0.0
    %2014 = vmatpush1.msra.mxu0 0.0
    %2015 = vmatprep.subr.mxu0 0.0
    %2016 = vmatpush1.msra.mxu0 0.0
    %2017 = vmatprep.subr.mxu0 0.0
    %2018 = vmatpush1.msra.mxu0 0.0
    %2019 = vmatprep.subr.mxu0 0.0
    %2020 = vmatpush1.msra.mxu0 0.0
    %2021 = vmatprep.subr.mxu0 0.0
    %2022 = vmatpush1.msra.mxu0 0.0
    %2023 = vmatprep.subr.mxu0 0.0
    %2024 = vmatpush1.msra.mxu0 0.0
    %2025 = vmatprep.subr.mxu0 0.0
    %2026 = vmatpush1.msra.mxu0 0.0
    %2027 = vmatprep.subr.mxu0 0.0
    %2028 = vmatpush1.msra.mxu0 0.0
    %2029 = vmatprep.subr.mxu0 0.0
    %2030 = vmatpush1.msra.mxu0 0.0
    %2031 = vmatprep.subr.mxu0 0.0
    %2032 = vmatpush1.msra.mxu0 0.0
    %2033 = vmatprep.subr.mxu0 0.0
    %2034 = vmatpush1.msra.mxu0 %v59
    %2035 = vmatprep.subr.mxu0 0.0
    %2036 = vmatpush1.msra.mxu0 %v58
    %2037 = vmatprep.subr.mxu0 0.0
    %2038 = vmatpush2.msra.mxu0 0.0
    %2039 = vmatprep.subr.mxu0 0.0
    %2040 = vmatpush2.msra.mxu0 0.0
    %2041 = vmatprep.subr.mxu0 0.0
    %2042 = vmatpush2.msra.mxu0 0.0
    %2043 = vmatprep.subr.mxu0 0.0
    %2044 = vmatpush2.msra.mxu0 0.0
    %2045 = vmatprep.subr.mxu0 0.0
    %2046 = vmatpush2.msra.mxu0 0.0
    %2047 = vmatprep.subr.mxu0 0.0
    %2048 = vmatpush2.msra.mxu0 0.0
    %2049 = vmatprep.subr.mxu0 0.0
    %2050 = vmatpush2.msra.mxu0 0.0
    %2051 = vmatprep.subr.mxu0 0.0
    %2052 = vmatpush2.msra.mxu0 0.0
    %2053 = vmatprep.subr.mxu0 0.0
    %2054 = vmatpush2.msra.mxu0 0.0
    %2055 = vmatprep.subr.mxu0 0.0
    %2056 = vmatpush2.msra.mxu0 0.0
    %2057 = vmatprep.subr.mxu0 0.0
    %2058 = vmatpush2.msra.mxu0 0.0
    %2059 = vmatprep.subr.mxu0 0.0
    %2060 = vmatpush2.msra.mxu0 0.0
    %2061 = vmatprep.subr.mxu0 0.0
    %2062 = vmatpush2.msra.mxu0 0.0
    %2063 = vmatprep.subr.mxu0 0.0
    %2064 = vmatpush2.msra.mxu0 0.0
    %2065 = vmatprep.subr.mxu0 0.0
    %2066 = vmatpush2.msra.mxu0 0.0
    %2067 = vmatprep.subr.mxu0 0.0
    %2068 = vmatpush2.msra.mxu0 0.0
    %2069 = vmatprep.mubr.f32.mxu0 0.0
    %2070 = vmatmul.mubr.f32.gmra.mxu0 %v2003
    %v2071 = vpop.f32.mrf.mxu0
    %v2072 = vadd.f32 %v415, %v2071
    %v2073 = vpop.f32.mrf.mxu0
    %2074 = vdwg.mxu0
    %v2075 = vxor.u32 %v2072, 2147483648
    %v2076 = vmul.f32 %v2075, 1.442695
    %v2077 = vpow.pop %v2076
    %v2078 = vadd.f32 %v2077, 1.0
    %v2079 = vrcp.pop %v2078
    %v2080 = vmul.f32 1.0, %v2079
    %v2081 = vtanh.pop %v2072
    %v2082 = vmul.f32 %v2080, %v1775
    %2084 = vrot.lane.b32.xlu0 %v2081, 104
    %v2085 = vpop.permute.xlu0 %2084
    %v2087 = vmul.f32 %v2080, %v2085
    %2089 = vrot.lane.b32.xlu0 %v2087, 8
    %v2090 = vpop.permute.xlu0 %2089
    %v2092 = vadd.f32 %v2082, %v2090
    %v2093 = vtanh.pop %v2092
    %2095 = vrot.lane.b32.xlu0 %v2093, 8
    %v2096 = vpop.permute.xlu0 %2095
    %v2098 = vmul.f32 %v2080, %v2096
    %v2099 = vrot.slane %v1885, 4
    %2100 = vrot.lane.b32.xlu0 %v2099, 112
    %v2101 = vpop.permute.xlu0 %2100
    %v2102 = vsel %vm175, %v2101, 0
    %2104 = vmatprep.subr.mxu0 0.0
    %2105 = vmatpush1.msra.mxu0 0.0
    %2106 = vmatprep.subr.mxu0 0.0
    %2107 = vmatpush1.msra.mxu0 0.0
    %2108 = vmatprep.subr.mxu0 0.0
    %2109 = vmatpush1.msra.mxu0 0.0
    %2110 = vmatprep.subr.mxu0 0.0
    %2111 = vmatpush1.msra.mxu0 0.0
    %2112 = vmatprep.subr.mxu0 0.0
    %2113 = vmatpush1.msra.mxu0 0.0
    %2114 = vmatprep.subr.mxu0 0.0
    %2115 = vmatpush1.msra.mxu0 0.0
    %2116 = vmatprep.subr.mxu0 0.0
    %2117 = vmatpush1.msra.mxu0 0.0
    %2118 = vmatprep.subr.mxu0 0.0
    %2119 = vmatpush1.msra.mxu0 0.0
    %2120 = vmatprep.subr.mxu0 0.0
    %2121 = vmatpush1.msra.mxu0 0.0
    %2122 = vmatprep.subr.mxu0 0.0
    %2123 = vmatpush1.msra.mxu0 0.0
    %2124 = vmatprep.subr.mxu0 0.0
    %2125 = vmatpush1.msra.mxu0 0.0
    %2126 = vmatprep.subr.mxu0 0.0
    %2127 = vmatpush1.msra.mxu0 0.0
    %2128 = vmatprep.subr.mxu0 0.0
    %2129 = vmatpush1.msra.mxu0 0.0
    %2130 = vmatprep.subr.mxu0 0.0
    %2131 = vmatpush1.msra.mxu0 0.0
    %2132 = vmatprep.subr.mxu0 0.0
    %2133 = vmatpush1.msra.mxu0 0.0
    %2134 = vmatprep.subr.mxu0 0.0
    %2135 = vmatpush1.msra.mxu0 %v55
    %2136 = vmatprep.subr.mxu0 0.0
    %2137 = vmatpush2.msra.mxu0 0.0
    %2138 = vmatprep.subr.mxu0 0.0
    %2139 = vmatpush2.msra.mxu0 0.0
    %2140 = vmatprep.subr.mxu0 0.0
    %2141 = vmatpush2.msra.mxu0 0.0
    %2142 = vmatprep.subr.mxu0 0.0
    %2143 = vmatpush2.msra.mxu0 0.0
    %2144 = vmatprep.subr.mxu0 0.0
    %2145 = vmatpush2.msra.mxu0 0.0
    %2146 = vmatprep.subr.mxu0 0.0
    %2147 = vmatpush2.msra.mxu0 0.0
    %2148 = vmatprep.subr.mxu0 0.0
    %2149 = vmatpush2.msra.mxu0 0.0
    %2150 = vmatprep.subr.mxu0 0.0
    %2151 = vmatpush2.msra.mxu0 0.0
    %2152 = vmatprep.subr.mxu0 0.0
    %2153 = vmatpush2.msra.mxu0 0.0
    %2154 = vmatprep.subr.mxu0 0.0
    %2155 = vmatpush2.msra.mxu0 0.0
    %2156 = vmatprep.subr.mxu0 0.0
    %2157 = vmatpush2.msra.mxu0 0.0
    %2158 = vmatprep.subr.mxu0 0.0
    %2159 = vmatpush2.msra.mxu0 0.0
    %2160 = vmatprep.subr.mxu0 0.0
    %2161 = vmatpush2.msra.mxu0 0.0
    %2162 = vmatprep.subr.mxu0 0.0
    %2163 = vmatpush2.msra.mxu0 0.0
    %2164 = vmatprep.subr.mxu0 0.0
    %2165 = vmatpush2.msra.mxu0 0.0
    %2166 = vmatprep.subr.mxu0 0.0
    %2167 = vmatpush2.msra.mxu0 0.0
    %2168 = vmatprep.mubr.f32.mxu0 0.0
    %2169 = vmatmul.mubr.f32.gmra.mxu0 %v2102
    %v2170 = vpop.f32.mrf.mxu0
    %v2171 = vadd.f32 0.0, %v2170
    %v2172 = vpop.f32.mrf.mxu0
    %2173 = vdwg.mxu0
    %v2174 = vadd.f32 %v172, %v2171
    %v2175 = vadd.f32 %v2174, %v254
    %v2176 = vxor.u32 %v2175, 2147483648
    %v2177 = vmul.f32 %v2176, 1.442695
    %v2178 = vpow.pop %v2177
    %v2179 = vadd.f32 %v2178, 1.0
    %v2180 = vrcp.pop %v2179
    %v2181 = vmul.f32 1.0, %v2180
    %v2182 = vtanh.pop %v2175
    %v2184 = vrot.slane %v1879, 4
    %v2186 = vmul.f32 %v2181, %v2184
    %2188 = vrot.lane.b32.xlu0 %v2182, 104
    %v2189 = vpop.permute.xlu0 %2188
    %v2191 = vmul.f32 %v2181, %v2189
    %2193 = vrot.lane.b32.xlu0 %v2191, 8
    %v2194 = vpop.permute.xlu0 %2193
    %v2196 = vadd.f32 %v2186, %v2194
    %v2197 = vtanh.pop %v2196
    %2199 = vrot.lane.b32.xlu0 %v2197, 8
    %v2200 = vpop.permute.xlu0 %2199
    %v2202 = vmul.f32 %v2181, %v2200
    %2204 = vrot.lane.b32.xlu0 %v2202, 112
    %v2205 = vpop.permute.xlu0 %2204
    %2207 = vrot.lane.b32.xlu0 %v1992, 120
    %v2208 = vpop.permute.xlu0 %2207
    %v2210 = vsel %vm175, %v2205, %v2208
    %v2212 = vsel %vm300, %v2210, 0
    %2214 = vmatprep.subr.mxu0 0.0
    %2215 = vmatpush1.msra.mxu0 0.0
    %2216 = vmatprep.subr.mxu0 0.0
    %2217 = vmatpush1.msra.mxu0 0.0
    %2218 = vmatprep.subr.mxu0 0.0
    %2219 = vmatpush1.msra.mxu0 0.0
    %2220 = vmatprep.subr.mxu0 0.0
    %2221 = vmatpush1.msra.mxu0 0.0
    %2222 = vmatprep.subr.mxu0 0.0
    %2223 = vmatpush1.msra.mxu0 0.0
    %2224 = vmatprep.subr.mxu0 0.0
    %2225 = vmatpush1.msra.mxu0 0.0
    %2226 = vmatprep.subr.mxu0 0.0
    %2227 = vmatpush1.msra.mxu0 0.0
    %2228 = vmatprep.subr.mxu0 0.0
    %2229 = vmatpush1.msra.mxu0 0.0
    %2230 = vmatprep.subr.mxu0 0.0
    %2231 = vmatpush1.msra.mxu0 0.0
    %2232 = vmatprep.subr.mxu0 0.0
    %2233 = vmatpush1.msra.mxu0 0.0
    %2234 = vmatprep.subr.mxu0 0.0
    %2235 = vmatpush1.msra.mxu0 0.0
    %2236 = vmatprep.subr.mxu0 0.0
    %2237 = vmatpush1.msra.mxu0 0.0
    %2238 = vmatprep.subr.mxu0 0.0
    %2239 = vmatpush1.msra.mxu0 0.0
    %2240 = vmatprep.subr.mxu0 0.0
    %2241 = vmatpush1.msra.mxu0 0.0
    %2242 = vmatprep.subr.mxu0 0.0
    %2243 = vmatpush1.msra.mxu0 %v57
    %2244 = vmatprep.subr.mxu0 0.0
    %2245 = vmatpush1.msra.mxu0 %v56
    %2246 = vmatprep.subr.mxu0 0.0
    %2247 = vmatpush2.msra.mxu0 0.0
    %2248 = vmatprep.subr.mxu0 0.0
    %2249 = vmatpush2.msra.mxu0 0.0
    %2250 = vmatprep.subr.mxu0 0.0
    %2251 = vmatpush2.msra.mxu0 0.0
    %2252 = vmatprep.subr.mxu0 0.0
    %2253 = vmatpush2.msra.mxu0 0.0
    %2254 = vmatprep.subr.mxu0 0.0
    %2255 = vmatpush2.msra.mxu0 0.0
    %2256 = vmatprep.subr.mxu0 0.0
    %2257 = vmatpush2.msra.mxu0 0.0
    %2258 = vmatprep.subr.mxu0 0.0
    %2259 = vmatpush2.msra.mxu0 0.0
    %2260 = vmatprep.subr.mxu0 0.0
    %2261 = vmatpush2.msra.mxu0 0.0
    %2262 = vmatprep.subr.mxu0 0.0
    %2263 = vmatpush2.msra.mxu0 0.0
    %2264 = vmatprep.subr.mxu0 0.0
    %2265 = vmatpush2.msra.mxu0 0.0
    %2266 = vmatprep.subr.mxu0 0.0
    %2267 = vmatpush2.msra.mxu0 0.0
    %2268 = vmatprep.subr.mxu0 0.0
    %2269 = vmatpush2.msra.mxu0 0.0
    %2270 = vmatprep.subr.mxu0 0.0
    %2271 = vmatpush2.msra.mxu0 0.0
    %2272 = vmatprep.subr.mxu0 0.0
    %2273 = vmatpush2.msra.mxu0 0.0
    %2274 = vmatprep.subr.mxu0 0.0
    %2275 = vmatpush2.msra.mxu0 0.0
    %2276 = vmatprep.subr.mxu0 0.0
    %2277 = vmatpush2.msra.mxu0 0.0
    %2278 = vmatprep.mubr.f32.mxu0 0.0
    %2279 = vmatmul.mubr.f32.gmra.mxu0 %v2212
    %v2280 = vpop.f32.mrf.mxu0
    %v2281 = vadd.f32 %v298, %v2280
    %v2282 = vpop.f32.mrf.mxu0
    %2283 = vdwg.mxu0
    %v2284 = vxor.u32 %v2281, 2147483648
    %v2285 = vmul.f32 %v2284, 1.442695
    %v2286 = vpow.pop %v2285
    %v2287 = vadd.f32 %v2286, 1.0
    %v2288 = vrcp.pop %v2287
    %v2289 = vmul.f32 1.0, %v2288
    %v2290 = vtanh.pop %v2281
    %v2291 = vmul.f32 %v2289, %v1986
    %2293 = vrot.lane.b32.xlu0 %v2290, 104
    %v2294 = vpop.permute.xlu0 %2293
    %v2296 = vmul.f32 %v2289, %v2294
    %2298 = vrot.lane.b32.xlu0 %v2296, 8
    %v2299 = vpop.permute.xlu0 %2298
    %v2301 = vadd.f32 %v2291, %v2299
    %v2302 = vtanh.pop %v2301
    %2304 = vrot.lane.b32.xlu0 %v2302, 8
    %v2305 = vpop.permute.xlu0 %2304
    %v2307 = vmul.f32 %v2289, %v2305
    %2309 = vrot.lane.b32.xlu0 %v2307, 112
    %v2310 = vpop.permute.xlu0 %2309
    %2313 = vrot.lane.b32.xlu0 %v2098, 120
    %v2314 = vpop.permute.xlu0 %2313
    %v2316 = vsel %vm175, %v2310, %v2314
    %v2318 = vsel %vm300, %v2316, 0
    %2320 = vmatprep.subr.mxu0 0.0
    %2321 = vmatpush1.msra.mxu0 0.0
    %2322 = vmatprep.subr.mxu0 0.0
    %2323 = vmatpush1.msra.mxu0 0.0
    %2324 = vmatprep.subr.mxu0 0.0
    %2325 = vmatpush1.msra.mxu0 0.0
    %2326 = vmatprep.subr.mxu0 0.0
    %2327 = vmatpush1.msra.mxu0 0.0
    %2328 = vmatprep.subr.mxu0 0.0
    %2329 = vmatpush1.msra.mxu0 0.0
    %2330 = vmatprep.subr.mxu0 0.0
    %2331 = vmatpush1.msra.mxu0 0.0
    %2332 = vmatprep.subr.mxu0 0.0
    %2333 = vmatpush1.msra.mxu0 0.0
    %2334 = vmatprep.subr.mxu0 0.0
    %2335 = vmatpush1.msra.mxu0 0.0
    %2336 = vmatprep.subr.mxu0 0.0
    %2337 = vmatpush1.msra.mxu0 0.0
    %2338 = vmatprep.subr.mxu0 0.0
    %2339 = vmatpush1.msra.mxu0 0.0
    %2340 = vmatprep.subr.mxu0 0.0
    %2341 = vmatpush1.msra.mxu0 0.0
    %2342 = vmatprep.subr.mxu0 0.0
    %2343 = vmatpush1.msra.mxu0 0.0
    %2344 = vmatprep.subr.mxu0 0.0
    %2345 = vmatpush1.msra.mxu0 0.0
    %2346 = vmatprep.subr.mxu0 0.0
    %2347 = vmatpush1.msra.mxu0 0.0
    %2348 = vmatprep.subr.mxu0 0.0
    %2349 = vmatpush1.msra.mxu0 %v59
    %2350 = vmatprep.subr.mxu0 0.0
    %2351 = vmatpush1.msra.mxu0 %v58
    %2352 = vmatprep.subr.mxu0 0.0
    %2353 = vmatpush2.msra.mxu0 0.0
    %2354 = vmatprep.subr.mxu0 0.0
    %2355 = vmatpush2.msra.mxu0 0.0
    %2356 = vmatprep.subr.mxu0 0.0
    %2357 = vmatpush2.msra.mxu0 0.0
    %2358 = vmatprep.subr.mxu0 0.0
    %2359 = vmatpush2.msra.mxu0 0.0
    %2360 = vmatprep.subr.mxu0 0.0
    %2361 = vmatpush2.msra.mxu0 0.0
    %2362 = vmatprep.subr.mxu0 0.0
    %2363 = vmatpush2.msra.mxu0 0.0
    %2364 = vmatprep.subr.mxu0 0.0
    %2365 = vmatpush2.msra.mxu0 0.0
    %2366 = vmatprep.subr.mxu0 0.0
    %2367 = vmatpush2.msra.mxu0 0.0
    %2368 = vmatprep.subr.mxu0 0.0
    %2369 = vmatpush2.msra.mxu0 0.0
    %2370 = vmatprep.subr.mxu0 0.0
    %2371 = vmatpush2.msra.mxu0 0.0
    %2372 = vmatprep.subr.mxu0 0.0
    %2373 = vmatpush2.msra.mxu0 0.0
    %2374 = vmatprep.subr.mxu0 0.0
    %2375 = vmatpush2.msra.mxu0 0.0
    %2376 = vmatprep.subr.mxu0 0.0
    %2377 = vmatpush2.msra.mxu0 0.0
    %2378 = vmatprep.subr.mxu0 0.0
    %2379 = vmatpush2.msra.mxu0 0.0
    %2380 = vmatprep.subr.mxu0 0.0
    %2381 = vmatpush2.msra.mxu0 0.0
    %2382 = vmatprep.subr.mxu0 0.0
    %2383 = vmatpush2.msra.mxu0 0.0
    %2384 = vmatprep.mubr.f32.mxu0 0.0
    %2385 = vmatmul.mubr.f32.gmra.mxu0 %v2318
    %v2386 = vpop.f32.mrf.mxu0
    %v2387 = vadd.f32 %v415, %v2386
    %v2388 = vpop.f32.mrf.mxu0
    %2389 = vdwg.mxu0
    %v2390 = vxor.u32 %v2387, 2147483648
    %v2391 = vmul.f32 %v2390, 1.442695
    %v2392 = vpow.pop %v2391
    %v2393 = vadd.f32 %v2392, 1.0
    %v2394 = vrcp.pop %v2393
    %v2395 = vmul.f32 1.0, %v2394
    %v2396 = vtanh.pop %v2387
    %v2397 = vmul.f32 %v2395, %v2092
    %2399 = vrot.lane.b32.xlu0 %v2396, 104
    %v2400 = vpop.permute.xlu0 %2399
    %v2402 = vmul.f32 %v2395, %v2400
    %2404 = vrot.lane.b32.xlu0 %v2402, 8
    %v2405 = vpop.permute.xlu0 %2404
    %v2407 = vadd.f32 %v2397, %v2405
    %v2408 = vtanh.pop %v2407
    %2410 = vrot.lane.b32.xlu0 %v2408, 8
    %v2411 = vpop.permute.xlu0 %2410
    %v2413 = vmul.f32 %v2395, %v2411
    %v2414 = vsel %vm175, %v2205, 0
    %2416 = vmatprep.subr.mxu0 0.0
    %2417 = vmatpush1.msra.mxu0 0.0
    %2418 = vmatprep.subr.mxu0 0.0
    %2419 = vmatpush1.msra.mxu0 0.0
    %2420 = vmatprep.subr.mxu0 0.0
    %2421 = vmatpush1.msra.mxu0 0.0
    %2422 = vmatprep.subr.mxu0 0.0
    %2423 = vmatpush1.msra.mxu0 0.0
    %2424 = vmatprep.subr.mxu0 0.0
    %2425 = vmatpush1.msra.mxu0 0.0
    %2426 = vmatprep.subr.mxu0 0.0
    %2427 = vmatpush1.msra.mxu0 0.0
    %2428 = vmatprep.subr.mxu0 0.0
    %2429 = vmatpush1.msra.mxu0 0.0
    %2430 = vmatprep.subr.mxu0 0.0
    %2431 = vmatpush1.msra.mxu0 0.0
    %2432 = vmatprep.subr.mxu0 0.0
    %2433 = vmatpush1.msra.mxu0 0.0
    %2434 = vmatprep.subr.mxu0 0.0
    %2435 = vmatpush1.msra.mxu0 0.0
    %2436 = vmatprep.subr.mxu0 0.0
    %2437 = vmatpush1.msra.mxu0 0.0
    %2438 = vmatprep.subr.mxu0 0.0
    %2439 = vmatpush1.msra.mxu0 0.0
    %2440 = vmatprep.subr.mxu0 0.0
    %2441 = vmatpush1.msra.mxu0 0.0
    %2442 = vmatprep.subr.mxu0 0.0
    %2443 = vmatpush1.msra.mxu0 0.0
    %2444 = vmatprep.subr.mxu0 0.0
    %2445 = vmatpush1.msra.mxu0 0.0
    %2446 = vmatprep.subr.mxu0 0.0
    %2447 = vmatpush1.msra.mxu0 %v55
    %2448 = vmatprep.subr.mxu0 0.0
    %2449 = vmatpush2.msra.mxu0 0.0
    %2450 = vmatprep.subr.mxu0 0.0
    %2451 = vmatpush2.msra.mxu0 0.0
    %2452 = vmatprep.subr.mxu0 0.0
    %2453 = vmatpush2.msra.mxu0 0.0
    %2454 = vmatprep.subr.mxu0 0.0
    %2455 = vmatpush2.msra.mxu0 0.0
    %2456 = vmatprep.subr.mxu0 0.0
    %2457 = vmatpush2.msra.mxu0 0.0
    %2458 = vmatprep.subr.mxu0 0.0
    %2459 = vmatpush2.msra.mxu0 0.0
    %2460 = vmatprep.subr.mxu0 0.0
    %2461 = vmatpush2.msra.mxu0 0.0
    %2462 = vmatprep.subr.mxu0 0.0
    %2463 = vmatpush2.msra.mxu0 0.0
    %2464 = vmatprep.subr.mxu0 0.0
    %2465 = vmatpush2.msra.mxu0 0.0
    %2466 = vmatprep.subr.mxu0 0.0
    %2467 = vmatpush2.msra.mxu0 0.0
    %2468 = vmatprep.subr.mxu0 0.0
    %2469 = vmatpush2.msra.mxu0 0.0
    %2470 = vmatprep.subr.mxu0 0.0
    %2471 = vmatpush2.msra.mxu0 0.0
    %2472 = vmatprep.subr.mxu0 0.0
    %2473 = vmatpush2.msra.mxu0 0.0
    %2474 = vmatprep.subr.mxu0 0.0
    %2475 = vmatpush2.msra.mxu0 0.0
    %2476 = vmatprep.subr.mxu0 0.0
    %2477 = vmatpush2.msra.mxu0 0.0
    %2478 = vmatprep.subr.mxu0 0.0
    %2479 = vmatpush2.msra.mxu0 0.0
    %2480 = vmatprep.mubr.f32.mxu0 0.0
    %2481 = vmatmul.mubr.f32.gmra.mxu0 %v2414
    %v2482 = vpop.f32.mrf.mxu0
    %v2483 = vadd.f32 0.0, %v2482
    %v2484 = vpop.f32.mrf.mxu0
    %2485 = vdwg.mxu0
    %v2487 = vrot.slane %v2483, 4
    %v2489 = vadd.f32 %v172, %v2487
    %v2490 = vadd.f32 %v2489, %v254
    %v2491 = vxor.u32 %v2490, 2147483648
    %v2492 = vmul.f32 %v2491, 1.442695
    %v2493 = vpow.pop %v2492
    %v2494 = vadd.f32 %v2493, 1.0
    %v2495 = vrcp.pop %v2494
    %v2496 = vmul.f32 1.0, %v2495
    %v2497 = vtanh.pop %v2490
    %v2499 = vrot.slane %v2196, 4
    %v2501 = vmul.f32 %v2496, %v2499
    %2503 = vrot.lane.b32.xlu0 %v2497, 104
    %v2504 = vpop.permute.xlu0 %2503
    %v2506 = vmul.f32 %v2496, %v2504
    %2508 = vrot.lane.b32.xlu0 %v2506, 8
    %v2509 = vpop.permute.xlu0 %2508
    %v2511 = vadd.f32 %v2501, %v2509
    %v2512 = vtanh.pop %v2511
    %2514 = vrot.lane.b32.xlu0 %v2512, 8
    %v2515 = vpop.permute.xlu0 %2514
    %v2517 = vmul.f32 %v2496, %v2515
    %2519 = vrot.lane.b32.xlu0 %v2517, 112
    %v2520 = vpop.permute.xlu0 %2519
    %v2522 = vrot.slane %v2307, 4
    %2523 = vrot.lane.b32.xlu0 %v2522, 120
    %v2524 = vpop.permute.xlu0 %2523
    %v2526 = vsel %vm175, %v2520, %v2524
    %v2528 = vrot.slane %v2526, 4
    %v2529 = vsel %vm300, %v2528, 0
    %2531 = vmatprep.subr.mxu0 0.0
    %2532 = vmatpush1.msra.mxu0 0.0
    %2533 = vmatprep.subr.mxu0 0.0
    %2534 = vmatpush1.msra.mxu0 0.0
    %2535 = vmatprep.subr.mxu0 0.0
    %2536 = vmatpush1.msra.mxu0 0.0
    %2537 = vmatprep.subr.mxu0 0.0
    %2538 = vmatpush1.msra.mxu0 0.0
    %2539 = vmatprep.subr.mxu0 0.0
    %2540 = vmatpush1.msra.mxu0 0.0
    %2541 = vmatprep.subr.mxu0 0.0
    %2542 = vmatpush1.msra.mxu0 0.0
    %2543 = vmatprep.subr.mxu0 0.0
    %2544 = vmatpush1.msra.mxu0 0.0
    %2545 = vmatprep.subr.mxu0 0.0
    %2546 = vmatpush1.msra.mxu0 0.0
    %2547 = vmatprep.subr.mxu0 0.0
    %2548 = vmatpush1.msra.mxu0 0.0
    %2549 = vmatprep.subr.mxu0 0.0
    %2550 = vmatpush1.msra.mxu0 0.0
    %2551 = vmatprep.subr.mxu0 0.0
    %2552 = vmatpush1.msra.mxu0 0.0
    %2553 = vmatprep.subr.mxu0 0.0
    %2554 = vmatpush1.msra.mxu0 0.0
    %2555 = vmatprep.subr.mxu0 0.0
    %2556 = vmatpush1.msra.mxu0 0.0
    %2557 = vmatprep.subr.mxu0 0.0
    %2558 = vmatpush1.msra.mxu0 0.0
    %2559 = vmatprep.subr.mxu0 0.0
    %2560 = vmatpush1.msra.mxu0 %v57
    %2561 = vmatprep.subr.mxu0 0.0
    %2562 = vmatpush1.msra.mxu0 %v56
    %2563 = vmatprep.subr.mxu0 0.0
    %2564 = vmatpush2.msra.mxu0 0.0
    %2565 = vmatprep.subr.mxu0 0.0
    %2566 = vmatpush2.msra.mxu0 0.0
    %2567 = vmatprep.subr.mxu0 0.0
    %2568 = vmatpush2.msra.mxu0 0.0
    %2569 = vmatprep.subr.mxu0 0.0
    %2570 = vmatpush2.msra.mxu0 0.0
    %2571 = vmatprep.subr.mxu0 0.0
    %2572 = vmatpush2.msra.mxu0 0.0
    %2573 = vmatprep.subr.mxu0 0.0
    %2574 = vmatpush2.msra.mxu0 0.0
    %2575 = vmatprep.subr.mxu0 0.0
    %2576 = vmatpush2.msra.mxu0 0.0
    %2577 = vmatprep.subr.mxu0 0.0
    %2578 = vmatpush2.msra.mxu0 0.0
    %2579 = vmatprep.subr.mxu0 0.0
    %2580 = vmatpush2.msra.mxu0 0.0
    %2581 = vmatprep.subr.mxu0 0.0
    %2582 = vmatpush2.msra.mxu0 0.0
    %2583 = vmatprep.subr.mxu0 0.0
    %2584 = vmatpush2.msra.mxu0 0.0
    %2585 = vmatprep.subr.mxu0 0.0
    %2586 = vmatpush2.msra.mxu0 0.0
    %2587 = vmatprep.subr.mxu0 0.0
    %2588 = vmatpush2.msra.mxu0 0.0
    %2589 = vmatprep.subr.mxu0 0.0
    %2590 = vmatpush2.msra.mxu0 0.0
    %2591 = vmatprep.subr.mxu0 0.0
    %2592 = vmatpush2.msra.mxu0 0.0
    %2593 = vmatprep.subr.mxu0 0.0
    %2594 = vmatpush2.msra.mxu0 0.0
    %2595 = vmatprep.mubr.f32.mxu0 0.0
    %2596 = vmatmul.mubr.f32.gmra.mxu0 %v2529
    %v2597 = vpop.f32.mrf.mxu0
    %v2598 = vadd.f32 %v298, %v2597
    %v2599 = vpop.f32.mrf.mxu0
    %2600 = vdwg.mxu0
    %v2601 = vxor.u32 %v2598, 2147483648
    %v2602 = vmul.f32 %v2601, 1.442695
    %v2603 = vpow.pop %v2602
    %v2604 = vadd.f32 %v2603, 1.0
    %v2605 = vrcp.pop %v2604
    %v2606 = vmul.f32 1.0, %v2605
    %v2607 = vtanh.pop %v2598
    %v2608 = vmul.f32 %v2606, %v2301
    %2610 = vrot.lane.b32.xlu0 %v2607, 104
    %v2611 = vpop.permute.xlu0 %2610
    %v2613 = vmul.f32 %v2606, %v2611
    %2615 = vrot.lane.b32.xlu0 %v2613, 8
    %v2616 = vpop.permute.xlu0 %2615
    %v2618 = vadd.f32 %v2608, %v2616
    %v2619 = vtanh.pop %v2618
    %2621 = vrot.lane.b32.xlu0 %v2619, 8
    %v2622 = vpop.permute.xlu0 %2621
    %v2624 = vmul.f32 %v2606, %v2622
    %2626 = vrot.lane.b32.xlu0 %v2624, 112
    %v2627 = vpop.permute.xlu0 %2626
    %2630 = vrot.lane.b32.xlu0 %v2413, 120
    %v2631 = vpop.permute.xlu0 %2630
    %v2633 = vsel %vm175, %v2627, %v2631
    %v2635 = vsel %vm300, %v2633, 0
    %2637 = vmatprep.subr.mxu0 0.0
    %2638 = vmatpush1.msra.mxu0 0.0
    %2639 = vmatprep.subr.mxu0 0.0
    %2640 = vmatpush1.msra.mxu0 0.0
    %2641 = vmatprep.subr.mxu0 0.0
    %2642 = vmatpush1.msra.mxu0 0.0
    %2643 = vmatprep.subr.mxu0 0.0
    %2644 = vmatpush1.msra.mxu0 0.0
    %2645 = vmatprep.subr.mxu0 0.0
    %2646 = vmatpush1.msra.mxu0 0.0
    %2647 = vmatprep.subr.mxu0 0.0
    %2648 = vmatpush1.msra.mxu0 0.0
    %2649 = vmatprep.subr.mxu0 0.0
    %2650 = vmatpush1.msra.mxu0 0.0
    %2651 = vmatprep.subr.mxu0 0.0
    %2652 = vmatpush1.msra.mxu0 0.0
    %2653 = vmatprep.subr.mxu0 0.0
    %2654 = vmatpush1.msra.mxu0 0.0
    %2655 = vmatprep.subr.mxu0 0.0
    %2656 = vmatpush1.msra.mxu0 0.0
    %2657 = vmatprep.subr.mxu0 0.0
    %2658 = vmatpush1.msra.mxu0 0.0
    %2659 = vmatprep.subr.mxu0 0.0
    %2660 = vmatpush1.msra.mxu0 0.0
    %2661 = vmatprep.subr.mxu0 0.0
    %2662 = vmatpush1.msra.mxu0 0.0
    %2663 = vmatprep.subr.mxu0 0.0
    %2664 = vmatpush1.msra.mxu0 0.0
    %2665 = vmatprep.subr.mxu0 0.0
    %2666 = vmatpush1.msra.mxu0 %v59
    %2667 = vmatprep.subr.mxu0 0.0
    %2668 = vmatpush1.msra.mxu0 %v58
    %2669 = vmatprep.subr.mxu0 0.0
    %2670 = vmatpush2.msra.mxu0 0.0
    %2671 = vmatprep.subr.mxu0 0.0
    %2672 = vmatpush2.msra.mxu0 0.0
    %2673 = vmatprep.subr.mxu0 0.0
    %2674 = vmatpush2.msra.mxu0 0.0
    %2675 = vmatprep.subr.mxu0 0.0
    %2676 = vmatpush2.msra.mxu0 0.0
    %2677 = vmatprep.subr.mxu0 0.0
    %2678 = vmatpush2.msra.mxu0 0.0
    %2679 = vmatprep.subr.mxu0 0.0
    %2680 = vmatpush2.msra.mxu0 0.0
    %2681 = vmatprep.subr.mxu0 0.0
    %2682 = vmatpush2.msra.mxu0 0.0
    %2683 = vmatprep.subr.mxu0 0.0
    %2684 = vmatpush2.msra.mxu0 0.0
    %2685 = vmatprep.subr.mxu0 0.0
    %2686 = vmatpush2.msra.mxu0 0.0
    %2687 = vmatprep.subr.mxu0 0.0
    %2688 = vmatpush2.msra.mxu0 0.0
    %2689 = vmatprep.subr.mxu0 0.0
    %2690 = vmatpush2.msra.mxu0 0.0
    %2691 = vmatprep.subr.mxu0 0.0
    %2692 = vmatpush2.msra.mxu0 0.0
    %2693 = vmatprep.subr.mxu0 0.0
    %2694 = vmatpush2.msra.mxu0 0.0
    %2695 = vmatprep.subr.mxu0 0.0
    %2696 = vmatpush2.msra.mxu0 0.0
    %2697 = vmatprep.subr.mxu0 0.0
    %2698 = vmatpush2.msra.mxu0 0.0
    %2699 = vmatprep.subr.mxu0 0.0
    %2700 = vmatpush2.msra.mxu0 0.0
    %2701 = vmatprep.mubr.f32.mxu0 0.0
    %2702 = vmatmul.mubr.f32.gmra.mxu0 %v2635
    %v2703 = vpop.f32.mrf.mxu0
    %v2704 = vadd.f32 %v415, %v2703
    %v2705 = vpop.f32.mrf.mxu0
    %2706 = vdwg.mxu0
    %v2707 = vxor.u32 %v2704, 2147483648
    %v2708 = vmul.f32 %v2707, 1.442695
    %v2709 = vpow.pop %v2708
    %v2710 = vadd.f32 %v2709, 1.0
    %v2711 = vrcp.pop %v2710
    %v2712 = vmul.f32 1.0, %v2711
    %v2713 = vtanh.pop %v2704
    %v2714 = vmul.f32 %v2712, %v2407
    %2716 = vrot.lane.b32.xlu0 %v2713, 104
    %v2717 = vpop.permute.xlu0 %2716
    %v2719 = vmul.f32 %v2712, %v2717
    %2721 = vrot.lane.b32.xlu0 %v2719, 8
    %v2722 = vpop.permute.xlu0 %2721
    %v2724 = vadd.f32 %v2714, %v2722
    %v2725 = vtanh.pop %v2724
    %2727 = vrot.lane.b32.xlu0 %v2725, 8
    %v2728 = vpop.permute.xlu0 %2727
    %v2730 = vmul.f32 %v2712, %v2728
    %v2732 = vsel %vm86, %v54, 0
    %2734 = vmatprep.subr.mxu0 0.0
    %2735 = vmatpush1.msra.mxu0 0.0
    %2736 = vmatprep.subr.mxu0 0.0
    %2737 = vmatpush1.msra.mxu0 0.0
    %2738 = vmatprep.subr.mxu0 0.0
    %2739 = vmatpush1.msra.mxu0 0.0
    %2740 = vmatprep.subr.mxu0 0.0
    %2741 = vmatpush1.msra.mxu0 0.0
    %2742 = vmatprep.subr.mxu0 0.0
    %2743 = vmatpush1.msra.mxu0 0.0
    %2744 = vmatprep.subr.mxu0 0.0
    %2745 = vmatpush1.msra.mxu0 0.0
    %2746 = vmatprep.subr.mxu0 0.0
    %2747 = vmatpush1.msra.mxu0 0.0
    %2748 = vmatprep.subr.mxu0 0.0
    %2749 = vmatpush1.msra.mxu0 0.0
    %2750 = vmatprep.subr.mxu0 0.0
    %2751 = vmatpush1.msra.mxu0 0.0
    %2752 = vmatprep.subr.mxu0 0.0
    %2753 = vmatpush1.msra.mxu0 0.0
    %2754 = vmatprep.subr.mxu0 0.0
    %2755 = vmatpush1.msra.mxu0 0.0
    %2756 = vmatprep.subr.mxu0 0.0
    %2757 = vmatpush1.msra.mxu0 0.0
    %2758 = vmatprep.subr.mxu0 0.0
    %2759 = vmatpush1.msra.mxu0 0.0
    %2760 = vmatprep.subr.mxu0 0.0
    %2761 = vmatpush1.msra.mxu0 0.0
    %2762 = vmatprep.subr.mxu0 0.0
    %2763 = vmatpush1.msra.mxu0 0.0
    %2764 = vmatprep.subr.mxu0 0.0
    %2765 = vmatpush1.msra.mxu0 %v2732
    %2766 = vmatprep.subr.mxu0 0.0
    %2767 = vmatpush2.msra.mxu0 0.0
    %2768 = vmatprep.subr.mxu0 0.0
    %2769 = vmatpush2.msra.mxu0 0.0
    %2770 = vmatprep.subr.mxu0 0.0
    %2771 = vmatpush2.msra.mxu0 0.0
    %2772 = vmatprep.subr.mxu0 0.0
    %2773 = vmatpush2.msra.mxu0 0.0
    %2774 = vmatprep.subr.mxu0 0.0
    %2775 = vmatpush2.msra.mxu0 0.0
    %2776 = vmatprep.subr.mxu0 0.0
    %2777 = vmatpush2.msra.mxu0 0.0
    %2778 = vmatprep.subr.mxu0 0.0
    %2779 = vmatpush2.msra.mxu0 0.0
    %2780 = vmatprep.subr.mxu0 0.0
    %2781 = vmatpush2.msra.mxu0 0.0
    %2782 = vmatprep.subr.mxu0 0.0
    %2783 = vmatpush2.msra.mxu0 0.0
    %2784 = vmatprep.subr.mxu0 0.0
    %2785 = vmatpush2.msra.mxu0 0.0
    %2786 = vmatprep.subr.mxu0 0.0
    %2787 = vmatpush2.msra.mxu0 0.0
    %2788 = vmatprep.subr.mxu0 0.0
    %2789 = vmatpush2.msra.mxu0 0.0
    %2790 = vmatprep.subr.mxu0 0.0
    %2791 = vmatpush2.msra.mxu0 0.0
    %2792 = vmatprep.subr.mxu0 0.0
    %2793 = vmatpush2.msra.mxu0 0.0
    %2794 = vmatprep.subr.mxu0 0.0
    %2795 = vmatpush2.msra.mxu0 0.0
    %2796 = vmatprep.subr.mxu0 0.0
    %2797 = vmatpush2.msra.mxu0 0.0
    %2798 = vmatprep.mubr.f32.mxu0 0.0
    %2799 = vmatmul.mubr.f32.gmra.mxu0 %v75
    %v2800 = vpop.f32.mrf.mxu0
    %v2801 = vadd.f32 0.0, %v2800
    %v2802 = vpop.f32.mrf.mxu0
    %2803 = vmatprep.mubr.f32.mxu0 0.0
    %2804 = vmatmul.mubr.f32.gmra.mxu0 %v78
    %v2805 = vpop.f32.mrf.mxu0
    %v2806 = vadd.f32 0.0, %v2805
    %v2807 = vpop.f32.mrf.mxu0
    %2808 = vmatprep.mubr.f32.mxu0 0.0
    %2809 = vmatmul.mubr.f32.gmra.mxu0 %v81
    %v2810 = vpop.f32.mrf.mxu0
    %v2811 = vadd.f32 0.0, %v2810
    %v2812 = vpop.f32.mrf.mxu0
    %2813 = vmatprep.mubr.f32.mxu0 0.0
    %2814 = vmatmul.mubr.f32.gmra.mxu0 %v84
    %v2815 = vpop.f32.mrf.mxu0
    %v2816 = vadd.f32 0.0, %v2815
    %v2817 = vpop.f32.mrf.mxu0
    %2818 = vdwg.mxu0
    %v2819 = vrot.slane %v2517, 4
    %2820 = vrot.lane.b32.xlu0 %v2819, 112
    %v2821 = vpop.permute.xlu0 %2820
    %v2822 = vsel %vm175, %v2821, 0
    %2824 = vmatprep.subr.mxu0 0.0
    %2825 = vmatpush1.msra.mxu0 0.0
    %2826 = vmatprep.subr.mxu0 0.0
    %2827 = vmatpush1.msra.mxu0 0.0
    %2828 = vmatprep.subr.mxu0 0.0
    %2829 = vmatpush1.msra.mxu0 0.0
    %2830 = vmatprep.subr.mxu0 0.0
    %2831 = vmatpush1.msra.mxu0 0.0
    %2832 = vmatprep.subr.mxu0 0.0
    %2833 = vmatpush1.msra.mxu0 0.0
    %2834 = vmatprep.subr.mxu0 0.0
    %2835 = vmatpush1.msra.mxu0 0.0
    %2836 = vmatprep.subr.mxu0 0.0
    %2837 = vmatpush1.msra.mxu0 0.0
    %2838 = vmatprep.subr.mxu0 0.0
    %2839 = vmatpush1.msra.mxu0 0.0
    %2840 = vmatprep.subr.mxu0 0.0
    %2841 = vmatpush1.msra.mxu0 0.0
    %2842 = vmatprep.subr.mxu0 0.0
    %2843 = vmatpush1.msra.mxu0 0.0
    %2844 = vmatprep.subr.mxu0 0.0
    %2845 = vmatpush1.msra.mxu0 0.0
    %2846 = vmatprep.subr.mxu0 0.0
    %2847 = vmatpush1.msra.mxu0 0.0
    %2848 = vmatprep.subr.mxu0 0.0
    %2849 = vmatpush1.msra.mxu0 0.0
    %2850 = vmatprep.subr.mxu0 0.0
    %2851 = vmatpush1.msra.mxu0 0.0
    %2852 = vmatprep.subr.mxu0 0.0
    %2853 = vmatpush1.msra.mxu0 0.0
    %2854 = vmatprep.subr.mxu0 0.0
    %2855 = vmatpush1.msra.mxu0 %v60
    %2856 = vmatprep.subr.mxu0 0.0
    %2857 = vmatpush2.msra.mxu0 0.0
    %2858 = vmatprep.subr.mxu0 0.0
    %2859 = vmatpush2.msra.mxu0 0.0
    %2860 = vmatprep.subr.mxu0 0.0
    %2861 = vmatpush2.msra.mxu0 0.0
    %2862 = vmatprep.subr.mxu0 0.0
    %2863 = vmatpush2.msra.mxu0 0.0
    %2864 = vmatprep.subr.mxu0 0.0
    %2865 = vmatpush2.msra.mxu0 0.0
    %2866 = vmatprep.subr.mxu0 0.0
    %2867 = vmatpush2.msra.mxu0 0.0
    %2868 = vmatprep.subr.mxu0 0.0
    %2869 = vmatpush2.msra.mxu0 0.0
    %2870 = vmatprep.subr.mxu0 0.0
    %2871 = vmatpush2.msra.mxu0 0.0
    %2872 = vmatprep.subr.mxu0 0.0
    %2873 = vmatpush2.msra.mxu0 0.0
    %2874 = vmatprep.subr.mxu0 0.0
    %2875 = vmatpush2.msra.mxu0 0.0
    %2876 = vmatprep.subr.mxu0 0.0
    %2877 = vmatpush2.msra.mxu0 0.0
    %2878 = vmatprep.subr.mxu0 0.0
    %2879 = vmatpush2.msra.mxu0 0.0
    %2880 = vmatprep.subr.mxu0 0.0
    %2881 = vmatpush2.msra.mxu0 0.0
    %2882 = vmatprep.subr.mxu0 0.0
    %2883 = vmatpush2.msra.mxu0 0.0
    %2884 = vmatprep.subr.mxu0 0.0
    %2885 = vmatpush2.msra.mxu0 0.0
    %2886 = vmatprep.subr.mxu0 0.0
    %2887 = vmatpush2.msra.mxu0 0.0
    %2888 = vmatprep.mubr.f32.mxu0 0.0
    %2889 = vmatmul.mubr.f32.gmra.mxu0 %v2822
    %v2890 = vpop.f32.mrf.mxu0
    %v2891 = vadd.f32 0.0, %v2890
    %v2892 = vpop.f32.mrf.mxu0
    %2893 = vdwg.mxu0
    %v2894 = vadd.f32 %v2801, %v2891
    %v2896 = vlaneseq
    %v2897 = vshrl.u32 %v2896, 7
    %v2898 = vsub.s32 0, %v2897
    %v2899 = vrot.slane %v68, %v2898
    %v2901 = vadd.f32 %v2894, %v2899
    %v2902 = vxor.u32 %v2901, 2147483648
    %v2903 = vmul.f32 %v2902, 1.442695
    %v2904 = vpow.pop %v2903
    %v2905 = vadd.f32 %v2904, 1.0
    %v2906 = vrcp.pop %v2905
    %v2907 = vmul.f32 1.0, %v2906
    %v2908 = vtanh.pop %v2901
    %v2910 = vrot.slane %v2511, 4
    %v2912 = vmul.f32 %v2907, %v2910
    %2914 = vrot.lane.b32.xlu0 %v2908, 104
    %v2915 = vpop.permute.xlu0 %2914
    %v2917 = vmul.f32 %v2907, %v2915
    %2919 = vrot.lane.b32.xlu0 %v2917, 8
    %v2920 = vpop.permute.xlu0 %2919
    %v2922 = vadd.f32 %v2912, %v2920
    %v2923 = vtanh.pop %v2922
    %2925 = vrot.lane.b32.xlu0 %v2923, 8
    %v2926 = vpop.permute.xlu0 %2925
    %v2928 = vmul.f32 %v2907, %v2926
    %2930 = vrot.lane.b32.xlu0 %v2928, 112
    %v2931 = vpop.permute.xlu0 %2930
    %2933 = vrot.lane.b32.xlu0 %v2624, 120
    %v2934 = vpop.permute.xlu0 %2933
    %v2936 = vsel %vm175, %v2931, %v2934
    %v2938 = vlaneseq
    %v2939 = vshrl.u32 %v2938, 7
    %v2940 = vsub.s32 0, %v2939
    %v2941 = vrot.slane %v69, %v2940
    %v2944 = vsel %vm300, %v2936, 0
    %2946 = vmatprep.subr.mxu0 0.0
    %2947 = vmatpush1.msra.mxu0 0.0
    %2948 = vmatprep.subr.mxu0 0.0
    %2949 = vmatpush1.msra.mxu0 0.0
    %2950 = vmatprep.subr.mxu0 0.0
    %2951 = vmatpush1.msra.mxu0 0.0
    %2952 = vmatprep.subr.mxu0 0.0
    %2953 = vmatpush1.msra.mxu0 0.0
    %2954 = vmatprep.subr.mxu0 0.0
    %2955 = vmatpush1.msra.mxu0 0.0
    %2956 = vmatprep.subr.mxu0 0.0
    %2957 = vmatpush1.msra.mxu0 0.0
    %2958 = vmatprep.subr.mxu0 0.0
    %2959 = vmatpush1.msra.mxu0 0.0
    %2960 = vmatprep.subr.mxu0 0.0
    %2961 = vmatpush1.msra.mxu0 0.0
    %2962 = vmatprep.subr.mxu0 0.0
    %2963 = vmatpush1.msra.mxu0 0.0
    %2964 = vmatprep.subr.mxu0 0.0
    %2965 = vmatpush1.msra.mxu0 0.0
    %2966 = vmatprep.subr.mxu0 0.0
    %2967 = vmatpush1.msra.mxu0 0.0
    %2968 = vmatprep.subr.mxu0 0.0
    %2969 = vmatpush1.msra.mxu0 0.0
    %2970 = vmatprep.subr.mxu0 0.0
    %2971 = vmatpush1.msra.mxu0 0.0
    %2972 = vmatprep.subr.mxu0 0.0
    %2973 = vmatpush1.msra.mxu0 0.0
    %2974 = vmatprep.subr.mxu0 0.0
    %2975 = vmatpush1.msra.mxu0 %v62
    %2976 = vmatprep.subr.mxu0 0.0
    %2977 = vmatpush1.msra.mxu0 %v61
    %2978 = vmatprep.subr.mxu0 0.0
    %2979 = vmatpush2.msra.mxu0 0.0
    %2980 = vmatprep.subr.mxu0 0.0
    %2981 = vmatpush2.msra.mxu0 0.0
    %2982 = vmatprep.subr.mxu0 0.0
    %2983 = vmatpush2.msra.mxu0 0.0
    %2984 = vmatprep.subr.mxu0 0.0
    %2985 = vmatpush2.msra.mxu0 0.0
    %2986 = vmatprep.subr.mxu0 0.0
    %2987 = vmatpush2.msra.mxu0 0.0
    %2988 = vmatprep.subr.mxu0 0.0
    %2989 = vmatpush2.msra.mxu0 0.0
    %2990 = vmatprep.subr.mxu0 0.0
    %2991 = vmatpush2.msra.mxu0 0.0
    %2992 = vmatprep.subr.mxu0 0.0
    %2993 = vmatpush2.msra.mxu0 0.0
    %2994 = vmatprep.subr.mxu0 0.0
    %2995 = vmatpush2.msra.mxu0 0.0
    %2996 = vmatprep.subr.mxu0 0.0
    %2997 = vmatpush2.msra.mxu0 0.0
    %2998 = vmatprep.subr.mxu0 0.0
    %2999 = vmatpush2.msra.mxu0 0.0
    %3000 = vmatprep.subr.mxu0 0.0
    %3001 = vmatpush2.msra.mxu0 0.0
    %3002 = vmatprep.subr.mxu0 0.0
    %3003 = vmatpush2.msra.mxu0 0.0
    %3004 = vmatprep.subr.mxu0 0.0
    %3005 = vmatpush2.msra.mxu0 0.0
    %3006 = vmatprep.subr.mxu0 0.0
    %3007 = vmatpush2.msra.mxu0 0.0
    %3008 = vmatprep.subr.mxu0 0.0
    %3009 = vmatpush2.msra.mxu0 0.0
    %3010 = vmatprep.mubr.f32.mxu0 0.0
    %3011 = vmatmul.mubr.f32.gmra.mxu0 %v2944
    %v3012 = vpop.f32.mrf.mxu0
    %v3013 = vadd.f32 %v2941, %v3012
    %v3014 = vpop.f32.mrf.mxu0
    %3015 = vdwg.mxu0
    %v3016 = vxor.u32 %v3013, 2147483648
    %v3017 = vmul.f32 %v3016, 1.442695
    %v3018 = vpow.pop %v3017
    %v3019 = vadd.f32 %v3018, 1.0
    %v3020 = vrcp.pop %v3019
    %v3021 = vmul.f32 1.0, %v3020
    %v3022 = vtanh.pop %v3013
    %v3023 = vmul.f32 %v3021, %v2618
    %3025 = vrot.lane.b32.xlu0 %v3022, 104
    %v3026 = vpop.permute.xlu0 %3025
    %v3028 = vmul.f32 %v3021, %v3026
    %3030 = vrot.lane.b32.xlu0 %v3028, 8
    %v3031 = vpop.permute.xlu0 %3030
    %v3033 = vadd.f32 %v3023, %v3031
    %v3034 = vtanh.pop %v3033
    %3036 = vrot.lane.b32.xlu0 %v3034, 8
    %v3037 = vpop.permute.xlu0 %3036
    %v3039 = vmul.f32 %v3021, %v3037
    %3041 = vrot.lane.b32.xlu0 %v3039, 112
    %v3042 = vpop.permute.xlu0 %3041
    %3045 = vrot.lane.b32.xlu0 %v2730, 120
    %v3046 = vpop.permute.xlu0 %3045
    %v3048 = vsel %vm175, %v3042, %v3046
    %v3050 = vlaneseq
    %v3051 = vshrl.u32 %v3050, 7
    %v3052 = vsub.s32 0, %v3051
    %v3053 = vrot.slane %v70, %v3052
    %v3056 = vsel %vm300, %v3048, 0
    %3058 = vmatprep.subr.mxu0 0.0
    %3059 = vmatpush1.msra.mxu0 0.0
    %3060 = vmatprep.subr.mxu0 0.0
    %3061 = vmatpush1.msra.mxu0 0.0
    %3062 = vmatprep.subr.mxu0 0.0
    %3063 = vmatpush1.msra.mxu0 0.0
    %3064 = vmatprep.subr.mxu0 0.0
    %3065 = vmatpush1.msra.mxu0 0.0
    %3066 = vmatprep.subr.mxu0 0.0
    %3067 = vmatpush1.msra.mxu0 0.0
    %3068 = vmatprep.subr.mxu0 0.0
    %3069 = vmatpush1.msra.mxu0 0.0
    %3070 = vmatprep.subr.mxu0 0.0
    %3071 = vmatpush1.msra.mxu0 0.0
    %3072 = vmatprep.subr.mxu0 0.0
    %3073 = vmatpush1.msra.mxu0 0.0
    %3074 = vmatprep.subr.mxu0 0.0
    %3075 = vmatpush1.msra.mxu0 0.0
    %3076 = vmatprep.subr.mxu0 0.0
    %3077 = vmatpush1.msra.mxu0 0.0
    %3078 = vmatprep.subr.mxu0 0.0
    %3079 = vmatpush1.msra.mxu0 0.0
    %3080 = vmatprep.subr.mxu0 0.0
    %3081 = vmatpush1.msra.mxu0 0.0
    %3082 = vmatprep.subr.mxu0 0.0
    %3083 = vmatpush1.msra.mxu0 0.0
    %3084 = vmatprep.subr.mxu0 0.0
    %3085 = vmatpush1.msra.mxu0 0.0
    %3086 = vmatprep.subr.mxu0 0.0
    %3087 = vmatpush1.msra.mxu0 %v64
    %3088 = vmatprep.subr.mxu0 0.0
    %3089 = vmatpush1.msra.mxu0 %v63
    %3090 = vmatprep.subr.mxu0 0.0
    %3091 = vmatpush2.msra.mxu0 0.0
    %3092 = vmatprep.subr.mxu0 0.0
    %3093 = vmatpush2.msra.mxu0 0.0
    %3094 = vmatprep.subr.mxu0 0.0
    %3095 = vmatpush2.msra.mxu0 0.0
    %3096 = vmatprep.subr.mxu0 0.0
    %3097 = vmatpush2.msra.mxu0 0.0
    %3098 = vmatprep.subr.mxu0 0.0
    %3099 = vmatpush2.msra.mxu0 0.0
    %3100 = vmatprep.subr.mxu0 0.0
    %3101 = vmatpush2.msra.mxu0 0.0
    %3102 = vmatprep.subr.mxu0 0.0
    %3103 = vmatpush2.msra.mxu0 0.0
    %3104 = vmatprep.subr.mxu0 0.0
    %3105 = vmatpush2.msra.mxu0 0.0
    %3106 = vmatprep.subr.mxu0 0.0
    %3107 = vmatpush2.msra.mxu0 0.0
    %3108 = vmatprep.subr.mxu0 0.0
    %3109 = vmatpush2.msra.mxu0 0.0
    %3110 = vmatprep.subr.mxu0 0.0
    %3111 = vmatpush2.msra.mxu0 0.0
    %3112 = vmatprep.subr.mxu0 0.0
    %3113 = vmatpush2.msra.mxu0 0.0
    %3114 = vmatprep.subr.mxu0 0.0
    %3115 = vmatpush2.msra.mxu0 0.0
    %3116 = vmatprep.subr.mxu0 0.0
    %3117 = vmatpush2.msra.mxu0 0.0
    %3118 = vmatprep.subr.mxu0 0.0
    %3119 = vmatpush2.msra.mxu0 0.0
    %3120 = vmatprep.subr.mxu0 0.0
    %3121 = vmatpush2.msra.mxu0 0.0
    %3122 = vmatprep.mubr.f32.mxu0 0.0
    %3123 = vmatmul.mubr.f32.gmra.mxu0 %v3056
    %v3124 = vpop.f32.mrf.mxu0
    %v3125 = vadd.f32 %v3053, %v3124
    %v3126 = vpop.f32.mrf.mxu0
    %3127 = vdwg.mxu0
    %v3128 = vxor.u32 %v3125, 2147483648
    %v3129 = vmul.f32 %v3128, 1.442695
    %v3130 = vpow.pop %v3129
    %v3131 = vadd.f32 %v3130, 1.0
    %v3132 = vrcp.pop %v3131
    %v3133 = vmul.f32 1.0, %v3132
    %v3134 = vtanh.pop %v3125
    %v3135 = vmul.f32 %v3133, %v2724
    %3137 = vrot.lane.b32.xlu0 %v3134, 104
    %v3138 = vpop.permute.xlu0 %3137
    %v3140 = vmul.f32 %v3133, %v3138
    %3142 = vrot.lane.b32.xlu0 %v3140, 8
    %v3143 = vpop.permute.xlu0 %3142
    %v3145 = vadd.f32 %v3135, %v3143
    %v3146 = vtanh.pop %v3145
    %3148 = vrot.lane.b32.xlu0 %v3146, 8
    %v3149 = vpop.permute.xlu0 %3148
    %v3151 = vmul.f32 %v3133, %v3149
    %v3152 = vsel %vm175, %v2931, 0
    %3154 = vmatprep.subr.mxu0 0.0
    %3155 = vmatpush1.msra.mxu0 0.0
    %3156 = vmatprep.subr.mxu0 0.0
    %3157 = vmatpush1.msra.mxu0 0.0
    %3158 = vmatprep.subr.mxu0 0.0
    %3159 = vmatpush1.msra.mxu0 0.0
    %3160 = vmatprep.subr.mxu0 0.0
    %3161 = vmatpush1.msra.mxu0 0.0
    %3162 = vmatprep.subr.mxu0 0.0
    %3163 = vmatpush1.msra.mxu0 0.0
    %3164 = vmatprep.subr.mxu0 0.0
    %3165 = vmatpush1.msra.mxu0 0.0
    %3166 = vmatprep.subr.mxu0 0.0
    %3167 = vmatpush1.msra.mxu0 0.0
    %3168 = vmatprep.subr.mxu0 0.0
    %3169 = vmatpush1.msra.mxu0 0.0
    %3170 = vmatprep.subr.mxu0 0.0
    %3171 = vmatpush1.msra.mxu0 0.0
    %3172 = vmatprep.subr.mxu0 0.0
    %3173 = vmatpush1.msra.mxu0 0.0
    %3174 = vmatprep.subr.mxu0 0.0
    %3175 = vmatpush1.msra.mxu0 0.0
    %3176 = vmatprep.subr.mxu0 0.0
    %3177 = vmatpush1.msra.mxu0 0.0
    %3178 = vmatprep.subr.mxu0 0.0
    %3179 = vmatpush1.msra.mxu0 0.0
    %3180 = vmatprep.subr.mxu0 0.0
    %3181 = vmatpush1.msra.mxu0 0.0
    %3182 = vmatprep.subr.mxu0 0.0
    %3183 = vmatpush1.msra.mxu0 0.0
    %3184 = vmatprep.subr.mxu0 0.0
    %3185 = vmatpush1.msra.mxu0 %v60
    %3186 = vmatprep.subr.mxu0 0.0
    %3187 = vmatpush2.msra.mxu0 0.0
    %3188 = vmatprep.subr.mxu0 0.0
    %3189 = vmatpush2.msra.mxu0 0.0
    %3190 = vmatprep.subr.mxu0 0.0
    %3191 = vmatpush2.msra.mxu0 0.0
    %3192 = vmatprep.subr.mxu0 0.0
    %3193 = vmatpush2.msra.mxu0 0.0
    %3194 = vmatprep.subr.mxu0 0.0
    %3195 = vmatpush2.msra.mxu0 0.0
    %3196 = vmatprep.subr.mxu0 0.0
    %3197 = vmatpush2.msra.mxu0 0.0
    %3198 = vmatprep.subr.mxu0 0.0
    %3199 = vmatpush2.msra.mxu0 0.0
    %3200 = vmatprep.subr.mxu0 0.0
    %3201 = vmatpush2.msra.mxu0 0.0
    %3202 = vmatprep.subr.mxu0 0.0
    %3203 = vmatpush2.msra.mxu0 0.0
    %3204 = vmatprep.subr.mxu0 0.0
    %3205 = vmatpush2.msra.mxu0 0.0
    %3206 = vmatprep.subr.mxu0 0.0
    %3207 = vmatpush2.msra.mxu0 0.0
    %3208 = vmatprep.subr.mxu0 0.0
    %3209 = vmatpush2.msra.mxu0 0.0
    %3210 = vmatprep.subr.mxu0 0.0
    %3211 = vmatpush2.msra.mxu0 0.0
    %3212 = vmatprep.subr.mxu0 0.0
    %3213 = vmatpush2.msra.mxu0 0.0
    %3214 = vmatprep.subr.mxu0 0.0
    %3215 = vmatpush2.msra.mxu0 0.0
    %3216 = vmatprep.subr.mxu0 0.0
    %3217 = vmatpush2.msra.mxu0 0.0
    %3218 = vmatprep.mubr.f32.mxu0 0.0
    %3219 = vmatmul.mubr.f32.gmra.mxu0 %v3152
    %v3220 = vpop.f32.mrf.mxu0
    %v3221 = vadd.f32 0.0, %v3220
    %v3222 = vpop.f32.mrf.mxu0
    %3223 = vdwg.mxu0
    %v3225 = vrot.slane %v3221, 4
    %v3227 = vadd.f32 %v2801, %v3225
    %v3228 = vadd.f32 %v3227, %v2899
    %v3229 = vxor.u32 %v3228, 2147483648
    %v3230 = vmul.f32 %v3229, 1.442695
    %v3231 = vpow.pop %v3230
    %v3232 = vadd.f32 %v3231, 1.0
    %v3233 = vrcp.pop %v3232
    %v3234 = vmul.f32 1.0, %v3233
    %v3235 = vtanh.pop %v3228
    %v3237 = vrot.slane %v2922, 4
    %v3239 = vmul.f32 %v3234, %v3237
    %3241 = vrot.lane.b32.xlu0 %v3235, 104
    %v3242 = vpop.permute.xlu0 %3241
    %v3244 = vmul.f32 %v3234, %v3242
    %3246 = vrot.lane.b32.xlu0 %v3244, 8
    %v3247 = vpop.permute.xlu0 %3246
    %v3249 = vadd.f32 %v3239, %v3247
    %v3250 = vtanh.pop %v3249
    %3252 = vrot.lane.b32.xlu0 %v3250, 8
    %v3253 = vpop.permute.xlu0 %3252
    %v3255 = vmul.f32 %v3234, %v3253
    %3257 = vrot.lane.b32.xlu0 %v3255, 112
    %v3258 = vpop.permute.xlu0 %3257
    %v3260 = vrot.slane %v3039, 4
    %3261 = vrot.lane.b32.xlu0 %v3260, 120
    %v3262 = vpop.permute.xlu0 %3261
    %v3264 = vsel %vm175, %v3258, %v3262
    %v3266 = vrot.slane %v3264, 4
    %v3267 = vsel %vm300, %v3266, 0
    %3269 = vmatprep.subr.mxu0 0.0
    %3270 = vmatpush1.msra.mxu0 0.0
    %3271 = vmatprep.subr.mxu0 0.0
    %3272 = vmatpush1.msra.mxu0 0.0
    %3273 = vmatprep.subr.mxu0 0.0
    %3274 = vmatpush1.msra.mxu0 0.0
    %3275 = vmatprep.subr.mxu0 0.0
    %3276 = vmatpush1.msra.mxu0 0.0
    %3277 = vmatprep.subr.mxu0 0.0
    %3278 = vmatpush1.msra.mxu0 0.0
    %3279 = vmatprep.subr.mxu0 0.0
    %3280 = vmatpush1.msra.mxu0 0.0
    %3281 = vmatprep.subr.mxu0 0.0
    %3282 = vmatpush1.msra.mxu0 0.0
    %3283 = vmatprep.subr.mxu0 0.0
    %3284 = vmatpush1.msra.mxu0 0.0
    %3285 = vmatprep.subr.mxu0 0.0
    %3286 = vmatpush1.msra.mxu0 0.0
    %3287 = vmatprep.subr.mxu0 0.0
    %3288 = vmatpush1.msra.mxu0 0.0
    %3289 = vmatprep.subr.mxu0 0.0
    %3290 = vmatpush1.msra.mxu0 0.0
    %3291 = vmatprep.subr.mxu0 0.0
    %3292 = vmatpush1.msra.mxu0 0.0
    %3293 = vmatprep.subr.mxu0 0.0
    %3294 = vmatpush1.msra.mxu0 0.0
    %3295 = vmatprep.subr.mxu0 0.0
    %3296 = vmatpush1.msra.mxu0 0.0
    %3297 = vmatprep.subr.mxu0 0.0
    %3298 = vmatpush1.msra.mxu0 %v62
    %3299 = vmatprep.subr.mxu0 0.0
    %3300 = vmatpush1.msra.mxu0 %v61
    %3301 = vmatprep.subr.mxu0 0.0
    %3302 = vmatpush2.msra.mxu0 0.0
    %3303 = vmatprep.subr.mxu0 0.0
    %3304 = vmatpush2.msra.mxu0 0.0
    %3305 = vmatprep.subr.mxu0 0.0
    %3306 = vmatpush2.msra.mxu0 0.0
    %3307 = vmatprep.subr.mxu0 0.0
    %3308 = vmatpush2.msra.mxu0 0.0
    %3309 = vmatprep.subr.mxu0 0.0
    %3310 = vmatpush2.msra.mxu0 0.0
    %3311 = vmatprep.subr.mxu0 0.0
    %3312 = vmatpush2.msra.mxu0 0.0
    %3313 = vmatprep.subr.mxu0 0.0
    %3314 = vmatpush2.msra.mxu0 0.0
    %3315 = vmatprep.subr.mxu0 0.0
    %3316 = vmatpush2.msra.mxu0 0.0
    %3317 = vmatprep.subr.mxu0 0.0
    %3318 = vmatpush2.msra.mxu0 0.0
    %3319 = vmatprep.subr.mxu0 0.0
    %3320 = vmatpush2.msra.mxu0 0.0
    %3321 = vmatprep.subr.mxu0 0.0
    %3322 = vmatpush2.msra.mxu0 0.0
    %3323 = vmatprep.subr.mxu0 0.0
    %3324 = vmatpush2.msra.mxu0 0.0
    %3325 = vmatprep.subr.mxu0 0.0
    %3326 = vmatpush2.msra.mxu0 0.0
    %3327 = vmatprep.subr.mxu0 0.0
    %3328 = vmatpush2.msra.mxu0 0.0
    %3329 = vmatprep.subr.mxu0 0.0
    %3330 = vmatpush2.msra.mxu0 0.0
    %3331 = vmatprep.subr.mxu0 0.0
    %3332 = vmatpush2.msra.mxu0 0.0
    %3333 = vmatprep.mubr.f32.mxu0 0.0
    %3334 = vmatmul.mubr.f32.gmra.mxu0 %v3267
    %v3335 = vpop.f32.mrf.mxu0
    %v3336 = vadd.f32 %v2941, %v3335
    %v3337 = vpop.f32.mrf.mxu0
    %3338 = vdwg.mxu0
    %v3339 = vxor.u32 %v3336, 2147483648
    %v3340 = vmul.f32 %v3339, 1.442695
    %v3341 = vpow.pop %v3340
    %v3342 = vadd.f32 %v3341, 1.0
    %v3343 = vrcp.pop %v3342
    %v3344 = vmul.f32 1.0, %v3343
    %v3345 = vtanh.pop %v3336
    %v3346 = vmul.f32 %v3344, %v3033
    %3348 = vrot.lane.b32.xlu0 %v3345, 104
    %v3349 = vpop.permute.xlu0 %3348
    %v3351 = vmul.f32 %v3344, %v3349
    %3353 = vrot.lane.b32.xlu0 %v3351, 8
    %v3354 = vpop.permute.xlu0 %3353
    %v3356 = vadd.f32 %v3346, %v3354
    %v3357 = vtanh.pop %v3356
    %3359 = vrot.lane.b32.xlu0 %v3357, 8
    %v3360 = vpop.permute.xlu0 %3359
    %v3362 = vmul.f32 %v3344, %v3360
    %3364 = vrot.lane.b32.xlu0 %v3362, 112
    %v3365 = vpop.permute.xlu0 %3364
    %3368 = vrot.lane.b32.xlu0 %v3151, 120
    %v3369 = vpop.permute.xlu0 %3368
    %v3371 = vsel %vm175, %v3365, %v3369
    %v3373 = vsel %vm300, %v3371, 0
    %3375 = vmatprep.subr.mxu0 0.0
    %3376 = vmatpush1.msra.mxu0 0.0
    %3377 = vmatprep.subr.mxu0 0.0
    %3378 = vmatpush1.msra.mxu0 0.0
    %3379 = vmatprep.subr.mxu0 0.0
    %3380 = vmatpush1.msra.mxu0 0.0
    %3381 = vmatprep.subr.mxu0 0.0
    %3382 = vmatpush1.msra.mxu0 0.0
    %3383 = vmatprep.subr.mxu0 0.0
    %3384 = vmatpush1.msra.mxu0 0.0
    %3385 = vmatprep.subr.mxu0 0.0
    %3386 = vmatpush1.msra.mxu0 0.0
    %3387 = vmatprep.subr.mxu0 0.0
    %3388 = vmatpush1.msra.mxu0 0.0
    %3389 = vmatprep.subr.mxu0 0.0
    %3390 = vmatpush1.msra.mxu0 0.0
    %3391 = vmatprep.subr.mxu0 0.0
    %3392 = vmatpush1.msra.mxu0 0.0
    %3393 = vmatprep.subr.mxu0 0.0
    %3394 = vmatpush1.msra.mxu0 0.0
    %3395 = vmatprep.subr.mxu0 0.0
    %3396 = vmatpush1.msra.mxu0 0.0
    %3397 = vmatprep.subr.mxu0 0.0
    %3398 = vmatpush1.msra.mxu0 0.0
    %3399 = vmatprep.subr.mxu0 0.0
    %3400 = vmatpush1.msra.mxu0 0.0
    %3401 = vmatprep.subr.mxu0 0.0
    %3402 = vmatpush1.msra.mxu0 0.0
    %3403 = vmatprep.subr.mxu0 0.0
    %3404 = vmatpush1.msra.mxu0 %v64
    %3405 = vmatprep.subr.mxu0 0.0
    %3406 = vmatpush1.msra.mxu0 %v63
    %3407 = vmatprep.subr.mxu0 0.0
    %3408 = vmatpush2.msra.mxu0 0.0
    %3409 = vmatprep.subr.mxu0 0.0
    %3410 = vmatpush2.msra.mxu0 0.0
    %3411 = vmatprep.subr.mxu0 0.0
    %3412 = vmatpush2.msra.mxu0 0.0
    %3413 = vmatprep.subr.mxu0 0.0
    %3414 = vmatpush2.msra.mxu0 0.0
    %3415 = vmatprep.subr.mxu0 0.0
    %3416 = vmatpush2.msra.mxu0 0.0
    %3417 = vmatprep.subr.mxu0 0.0
    %3418 = vmatpush2.msra.mxu0 0.0
    %3419 = vmatprep.subr.mxu0 0.0
    %3420 = vmatpush2.msra.mxu0 0.0
    %3421 = vmatprep.subr.mxu0 0.0
    %3422 = vmatpush2.msra.mxu0 0.0
    %3423 = vmatprep.subr.mxu0 0.0
    %3424 = vmatpush2.msra.mxu0 0.0
    %3425 = vmatprep.subr.mxu0 0.0
    %3426 = vmatpush2.msra.mxu0 0.0
    %3427 = vmatprep.subr.mxu0 0.0
    %3428 = vmatpush2.msra.mxu0 0.0
    %3429 = vmatprep.subr.mxu0 0.0
    %3430 = vmatpush2.msra.mxu0 0.0
    %3431 = vmatprep.subr.mxu0 0.0
    %3432 = vmatpush2.msra.mxu0 0.0
    %3433 = vmatprep.subr.mxu0 0.0
    %3434 = vmatpush2.msra.mxu0 0.0
    %3435 = vmatprep.subr.mxu0 0.0
    %3436 = vmatpush2.msra.mxu0 0.0
    %3437 = vmatprep.subr.mxu0 0.0
    %3438 = vmatpush2.msra.mxu0 0.0
    %3439 = vmatprep.mubr.f32.mxu0 0.0
    %3440 = vmatmul.mubr.f32.gmra.mxu0 %v3373
    %v3441 = vpop.f32.mrf.mxu0
    %v3442 = vadd.f32 %v3053, %v3441
    %v3443 = vpop.f32.mrf.mxu0
    %3444 = vdwg.mxu0
    %v3445 = vxor.u32 %v3442, 2147483648
    %v3446 = vmul.f32 %v3445, 1.442695
    %v3447 = vpow.pop %v3446
    %v3448 = vadd.f32 %v3447, 1.0
    %v3449 = vrcp.pop %v3448
    %v3450 = vmul.f32 1.0, %v3449
    %v3451 = vtanh.pop %v3442
    %v3452 = vmul.f32 %v3450, %v3145
    %3454 = vrot.lane.b32.xlu0 %v3451, 104
    %v3455 = vpop.permute.xlu0 %3454
    %v3457 = vmul.f32 %v3450, %v3455
    %3459 = vrot.lane.b32.xlu0 %v3457, 8
    %v3460 = vpop.permute.xlu0 %3459
    %v3462 = vadd.f32 %v3452, %v3460
    %v3463 = vtanh.pop %v3462
    %3465 = vrot.lane.b32.xlu0 %v3463, 8
    %v3466 = vpop.permute.xlu0 %3465
    %v3468 = vmul.f32 %v3450, %v3466
    %v3469 = vrot.slane %v3255, 4
    %3470 = vrot.lane.b32.xlu0 %v3469, 112
    %v3471 = vpop.permute.xlu0 %3470
    %v3472 = vsel %vm175, %v3471, 0
    %3474 = vmatprep.subr.mxu0 0.0
    %3475 = vmatpush1.msra.mxu0 0.0
    %3476 = vmatprep.subr.mxu0 0.0
    %3477 = vmatpush1.msra.mxu0 0.0
    %3478 = vmatprep.subr.mxu0 0.0
    %3479 = vmatpush1.msra.mxu0 0.0
    %3480 = vmatprep.subr.mxu0 0.0
    %3481 = vmatpush1.msra.mxu0 0.0
    %3482 = vmatprep.subr.mxu0 0.0
    %3483 = vmatpush1.msra.mxu0 0.0
    %3484 = vmatprep.subr.mxu0 0.0
    %3485 = vmatpush1.msra.mxu0 0.0
    %3486 = vmatprep.subr.mxu0 0.0
    %3487 = vmatpush1.msra.mxu0 0.0
    %3488 = vmatprep.subr.mxu0 0.0
    %3489 = vmatpush1.msra.mxu0 0.0
    %3490 = vmatprep.subr.mxu0 0.0
    %3491 = vmatpush1.msra.mxu0 0.0
    %3492 = vmatprep.subr.mxu0 0.0
    %3493 = vmatpush1.msra.mxu0 0.0
    %3494 = vmatprep.subr.mxu0 0.0
    %3495 = vmatpush1.msra.mxu0 0.0
    %3496 = vmatprep.subr.mxu0 0.0
    %3497 = vmatpush1.msra.mxu0 0.0
    %3498 = vmatprep.subr.mxu0 0.0
    %3499 = vmatpush1.msra.mxu0 0.0
    %3500 = vmatprep.subr.mxu0 0.0
    %3501 = vmatpush1.msra.mxu0 0.0
    %3502 = vmatprep.subr.mxu0 0.0
    %3503 = vmatpush1.msra.mxu0 0.0
    %3504 = vmatprep.subr.mxu0 0.0
    %3505 = vmatpush1.msra.mxu0 %v60
    %3506 = vmatprep.subr.mxu0 0.0
    %3507 = vmatpush2.msra.mxu0 0.0
    %3508 = vmatprep.subr.mxu0 0.0
    %3509 = vmatpush2.msra.mxu0 0.0
    %3510 = vmatprep.subr.mxu0 0.0
    %3511 = vmatpush2.msra.mxu0 0.0
    %3512 = vmatprep.subr.mxu0 0.0
    %3513 = vmatpush2.msra.mxu0 0.0
    %3514 = vmatprep.subr.mxu0 0.0
    %3515 = vmatpush2.msra.mxu0 0.0
    %3516 = vmatprep.subr.mxu0 0.0
    %3517 = vmatpush2.msra.mxu0 0.0
    %3518 = vmatprep.subr.mxu0 0.0
    %3519 = vmatpush2.msra.mxu0 0.0
    %3520 = vmatprep.subr.mxu0 0.0
    %3521 = vmatpush2.msra.mxu0 0.0
    %3522 = vmatprep.subr.mxu0 0.0
    %3523 = vmatpush2.msra.mxu0 0.0
    %3524 = vmatprep.subr.mxu0 0.0
    %3525 = vmatpush2.msra.mxu0 0.0
    %3526 = vmatprep.subr.mxu0 0.0
    %3527 = vmatpush2.msra.mxu0 0.0
    %3528 = vmatprep.subr.mxu0 0.0
    %3529 = vmatpush2.msra.mxu0 0.0
    %3530 = vmatprep.subr.mxu0 0.0
    %3531 = vmatpush2.msra.mxu0 0.0
    %3532 = vmatprep.subr.mxu0 0.0
    %3533 = vmatpush2.msra.mxu0 0.0
    %3534 = vmatprep.subr.mxu0 0.0
    %3535 = vmatpush2.msra.mxu0 0.0
    %3536 = vmatprep.subr.mxu0 0.0
    %3537 = vmatpush2.msra.mxu0 0.0
    %3538 = vmatprep.mubr.f32.mxu0 0.0
    %3539 = vmatmul.mubr.f32.gmra.mxu0 %v3472
    %v3540 = vpop.f32.mrf.mxu0
    %v3541 = vadd.f32 0.0, %v3540
    %v3542 = vpop.f32.mrf.mxu0
    %3543 = vdwg.mxu0
    %v3544 = vadd.f32 %v2806, %v3541
    %v3545 = vadd.f32 %v3544, %v2899
    %v3546 = vxor.u32 %v3545, 2147483648
    %v3547 = vmul.f32 %v3546, 1.442695
    %v3548 = vpow.pop %v3547
    %v3549 = vadd.f32 %v3548, 1.0
    %v3550 = vrcp.pop %v3549
    %v3551 = vmul.f32 1.0, %v3550
    %v3552 = vtanh.pop %v3545
    %v3554 = vrot.slane %v3249, 4
    %v3556 = vmul.f32 %v3551, %v3554
    %3558 = vrot.lane.b32.xlu0 %v3552, 104
    %v3559 = vpop.permute.xlu0 %3558
    %v3561 = vmul.f32 %v3551, %v3559
    %3563 = vrot.lane.b32.xlu0 %v3561, 8
    %v3564 = vpop.permute.xlu0 %3563
    %v3566 = vadd.f32 %v3556, %v3564
    %v3567 = vtanh.pop %v3566
    %3569 = vrot.lane.b32.xlu0 %v3567, 8
    %v3570 = vpop.permute.xlu0 %3569
    %v3572 = vmul.f32 %v3551, %v3570
    %3574 = vrot.lane.b32.xlu0 %v3572, 112
    %v3575 = vpop.permute.xlu0 %3574
    %3577 = vrot.lane.b32.xlu0 %v3362, 120
    %v3578 = vpop.permute.xlu0 %3577
    %v3580 = vsel %vm175, %v3575, %v3578
    %v3582 = vsel %vm300, %v3580, 0
    %3584 = vmatprep.subr.mxu0 0.0
    %3585 = vmatpush1.msra.mxu0 0.0
    %3586 = vmatprep.subr.mxu0 0.0
    %3587 = vmatpush1.msra.mxu0 0.0
    %3588 = vmatprep.subr.mxu0 0.0
    %3589 = vmatpush1.msra.mxu0 0.0
    %3590 = vmatprep.subr.mxu0 0.0
    %3591 = vmatpush1.msra.mxu0 0.0
    %3592 = vmatprep.subr.mxu0 0.0
    %3593 = vmatpush1.msra.mxu0 0.0
    %3594 = vmatprep.subr.mxu0 0.0
    %3595 = vmatpush1.msra.mxu0 0.0
    %3596 = vmatprep.subr.mxu0 0.0
    %3597 = vmatpush1.msra.mxu0 0.0
    %3598 = vmatprep.subr.mxu0 0.0
    %3599 = vmatpush1.msra.mxu0 0.0
    %3600 = vmatprep.subr.mxu0 0.0
    %3601 = vmatpush1.msra.mxu0 0.0
    %3602 = vmatprep.subr.mxu0 0.0
    %3603 = vmatpush1.msra.mxu0 0.0
    %3604 = vmatprep.subr.mxu0 0.0
    %3605 = vmatpush1.msra.mxu0 0.0
    %3606 = vmatprep.subr.mxu0 0.0
    %3607 = vmatpush1.msra.mxu0 0.0
    %3608 = vmatprep.subr.mxu0 0.0
    %3609 = vmatpush1.msra.mxu0 0.0
    %3610 = vmatprep.subr.mxu0 0.0
    %3611 = vmatpush1.msra.mxu0 0.0
    %3612 = vmatprep.subr.mxu0 0.0
    %3613 = vmatpush1.msra.mxu0 %v62
    %3614 = vmatprep.subr.mxu0 0.0
    %3615 = vmatpush1.msra.mxu0 %v61
    %3616 = vmatprep.subr.mxu0 0.0
    %3617 = vmatpush2.msra.mxu0 0.0
    %3618 = vmatprep.subr.mxu0 0.0
    %3619 = vmatpush2.msra.mxu0 0.0
    %3620 = vmatprep.subr.mxu0 0.0
    %3621 = vmatpush2.msra.mxu0 0.0
    %3622 = vmatprep.subr.mxu0 0.0
    %3623 = vmatpush2.msra.mxu0 0.0
    %3624 = vmatprep.subr.mxu0 0.0
    %3625 = vmatpush2.msra.mxu0 0.0
    %3626 = vmatprep.subr.mxu0 0.0
    %3627 = vmatpush2.msra.mxu0 0.0
    %3628 = vmatprep.subr.mxu0 0.0
    %3629 = vmatpush2.msra.mxu0 0.0
    %3630 = vmatprep.subr.mxu0 0.0
    %3631 = vmatpush2.msra.mxu0 0.0
    %3632 = vmatprep.subr.mxu0 0.0
    %3633 = vmatpush2.msra.mxu0 0.0
    %3634 = vmatprep.subr.mxu0 0.0
    %3635 = vmatpush2.msra.mxu0 0.0
    %3636 = vmatprep.subr.mxu0 0.0
    %3637 = vmatpush2.msra.mxu0 0.0
    %3638 = vmatprep.subr.mxu0 0.0
    %3639 = vmatpush2.msra.mxu0 0.0
    %3640 = vmatprep.subr.mxu0 0.0
    %3641 = vmatpush2.msra.mxu0 0.0
    %3642 = vmatprep.subr.mxu0 0.0
    %3643 = vmatpush2.msra.mxu0 0.0
    %3644 = vmatprep.subr.mxu0 0.0
    %3645 = vmatpush2.msra.mxu0 0.0
    %3646 = vmatprep.subr.mxu0 0.0
    %3647 = vmatpush2.msra.mxu0 0.0
    %3648 = vmatprep.mubr.f32.mxu0 0.0
    %3649 = vmatmul.mubr.f32.gmra.mxu0 %v3582
    %v3650 = vpop.f32.mrf.mxu0
    %v3651 = vadd.f32 %v2941, %v3650
    %v3652 = vpop.f32.mrf.mxu0
    %3653 = vdwg.mxu0
    %v3654 = vxor.u32 %v3651, 2147483648
    %v3655 = vmul.f32 %v3654, 1.442695
    %v3656 = vpow.pop %v3655
    %v3657 = vadd.f32 %v3656, 1.0
    %v3658 = vrcp.pop %v3657
    %v3659 = vmul.f32 1.0, %v3658
    %v3660 = vtanh.pop %v3651
    %v3661 = vmul.f32 %v3659, %v3356
    %3663 = vrot.lane.b32.xlu0 %v3660, 104
    %v3664 = vpop.permute.xlu0 %3663
    %v3666 = vmul.f32 %v3659, %v3664
    %3668 = vrot.lane.b32.xlu0 %v3666, 8
    %v3669 = vpop.permute.xlu0 %3668
    %v3671 = vadd.f32 %v3661, %v3669
    %v3672 = vtanh.pop %v3671
    %3674 = vrot.lane.b32.xlu0 %v3672, 8
    %v3675 = vpop.permute.xlu0 %3674
    %v3677 = vmul.f32 %v3659, %v3675
    %3679 = vrot.lane.b32.xlu0 %v3677, 112
    %v3680 = vpop.permute.xlu0 %3679
    %3683 = vrot.lane.b32.xlu0 %v3468, 120
    %v3684 = vpop.permute.xlu0 %3683
    %v3686 = vsel %vm175, %v3680, %v3684
    %v3688 = vsel %vm300, %v3686, 0
    %3690 = vmatprep.subr.mxu0 0.0
    %3691 = vmatpush1.msra.mxu0 0.0
    %3692 = vmatprep.subr.mxu0 0.0
    %3693 = vmatpush1.msra.mxu0 0.0
    %3694 = vmatprep.subr.mxu0 0.0
    %3695 = vmatpush1.msra.mxu0 0.0
    %3696 = vmatprep.subr.mxu0 0.0
    %3697 = vmatpush1.msra.mxu0 0.0
    %3698 = vmatprep.subr.mxu0 0.0
    %3699 = vmatpush1.msra.mxu0 0.0
    %3700 = vmatprep.subr.mxu0 0.0
    %3701 = vmatpush1.msra.mxu0 0.0
    %3702 = vmatprep.subr.mxu0 0.0
    %3703 = vmatpush1.msra.mxu0 0.0
    %3704 = vmatprep.subr.mxu0 0.0
    %3705 = vmatpush1.msra.mxu0 0.0
    %3706 = vmatprep.subr.mxu0 0.0
    %3707 = vmatpush1.msra.mxu0 0.0
    %3708 = vmatprep.subr.mxu0 0.0
    %3709 = vmatpush1.msra.mxu0 0.0
    %3710 = vmatprep.subr.mxu0 0.0
    %3711 = vmatpush1.msra.mxu0 0.0
    %3712 = vmatprep.subr.mxu0 0.0
    %3713 = vmatpush1.msra.mxu0 0.0
    %3714 = vmatprep.subr.mxu0 0.0
    %3715 = vmatpush1.msra.mxu0 0.0
    %3716 = vmatprep.subr.mxu0 0.0
    %3717 = vmatpush1.msra.mxu0 0.0
    %3718 = vmatprep.subr.mxu0 0.0
    %3719 = vmatpush1.msra.mxu0 %v64
    %3720 = vmatprep.subr.mxu0 0.0
    %3721 = vmatpush1.msra.mxu0 %v63
    %3722 = vmatprep.subr.mxu0 0.0
    %3723 = vmatpush2.msra.mxu0 0.0
    %3724 = vmatprep.subr.mxu0 0.0
    %3725 = vmatpush2.msra.mxu0 0.0
    %3726 = vmatprep.subr.mxu0 0.0
    %3727 = vmatpush2.msra.mxu0 0.0
    %3728 = vmatprep.subr.mxu0 0.0
    %3729 = vmatpush2.msra.mxu0 0.0
    %3730 = vmatprep.subr.mxu0 0.0
    %3731 = vmatpush2.msra.mxu0 0.0
    %3732 = vmatprep.subr.mxu0 0.0
    %3733 = vmatpush2.msra.mxu0 0.0
    %3734 = vmatprep.subr.mxu0 0.0
    %3735 = vmatpush2.msra.mxu0 0.0
    %3736 = vmatprep.subr.mxu0 0.0
    %3737 = vmatpush2.msra.mxu0 0.0
    %3738 = vmatprep.subr.mxu0 0.0
    %3739 = vmatpush2.msra.mxu0 0.0
    %3740 = vmatprep.subr.mxu0 0.0
    %3741 = vmatpush2.msra.mxu0 0.0
    %3742 = vmatprep.subr.mxu0 0.0
    %3743 = vmatpush2.msra.mxu0 0.0
    %3744 = vmatprep.subr.mxu0 0.0
    %3745 = vmatpush2.msra.mxu0 0.0
    %3746 = vmatprep.subr.mxu0 0.0
    %3747 = vmatpush2.msra.mxu0 0.0
    %3748 = vmatprep.subr.mxu0 0.0
    %3749 = vmatpush2.msra.mxu0 0.0
    %3750 = vmatprep.subr.mxu0 0.0
    %3751 = vmatpush2.msra.mxu0 0.0
    %3752 = vmatprep.subr.mxu0 0.0
    %3753 = vmatpush2.msra.mxu0 0.0
    %3754 = vmatprep.mubr.f32.mxu0 0.0
    %3755 = vmatmul.mubr.f32.gmra.mxu0 %v3688
    %v3756 = vpop.f32.mrf.mxu0
    %v3757 = vadd.f32 %v3053, %v3756
    %v3758 = vpop.f32.mrf.mxu0
    %3759 = vdwg.mxu0
    %v3760 = vxor.u32 %v3757, 2147483648
    %v3761 = vmul.f32 %v3760, 1.442695
    %v3762 = vpow.pop %v3761
    %v3763 = vadd.f32 %v3762, 1.0
    %v3764 = vrcp.pop %v3763
    %v3765 = vmul.f32 1.0, %v3764
    %v3766 = vtanh.pop %v3757
    %v3767 = vmul.f32 %v3765, %v3462
    %3769 = vrot.lane.b32.xlu0 %v3766, 104
    %v3770 = vpop.permute.xlu0 %3769
    %v3772 = vmul.f32 %v3765, %v3770
    %3774 = vrot.lane.b32.xlu0 %v3772, 8
    %v3775 = vpop.permute.xlu0 %3774
    %v3777 = vadd.f32 %v3767, %v3775
    %v3778 = vtanh.pop %v3777
    %3780 = vrot.lane.b32.xlu0 %v3778, 8
    %v3781 = vpop.permute.xlu0 %3780
    %v3783 = vmul.f32 %v3765, %v3781
    %v3784 = vsel %vm175, %v3575, 0
    %3786 = vmatprep.subr.mxu0 0.0
    %3787 = vmatpush1.msra.mxu0 0.0
    %3788 = vmatprep.subr.mxu0 0.0
    %3789 = vmatpush1.msra.mxu0 0.0
    %3790 = vmatprep.subr.mxu0 0.0
    %3791 = vmatpush1.msra.mxu0 0.0
    %3792 = vmatprep.subr.mxu0 0.0
    %3793 = vmatpush1.msra.mxu0 0.0
    %3794 = vmatprep.subr.mxu0 0.0
    %3795 = vmatpush1.msra.mxu0 0.0
    %3796 = vmatprep.subr.mxu0 0.0
    %3797 = vmatpush1.msra.mxu0 0.0
    %3798 = vmatprep.subr.mxu0 0.0
    %3799 = vmatpush1.msra.mxu0 0.0
    %3800 = vmatprep.subr.mxu0 0.0
    %3801 = vmatpush1.msra.mxu0 0.0
    %3802 = vmatprep.subr.mxu0 0.0
    %3803 = vmatpush1.msra.mxu0 0.0
    %3804 = vmatprep.subr.mxu0 0.0
    %3805 = vmatpush1.msra.mxu0 0.0
    %3806 = vmatprep.subr.mxu0 0.0
    %3807 = vmatpush1.msra.mxu0 0.0
    %3808 = vmatprep.subr.mxu0 0.0
    %3809 = vmatpush1.msra.mxu0 0.0
    %3810 = vmatprep.subr.mxu0 0.0
    %3811 = vmatpush1.msra.mxu0 0.0
    %3812 = vmatprep.subr.mxu0 0.0
    %3813 = vmatpush1.msra.mxu0 0.0
    %3814 = vmatprep.subr.mxu0 0.0
    %3815 = vmatpush1.msra.mxu0 0.0
    %3816 = vmatprep.subr.mxu0 0.0
    %3817 = vmatpush1.msra.mxu0 %v60
    %3818 = vmatprep.subr.mxu0 0.0
    %3819 = vmatpush2.msra.mxu0 0.0
    %3820 = vmatprep.subr.mxu0 0.0
    %3821 = vmatpush2.msra.mxu0 0.0
    %3822 = vmatprep.subr.mxu0 0.0
    %3823 = vmatpush2.msra.mxu0 0.0
    %3824 = vmatprep.subr.mxu0 0.0
    %3825 = vmatpush2.msra.mxu0 0.0
    %3826 = vmatprep.subr.mxu0 0.0
    %3827 = vmatpush2.msra.mxu0 0.0
    %3828 = vmatprep.subr.mxu0 0.0
    %3829 = vmatpush2.msra.mxu0 0.0
    %3830 = vmatprep.subr.mxu0 0.0
    %3831 = vmatpush2.msra.mxu0 0.0
    %3832 = vmatprep.subr.mxu0 0.0
    %3833 = vmatpush2.msra.mxu0 0.0
    %3834 = vmatprep.subr.mxu0 0.0
    %3835 = vmatpush2.msra.mxu0 0.0
    %3836 = vmatprep.subr.mxu0 0.0
    %3837 = vmatpush2.msra.mxu0 0.0
    %3838 = vmatprep.subr.mxu0 0.0
    %3839 = vmatpush2.msra.mxu0 0.0
    %3840 = vmatprep.subr.mxu0 0.0
    %3841 = vmatpush2.msra.mxu0 0.0
    %3842 = vmatprep.subr.mxu0 0.0
    %3843 = vmatpush2.msra.mxu0 0.0
    %3844 = vmatprep.subr.mxu0 0.0
    %3845 = vmatpush2.msra.mxu0 0.0
    %3846 = vmatprep.subr.mxu0 0.0
    %3847 = vmatpush2.msra.mxu0 0.0
    %3848 = vmatprep.subr.mxu0 0.0
    %3849 = vmatpush2.msra.mxu0 0.0
    %3850 = vmatprep.mubr.f32.mxu0 0.0
    %3851 = vmatmul.mubr.f32.gmra.mxu0 %v3784
    %v3852 = vpop.f32.mrf.mxu0
    %v3853 = vadd.f32 0.0, %v3852
    %v3854 = vpop.f32.mrf.mxu0
    %3855 = vdwg.mxu0
    %v3857 = vrot.slane %v3853, 4
    %v3859 = vadd.f32 %v2806, %v3857
    %v3860 = vadd.f32 %v3859, %v2899
    %v3861 = vxor.u32 %v3860, 2147483648
    %v3862 = vmul.f32 %v3861, 1.442695
    %v3863 = vpow.pop %v3862
    %v3864 = vadd.f32 %v3863, 1.0
    %v3865 = vrcp.pop %v3864
    %v3866 = vmul.f32 1.0, %v3865
    %v3867 = vtanh.pop %v3860
    %v3869 = vrot.slane %v3566, 4
    %v3871 = vmul.f32 %v3866, %v3869
    %3873 = vrot.lane.b32.xlu0 %v3867, 104
    %v3874 = vpop.permute.xlu0 %3873
    %v3876 = vmul.f32 %v3866, %v3874
    %3878 = vrot.lane.b32.xlu0 %v3876, 8
    %v3879 = vpop.permute.xlu0 %3878
    %v3881 = vadd.f32 %v3871, %v3879
    %v3882 = vtanh.pop %v3881
    %3884 = vrot.lane.b32.xlu0 %v3882, 8
    %v3885 = vpop.permute.xlu0 %3884
    %v3887 = vmul.f32 %v3866, %v3885
    %3889 = vrot.lane.b32.xlu0 %v3887, 112
    %v3890 = vpop.permute.xlu0 %3889
    %v3892 = vrot.slane %v3677, 4
    %3893 = vrot.lane.b32.xlu0 %v3892, 120
    %v3894 = vpop.permute.xlu0 %3893
    %v3896 = vsel %vm175, %v3890, %v3894
    %v3898 = vrot.slane %v3896, 4
    %v3899 = vsel %vm300, %v3898, 0
    %3901 = vmatprep.subr.mxu0 0.0
    %3902 = vmatpush1.msra.mxu0 0.0
    %3903 = vmatprep.subr.mxu0 0.0
    %3904 = vmatpush1.msra.mxu0 0.0
    %3905 = vmatprep.subr.mxu0 0.0
    %3906 = vmatpush1.msra.mxu0 0.0
    %3907 = vmatprep.subr.mxu0 0.0
    %3908 = vmatpush1.msra.mxu0 0.0
    %3909 = vmatprep.subr.mxu0 0.0
    %3910 = vmatpush1.msra.mxu0 0.0
    %3911 = vmatprep.subr.mxu0 0.0
    %3912 = vmatpush1.msra.mxu0 0.0
    %3913 = vmatprep.subr.mxu0 0.0
    %3914 = vmatpush1.msra.mxu0 0.0
    %3915 = vmatprep.subr.mxu0 0.0
    %3916 = vmatpush1.msra.mxu0 0.0
    %3917 = vmatprep.subr.mxu0 0.0
    %3918 = vmatpush1.msra.mxu0 0.0
    %3919 = vmatprep.subr.mxu0 0.0
    %3920 = vmatpush1.msra.mxu0 0.0
    %3921 = vmatprep.subr.mxu0 0.0
    %3922 = vmatpush1.msra.mxu0 0.0
    %3923 = vmatprep.subr.mxu0 0.0
    %3924 = vmatpush1.msra.mxu0 0.0
    %3925 = vmatprep.subr.mxu0 0.0
    %3926 = vmatpush1.msra.mxu0 0.0
    %3927 = vmatprep.subr.mxu0 0.0
    %3928 = vmatpush1.msra.mxu0 0.0
    %3929 = vmatprep.subr.mxu0 0.0
    %3930 = vmatpush1.msra.mxu0 %v62
    %3931 = vmatprep.subr.mxu0 0.0
    %3932 = vmatpush1.msra.mxu0 %v61
    %3933 = vmatprep.subr.mxu0 0.0
    %3934 = vmatpush2.msra.mxu0 0.0
    %3935 = vmatprep.subr.mxu0 0.0
    %3936 = vmatpush2.msra.mxu0 0.0
    %3937 = vmatprep.subr.mxu0 0.0
    %3938 = vmatpush2.msra.mxu0 0.0
    %3939 = vmatprep.subr.mxu0 0.0
    %3940 = vmatpush2.msra.mxu0 0.0
    %3941 = vmatprep.subr.mxu0 0.0
    %3942 = vmatpush2.msra.mxu0 0.0
    %3943 = vmatprep.subr.mxu0 0.0
    %3944 = vmatpush2.msra.mxu0 0.0
    %3945 = vmatprep.subr.mxu0 0.0
    %3946 = vmatpush2.msra.mxu0 0.0
    %3947 = vmatprep.subr.mxu0 0.0
    %3948 = vmatpush2.msra.mxu0 0.0
    %3949 = vmatprep.subr.mxu0 0.0
    %3950 = vmatpush2.msra.mxu0 0.0
    %3951 = vmatprep.subr.mxu0 0.0
    %3952 = vmatpush2.msra.mxu0 0.0
    %3953 = vmatprep.subr.mxu0 0.0
    %3954 = vmatpush2.msra.mxu0 0.0
    %3955 = vmatprep.subr.mxu0 0.0
    %3956 = vmatpush2.msra.mxu0 0.0
    %3957 = vmatprep.subr.mxu0 0.0
    %3958 = vmatpush2.msra.mxu0 0.0
    %3959 = vmatprep.subr.mxu0 0.0
    %3960 = vmatpush2.msra.mxu0 0.0
    %3961 = vmatprep.subr.mxu0 0.0
    %3962 = vmatpush2.msra.mxu0 0.0
    %3963 = vmatprep.subr.mxu0 0.0
    %3964 = vmatpush2.msra.mxu0 0.0
    %3965 = vmatprep.mubr.f32.mxu0 0.0
    %3966 = vmatmul.mubr.f32.gmra.mxu0 %v3899
    %v3967 = vpop.f32.mrf.mxu0
    %v3968 = vadd.f32 %v2941, %v3967
    %v3969 = vpop.f32.mrf.mxu0
    %3970 = vdwg.mxu0
    %v3971 = vxor.u32 %v3968, 2147483648
    %v3972 = vmul.f32 %v3971, 1.442695
    %v3973 = vpow.pop %v3972
    %v3974 = vadd.f32 %v3973, 1.0
    %v3975 = vrcp.pop %v3974
    %v3976 = vmul.f32 1.0, %v3975
    %v3977 = vtanh.pop %v3968
    %v3978 = vmul.f32 %v3976, %v3671
    %3980 = vrot.lane.b32.xlu0 %v3977, 104
    %v3981 = vpop.permute.xlu0 %3980
    %v3983 = vmul.f32 %v3976, %v3981
    %3985 = vrot.lane.b32.xlu0 %v3983, 8
    %v3986 = vpop.permute.xlu0 %3985
    %v3988 = vadd.f32 %v3978, %v3986
    %v3989 = vtanh.pop %v3988
    %3991 = vrot.lane.b32.xlu0 %v3989, 8
    %v3992 = vpop.permute.xlu0 %3991
    %v3994 = vmul.f32 %v3976, %v3992
    %3996 = vrot.lane.b32.xlu0 %v3994, 112
    %v3997 = vpop.permute.xlu0 %3996
    %4000 = vrot.lane.b32.xlu0 %v3783, 120
    %v4001 = vpop.permute.xlu0 %4000
    %v4003 = vsel %vm175, %v3997, %v4001
    %v4005 = vsel %vm300, %v4003, 0
    %4007 = vmatprep.subr.mxu0 0.0
    %4008 = vmatpush1.msra.mxu0 0.0
    %4009 = vmatprep.subr.mxu0 0.0
    %4010 = vmatpush1.msra.mxu0 0.0
    %4011 = vmatprep.subr.mxu0 0.0
    %4012 = vmatpush1.msra.mxu0 0.0
    %4013 = vmatprep.subr.mxu0 0.0
    %4014 = vmatpush1.msra.mxu0 0.0
    %4015 = vmatprep.subr.mxu0 0.0
    %4016 = vmatpush1.msra.mxu0 0.0
    %4017 = vmatprep.subr.mxu0 0.0
    %4018 = vmatpush1.msra.mxu0 0.0
    %4019 = vmatprep.subr.mxu0 0.0
    %4020 = vmatpush1.msra.mxu0 0.0
    %4021 = vmatprep.subr.mxu0 0.0
    %4022 = vmatpush1.msra.mxu0 0.0
    %4023 = vmatprep.subr.mxu0 0.0
    %4024 = vmatpush1.msra.mxu0 0.0
    %4025 = vmatprep.subr.mxu0 0.0
    %4026 = vmatpush1.msra.mxu0 0.0
    %4027 = vmatprep.subr.mxu0 0.0
    %4028 = vmatpush1.msra.mxu0 0.0
    %4029 = vmatprep.subr.mxu0 0.0
    %4030 = vmatpush1.msra.mxu0 0.0
    %4031 = vmatprep.subr.mxu0 0.0
    %4032 = vmatpush1.msra.mxu0 0.0
    %4033 = vmatprep.subr.mxu0 0.0
    %4034 = vmatpush1.msra.mxu0 0.0
    %4035 = vmatprep.subr.mxu0 0.0
    %4036 = vmatpush1.msra.mxu0 %v64
    %4037 = vmatprep.subr.mxu0 0.0
    %4038 = vmatpush1.msra.mxu0 %v63
    %4039 = vmatprep.subr.mxu0 0.0
    %4040 = vmatpush2.msra.mxu0 0.0
    %4041 = vmatprep.subr.mxu0 0.0
    %4042 = vmatpush2.msra.mxu0 0.0
    %4043 = vmatprep.subr.mxu0 0.0
    %4044 = vmatpush2.msra.mxu0 0.0
    %4045 = vmatprep.subr.mxu0 0.0
    %4046 = vmatpush2.msra.mxu0 0.0
    %4047 = vmatprep.subr.mxu0 0.0
    %4048 = vmatpush2.msra.mxu0 0.0
    %4049 = vmatprep.subr.mxu0 0.0
    %4050 = vmatpush2.msra.mxu0 0.0
    %4051 = vmatprep.subr.mxu0 0.0
    %4052 = vmatpush2.msra.mxu0 0.0
    %4053 = vmatprep.subr.mxu0 0.0
    %4054 = vmatpush2.msra.mxu0 0.0
    %4055 = vmatprep.subr.mxu0 0.0
    %4056 = vmatpush2.msra.mxu0 0.0
    %4057 = vmatprep.subr.mxu0 0.0
    %4058 = vmatpush2.msra.mxu0 0.0
    %4059 = vmatprep.subr.mxu0 0.0
    %4060 = vmatpush2.msra.mxu0 0.0
    %4061 = vmatprep.subr.mxu0 0.0
    %4062 = vmatpush2.msra.mxu0 0.0
    %4063 = vmatprep.subr.mxu0 0.0
    %4064 = vmatpush2.msra.mxu0 0.0
    %4065 = vmatprep.subr.mxu0 0.0
    %4066 = vmatpush2.msra.mxu0 0.0
    %4067 = vmatprep.subr.mxu0 0.0
    %4068 = vmatpush2.msra.mxu0 0.0
    %4069 = vmatprep.subr.mxu0 0.0
    %4070 = vmatpush2.msra.mxu0 0.0
    %4071 = vmatprep.mubr.f32.mxu0 0.0
    %4072 = vmatmul.mubr.f32.gmra.mxu0 %v4005
    %v4073 = vpop.f32.mrf.mxu0
    %v4074 = vadd.f32 %v3053, %v4073
    %v4075 = vpop.f32.mrf.mxu0
    %4076 = vdwg.mxu0
    %v4077 = vxor.u32 %v4074, 2147483648
    %v4078 = vmul.f32 %v4077, 1.442695
    %v4079 = vpow.pop %v4078
    %v4080 = vadd.f32 %v4079, 1.0
    %v4081 = vrcp.pop %v4080
    %v4082 = vmul.f32 1.0, %v4081
    %v4083 = vtanh.pop %v4074
    %v4084 = vmul.f32 %v4082, %v3777
    %4086 = vrot.lane.b32.xlu0 %v4083, 104
    %v4087 = vpop.permute.xlu0 %4086
    %v4089 = vmul.f32 %v4082, %v4087
    %4091 = vrot.lane.b32.xlu0 %v4089, 8
    %v4092 = vpop.permute.xlu0 %4091
    %v4094 = vadd.f32 %v4084, %v4092
    %v4095 = vtanh.pop %v4094
    %4097 = vrot.lane.b32.xlu0 %v4095, 8
    %v4098 = vpop.permute.xlu0 %4097
    %v4100 = vmul.f32 %v4082, %v4098
    %v4101 = vrot.slane %v3887, 4
    %4102 = vrot.lane.b32.xlu0 %v4101, 112
    %v4103 = vpop.permute.xlu0 %4102
    %v4104 = vsel %vm175, %v4103, 0
    %4106 = vmatprep.subr.mxu0 0.0
    %4107 = vmatpush1.msra.mxu0 0.0
    %4108 = vmatprep.subr.mxu0 0.0
    %4109 = vmatpush1.msra.mxu0 0.0
    %4110 = vmatprep.subr.mxu0 0.0
    %4111 = vmatpush1.msra.mxu0 0.0
    %4112 = vmatprep.subr.mxu0 0.0
    %4113 = vmatpush1.msra.mxu0 0.0
    %4114 = vmatprep.subr.mxu0 0.0
    %4115 = vmatpush1.msra.mxu0 0.0
    %4116 = vmatprep.subr.mxu0 0.0
    %4117 = vmatpush1.msra.mxu0 0.0
    %4118 = vmatprep.subr.mxu0 0.0
    %4119 = vmatpush1.msra.mxu0 0.0
    %4120 = vmatprep.subr.mxu0 0.0
    %4121 = vmatpush1.msra.mxu0 0.0
    %4122 = vmatprep.subr.mxu0 0.0
    %4123 = vmatpush1.msra.mxu0 0.0
    %4124 = vmatprep.subr.mxu0 0.0
    %4125 = vmatpush1.msra.mxu0 0.0
    %4126 = vmatprep.subr.mxu0 0.0
    %4127 = vmatpush1.msra.mxu0 0.0
    %4128 = vmatprep.subr.mxu0 0.0
    %4129 = vmatpush1.msra.mxu0 0.0
    %4130 = vmatprep.subr.mxu0 0.0
    %4131 = vmatpush1.msra.mxu0 0.0
    %4132 = vmatprep.subr.mxu0 0.0
    %4133 = vmatpush1.msra.mxu0 0.0
    %4134 = vmatprep.subr.mxu0 0.0
    %4135 = vmatpush1.msra.mxu0 0.0
    %4136 = vmatprep.subr.mxu0 0.0
    %4137 = vmatpush1.msra.mxu0 %v60
    %4138 = vmatprep.subr.mxu0 0.0
    %4139 = vmatpush2.msra.mxu0 0.0
    %4140 = vmatprep.subr.mxu0 0.0
    %4141 = vmatpush2.msra.mxu0 0.0
    %4142 = vmatprep.subr.mxu0 0.0
    %4143 = vmatpush2.msra.mxu0 0.0
    %4144 = vmatprep.subr.mxu0 0.0
    %4145 = vmatpush2.msra.mxu0 0.0
    %4146 = vmatprep.subr.mxu0 0.0
    %4147 = vmatpush2.msra.mxu0 0.0
    %4148 = vmatprep.subr.mxu0 0.0
    %4149 = vmatpush2.msra.mxu0 0.0
    %4150 = vmatprep.subr.mxu0 0.0
    %4151 = vmatpush2.msra.mxu0 0.0
    %4152 = vmatprep.subr.mxu0 0.0
    %4153 = vmatpush2.msra.mxu0 0.0
    %4154 = vmatprep.subr.mxu0 0.0
    %4155 = vmatpush2.msra.mxu0 0.0
    %4156 = vmatprep.subr.mxu0 0.0
    %4157 = vmatpush2.msra.mxu0 0.0
    %4158 = vmatprep.subr.mxu0 0.0
    %4159 = vmatpush2.msra.mxu0 0.0
    %4160 = vmatprep.subr.mxu0 0.0
    %4161 = vmatpush2.msra.mxu0 0.0
    %4162 = vmatprep.subr.mxu0 0.0
    %4163 = vmatpush2.msra.mxu0 0.0
    %4164 = vmatprep.subr.mxu0 0.0
    %4165 = vmatpush2.msra.mxu0 0.0
    %4166 = vmatprep.subr.mxu0 0.0
    %4167 = vmatpush2.msra.mxu0 0.0
    %4168 = vmatprep.subr.mxu0 0.0
    %4169 = vmatpush2.msra.mxu0 0.0
    %4170 = vmatprep.mubr.f32.mxu0 0.0
    %4171 = vmatmul.mubr.f32.gmra.mxu0 %v4104
    %v4172 = vpop.f32.mrf.mxu0
    %v4173 = vadd.f32 0.0, %v4172
    %v4174 = vpop.f32.mrf.mxu0
    %4175 = vdwg.mxu0
    %v4176 = vadd.f32 %v2811, %v4173
    %v4177 = vadd.f32 %v4176, %v2899
    %v4178 = vxor.u32 %v4177, 2147483648
    %v4179 = vmul.f32 %v4178, 1.442695
    %v4180 = vpow.pop %v4179
    %v4181 = vadd.f32 %v4180, 1.0
    %v4182 = vrcp.pop %v4181
    %v4183 = vmul.f32 1.0, %v4182
    %v4184 = vtanh.pop %v4177
    %v4186 = vrot.slane %v3881, 4
    %v4188 = vmul.f32 %v4183, %v4186
    %4190 = vrot.lane.b32.xlu0 %v4184, 104
    %v4191 = vpop.permute.xlu0 %4190
    %v4193 = vmul.f32 %v4183, %v4191
    %4195 = vrot.lane.b32.xlu0 %v4193, 8
    %v4196 = vpop.permute.xlu0 %4195
    %v4198 = vadd.f32 %v4188, %v4196
    %v4199 = vtanh.pop %v4198
    %4201 = vrot.lane.b32.xlu0 %v4199, 8
    %v4202 = vpop.permute.xlu0 %4201
    %v4204 = vmul.f32 %v4183, %v4202
    %4206 = vrot.lane.b32.xlu0 %v4204, 112
    %v4207 = vpop.permute.xlu0 %4206
    %4209 = vrot.lane.b32.xlu0 %v3994, 120
    %v4210 = vpop.permute.xlu0 %4209
    %v4212 = vsel %vm175, %v4207, %v4210
    %v4214 = vsel %vm300, %v4212, 0
    %4216 = vmatprep.subr.mxu0 0.0
    %4217 = vmatpush1.msra.mxu0 0.0
    %4218 = vmatprep.subr.mxu0 0.0
    %4219 = vmatpush1.msra.mxu0 0.0
    %4220 = vmatprep.subr.mxu0 0.0
    %4221 = vmatpush1.msra.mxu0 0.0
    %4222 = vmatprep.subr.mxu0 0.0
    %4223 = vmatpush1.msra.mxu0 0.0
    %4224 = vmatprep.subr.mxu0 0.0
    %4225 = vmatpush1.msra.mxu0 0.0
    %4226 = vmatprep.subr.mxu0 0.0
    %4227 = vmatpush1.msra.mxu0 0.0
    %4228 = vmatprep.subr.mxu0 0.0
    %4229 = vmatpush1.msra.mxu0 0.0
    %4230 = vmatprep.subr.mxu0 0.0
    %4231 = vmatpush1.msra.mxu0 0.0
    %4232 = vmatprep.subr.mxu0 0.0
    %4233 = vmatpush1.msra.mxu0 0.0
    %4234 = vmatprep.subr.mxu0 0.0
    %4235 = vmatpush1.msra.mxu0 0.0
    %4236 = vmatprep.subr.mxu0 0.0
    %4237 = vmatpush1.msra.mxu0 0.0
    %4238 = vmatprep.subr.mxu0 0.0
    %4239 = vmatpush1.msra.mxu0 0.0
    %4240 = vmatprep.subr.mxu0 0.0
    %4241 = vmatpush1.msra.mxu0 0.0
    %4242 = vmatprep.subr.mxu0 0.0
    %4243 = vmatpush1.msra.mxu0 0.0
    %4244 = vmatprep.subr.mxu0 0.0
    %4245 = vmatpush1.msra.mxu0 %v62
    %4246 = vmatprep.subr.mxu0 0.0
    %4247 = vmatpush1.msra.mxu0 %v61
    %4248 = vmatprep.subr.mxu0 0.0
    %4249 = vmatpush2.msra.mxu0 0.0
    %4250 = vmatprep.subr.mxu0 0.0
    %4251 = vmatpush2.msra.mxu0 0.0
    %4252 = vmatprep.subr.mxu0 0.0
    %4253 = vmatpush2.msra.mxu0 0.0
    %4254 = vmatprep.subr.mxu0 0.0
    %4255 = vmatpush2.msra.mxu0 0.0
    %4256 = vmatprep.subr.mxu0 0.0
    %4257 = vmatpush2.msra.mxu0 0.0
    %4258 = vmatprep.subr.mxu0 0.0
    %4259 = vmatpush2.msra.mxu0 0.0
    %4260 = vmatprep.subr.mxu0 0.0
    %4261 = vmatpush2.msra.mxu0 0.0
    %4262 = vmatprep.subr.mxu0 0.0
    %4263 = vmatpush2.msra.mxu0 0.0
    %4264 = vmatprep.subr.mxu0 0.0
    %4265 = vmatpush2.msra.mxu0 0.0
    %4266 = vmatprep.subr.mxu0 0.0
    %4267 = vmatpush2.msra.mxu0 0.0
    %4268 = vmatprep.subr.mxu0 0.0
    %4269 = vmatpush2.msra.mxu0 0.0
    %4270 = vmatprep.subr.mxu0 0.0
    %4271 = vmatpush2.msra.mxu0 0.0
    %4272 = vmatprep.subr.mxu0 0.0
    %4273 = vmatpush2.msra.mxu0 0.0
    %4274 = vmatprep.subr.mxu0 0.0
    %4275 = vmatpush2.msra.mxu0 0.0
    %4276 = vmatprep.subr.mxu0 0.0
    %4277 = vmatpush2.msra.mxu0 0.0
    %4278 = vmatprep.subr.mxu0 0.0
    %4279 = vmatpush2.msra.mxu0 0.0
    %4280 = vmatprep.mubr.f32.mxu0 0.0
    %4281 = vmatmul.mubr.f32.gmra.mxu0 %v4214
    %v4282 = vpop.f32.mrf.mxu0
    %v4283 = vadd.f32 %v2941, %v4282
    %v4284 = vpop.f32.mrf.mxu0
    %4285 = vdwg.mxu0
    %v4286 = vxor.u32 %v4283, 2147483648
    %v4287 = vmul.f32 %v4286, 1.442695
    %v4288 = vpow.pop %v4287
    %v4289 = vadd.f32 %v4288, 1.0
    %v4290 = vrcp.pop %v4289
    %v4291 = vmul.f32 1.0, %v4290
    %v4292 = vtanh.pop %v4283
    %v4293 = vmul.f32 %v4291, %v3988
    %4295 = vrot.lane.b32.xlu0 %v4292, 104
    %v4296 = vpop.permute.xlu0 %4295
    %v4298 = vmul.f32 %v4291, %v4296
    %4300 = vrot.lane.b32.xlu0 %v4298, 8
    %v4301 = vpop.permute.xlu0 %4300
    %v4303 = vadd.f32 %v4293, %v4301
    %v4304 = vtanh.pop %v4303
    %4306 = vrot.lane.b32.xlu0 %v4304, 8
    %v4307 = vpop.permute.xlu0 %4306
    %v4309 = vmul.f32 %v4291, %v4307
    %4311 = vrot.lane.b32.xlu0 %v4309, 112
    %v4312 = vpop.permute.xlu0 %4311
    %4315 = vrot.lane.b32.xlu0 %v4100, 120
    %v4316 = vpop.permute.xlu0 %4315
    %v4318 = vsel %vm175, %v4312, %v4316
    %v4320 = vsel %vm300, %v4318, 0
    %4322 = vmatprep.subr.mxu0 0.0
    %4323 = vmatpush1.msra.mxu0 0.0
    %4324 = vmatprep.subr.mxu0 0.0
    %4325 = vmatpush1.msra.mxu0 0.0
    %4326 = vmatprep.subr.mxu0 0.0
    %4327 = vmatpush1.msra.mxu0 0.0
    %4328 = vmatprep.subr.mxu0 0.0
    %4329 = vmatpush1.msra.mxu0 0.0
    %4330 = vmatprep.subr.mxu0 0.0
    %4331 = vmatpush1.msra.mxu0 0.0
    %4332 = vmatprep.subr.mxu0 0.0
    %4333 = vmatpush1.msra.mxu0 0.0
    %4334 = vmatprep.subr.mxu0 0.0
    %4335 = vmatpush1.msra.mxu0 0.0
    %4336 = vmatprep.subr.mxu0 0.0
    %4337 = vmatpush1.msra.mxu0 0.0
    %4338 = vmatprep.subr.mxu0 0.0
    %4339 = vmatpush1.msra.mxu0 0.0
    %4340 = vmatprep.subr.mxu0 0.0
    %4341 = vmatpush1.msra.mxu0 0.0
    %4342 = vmatprep.subr.mxu0 0.0
    %4343 = vmatpush1.msra.mxu0 0.0
    %4344 = vmatprep.subr.mxu0 0.0
    %4345 = vmatpush1.msra.mxu0 0.0
    %4346 = vmatprep.subr.mxu0 0.0
    %4347 = vmatpush1.msra.mxu0 0.0
    %4348 = vmatprep.subr.mxu0 0.0
    %4349 = vmatpush1.msra.mxu0 0.0
    %4350 = vmatprep.subr.mxu0 0.0
    %4351 = vmatpush1.msra.mxu0 %v64
    %4352 = vmatprep.subr.mxu0 0.0
    %4353 = vmatpush1.msra.mxu0 %v63
    %4354 = vmatprep.subr.mxu0 0.0
    %4355 = vmatpush2.msra.mxu0 0.0
    %4356 = vmatprep.subr.mxu0 0.0
    %4357 = vmatpush2.msra.mxu0 0.0
    %4358 = vmatprep.subr.mxu0 0.0
    %4359 = vmatpush2.msra.mxu0 0.0
    %4360 = vmatprep.subr.mxu0 0.0
    %4361 = vmatpush2.msra.mxu0 0.0
    %4362 = vmatprep.subr.mxu0 0.0
    %4363 = vmatpush2.msra.mxu0 0.0
    %4364 = vmatprep.subr.mxu0 0.0
    %4365 = vmatpush2.msra.mxu0 0.0
    %4366 = vmatprep.subr.mxu0 0.0
    %4367 = vmatpush2.msra.mxu0 0.0
    %4368 = vmatprep.subr.mxu0 0.0
    %4369 = vmatpush2.msra.mxu0 0.0
    %4370 = vmatprep.subr.mxu0 0.0
    %4371 = vmatpush2.msra.mxu0 0.0
    %4372 = vmatprep.subr.mxu0 0.0
    %4373 = vmatpush2.msra.mxu0 0.0
    %4374 = vmatprep.subr.mxu0 0.0
    %4375 = vmatpush2.msra.mxu0 0.0
    %4376 = vmatprep.subr.mxu0 0.0
    %4377 = vmatpush2.msra.mxu0 0.0
    %4378 = vmatprep.subr.mxu0 0.0
    %4379 = vmatpush2.msra.mxu0 0.0
    %4380 = vmatprep.subr.mxu0 0.0
    %4381 = vmatpush2.msra.mxu0 0.0
    %4382 = vmatprep.subr.mxu0 0.0
    %4383 = vmatpush2.msra.mxu0 0.0
    %4384 = vmatprep.subr.mxu0 0.0
    %4385 = vmatpush2.msra.mxu0 0.0
    %4386 = vmatprep.mubr.f32.mxu0 0.0
    %4387 = vmatmul.mubr.f32.gmra.mxu0 %v4320
    %v4388 = vpop.f32.mrf.mxu0
    %v4389 = vadd.f32 %v3053, %v4388
    %v4390 = vpop.f32.mrf.mxu0
    %4391 = vdwg.mxu0
    %v4392 = vxor.u32 %v4389, 2147483648
    %v4393 = vmul.f32 %v4392, 1.442695
    %v4394 = vpow.pop %v4393
    %v4395 = vadd.f32 %v4394, 1.0
    %v4396 = vrcp.pop %v4395
    %v4397 = vmul.f32 1.0, %v4396
    %v4398 = vtanh.pop %v4389
    %v4399 = vmul.f32 %v4397, %v4094
    %4401 = vrot.lane.b32.xlu0 %v4398, 104
    %v4402 = vpop.permute.xlu0 %4401
    %v4404 = vmul.f32 %v4397, %v4402
    %4406 = vrot.lane.b32.xlu0 %v4404, 8
    %v4407 = vpop.permute.xlu0 %4406
    %v4409 = vadd.f32 %v4399, %v4407
    %v4410 = vtanh.pop %v4409
    %4412 = vrot.lane.b32.xlu0 %v4410, 8
    %v4413 = vpop.permute.xlu0 %4412
    %v4415 = vmul.f32 %v4397, %v4413
    %v4416 = vsel %vm175, %v4207, 0
    %4418 = vmatprep.subr.mxu0 0.0
    %4419 = vmatpush1.msra.mxu0 0.0
    %4420 = vmatprep.subr.mxu0 0.0
    %4421 = vmatpush1.msra.mxu0 0.0
    %4422 = vmatprep.subr.mxu0 0.0
    %4423 = vmatpush1.msra.mxu0 0.0
    %4424 = vmatprep.subr.mxu0 0.0
    %4425 = vmatpush1.msra.mxu0 0.0
    %4426 = vmatprep.subr.mxu0 0.0
    %4427 = vmatpush1.msra.mxu0 0.0
    %4428 = vmatprep.subr.mxu0 0.0
    %4429 = vmatpush1.msra.mxu0 0.0
    %4430 = vmatprep.subr.mxu0 0.0
    %4431 = vmatpush1.msra.mxu0 0.0
    %4432 = vmatprep.subr.mxu0 0.0
    %4433 = vmatpush1.msra.mxu0 0.0
    %4434 = vmatprep.subr.mxu0 0.0
    %4435 = vmatpush1.msra.mxu0 0.0
    %4436 = vmatprep.subr.mxu0 0.0
    %4437 = vmatpush1.msra.mxu0 0.0
    %4438 = vmatprep.subr.mxu0 0.0
    %4439 = vmatpush1.msra.mxu0 0.0
    %4440 = vmatprep.subr.mxu0 0.0
    %4441 = vmatpush1.msra.mxu0 0.0
    %4442 = vmatprep.subr.mxu0 0.0
    %4443 = vmatpush1.msra.mxu0 0.0
    %4444 = vmatprep.subr.mxu0 0.0
    %4445 = vmatpush1.msra.mxu0 0.0
    %4446 = vmatprep.subr.mxu0 0.0
    %4447 = vmatpush1.msra.mxu0 0.0
    %4448 = vmatprep.subr.mxu0 0.0
    %4449 = vmatpush1.msra.mxu0 %v60
    %4450 = vmatprep.subr.mxu0 0.0
    %4451 = vmatpush2.msra.mxu0 0.0
    %4452 = vmatprep.subr.mxu0 0.0
    %4453 = vmatpush2.msra.mxu0 0.0
    %4454 = vmatprep.subr.mxu0 0.0
    %4455 = vmatpush2.msra.mxu0 0.0
    %4456 = vmatprep.subr.mxu0 0.0
    %4457 = vmatpush2.msra.mxu0 0.0
    %4458 = vmatprep.subr.mxu0 0.0
    %4459 = vmatpush2.msra.mxu0 0.0
    %4460 = vmatprep.subr.mxu0 0.0
    %4461 = vmatpush2.msra.mxu0 0.0
    %4462 = vmatprep.subr.mxu0 0.0
    %4463 = vmatpush2.msra.mxu0 0.0
    %4464 = vmatprep.subr.mxu0 0.0
    %4465 = vmatpush2.msra.mxu0 0.0
    %4466 = vmatprep.subr.mxu0 0.0
    %4467 = vmatpush2.msra.mxu0 0.0
    %4468 = vmatprep.subr.mxu0 0.0
    %4469 = vmatpush2.msra.mxu0 0.0
    %4470 = vmatprep.subr.mxu0 0.0
    %4471 = vmatpush2.msra.mxu0 0.0
    %4472 = vmatprep.subr.mxu0 0.0
    %4473 = vmatpush2.msra.mxu0 0.0
    %4474 = vmatprep.subr.mxu0 0.0
    %4475 = vmatpush2.msra.mxu0 0.0
    %4476 = vmatprep.subr.mxu0 0.0
    %4477 = vmatpush2.msra.mxu0 0.0
    %4478 = vmatprep.subr.mxu0 0.0
    %4479 = vmatpush2.msra.mxu0 0.0
    %4480 = vmatprep.subr.mxu0 0.0
    %4481 = vmatpush2.msra.mxu0 0.0
    %4482 = vmatprep.mubr.f32.mxu0 0.0
    %4483 = vmatmul.mubr.f32.gmra.mxu0 %v4416
    %v4484 = vpop.f32.mrf.mxu0
    %v4485 = vadd.f32 0.0, %v4484
    %v4486 = vpop.f32.mrf.mxu0
    %4487 = vdwg.mxu0
    %v4489 = vrot.slane %v4485, 4
    %v4491 = vadd.f32 %v2811, %v4489
    %v4492 = vadd.f32 %v4491, %v2899
    %v4493 = vxor.u32 %v4492, 2147483648
    %v4494 = vmul.f32 %v4493, 1.442695
    %v4495 = vpow.pop %v4494
    %v4496 = vadd.f32 %v4495, 1.0
    %v4497 = vrcp.pop %v4496
    %v4498 = vmul.f32 1.0, %v4497
    %v4499 = vtanh.pop %v4492
    %v4501 = vrot.slane %v4198, 4
    %v4503 = vmul.f32 %v4498, %v4501
    %4505 = vrot.lane.b32.xlu0 %v4499, 104
    %v4506 = vpop.permute.xlu0 %4505
    %v4508 = vmul.f32 %v4498, %v4506
    %4510 = vrot.lane.b32.xlu0 %v4508, 8
    %v4511 = vpop.permute.xlu0 %4510
    %v4513 = vadd.f32 %v4503, %v4511
    %v4514 = vtanh.pop %v4513
    %4516 = vrot.lane.b32.xlu0 %v4514, 8
    %v4517 = vpop.permute.xlu0 %4516
    %v4519 = vmul.f32 %v4498, %v4517
    %4521 = vrot.lane.b32.xlu0 %v4519, 112
    %v4522 = vpop.permute.xlu0 %4521
    %v4524 = vrot.slane %v4309, 4
    %4525 = vrot.lane.b32.xlu0 %v4524, 120
    %v4526 = vpop.permute.xlu0 %4525
    %v4528 = vsel %vm175, %v4522, %v4526
    %v4530 = vrot.slane %v4528, 4
    %v4531 = vsel %vm300, %v4530, 0
    %4533 = vmatprep.subr.mxu0 0.0
    %4534 = vmatpush1.msra.mxu0 0.0
    %4535 = vmatprep.subr.mxu0 0.0
    %4536 = vmatpush1.msra.mxu0 0.0
    %4537 = vmatprep.subr.mxu0 0.0
    %4538 = vmatpush1.msra.mxu0 0.0
    %4539 = vmatprep.subr.mxu0 0.0
    %4540 = vmatpush1.msra.mxu0 0.0
    %4541 = vmatprep.subr.mxu0 0.0
    %4542 = vmatpush1.msra.mxu0 0.0
    %4543 = vmatprep.subr.mxu0 0.0
    %4544 = vmatpush1.msra.mxu0 0.0
    %4545 = vmatprep.subr.mxu0 0.0
    %4546 = vmatpush1.msra.mxu0 0.0
    %4547 = vmatprep.subr.mxu0 0.0
    %4548 = vmatpush1.msra.mxu0 0.0
    %4549 = vmatprep.subr.mxu0 0.0
    %4550 = vmatpush1.msra.mxu0 0.0
    %4551 = vmatprep.subr.mxu0 0.0
    %4552 = vmatpush1.msra.mxu0 0.0
    %4553 = vmatprep.subr.mxu0 0.0
    %4554 = vmatpush1.msra.mxu0 0.0
    %4555 = vmatprep.subr.mxu0 0.0
    %4556 = vmatpush1.msra.mxu0 0.0
    %4557 = vmatprep.subr.mxu0 0.0
    %4558 = vmatpush1.msra.mxu0 0.0
    %4559 = vmatprep.subr.mxu0 0.0
    %4560 = vmatpush1.msra.mxu0 0.0
    %4561 = vmatprep.subr.mxu0 0.0
    %4562 = vmatpush1.msra.mxu0 %v62
    %4563 = vmatprep.subr.mxu0 0.0
    %4564 = vmatpush1.msra.mxu0 %v61
    %4565 = vmatprep.subr.mxu0 0.0
    %4566 = vmatpush2.msra.mxu0 0.0
    %4567 = vmatprep.subr.mxu0 0.0
    %4568 = vmatpush2.msra.mxu0 0.0
    %4569 = vmatprep.subr.mxu0 0.0
    %4570 = vmatpush2.msra.mxu0 0.0
    %4571 = vmatprep.subr.mxu0 0.0
    %4572 = vmatpush2.msra.mxu0 0.0
    %4573 = vmatprep.subr.mxu0 0.0
    %4574 = vmatpush2.msra.mxu0 0.0
    %4575 = vmatprep.subr.mxu0 0.0
    %4576 = vmatpush2.msra.mxu0 0.0
    %4577 = vmatprep.subr.mxu0 0.0
    %4578 = vmatpush2.msra.mxu0 0.0
    %4579 = vmatprep.subr.mxu0 0.0
    %4580 = vmatpush2.msra.mxu0 0.0
    %4581 = vmatprep.subr.mxu0 0.0
    %4582 = vmatpush2.msra.mxu0 0.0
    %4583 = vmatprep.subr.mxu0 0.0
    %4584 = vmatpush2.msra.mxu0 0.0
    %4585 = vmatprep.subr.mxu0 0.0
    %4586 = vmatpush2.msra.mxu0 0.0
    %4587 = vmatprep.subr.mxu0 0.0
    %4588 = vmatpush2.msra.mxu0 0.0
    %4589 = vmatprep.subr.mxu0 0.0
    %4590 = vmatpush2.msra.mxu0 0.0
    %4591 = vmatprep.subr.mxu0 0.0
    %4592 = vmatpush2.msra.mxu0 0.0
    %4593 = vmatprep.subr.mxu0 0.0
    %4594 = vmatpush2.msra.mxu0 0.0
    %4595 = vmatprep.subr.mxu0 0.0
    %4596 = vmatpush2.msra.mxu0 0.0
    %4597 = vmatprep.mubr.f32.mxu0 0.0
    %4598 = vmatmul.mubr.f32.gmra.mxu0 %v4531
    %v4599 = vpop.f32.mrf.mxu0
    %v4600 = vadd.f32 %v2941, %v4599
    %v4601 = vpop.f32.mrf.mxu0
    %4602 = vdwg.mxu0
    %v4603 = vxor.u32 %v4600, 2147483648
    %v4604 = vmul.f32 %v4603, 1.442695
    %v4605 = vpow.pop %v4604
    %v4606 = vadd.f32 %v4605, 1.0
    %v4607 = vrcp.pop %v4606
    %v4608 = vmul.f32 1.0, %v4607
    %v4609 = vtanh.pop %v4600
    %v4610 = vmul.f32 %v4608, %v4303
    %4612 = vrot.lane.b32.xlu0 %v4609, 104
    %v4613 = vpop.permute.xlu0 %4612
    %v4615 = vmul.f32 %v4608, %v4613
    %4617 = vrot.lane.b32.xlu0 %v4615, 8
    %v4618 = vpop.permute.xlu0 %4617
    %v4620 = vadd.f32 %v4610, %v4618
    %v4621 = vtanh.pop %v4620
    %4623 = vrot.lane.b32.xlu0 %v4621, 8
    %v4624 = vpop.permute.xlu0 %4623
    %v4626 = vmul.f32 %v4608, %v4624
    %4628 = vrot.lane.b32.xlu0 %v4626, 112
    %v4629 = vpop.permute.xlu0 %4628
    %4632 = vrot.lane.b32.xlu0 %v4415, 120
    %v4633 = vpop.permute.xlu0 %4632
    %v4635 = vsel %vm175, %v4629, %v4633
    %v4637 = vsel %vm300, %v4635, 0
    %4639 = vmatprep.subr.mxu0 0.0
    %4640 = vmatpush1.msra.mxu0 0.0
    %4641 = vmatprep.subr.mxu0 0.0
    %4642 = vmatpush1.msra.mxu0 0.0
    %4643 = vmatprep.subr.mxu0 0.0
    %4644 = vmatpush1.msra.mxu0 0.0
    %4645 = vmatprep.subr.mxu0 0.0
    %4646 = vmatpush1.msra.mxu0 0.0
    %4647 = vmatprep.subr.mxu0 0.0
    %4648 = vmatpush1.msra.mxu0 0.0
    %4649 = vmatprep.subr.mxu0 0.0
    %4650 = vmatpush1.msra.mxu0 0.0
    %4651 = vmatprep.subr.mxu0 0.0
    %4652 = vmatpush1.msra.mxu0 0.0
    %4653 = vmatprep.subr.mxu0 0.0
    %4654 = vmatpush1.msra.mxu0 0.0
    %4655 = vmatprep.subr.mxu0 0.0
    %4656 = vmatpush1.msra.mxu0 0.0
    %4657 = vmatprep.subr.mxu0 0.0
    %4658 = vmatpush1.msra.mxu0 0.0
    %4659 = vmatprep.subr.mxu0 0.0
    %4660 = vmatpush1.msra.mxu0 0.0
    %4661 = vmatprep.subr.mxu0 0.0
    %4662 = vmatpush1.msra.mxu0 0.0
    %4663 = vmatprep.subr.mxu0 0.0
    %4664 = vmatpush1.msra.mxu0 0.0
    %4665 = vmatprep.subr.mxu0 0.0
    %4666 = vmatpush1.msra.mxu0 0.0
    %4667 = vmatprep.subr.mxu0 0.0
    %4668 = vmatpush1.msra.mxu0 %v64
    %4669 = vmatprep.subr.mxu0 0.0
    %4670 = vmatpush1.msra.mxu0 %v63
    %4671 = vmatprep.subr.mxu0 0.0
    %4672 = vmatpush2.msra.mxu0 0.0
    %4673 = vmatprep.subr.mxu0 0.0
    %4674 = vmatpush2.msra.mxu0 0.0
    %4675 = vmatprep.subr.mxu0 0.0
    %4676 = vmatpush2.msra.mxu0 0.0
    %4677 = vmatprep.subr.mxu0 0.0
    %4678 = vmatpush2.msra.mxu0 0.0
    %4679 = vmatprep.subr.mxu0 0.0
    %4680 = vmatpush2.msra.mxu0 0.0
    %4681 = vmatprep.subr.mxu0 0.0
    %4682 = vmatpush2.msra.mxu0 0.0
    %4683 = vmatprep.subr.mxu0 0.0
    %4684 = vmatpush2.msra.mxu0 0.0
    %4685 = vmatprep.subr.mxu0 0.0
    %4686 = vmatpush2.msra.mxu0 0.0
    %4687 = vmatprep.subr.mxu0 0.0
    %4688 = vmatpush2.msra.mxu0 0.0
    %4689 = vmatprep.subr.mxu0 0.0
    %4690 = vmatpush2.msra.mxu0 0.0
    %4691 = vmatprep.subr.mxu0 0.0
    %4692 = vmatpush2.msra.mxu0 0.0
    %4693 = vmatprep.subr.mxu0 0.0
    %4694 = vmatpush2.msra.mxu0 0.0
    %4695 = vmatprep.subr.mxu0 0.0
    %4696 = vmatpush2.msra.mxu0 0.0
    %4697 = vmatprep.subr.mxu0 0.0
    %4698 = vmatpush2.msra.mxu0 0.0
    %4699 = vmatprep.subr.mxu0 0.0
    %4700 = vmatpush2.msra.mxu0 0.0
    %4701 = vmatprep.subr.mxu0 0.0
    %4702 = vmatpush2.msra.mxu0 0.0
    %4703 = vmatprep.mubr.f32.mxu0 0.0
    %4704 = vmatmul.mubr.f32.gmra.mxu0 %v4637
    %v4705 = vpop.f32.mrf.mxu0
    %v4706 = vadd.f32 %v3053, %v4705
    %v4707 = vpop.f32.mrf.mxu0
    %4708 = vdwg.mxu0
    %v4709 = vxor.u32 %v4706, 2147483648
    %v4710 = vmul.f32 %v4709, 1.442695
    %v4711 = vpow.pop %v4710
    %v4712 = vadd.f32 %v4711, 1.0
    %v4713 = vrcp.pop %v4712
    %v4714 = vmul.f32 1.0, %v4713
    %v4715 = vtanh.pop %v4706
    %v4716 = vmul.f32 %v4714, %v4409
    %4718 = vrot.lane.b32.xlu0 %v4715, 104
    %v4719 = vpop.permute.xlu0 %4718
    %v4721 = vmul.f32 %v4714, %v4719
    %4723 = vrot.lane.b32.xlu0 %v4721, 8
    %v4724 = vpop.permute.xlu0 %4723
    %v4726 = vadd.f32 %v4716, %v4724
    %v4727 = vtanh.pop %v4726
    %4729 = vrot.lane.b32.xlu0 %v4727, 8
    %v4730 = vpop.permute.xlu0 %4729
    %v4732 = vmul.f32 %v4714, %v4730
    %v4733 = vrot.slane %v4519, 4
    %4734 = vrot.lane.b32.xlu0 %v4733, 112
    %v4735 = vpop.permute.xlu0 %4734
    %v4736 = vsel %vm175, %v4735, 0
    %4738 = vmatprep.subr.mxu0 0.0
    %4739 = vmatpush1.msra.mxu0 0.0
    %4740 = vmatprep.subr.mxu0 0.0
    %4741 = vmatpush1.msra.mxu0 0.0
    %4742 = vmatprep.subr.mxu0 0.0
    %4743 = vmatpush1.msra.mxu0 0.0
    %4744 = vmatprep.subr.mxu0 0.0
    %4745 = vmatpush1.msra.mxu0 0.0
    %4746 = vmatprep.subr.mxu0 0.0
    %4747 = vmatpush1.msra.mxu0 0.0
    %4748 = vmatprep.subr.mxu0 0.0
    %4749 = vmatpush1.msra.mxu0 0.0
    %4750 = vmatprep.subr.mxu0 0.0
    %4751 = vmatpush1.msra.mxu0 0.0
    %4752 = vmatprep.subr.mxu0 0.0
    %4753 = vmatpush1.msra.mxu0 0.0
    %4754 = vmatprep.subr.mxu0 0.0
    %4755 = vmatpush1.msra.mxu0 0.0
    %4756 = vmatprep.subr.mxu0 0.0
    %4757 = vmatpush1.msra.mxu0 0.0
    %4758 = vmatprep.subr.mxu0 0.0
    %4759 = vmatpush1.msra.mxu0 0.0
    %4760 = vmatprep.subr.mxu0 0.0
    %4761 = vmatpush1.msra.mxu0 0.0
    %4762 = vmatprep.subr.mxu0 0.0
    %4763 = vmatpush1.msra.mxu0 0.0
    %4764 = vmatprep.subr.mxu0 0.0
    %4765 = vmatpush1.msra.mxu0 0.0
    %4766 = vmatprep.subr.mxu0 0.0
    %4767 = vmatpush1.msra.mxu0 0.0
    %4768 = vmatprep.subr.mxu0 0.0
    %4769 = vmatpush1.msra.mxu0 %v60
    %4770 = vmatprep.subr.mxu0 0.0
    %4771 = vmatpush2.msra.mxu0 0.0
    %4772 = vmatprep.subr.mxu0 0.0
    %4773 = vmatpush2.msra.mxu0 0.0
    %4774 = vmatprep.subr.mxu0 0.0
    %4775 = vmatpush2.msra.mxu0 0.0
    %4776 = vmatprep.subr.mxu0 0.0
    %4777 = vmatpush2.msra.mxu0 0.0
    %4778 = vmatprep.subr.mxu0 0.0
    %4779 = vmatpush2.msra.mxu0 0.0
    %4780 = vmatprep.subr.mxu0 0.0
    %4781 = vmatpush2.msra.mxu0 0.0
    %4782 = vmatprep.subr.mxu0 0.0
    %4783 = vmatpush2.msra.mxu0 0.0
    %4784 = vmatprep.subr.mxu0 0.0
    %4785 = vmatpush2.msra.mxu0 0.0
    %4786 = vmatprep.subr.mxu0 0.0
    %4787 = vmatpush2.msra.mxu0 0.0
    %4788 = vmatprep.subr.mxu0 0.0
    %4789 = vmatpush2.msra.mxu0 0.0
    %4790 = vmatprep.subr.mxu0 0.0
    %4791 = vmatpush2.msra.mxu0 0.0
    %4792 = vmatprep.subr.mxu0 0.0
    %4793 = vmatpush2.msra.mxu0 0.0
    %4794 = vmatprep.subr.mxu0 0.0
    %4795 = vmatpush2.msra.mxu0 0.0
    %4796 = vmatprep.subr.mxu0 0.0
    %4797 = vmatpush2.msra.mxu0 0.0
    %4798 = vmatprep.subr.mxu0 0.0
    %4799 = vmatpush2.msra.mxu0 0.0
    %4800 = vmatprep.subr.mxu0 0.0
    %4801 = vmatpush2.msra.mxu0 0.0
    %4802 = vmatprep.mubr.f32.mxu0 0.0
    %4803 = vmatmul.mubr.f32.gmra.mxu0 %v4736
    %v4804 = vpop.f32.mrf.mxu0
    %v4805 = vadd.f32 0.0, %v4804
    %v4806 = vpop.f32.mrf.mxu0
    %4807 = vdwg.mxu0
    %v4808 = vadd.f32 %v2816, %v4805
    %v4809 = vadd.f32 %v4808, %v2899
    %v4810 = vxor.u32 %v4809, 2147483648
    %v4811 = vmul.f32 %v4810, 1.442695
    %v4812 = vpow.pop %v4811
    %v4813 = vadd.f32 %v4812, 1.0
    %v4814 = vrcp.pop %v4813
    %v4815 = vmul.f32 1.0, %v4814
    %v4816 = vtanh.pop %v4809
    %v4818 = vrot.slane %v4513, 4
    %v4820 = vmul.f32 %v4815, %v4818
    %4822 = vrot.lane.b32.xlu0 %v4816, 104
    %v4823 = vpop.permute.xlu0 %4822
    %v4825 = vmul.f32 %v4815, %v4823
    %4827 = vrot.lane.b32.xlu0 %v4825, 8
    %v4828 = vpop.permute.xlu0 %4827
    %v4830 = vadd.f32 %v4820, %v4828
    %v4831 = vtanh.pop %v4830
    %4833 = vrot.lane.b32.xlu0 %v4831, 8
    %v4834 = vpop.permute.xlu0 %4833
    %v4836 = vmul.f32 %v4815, %v4834
    %4838 = vrot.lane.b32.xlu0 %v4836, 112
    %v4839 = vpop.permute.xlu0 %4838
    %4841 = vrot.lane.b32.xlu0 %v4626, 120
    %v4842 = vpop.permute.xlu0 %4841
    %v4844 = vsel %vm175, %v4839, %v4842
    %v4846 = vsel %vm300, %v4844, 0
    %4848 = vmatprep.subr.mxu0 0.0
    %4849 = vmatpush1.msra.mxu0 0.0
    %4850 = vmatprep.subr.mxu0 0.0
    %4851 = vmatpush1.msra.mxu0 0.0
    %4852 = vmatprep.subr.mxu0 0.0
    %4853 = vmatpush1.msra.mxu0 0.0
    %4854 = vmatprep.subr.mxu0 0.0
    %4855 = vmatpush1.msra.mxu0 0.0
    %4856 = vmatprep.subr.mxu0 0.0
    %4857 = vmatpush1.msra.mxu0 0.0
    %4858 = vmatprep.subr.mxu0 0.0
    %4859 = vmatpush1.msra.mxu0 0.0
    %4860 = vmatprep.subr.mxu0 0.0
    %4861 = vmatpush1.msra.mxu0 0.0
    %4862 = vmatprep.subr.mxu0 0.0
    %4863 = vmatpush1.msra.mxu0 0.0
    %4864 = vmatprep.subr.mxu0 0.0
    %4865 = vmatpush1.msra.mxu0 0.0
    %4866 = vmatprep.subr.mxu0 0.0
    %4867 = vmatpush1.msra.mxu0 0.0
    %4868 = vmatprep.subr.mxu0 0.0
    %4869 = vmatpush1.msra.mxu0 0.0
    %4870 = vmatprep.subr.mxu0 0.0
    %4871 = vmatpush1.msra.mxu0 0.0
    %4872 = vmatprep.subr.mxu0 0.0
    %4873 = vmatpush1.msra.mxu0 0.0
    %4874 = vmatprep.subr.mxu0 0.0
    %4875 = vmatpush1.msra.mxu0 0.0
    %4876 = vmatprep.subr.mxu0 0.0
    %4877 = vmatpush1.msra.mxu0 %v62
    %4878 = vmatprep.subr.mxu0 0.0
    %4879 = vmatpush1.msra.mxu0 %v61
    %4880 = vmatprep.subr.mxu0 0.0
    %4881 = vmatpush2.msra.mxu0 0.0
    %4882 = vmatprep.subr.mxu0 0.0
    %4883 = vmatpush2.msra.mxu0 0.0
    %4884 = vmatprep.subr.mxu0 0.0
    %4885 = vmatpush2.msra.mxu0 0.0
    %4886 = vmatprep.subr.mxu0 0.0
    %4887 = vmatpush2.msra.mxu0 0.0
    %4888 = vmatprep.subr.mxu0 0.0
    %4889 = vmatpush2.msra.mxu0 0.0
    %4890 = vmatprep.subr.mxu0 0.0
    %4891 = vmatpush2.msra.mxu0 0.0
    %4892 = vmatprep.subr.mxu0 0.0
    %4893 = vmatpush2.msra.mxu0 0.0
    %4894 = vmatprep.subr.mxu0 0.0
    %4895 = vmatpush2.msra.mxu0 0.0
    %4896 = vmatprep.subr.mxu0 0.0
    %4897 = vmatpush2.msra.mxu0 0.0
    %4898 = vmatprep.subr.mxu0 0.0
    %4899 = vmatpush2.msra.mxu0 0.0
    %4900 = vmatprep.subr.mxu0 0.0
    %4901 = vmatpush2.msra.mxu0 0.0
    %4902 = vmatprep.subr.mxu0 0.0
    %4903 = vmatpush2.msra.mxu0 0.0
    %4904 = vmatprep.subr.mxu0 0.0
    %4905 = vmatpush2.msra.mxu0 0.0
    %4906 = vmatprep.subr.mxu0 0.0
    %4907 = vmatpush2.msra.mxu0 0.0
    %4908 = vmatprep.subr.mxu0 0.0
    %4909 = vmatpush2.msra.mxu0 0.0
    %4910 = vmatprep.subr.mxu0 0.0
    %4911 = vmatpush2.msra.mxu0 0.0
    %4912 = vmatprep.mubr.f32.mxu0 0.0
    %4913 = vmatmul.mubr.f32.gmra.mxu0 %v4846
    %v4914 = vpop.f32.mrf.mxu0
    %v4915 = vadd.f32 %v2941, %v4914
    %v4916 = vpop.f32.mrf.mxu0
    %4917 = vdwg.mxu0
    %v4918 = vxor.u32 %v4915, 2147483648
    %v4919 = vmul.f32 %v4918, 1.442695
    %v4920 = vpow.pop %v4919
    %v4921 = vadd.f32 %v4920, 1.0
    %v4922 = vrcp.pop %v4921
    %v4923 = vmul.f32 1.0, %v4922
    %v4924 = vtanh.pop %v4915
    %v4925 = vmul.f32 %v4923, %v4620
    %4927 = vrot.lane.b32.xlu0 %v4924, 104
    %v4928 = vpop.permute.xlu0 %4927
    %v4930 = vmul.f32 %v4923, %v4928
    %4932 = vrot.lane.b32.xlu0 %v4930, 8
    %v4933 = vpop.permute.xlu0 %4932
    %v4935 = vadd.f32 %v4925, %v4933
    %v4936 = vtanh.pop %v4935
    %4938 = vrot.lane.b32.xlu0 %v4936, 8
    %v4939 = vpop.permute.xlu0 %4938
    %v4941 = vmul.f32 %v4923, %v4939
    %4943 = vrot.lane.b32.xlu0 %v4941, 112
    %v4944 = vpop.permute.xlu0 %4943
    %4947 = vrot.lane.b32.xlu0 %v4732, 120
    %v4948 = vpop.permute.xlu0 %4947
    %v4950 = vsel %vm175, %v4944, %v4948
    %v4952 = vsel %vm300, %v4950, 0
    %4954 = vmatprep.subr.mxu0 0.0
    %4955 = vmatpush1.msra.mxu0 0.0
    %4956 = vmatprep.subr.mxu0 0.0
    %4957 = vmatpush1.msra.mxu0 0.0
    %4958 = vmatprep.subr.mxu0 0.0
    %4959 = vmatpush1.msra.mxu0 0.0
    %4960 = vmatprep.subr.mxu0 0.0
    %4961 = vmatpush1.msra.mxu0 0.0
    %4962 = vmatprep.subr.mxu0 0.0
    %4963 = vmatpush1.msra.mxu0 0.0
    %4964 = vmatprep.subr.mxu0 0.0
    %4965 = vmatpush1.msra.mxu0 0.0
    %4966 = vmatprep.subr.mxu0 0.0
    %4967 = vmatpush1.msra.mxu0 0.0
    %4968 = vmatprep.subr.mxu0 0.0
    %4969 = vmatpush1.msra.mxu0 0.0
    %4970 = vmatprep.subr.mxu0 0.0
    %4971 = vmatpush1.msra.mxu0 0.0
    %4972 = vmatprep.subr.mxu0 0.0
    %4973 = vmatpush1.msra.mxu0 0.0
    %4974 = vmatprep.subr.mxu0 0.0
    %4975 = vmatpush1.msra.mxu0 0.0
    %4976 = vmatprep.subr.mxu0 0.0
    %4977 = vmatpush1.msra.mxu0 0.0
    %4978 = vmatprep.subr.mxu0 0.0
    %4979 = vmatpush1.msra.mxu0 0.0
    %4980 = vmatprep.subr.mxu0 0.0
    %4981 = vmatpush1.msra.mxu0 0.0
    %4982 = vmatprep.subr.mxu0 0.0
    %4983 = vmatpush1.msra.mxu0 %v64
    %4984 = vmatprep.subr.mxu0 0.0
    %4985 = vmatpush1.msra.mxu0 %v63
    %4986 = vmatprep.subr.mxu0 0.0
    %4987 = vmatpush2.msra.mxu0 0.0
    %4988 = vmatprep.subr.mxu0 0.0
    %4989 = vmatpush2.msra.mxu0 0.0
    %4990 = vmatprep.subr.mxu0 0.0
    %4991 = vmatpush2.msra.mxu0 0.0
    %4992 = vmatprep.subr.mxu0 0.0
    %4993 = vmatpush2.msra.mxu0 0.0
    %4994 = vmatprep.subr.mxu0 0.0
    %4995 = vmatpush2.msra.mxu0 0.0
    %4996 = vmatprep.subr.mxu0 0.0
    %4997 = vmatpush2.msra.mxu0 0.0
    %4998 = vmatprep.subr.mxu0 0.0
    %4999 = vmatpush2.msra.mxu0 0.0
    %5000 = vmatprep.subr.mxu0 0.0
    %5001 = vmatpush2.msra.mxu0 0.0
    %5002 = vmatprep.subr.mxu0 0.0
    %5003 = vmatpush2.msra.mxu0 0.0
    %5004 = vmatprep.subr.mxu0 0.0
    %5005 = vmatpush2.msra.mxu0 0.0
    %5006 = vmatprep.subr.mxu0 0.0
    %5007 = vmatpush2.msra.mxu0 0.0
    %5008 = vmatprep.subr.mxu0 0.0
    %5009 = vmatpush2.msra.mxu0 0.0
    %5010 = vmatprep.subr.mxu0 0.0
    %5011 = vmatpush2.msra.mxu0 0.0
    %5012 = vmatprep.subr.mxu0 0.0
    %5013 = vmatpush2.msra.mxu0 0.0
    %5014 = vmatprep.subr.mxu0 0.0
    %5015 = vmatpush2.msra.mxu0 0.0
    %5016 = vmatprep.subr.mxu0 0.0
    %5017 = vmatpush2.msra.mxu0 0.0
    %5018 = vmatprep.mubr.f32.mxu0 0.0
    %5019 = vmatmul.mubr.f32.gmra.mxu0 %v4952
    %v5020 = vpop.f32.mrf.mxu0
    %v5021 = vadd.f32 %v3053, %v5020
    %v5022 = vpop.f32.mrf.mxu0
    %5023 = vdwg.mxu0
    %v5024 = vxor.u32 %v5021, 2147483648
    %v5025 = vmul.f32 %v5024, 1.442695
    %v5026 = vpow.pop %v5025
    %v5027 = vadd.f32 %v5026, 1.0
    %v5028 = vrcp.pop %v5027
    %v5029 = vmul.f32 1.0, %v5028
    %v5030 = vtanh.pop %v5021
    %v5031 = vmul.f32 %v5029, %v4726
    %5033 = vrot.lane.b32.xlu0 %v5030, 104
    %v5034 = vpop.permute.xlu0 %5033
    %v5036 = vmul.f32 %v5029, %v5034
    %5038 = vrot.lane.b32.xlu0 %v5036, 8
    %v5039 = vpop.permute.xlu0 %5038
    %v5041 = vadd.f32 %v5031, %v5039
    %v5042 = vtanh.pop %v5041
    %5044 = vrot.lane.b32.xlu0 %v5042, 8
    %v5045 = vpop.permute.xlu0 %5044
    %v5047 = vmul.f32 %v5029, %v5045
    %v5048 = vsel %vm175, %v4839, 0
    %5050 = vmatprep.subr.mxu0 0.0
    %5051 = vmatpush1.msra.mxu0 0.0
    %5052 = vmatprep.subr.mxu0 0.0
    %5053 = vmatpush1.msra.mxu0 0.0
    %5054 = vmatprep.subr.mxu0 0.0
    %5055 = vmatpush1.msra.mxu0 0.0
    %5056 = vmatprep.subr.mxu0 0.0
    %5057 = vmatpush1.msra.mxu0 0.0
    %5058 = vmatprep.subr.mxu0 0.0
    %5059 = vmatpush1.msra.mxu0 0.0
    %5060 = vmatprep.subr.mxu0 0.0
    %5061 = vmatpush1.msra.mxu0 0.0
    %5062 = vmatprep.subr.mxu0 0.0
    %5063 = vmatpush1.msra.mxu0 0.0
    %5064 = vmatprep.subr.mxu0 0.0
    %5065 = vmatpush1.msra.mxu0 0.0
    %5066 = vmatprep.subr.mxu0 0.0
    %5067 = vmatpush1.msra.mxu0 0.0
    %5068 = vmatprep.subr.mxu0 0.0
    %5069 = vmatpush1.msra.mxu0 0.0
    %5070 = vmatprep.subr.mxu0 0.0
    %5071 = vmatpush1.msra.mxu0 0.0
    %5072 = vmatprep.subr.mxu0 0.0
    %5073 = vmatpush1.msra.mxu0 0.0
    %5074 = vmatprep.subr.mxu0 0.0
    %5075 = vmatpush1.msra.mxu0 0.0
    %5076 = vmatprep.subr.mxu0 0.0
    %5077 = vmatpush1.msra.mxu0 0.0
    %5078 = vmatprep.subr.mxu0 0.0
    %5079 = vmatpush1.msra.mxu0 0.0
    %5080 = vmatprep.subr.mxu0 0.0
    %5081 = vmatpush1.msra.mxu0 %v60
    %5082 = vmatprep.subr.mxu0 0.0
    %5083 = vmatpush2.msra.mxu0 0.0
    %5084 = vmatprep.subr.mxu0 0.0
    %5085 = vmatpush2.msra.mxu0 0.0
    %5086 = vmatprep.subr.mxu0 0.0
    %5087 = vmatpush2.msra.mxu0 0.0
    %5088 = vmatprep.subr.mxu0 0.0
    %5089 = vmatpush2.msra.mxu0 0.0
    %5090 = vmatprep.subr.mxu0 0.0
    %5091 = vmatpush2.msra.mxu0 0.0
    %5092 = vmatprep.subr.mxu0 0.0
    %5093 = vmatpush2.msra.mxu0 0.0
    %5094 = vmatprep.subr.mxu0 0.0
    %5095 = vmatpush2.msra.mxu0 0.0
    %5096 = vmatprep.subr.mxu0 0.0
    %5097 = vmatpush2.msra.mxu0 0.0
    %5098 = vmatprep.subr.mxu0 0.0
    %5099 = vmatpush2.msra.mxu0 0.0
    %5100 = vmatprep.subr.mxu0 0.0
    %5101 = vmatpush2.msra.mxu0 0.0
    %5102 = vmatprep.subr.mxu0 0.0
    %5103 = vmatpush2.msra.mxu0 0.0
    %5104 = vmatprep.subr.mxu0 0.0
    %5105 = vmatpush2.msra.mxu0 0.0
    %5106 = vmatprep.subr.mxu0 0.0
    %5107 = vmatpush2.msra.mxu0 0.0
    %5108 = vmatprep.subr.mxu0 0.0
    %5109 = vmatpush2.msra.mxu0 0.0
    %5110 = vmatprep.subr.mxu0 0.0
    %5111 = vmatpush2.msra.mxu0 0.0
    %5112 = vmatprep.subr.mxu0 0.0
    %5113 = vmatpush2.msra.mxu0 0.0
    %5114 = vmatprep.mubr.f32.mxu0 0.0
    %5115 = vmatmul.mubr.f32.gmra.mxu0 %v5048
    %v5116 = vpop.f32.mrf.mxu0
    %v5117 = vadd.f32 0.0, %v5116
    %v5118 = vpop.f32.mrf.mxu0
    %5119 = vdwg.mxu0
    %v5121 = vrot.slane %v5117, 4
    %v5123 = vadd.f32 %v2816, %v5121
    %v5124 = vadd.f32 %v5123, %v2899
    %v5125 = vxor.u32 %v5124, 2147483648
    %v5126 = vmul.f32 %v5125, 1.442695
    %v5127 = vpow.pop %v5126
    %v5128 = vadd.f32 %v5127, 1.0
    %v5129 = vrcp.pop %v5128
    %v5130 = vmul.f32 1.0, %v5129
    %v5131 = vtanh.pop %v5124
    %v5133 = vrot.slane %v4830, 4
    %v5135 = vmul.f32 %v5130, %v5133
    %5137 = vrot.lane.b32.xlu0 %v5131, 104
    %v5138 = vpop.permute.xlu0 %5137
    %v5140 = vmul.f32 %v5130, %v5138
    %5142 = vrot.lane.b32.xlu0 %v5140, 8
    %v5143 = vpop.permute.xlu0 %5142
    %v5145 = vadd.f32 %v5135, %v5143
    %v5146 = vtanh.pop %v5145
    %5148 = vrot.lane.b32.xlu0 %v5146, 8
    %v5149 = vpop.permute.xlu0 %5148
    %v5151 = vmul.f32 %v5130, %v5149
    %5153 = vrot.lane.b32.xlu0 %v5151, 112
    %v5154 = vpop.permute.xlu0 %5153
    %v5156 = vrot.slane %v4941, 4
    %5157 = vrot.lane.b32.xlu0 %v5156, 120
    %v5158 = vpop.permute.xlu0 %5157
    %v5160 = vsel %vm175, %v5154, %v5158
    %v5162 = vrot.slane %v5160, 4
    %v5163 = vsel %vm300, %v5162, 0
    %5165 = vmatprep.subr.mxu0 0.0
    %5166 = vmatpush1.msra.mxu0 0.0
    %5167 = vmatprep.subr.mxu0 0.0
    %5168 = vmatpush1.msra.mxu0 0.0
    %5169 = vmatprep.subr.mxu0 0.0
    %5170 = vmatpush1.msra.mxu0 0.0
    %5171 = vmatprep.subr.mxu0 0.0
    %5172 = vmatpush1.msra.mxu0 0.0
    %5173 = vmatprep.subr.mxu0 0.0
    %5174 = vmatpush1.msra.mxu0 0.0
    %5175 = vmatprep.subr.mxu0 0.0
    %5176 = vmatpush1.msra.mxu0 0.0
    %5177 = vmatprep.subr.mxu0 0.0
    %5178 = vmatpush1.msra.mxu0 0.0
    %5179 = vmatprep.subr.mxu0 0.0
    %5180 = vmatpush1.msra.mxu0 0.0
    %5181 = vmatprep.subr.mxu0 0.0
    %5182 = vmatpush1.msra.mxu0 0.0
    %5183 = vmatprep.subr.mxu0 0.0
    %5184 = vmatpush1.msra.mxu0 0.0
    %5185 = vmatprep.subr.mxu0 0.0
    %5186 = vmatpush1.msra.mxu0 0.0
    %5187 = vmatprep.subr.mxu0 0.0
    %5188 = vmatpush1.msra.mxu0 0.0
    %5189 = vmatprep.subr.mxu0 0.0
    %5190 = vmatpush1.msra.mxu0 0.0
    %5191 = vmatprep.subr.mxu0 0.0
    %5192 = vmatpush1.msra.mxu0 0.0
    %5193 = vmatprep.subr.mxu0 0.0
    %5194 = vmatpush1.msra.mxu0 %v62
    %5195 = vmatprep.subr.mxu0 0.0
    %5196 = vmatpush1.msra.mxu0 %v61
    %5197 = vmatprep.subr.mxu0 0.0
    %5198 = vmatpush2.msra.mxu0 0.0
    %5199 = vmatprep.subr.mxu0 0.0
    %5200 = vmatpush2.msra.mxu0 0.0
    %5201 = vmatprep.subr.mxu0 0.0
    %5202 = vmatpush2.msra.mxu0 0.0
    %5203 = vmatprep.subr.mxu0 0.0
    %5204 = vmatpush2.msra.mxu0 0.0
    %5205 = vmatprep.subr.mxu0 0.0
    %5206 = vmatpush2.msra.mxu0 0.0
    %5207 = vmatprep.subr.mxu0 0.0
    %5208 = vmatpush2.msra.mxu0 0.0
    %5209 = vmatprep.subr.mxu0 0.0
    %5210 = vmatpush2.msra.mxu0 0.0
    %5211 = vmatprep.subr.mxu0 0.0
    %5212 = vmatpush2.msra.mxu0 0.0
    %5213 = vmatprep.subr.mxu0 0.0
    %5214 = vmatpush2.msra.mxu0 0.0
    %5215 = vmatprep.subr.mxu0 0.0
    %5216 = vmatpush2.msra.mxu0 0.0
    %5217 = vmatprep.subr.mxu0 0.0
    %5218 = vmatpush2.msra.mxu0 0.0
    %5219 = vmatprep.subr.mxu0 0.0
    %5220 = vmatpush2.msra.mxu0 0.0
    %5221 = vmatprep.subr.mxu0 0.0
    %5222 = vmatpush2.msra.mxu0 0.0
    %5223 = vmatprep.subr.mxu0 0.0
    %5224 = vmatpush2.msra.mxu0 0.0
    %5225 = vmatprep.subr.mxu0 0.0
    %5226 = vmatpush2.msra.mxu0 0.0
    %5227 = vmatprep.subr.mxu0 0.0
    %5228 = vmatpush2.msra.mxu0 0.0
    %5229 = vmatprep.mubr.f32.mxu0 0.0
    %5230 = vmatmul.mubr.f32.gmra.mxu0 %v5163
    %v5231 = vpop.f32.mrf.mxu0
    %v5232 = vadd.f32 %v2941, %v5231
    %v5233 = vpop.f32.mrf.mxu0
    %5234 = vdwg.mxu0
    %v5235 = vxor.u32 %v5232, 2147483648
    %v5236 = vmul.f32 %v5235, 1.442695
    %v5237 = vpow.pop %v5236
    %v5238 = vadd.f32 %v5237, 1.0
    %v5239 = vrcp.pop %v5238
    %v5240 = vmul.f32 1.0, %v5239
    %v5241 = vtanh.pop %v5232
    %v5242 = vmul.f32 %v5240, %v4935
    %5244 = vrot.lane.b32.xlu0 %v5241, 104
    %v5245 = vpop.permute.xlu0 %5244
    %v5247 = vmul.f32 %v5240, %v5245
    %5249 = vrot.lane.b32.xlu0 %v5247, 8
    %v5250 = vpop.permute.xlu0 %5249
    %v5252 = vadd.f32 %v5242, %v5250
    %v5253 = vtanh.pop %v5252
    %5255 = vrot.lane.b32.xlu0 %v5253, 8
    %v5256 = vpop.permute.xlu0 %5255
    %v5258 = vmul.f32 %v5240, %v5256
    %5260 = vrot.lane.b32.xlu0 %v5258, 112
    %v5261 = vpop.permute.xlu0 %5260
    %5264 = vrot.lane.b32.xlu0 %v5047, 120
    %v5265 = vpop.permute.xlu0 %5264
    %v5267 = vsel %vm175, %v5261, %v5265
    %v5269 = vsel %vm300, %v5267, 0
    %5271 = vmatprep.subr.mxu0 0.0
    %5272 = vmatpush1.msra.mxu0 0.0
    %5273 = vmatprep.subr.mxu0 0.0
    %5274 = vmatpush1.msra.mxu0 0.0
    %5275 = vmatprep.subr.mxu0 0.0
    %5276 = vmatpush1.msra.mxu0 0.0
    %5277 = vmatprep.subr.mxu0 0.0
    %5278 = vmatpush1.msra.mxu0 0.0
    %5279 = vmatprep.subr.mxu0 0.0
    %5280 = vmatpush1.msra.mxu0 0.0
    %5281 = vmatprep.subr.mxu0 0.0
    %5282 = vmatpush1.msra.mxu0 0.0
    %5283 = vmatprep.subr.mxu0 0.0
    %5284 = vmatpush1.msra.mxu0 0.0
    %5285 = vmatprep.subr.mxu0 0.0
    %5286 = vmatpush1.msra.mxu0 0.0
    %5287 = vmatprep.subr.mxu0 0.0
    %5288 = vmatpush1.msra.mxu0 0.0
    %5289 = vmatprep.subr.mxu0 0.0
    %5290 = vmatpush1.msra.mxu0 0.0
    %5291 = vmatprep.subr.mxu0 0.0
    %5292 = vmatpush1.msra.mxu0 0.0
    %5293 = vmatprep.subr.mxu0 0.0
    %5294 = vmatpush1.msra.mxu0 0.0
    %5295 = vmatprep.subr.mxu0 0.0
    %5296 = vmatpush1.msra.mxu0 0.0
    %5297 = vmatprep.subr.mxu0 0.0
    %5298 = vmatpush1.msra.mxu0 0.0
    %5299 = vmatprep.subr.mxu0 0.0
    %5300 = vmatpush1.msra.mxu0 %v64
    %5301 = vmatprep.subr.mxu0 0.0
    %5302 = vmatpush1.msra.mxu0 %v63
    %5303 = vmatprep.subr.mxu0 0.0
    %5304 = vmatpush2.msra.mxu0 0.0
    %5305 = vmatprep.subr.mxu0 0.0
    %5306 = vmatpush2.msra.mxu0 0.0
    %5307 = vmatprep.subr.mxu0 0.0
    %5308 = vmatpush2.msra.mxu0 0.0
    %5309 = vmatprep.subr.mxu0 0.0
    %5310 = vmatpush2.msra.mxu0 0.0
    %5311 = vmatprep.subr.mxu0 0.0
    %5312 = vmatpush2.msra.mxu0 0.0
    %5313 = vmatprep.subr.mxu0 0.0
    %5314 = vmatpush2.msra.mxu0 0.0
    %5315 = vmatprep.subr.mxu0 0.0
    %5316 = vmatpush2.msra.mxu0 0.0
    %5317 = vmatprep.subr.mxu0 0.0
    %5318 = vmatpush2.msra.mxu0 0.0
    %5319 = vmatprep.subr.mxu0 0.0
    %5320 = vmatpush2.msra.mxu0 0.0
    %5321 = vmatprep.subr.mxu0 0.0
    %5322 = vmatpush2.msra.mxu0 0.0
    %5323 = vmatprep.subr.mxu0 0.0
    %5324 = vmatpush2.msra.mxu0 0.0
    %5325 = vmatprep.subr.mxu0 0.0
    %5326 = vmatpush2.msra.mxu0 0.0
    %5327 = vmatprep.subr.mxu0 0.0
    %5328 = vmatpush2.msra.mxu0 0.0
    %5329 = vmatprep.subr.mxu0 0.0
    %5330 = vmatpush2.msra.mxu0 0.0
    %5331 = vmatprep.subr.mxu0 0.0
    %5332 = vmatpush2.msra.mxu0 0.0
    %5333 = vmatprep.subr.mxu0 0.0
    %5334 = vmatpush2.msra.mxu0 0.0
    %5335 = vmatprep.mubr.f32.mxu0 0.0
    %5336 = vmatmul.mubr.f32.gmra.mxu0 %v5269
    %v5337 = vpop.f32.mrf.mxu0
    %v5338 = vadd.f32 %v3053, %v5337
    %v5339 = vpop.f32.mrf.mxu0
    %5340 = vdwg.mxu0
    %v5341 = vxor.u32 %v5338, 2147483648
    %v5342 = vmul.f32 %v5341, 1.442695
    %v5343 = vpow.pop %v5342
    %v5344 = vadd.f32 %v5343, 1.0
    %v5345 = vrcp.pop %v5344
    %v5346 = vmul.f32 1.0, %v5345
    %v5347 = vtanh.pop %v5338
    %v5348 = vmul.f32 %v5346, %v5041
    %5350 = vrot.lane.b32.xlu0 %v5347, 104
    %v5351 = vpop.permute.xlu0 %5350
    %v5353 = vmul.f32 %v5346, %v5351
    %5355 = vrot.lane.b32.xlu0 %v5353, 8
    %v5356 = vpop.permute.xlu0 %5355
    %v5358 = vadd.f32 %v5348, %v5356
    %v5359 = vtanh.pop %v5358
    %5361 = vrot.lane.b32.xlu0 %v5359, 8
    %v5362 = vpop.permute.xlu0 %5361
    %v5364 = vmul.f32 %v5346, %v5362
    %v5366 = vlaneseq
    %v5367 = vshrl.u32 %v5366, 7
    %v5368 = vsub.s32 0, %v5367
    %v5369 = vrot.slane %v72, %v5368
    %5372 = vrot.lane.b32.xlu0 %v5364, 112
    %v5373 = vpop.permute.xlu0 %5372
    %v5374 = vsel %vm175, %v5373, 0
    %5376 = vmatprep.subr.mxu0 0.0
    %5377 = vmatpush1.msra.mxu0 0.0
    %5378 = vmatprep.subr.mxu0 0.0
    %5379 = vmatpush1.msra.mxu0 0.0
    %5380 = vmatprep.subr.mxu0 0.0
    %5381 = vmatpush1.msra.mxu0 0.0
    %5382 = vmatprep.subr.mxu0 0.0
    %5383 = vmatpush1.msra.mxu0 0.0
    %5384 = vmatprep.subr.mxu0 0.0
    %5385 = vmatpush1.msra.mxu0 0.0
    %5386 = vmatprep.subr.mxu0 0.0
    %5387 = vmatpush1.msra.mxu0 0.0
    %5388 = vmatprep.subr.mxu0 0.0
    %5389 = vmatpush1.msra.mxu0 0.0
    %5390 = vmatprep.subr.mxu0 0.0
    %5391 = vmatpush1.msra.mxu0 0.0
    %5392 = vmatprep.subr.mxu0 0.0
    %5393 = vmatpush1.msra.mxu0 0.0
    %5394 = vmatprep.subr.mxu0 0.0
    %5395 = vmatpush1.msra.mxu0 0.0
    %5396 = vmatprep.subr.mxu0 0.0
    %5397 = vmatpush1.msra.mxu0 0.0
    %5398 = vmatprep.subr.mxu0 0.0
    %5399 = vmatpush1.msra.mxu0 0.0
    %5400 = vmatprep.subr.mxu0 0.0
    %5401 = vmatpush1.msra.mxu0 0.0
    %5402 = vmatprep.subr.mxu0 0.0
    %5403 = vmatpush1.msra.mxu0 0.0
    %5404 = vmatprep.subr.mxu0 0.0
    %5405 = vmatpush1.msra.mxu0 0.0
    %5406 = vmatprep.subr.mxu0 0.0
    %5407 = vmatpush1.msra.mxu0 %v71
    %5408 = vmatprep.subr.mxu0 0.0
    %5409 = vmatpush2.msra.mxu0 0.0
    %5410 = vmatprep.subr.mxu0 0.0
    %5411 = vmatpush2.msra.mxu0 0.0
    %5412 = vmatprep.subr.mxu0 0.0
    %5413 = vmatpush2.msra.mxu0 0.0
    %5414 = vmatprep.subr.mxu0 0.0
    %5415 = vmatpush2.msra.mxu0 0.0
    %5416 = vmatprep.subr.mxu0 0.0
    %5417 = vmatpush2.msra.mxu0 0.0
    %5418 = vmatprep.subr.mxu0 0.0
    %5419 = vmatpush2.msra.mxu0 0.0
    %5420 = vmatprep.subr.mxu0 0.0
    %5421 = vmatpush2.msra.mxu0 0.0
    %5422 = vmatprep.subr.mxu0 0.0
    %5423 = vmatpush2.msra.mxu0 0.0
    %5424 = vmatprep.subr.mxu0 0.0
    %5425 = vmatpush2.msra.mxu0 0.0
    %5426 = vmatprep.subr.mxu0 0.0
    %5427 = vmatpush2.msra.mxu0 0.0
    %5428 = vmatprep.subr.mxu0 0.0
    %5429 = vmatpush2.msra.mxu0 0.0
    %5430 = vmatprep.subr.mxu0 0.0
    %5431 = vmatpush2.msra.mxu0 0.0
    %5432 = vmatprep.subr.mxu0 0.0
    %5433 = vmatpush2.msra.mxu0 0.0
    %5434 = vmatprep.subr.mxu0 0.0
    %5435 = vmatpush2.msra.mxu0 0.0
    %5436 = vmatprep.subr.mxu0 0.0
    %5437 = vmatpush2.msra.mxu0 0.0
    %5438 = vmatprep.subr.mxu0 0.0
    %5439 = vmatpush2.msra.mxu0 0.0
    %5440 = vmatprep.mubr.f32.mxu0 0.0
    %5441 = vmatmul.mubr.f32.gmra.mxu0 %v5374
    %v5442 = vpop.f32.mrf.mxu0
    %v5443 = vadd.f32 %v5369, %v5442
    %v5444 = vpop.f32.mrf.mxu0
    %5445 = vdwg.mxu0
    %vm5446 = vcmask 11264
    %5447 = vst.msk [vmem:[%s8] sm:$0xf] %vm5446, %v5443
    // Predicated region
    $region38: #{tpu_custom_call.1} parent=1 // pred_check
      _
    $region39: #{tpu_custom_call.1} parent=1 // pred_check_branch
      %5449 = sbr.rel (0) target = $region41
    $region40: #{tpu_custom_call.1} parent=1 // pred_region
      _
    $region41: #{tpu_custom_call.1} parent=1 // pred_fallthru
      _
    // Predicated region
    $region42: #{tpu_custom_call.1} parent=1 // pred_check
      _
    $region43: #{tpu_custom_call.1} parent=1 // pred_check_branch
      %5451 = sbr.rel (0) target = $region45
    $region44: #{tpu_custom_call.1} parent=1 // pred_region
      _
    $region45: #{tpu_custom_call.1} parent=1 // pred_fallthru
      _
    %5452 = vsyncpa [#allocation3], 1

</llo_original>
